<compile_context>
chip_gen: v7x
topology: tpu7x:2x2x1
jax: 0.10.0
libtpu: 0.0.40
codegen_flags: <defaults>
</compile_context>

<pallas_src>
import jax
import jax.numpy as jnp
from jax import lax
from jax.experimental import pallas as pl
from jax.experimental.pallas import tpu as pltpu

THRESHOLD = 2.0

FC1_IN = 7 * 7 * 64      # 3136
FC1_IN_PAD = 3200        # 25 * 128: lane-aligned K for the streamed head matmul
FC1_OUT = 1000
HEAD_TK = 640            # fc1-weight K chunk: 5 grid steps, 2.56 MB/chunk, double-buffered


# ---------------------------- Pallas kernels ----------------------------

def conv_relu_pool_kernel(x_ref, w_ref, b_ref, o_ref):
    """Fused 5x5 conv + bias + ReLU + 2x2/2 max-pool.

    x_ref: (4, M, K) im2col patches grouped by pool position
           (K = 25*Cin, M = N*Hout*Wout AFTER pooling)
    w_ref: (K, Cout);  b_ref: (1, Cout);  o_ref: (M, Cout)

    One matmul per pool position; pool = pairwise VPU maximum (bias/ReLU
    commute with max, so they are applied once after the reduction).
    """
    w = w_ref[...]
    y0 = jnp.dot(x_ref[0], w, preferred_element_type=jnp.float32)
    y1 = jnp.dot(x_ref[1], w, preferred_element_type=jnp.float32)
    y2 = jnp.dot(x_ref[2], w, preferred_element_type=jnp.float32)
    y3 = jnp.dot(x_ref[3], w, preferred_element_type=jnp.float32)
    m = jnp.maximum(jnp.maximum(y0, y1), jnp.maximum(y2, y3))
    o_ref[...] = jnp.maximum(m + b_ref[...], 0.0)


def head_kernel(x_ref, w1_ref, b1_ref, w2_ref, b2_ref, o_ref, h_ref):
    """fc1 (K-streamed) + L4-norm shrinkage + fc2.

    Grid axis 0 tiles the fc1 reduction dimension; the (N, 1000) partial
    product lives in VMEM scratch; shrinkage + fc2 run on the last step.
    """
    k = pl.program_id(0)

    @pl.when(k == 0)
    def _init():
        h_ref[...] = jnp.zeros_like(h_ref)

    h_ref[...] += jnp.dot(x_ref[...], w1_ref[...], preferred_element_type=jnp.float32)

    @pl.when(k == pl.num_programs(0) - 1)
    def _finish():
        h = h_ref[...] + b1_ref[...]
        s4 = jnp.sum(h * h * h * h)          # sum |h|^4 (even power)
        n4 = jnp.sqrt(jnp.sqrt(s4))          # torch.norm(h, 4)
        scale = jnp.minimum(n4, THRESHOLD) / n4   # NaN if n4 == 0, matching torch/ref
        hs = h * scale
        o_ref[...] = jnp.dot(hs, w2_ref[...], preferred_element_type=jnp.float32) + b2_ref[...]


# ---------------------------- Pallas wrappers ----------------------------

def conv5x5_relu_pool(x_nhwc, w_flat, b):
    """5x5 conv (stride 1, pad 2) + bias + ReLU + MaxPool2d(2,2), one kernel.

    w_flat: (25*Cin, Cout) with row index (ky*5 + kx)*Cin + ci.
    """
    N, H, W, Cin = x_nhwc.shape
    K, Cout = w_flat.shape
    Hh, Wh = H // 2, W // 2
    M = N * Hh * Wh
    xp = jnp.pad(x_nhwc, ((0, 0), (2, 2), (2, 2), (0, 0)))
    # im2col (glue): (N, H, W, 25*Cin)
    taps = jnp.concatenate(
        [xp[:, dy:dy + H, dx:dx + W, :] for dy in range(5) for dx in range(5)],
        axis=-1)
    # group by 2x2 pool position (glue): (4, N*Hh*Wh, 25*Cin)
    groups = (taps.reshape(N, Hh, 2, Wh, 2, K)
              .transpose(2, 4, 0, 1, 3, 5)
              .reshape(4, M, K))
    out = pl.pallas_call(
        conv_relu_pool_kernel,
        out_shape=jax.ShapeDtypeStruct((M, Cout), jnp.float32),
        in_specs=[pl.BlockSpec(memory_space=pltpu.MemorySpace.VMEM)] * 3,
        out_specs=pl.BlockSpec(memory_space=pltpu.MemorySpace.VMEM),
    )(groups, w_flat, b.reshape(1, Cout))
    return out.reshape(N, Hh, Wh, Cout)


def head(flat, w1_t_pad, b1, w2_t, b2):
    """fc1 (3136->1000, weight streamed in 640-wide K chunks) + shrinkage + fc2."""
    N = flat.shape[0]
    KP = w1_t_pad.shape[0]                                   # 3200 (zero-padded K)
    flat_pad = jnp.pad(flat, ((0, 0), (0, KP - flat.shape[1])))
    return pl.pallas_call(
        head_kernel,
        out_shape=jax.ShapeDtypeStruct((N, 2), jnp.float32),
        grid=(KP // HEAD_TK,),
        in_specs=[
            pl.BlockSpec((N, HEAD_TK), lambda k: (0, k)),        # activations chunk
            pl.BlockSpec((HEAD_TK, FC1_OUT), lambda k: (k, 0)),  # fc1 weight chunk (streamed)
            pl.BlockSpec((1, FC1_OUT), lambda k: (0, 0)),        # fc1 bias (resident)
            pl.BlockSpec((FC1_OUT, 2), lambda k: (0, 0)),        # fc2 weight (resident)
            pl.BlockSpec((1, 2), lambda k: (0, 0)),              # fc2 bias
        ],
        out_specs=pl.BlockSpec((N, 2), lambda k: (0, 0)),
        scratch_shapes=[pltpu.VMEM((N, FC1_OUT), jnp.float32)],
        compiler_params=pltpu.CompilerParams(dimension_semantics=("arbitrary",)),
    )(flat_pad, w1_t_pad, b1.reshape(1, -1), w2_t, b2.reshape(1, -1))


def convnet_s_forward(x_nchw, params):
    N = x_nchw.shape[0]
    x = jnp.transpose(x_nchw, (0, 2, 3, 1))                    # NCHW -> NHWC
    y = conv5x5_relu_pool(x, params["w1_flat"], params["b1"])  # (N,14,14,32)
    y = conv5x5_relu_pool(y, params["w2_flat"], params["b2"])  # (N,7,7,64)
    flat = jnp.transpose(y, (0, 3, 1, 2)).reshape(N, -1)       # torch NCHW flatten order
    # TODO(synk): nn.Dropout() is stochastic in train mode; modeled as eval-mode identity.
    return head(flat, params["wf1_t_pad"], params["bf1"], params["wf2_t"], params["bf2"])


# ---------------------------- pure-JAX reference ----------------------------

def reference_forward(x_nchw, w1, b1, w2, b2, wf1, bf1, wf2, bf2):
    x = jnp.transpose(x_nchw, (0, 2, 3, 1))

    def conv(x, w, b):
        w_hwio = jnp.transpose(w, (2, 3, 1, 0))
        y = lax.conv_general_dilated(x, w_hwio, (1, 1), ((2, 2), (2, 2)),
                                     dimension_numbers=("NHWC", "HWIO", "NHWC"))
        return jnp.maximum(y + b, 0.0)

    def pool(y):
        return lax.reduce_window(y, -jnp.inf, lax.max, (1, 2, 2, 1), (1, 2, 2, 1), "VALID")

    y = pool(conv(x, w1, b1))
    y = pool(conv(y, w2, b2))
    flat = jnp.transpose(y, (0, 3, 1, 2)).reshape(y.shape[0], -1)
    h = flat @ wf1.T + bf1
    n4 = jnp.sum(h ** 4) ** 0.25
    h = jnp.minimum(n4, THRESHOLD) / n4 * h
    return h @ wf2.T + bf2


# ---------------------------- main ----------------------------

if __name__ == "__main__":
    key = jax.random.PRNGKey(0)
    ks = jax.random.split(key, 9)

    # Deterministic synthetic parameters in PyTorch layouts.
    w1 = 0.20 * jax.random.normal(ks[0], (32, 1, 5, 5), jnp.float32)        # Conv2d(1,32,5)
    b1 = 0.10 * jax.random.normal(ks[1], (32,), jnp.float32)
    w2 = 0.05 * jax.random.normal(ks[2], (64, 32, 5, 5), jnp.float32)       # Conv2d(32,64,5)
    b2 = 0.10 * jax.random.normal(ks[3], (64,), jnp.float32)
    wf1 = 0.02 * jax.random.normal(ks[4], (1000, FC1_IN), jnp.float32)      # Linear(3136,1000)
    bf1 = 0.02 * jax.random.normal(ks[5], (1000,), jnp.float32)
    wf2 = 0.05 * jax.random.normal(ks[6], (2, 1000), jnp.float32)           # Linear(1000,2)
    bf2 = 0.05 * jax.random.normal(ks[7], (2,), jnp.float32)

    # Input: NCHW, MNIST-sized spatial (required by the 7*7*64 fc1 input), small batch.
    x = jax.random.normal(ks[8], (2, 1, 28, 28), jnp.float32)

    params = dict(
        # folded conv weights: (25*Cin, Cout); row (ky*5+kx)*Cin + ci == w[co, ci, ky, kx]
        w1_flat=jnp.transpose(w1, (2, 3, 1, 0)).reshape(25 * 1, 32),
        b1=b1,
        w2_flat=jnp.transpose(w2, (2, 3, 1, 0)).reshape(25 * 32, 64),
        b2=b2,
        # fc1 weight transposed and zero-padded once (outside jit) to the
        # lane-aligned streamed-K length; zero rows contribute nothing.
        wf1_t_pad=jnp.pad(wf1.T, ((0, FC1_IN_PAD - FC1_IN), (0, 0))),
        bf1=bf1,
        wf2_t=wf2.T, bf2=bf2,
    )

    out = jax.jit(convnet_s_forward)(x, params)
    out = jax.block_until_ready(out)

    ref = reference_forward(x, w1, b1, w2, b2, wf1, bf1, wf2, bf2)
    err = float(jnp.max(jnp.abs(out - ref)))
    assert out.shape == (2, 2), out.shape
    assert err < 1e-2, f"max abs err vs reference: {err}"

    print("KERNEL_OK")
</pallas_src>

<mosaic_0001>
module attributes {stable_mosaic.version = 11 : i64} {
  func.func @conv_relu_pool_kernel(%arg0: memref<4x392x25xf32, #tpu.memory_space<vmem>>, %arg1: memref<25x32xf32, #tpu.memory_space<vmem>>, %arg2: memref<1x32xf32, #tpu.memory_space<vmem>>, %arg3: memref<392x32xf32, #tpu.memory_space<vmem>>) attributes {dimension_semantics = [], scalar_prefetch = 0 : i64, scratch_operands = 0 : i64, tpu.core_type = #tpu.core_type<tc>} {
    %c0 = arith.constant 0 : index
    %c0_0 = arith.constant 0 : index
    %0 = vector.load %arg1[%c0, %c0_0] : memref<25x32xf32, #tpu.memory_space<vmem>>, vector<25x32xf32>
    %c0_1 = arith.constant 0 : index
    %c0_2 = arith.constant 0 : index
    %c0_3 = arith.constant 0 : index
    %1 = vector.load %arg0[%c0_1, %c0_2, %c0_3] : memref<4x392x25xf32, #tpu.memory_space<vmem>>, vector<1x392x25xf32>
    %2 = vector.shape_cast %1 : vector<1x392x25xf32> to vector<392x25xf32>
    %cst = arith.constant dense<0.000000e+00> : vector<392x32xf32>
    %3 = tpu.matmul %2, %0, %cst {dimension_numbers = #tpu.dot_dimension_numbers<[1], [0], [0], [1], [0, 0, 1, 1], [], []>} : vector<392x25xf32>, vector<25x32xf32>, vector<392x32xf32> -> vector<392x32xf32>
    %c1 = arith.constant 1 : index
    %c0_4 = arith.constant 0 : index
    %c0_5 = arith.constant 0 : index
    %4 = vector.load %arg0[%c1, %c0_4, %c0_5] : memref<4x392x25xf32, #tpu.memory_space<vmem>>, vector<1x392x25xf32>
    %5 = vector.shape_cast %4 : vector<1x392x25xf32> to vector<392x25xf32>
    %cst_6 = arith.constant dense<0.000000e+00> : vector<392x32xf32>
    %6 = tpu.matmul %5, %0, %cst_6 {dimension_numbers = #tpu.dot_dimension_numbers<[1], [0], [0], [1], [0, 0, 1, 1], [], []>} : vector<392x25xf32>, vector<25x32xf32>, vector<392x32xf32> -> vector<392x32xf32>
    %c2 = arith.constant 2 : index
    %c0_7 = arith.constant 0 : index
    %c0_8 = arith.constant 0 : index
    %7 = vector.load %arg0[%c2, %c0_7, %c0_8] : memref<4x392x25xf32, #tpu.memory_space<vmem>>, vector<1x392x25xf32>
    %8 = vector.shape_cast %7 : vector<1x392x25xf32> to vector<392x25xf32>
    %cst_9 = arith.constant dense<0.000000e+00> : vector<392x32xf32>
    %9 = tpu.matmul %8, %0, %cst_9 {dimension_numbers = #tpu.dot_dimension_numbers<[1], [0], [0], [1], [0, 0, 1, 1], [], []>} : vector<392x25xf32>, vector<25x32xf32>, vector<392x32xf32> -> vector<392x32xf32>
    %c3 = arith.constant 3 : index
    %c0_10 = arith.constant 0 : index
    %c0_11 = arith.constant 0 : index
    %10 = vector.load %arg0[%c3, %c0_10, %c0_11] : memref<4x392x25xf32, #tpu.memory_space<vmem>>, vector<1x392x25xf32>
    %11 = vector.shape_cast %10 : vector<1x392x25xf32> to vector<392x25xf32>
    %cst_12 = arith.constant dense<0.000000e+00> : vector<392x32xf32>
    %12 = tpu.matmul %11, %0, %cst_12 {dimension_numbers = #tpu.dot_dimension_numbers<[1], [0], [0], [1], [0, 0, 1, 1], [], []>} : vector<392x25xf32>, vector<25x32xf32>, vector<392x32xf32> -> vector<392x32xf32>
    %13 = arith.maximumf %3, %6 : vector<392x32xf32>
    %14 = arith.maximumf %9, %12 : vector<392x32xf32>
    %15 = arith.maximumf %13, %14 : vector<392x32xf32>
    %c0_13 = arith.constant 0 : index
    %c0_14 = arith.constant 0 : index
    %16 = vector.load %arg2[%c0_13, %c0_14] : memref<1x32xf32, #tpu.memory_space<vmem>>, vector<1x32xf32>
    %17 = vector.broadcast %16 : vector<1x32xf32> to vector<392x32xf32>
    %18 = arith.addf %15, %17 : vector<392x32xf32>
    %cst_15 = arith.constant 0.000000e+00 : f32
    %19 = vector.broadcast %cst_15 : f32 to vector<392x32xf32>
    %20 = arith.maximumf %18, %19 : vector<392x32xf32>
    %c0_16 = arith.constant 0 : index
    %c0_17 = arith.constant 0 : index
    %21 = vector.load %arg3[%c0_16, %c0_17] : memref<392x32xf32, #tpu.memory_space<vmem>>, vector<392x32xf32>
    tpu.vector_store %arg3[%c0_16, %c0_17], %20 {strides = array<i32>} : memref<392x32xf32, #tpu.memory_space<vmem>>, vector<392x32xf32>,
    return
  }
}

module attributes {stable_mosaic.version = 11 : i64} {
  func.func @conv_relu_pool_kernel(%arg0: memref<4x98x800xf32, #tpu.memory_space<vmem>>, %arg1: memref<800x64xf32, #tpu.memory_space<vmem>>, %arg2: memref<1x64xf32, #tpu.memory_space<vmem>>, %arg3: memref<98x64xf32, #tpu.memory_space<vmem>>) attributes {dimension_semantics = [], scalar_prefetch = 0 : i64, scratch_operands = 0 : i64, tpu.core_type = #tpu.core_type<tc>} {
    %c0 = arith.constant 0 : index
    %c0_0 = arith.constant 0 : index
    %0 = vector.load %arg1[%c0, %c0_0] : memref<800x64xf32, #tpu.memory_space<vmem>>, vector<800x64xf32>
    %c0_1 = arith.constant 0 : index
    %c0_2 = arith.constant 0 : index
    %c0_3 = arith.constant 0 : index
    %1 = vector.load %arg0[%c0_1, %c0_2, %c0_3] : memref<4x98x800xf32, #tpu.memory_space<vmem>>, vector<1x98x800xf32>
    %2 = vector.shape_cast %1 : vector<1x98x800xf32> to vector<98x800xf32>
    %cst = arith.constant dense<0.000000e+00> : vector<98x64xf32>
    %3 = tpu.matmul %2, %0, %cst {dimension_numbers = #tpu.dot_dimension_numbers<[1], [0], [0], [1], [0, 0, 1, 1], [], []>} : vector<98x800xf32>, vector<800x64xf32>, vector<98x64xf32> -> vector<98x64xf32>
    %c1 = arith.constant 1 : index
    %c0_4 = arith.constant 0 : index
    %c0_5 = arith.constant 0 : index
    %4 = vector.load %arg0[%c1, %c0_4, %c0_5] : memref<4x98x800xf32, #tpu.memory_space<vmem>>, vector<1x98x800xf32>
    %5 = vector.shape_cast %4 : vector<1x98x800xf32> to vector<98x800xf32>
    %cst_6 = arith.constant dense<0.000000e+00> : vector<98x64xf32>
    %6 = tpu.matmul %5, %0, %cst_6 {dimension_numbers = #tpu.dot_dimension_numbers<[1], [0], [0], [1], [0, 0, 1, 1], [], []>} : vector<98x800xf32>, vector<800x64xf32>, vector<98x64xf32> -> vector<98x64xf32>
    %c2 = arith.constant 2 : index
    %c0_7 = arith.constant 0 : index
    %c0_8 = arith.constant 0 : index
    %7 = vector.load %arg0[%c2, %c0_7, %c0_8] : memref<4x98x800xf32, #tpu.memory_space<vmem>>, vector<1x98x800xf32>
    %8 = vector.shape_cast %7 : vector<1x98x800xf32> to vector<98x800xf32>
    %cst_9 = arith.constant dense<0.000000e+00> : vector<98x64xf32>
    %9 = tpu.matmul %8, %0, %cst_9 {dimension_numbers = #tpu.dot_dimension_numbers<[1], [0], [0], [1], [0, 0, 1, 1], [], []>} : vector<98x800xf32>, vector<800x64xf32>, vector<98x64xf32> -> vector<98x64xf32>
    %c3 = arith.constant 3 : index
    %c0_10 = arith.constant 0 : index
    %c0_11 = arith.constant 0 : index
    %10 = vector.load %arg0[%c3, %c0_10, %c0_11] : memref<4x98x800xf32, #tpu.memory_space<vmem>>, vector<1x98x800xf32>
    %11 = vector.shape_cast %10 : vector<1x98x800xf32> to vector<98x800xf32>
    %cst_12 = arith.constant dense<0.000000e+00> : vector<98x64xf32>
    %12 = tpu.matmul %11, %0, %cst_12 {dimension_numbers = #tpu.dot_dimension_numbers<[1], [0], [0], [1], [0, 0, 1, 1], [], []>} : vector<98x800xf32>, vector<800x64xf32>, vector<98x64xf32> -> vector<98x64xf32>
    %13 = arith.maximumf %3, %6 : vector<98x64xf32>
    %14 = arith.maximumf %9, %12 : vector<98x64xf32>
    %15 = arith.maximumf %13, %14 : vector<98x64xf32>
    %c0_13 = arith.constant 0 : index
    %c0_14 = arith.constant 0 : index
    %16 = vector.load %arg2[%c0_13, %c0_14] : memref<1x64xf32, #tpu.memory_space<vmem>>, vector<1x64xf32>
    %17 = vector.broadcast %16 : vector<1x64xf32> to vector<98x64xf32>
    %18 = arith.addf %15, %17 : vector<98x64xf32>
    %cst_15 = arith.constant 0.000000e+00 : f32
    %19 = vector.broadcast %cst_15 : f32 to vector<98x64xf32>
    %20 = arith.maximumf %18, %19 : vector<98x64xf32>
    %c0_16 = arith.constant 0 : index
    %c0_17 = arith.constant 0 : index
    %21 = vector.load %arg3[%c0_16, %c0_17] : memref<98x64xf32, #tpu.memory_space<vmem>>, vector<98x64xf32>
    tpu.vector_store %arg3[%c0_16, %c0_17], %20 {strides = array<i32>} : memref<98x64xf32, #tpu.memory_space<vmem>>, vector<98x64xf32>,
    return
  }
}

module attributes {stable_mosaic.version = 11 : i64} {
  func.func @head_kernel(%arg0: i32, %arg1: memref<2x640xf32, #tpu.memory_space<vmem>>, %arg2: memref<640x1000xf32, #tpu.memory_space<vmem>>, %arg3: memref<1x1000xf32, #tpu.memory_space<vmem>>, %arg4: memref<1000x2xf32, #tpu.memory_space<vmem>>, %arg5: memref<1x2xf32, #tpu.memory_space<vmem>>, %arg6: memref<2x2xf32, #tpu.memory_space<vmem>>, %arg7: memref<2x1000xf32, #tpu.memory_space<vmem>>) attributes {dimension_semantics = [#tpu.dimension_semantics<arbitrary>], iteration_bounds = array<i64: 5>, scalar_prefetch = 0 : i64, scratch_operands = 1 : i64, tpu.core_type = #tpu.core_type<tc>, window_params = [{transform_indices = @transform_0, window_bounds = array<i64: 2, 640>}, {transform_indices = @transform_1, window_bounds = array<i64: 640, 1000>}, {pipeline_mode = #tpu.pipeline_mode<synchronous>, transform_indices = @transform_2, window_bounds = array<i64: 1, 1000>}, {pipeline_mode = #tpu.pipeline_mode<synchronous>, transform_indices = @transform_3, window_bounds = array<i64: 1000, 2>}, {pipeline_mode = #tpu.pipeline_mode<synchronous>, transform_indices = @transform_4, window_bounds = array<i64: 1, 2>}, {pipeline_mode = #tpu.pipeline_mode<synchronous>, transform_indices = @transform_5, window_bounds = array<i64: 2, 2>}]} {
    %c0_i32 = arith.constant 0 : i32
    %0 = arith.cmpi eq, %arg0, %c0_i32 : i32
    %1 = arith.extui %0 : i1 to i32
    %c0_i32_0 = arith.constant 0 : i32
    %2 = arith.cmpi ne, %1, %c0_i32_0 : i32
    scf.if %2 {
      %cst_9 = arith.constant 0.000000e+00 : f32
      %12 = vector.broadcast %cst_9 : f32 to vector<2x1000xf32>
      %c0_10 = arith.constant 0 : index
      %c0_11 = arith.constant 0 : index
      %13 = vector.load %arg7[%c0_10, %c0_11] : memref<2x1000xf32, #tpu.memory_space<vmem>>, vector<2x1000xf32>
      tpu.vector_store %arg7[%c0_10, %c0_11], %12 {strides = array<i32>} : memref<2x1000xf32, #tpu.memory_space<vmem>>, vector<2x1000xf32>,
    } else {
    }
    %c0 = arith.constant 0 : index
    %c0_1 = arith.constant 0 : index
    %3 = vector.load %arg7[%c0, %c0_1] : memref<2x1000xf32, #tpu.memory_space<vmem>>, vector<2x1000xf32>
    %c0_2 = arith.constant 0 : index
    %c0_3 = arith.constant 0 : index
    %4 = vector.load %arg1[%c0_2, %c0_3] : memref<2x640xf32, #tpu.memory_space<vmem>>, vector<2x640xf32>
    %c0_4 = arith.constant 0 : index
    %c0_5 = arith.constant 0 : index
    %5 = vector.load %arg2[%c0_4, %c0_5] : memref<640x1000xf32, #tpu.memory_space<vmem>>, vector<640x1000xf32>
    %cst = arith.constant dense<0.000000e+00> : vector<2x1000xf32>
    %6 = tpu.matmul %4, %5, %cst {dimension_numbers = #tpu.dot_dimension_numbers<[1], [0], [0], [1], [0, 0, 1, 1], [], []>} : vector<2x640xf32>, vector<640x1000xf32>, vector<2x1000xf32> -> vector<2x1000xf32>
    %7 = arith.addf %3, %6 : vector<2x1000xf32>
    %c0_6 = arith.constant 0 : index
    %c0_7 = arith.constant 0 : index
    %8 = vector.load %arg7[%c0_6, %c0_7] : memref<2x1000xf32, #tpu.memory_space<vmem>>, vector<2x1000xf32>
    tpu.vector_store %arg7[%c0_6, %c0_7], %7 {strides = array<i32>} : memref<2x1000xf32, #tpu.memory_space<vmem>>, vector<2x1000xf32>,
    %c4_i32 = arith.constant 4 : i32
    %9 = arith.cmpi eq, %arg0, %c4_i32 : i32
    %10 = arith.extui %9 : i1 to i32
    %c0_i32_8 = arith.constant 0 : i32
    %11 = arith.cmpi ne, %10, %c0_i32_8 : i32
    scf.if %11 {
      %c0_9 = arith.constant 0 : index
      %c0_10 = arith.constant 0 : index
      %12 = vector.load %arg7[%c0_9, %c0_10] : memref<2x1000xf32, #tpu.memory_space<vmem>>, vector<2x1000xf32>
      %c0_11 = arith.constant 0 : index
      %c0_12 = arith.constant 0 : index
      %13 = vector.load %arg3[%c0_11, %c0_12] : memref<1x1000xf32, #tpu.memory_space<vmem>>, vector<1x1000xf32>
      %14 = vector.broadcast %13 : vector<1x1000xf32> to vector<2x1000xf32>
      %15 = arith.addf %12, %14 : vector<2x1000xf32>
      %16 = arith.mulf %15, %15 : vector<2x1000xf32>
      %17 = arith.mulf %16, %15 : vector<2x1000xf32>
      %18 = arith.mulf %17, %15 : vector<2x1000xf32>
      %19 = vector.shape_cast %18 : vector<2x1000xf32> to vector<1x2x1000xf32>
      %cst_13 = arith.constant dense<0.000000e+00> : vector<1xf32>
      %20 = vector.multi_reduction <add>, %19, %cst_13 [1, 2] : vector<1x2x1000xf32> to vector<1xf32>
      %21 = vector.shape_cast %20 : vector<1xf32> to vector<1x1x1xf32>
      %22 = vector.extract %21[0, 0, 0] : f32 from vector<1x1x1xf32>
      %23 = math.sqrt %22 : f32
      %24 = math.sqrt %23 : f32
      %cst_14 = arith.constant 2.000000e+00 : f32
      %25 = arith.minimumf %24, %cst_14 : f32
      %26 = arith.divf %25, %24 : f32
      %27 = vector.broadcast %26 : f32 to vector<2x1000xf32>
      %28 = arith.mulf %15, %27 : vector<2x1000xf32>
      %c0_15 = arith.constant 0 : index
      %c0_16 = arith.constant 0 : index
      %29 = vector.load %arg4[%c0_15, %c0_16] : memref<1000x2xf32, #tpu.memory_space<vmem>>, vector<1000x2xf32>
      %cst_17 = arith.constant dense<0.000000e+00> : vector<2x2xf32>
      %30 = tpu.matmul %28, %29, %cst_17 {dimension_numbers = #tpu.dot_dimension_numbers<[1], [0], [0], [1], [0, 0, 1, 1], [], []>} : vector<2x1000xf32>, vector<1000x2xf32>, vector<2x2xf32> -> vector<2x2xf32>
      %c0_18 = arith.constant 0 : index
      %c0_19 = arith.constant 0 : index
      %31 = vector.load %arg5[%c0_18, %c0_19] : memref<1x2xf32, #tpu.memory_space<vmem>>, vector<1x2xf32>
      %32 = vector.broadcast %31 : vector<1x2xf32> to vector<2x2xf32>
      %33 = arith.addf %30, %32 : vector<2x2xf32>
      %c0_20 = arith.constant 0 : index
      %c0_21 = arith.constant 0 : index
      %34 = vector.load %arg6[%c0_20, %c0_21] : memref<2x2xf32, #tpu.memory_space<vmem>>, vector<2x2xf32>
      tpu.vector_store %arg6[%c0_20, %c0_21], %33 {strides = array<i32>} : memref<2x2xf32, #tpu.memory_space<vmem>>, vector<2x2xf32>,
    } else {
    }
    return
  }
  func.func @transform_0(%arg0: i32) -> (i32, i32) {
    %c0_i32 = arith.constant 0 : i32
    %c0_i32_0 = arith.constant 0 : i32
    return %c0_i32, %arg0 : i32, i32
  }
  func.func @transform_1(%arg0: i32) -> (i32, i32) {
    %c0_i32 = arith.constant 0 : i32
    %c0_i32_0 = arith.constant 0 : i32
    return %arg0, %c0_i32 : i32, i32
  }
  func.func @transform_2(%arg0: i32) -> (i32, i32) {
    %c0_i32 = arith.constant 0 : i32
    %c0_i32_0 = arith.constant 0 : i32
    %c0_i32_1 = arith.constant 0 : i32
    return %c0_i32, %c0_i32_0 : i32, i32
  }
  func.func @transform_3(%arg0: i32) -> (i32, i32) {
    %c0_i32 = arith.constant 0 : i32
    %c0_i32_0 = arith.constant 0 : i32
    %c0_i32_1 = arith.constant 0 : i32
    return %c0_i32, %c0_i32_0 : i32, i32
  }
  func.func @transform_4(%arg0: i32) -> (i32, i32) {
    %c0_i32 = arith.constant 0 : i32
    %c0_i32_0 = arith.constant 0 : i32
    %c0_i32_1 = arith.constant 0 : i32
    return %c0_i32, %c0_i32_0 : i32, i32
  }
  func.func @transform_5(%arg0: i32) -> (i32, i32) {
    %c0_i32 = arith.constant 0 : i32
    %c0_i32_0 = arith.constant 0 : i32
    %c0_i32_1 = arith.constant 0 : i32
    return %c0_i32, %c0_i32_0 : i32, i32
  }
}

</mosaic_0001>

<llo_original>
// kernel: convnet_s_forward.3
$region0: #{convnet_s_forward.3}
  #allocation0 [shape = 'u32[]', space=smem, size = 0x4, offset = 0x4, fixed_abs, tag = 'smem constant byte address 0x4 - core index']
  #allocation1 [shape = 'u32[144,128]{1,0:T(1,128)}', space=vmem, size = 0x12000, scoped, tag = 'internal scratch']
  %s0 = inlined_call_operand.vmem [shape: f32[4,392,25], index: 0, kind: input, shape index: {}]
  %s1 = inlined_call_operand.vmem [shape: f32[25,32], index: 1, kind: input, shape index: {}]
  %s2 = inlined_call_operand.vmem [shape: f32[1,32], index: 2, kind: input, shape index: {}]
  %s3 = inlined_call_operand.vmem [shape: f32[392,32], index: 3, kind: output, shape index: {}]
  %s4 = sld [smem:[#allocation0]]
  $region22: #{convnet_s_forward.3} parent=0
    _
  %s6 = ssub.s32 1, %s4
  %s7 = scalar_select 0, %s6, %s4
  // Predicated region
  $region2: #{convnet_s_forward.3} parent=0 // pred_check
    _
  $region3: #{convnet_s_forward.3} parent=0 // pred_check_branch
    %9 = sbr.rel (0) target = $region5
  $region4: #{convnet_s_forward.3} parent=0 // pred_region
    _
  $region5: #{convnet_s_forward.3} parent=0 // pred_fallthru
    _
  // Predicated region
  $region6: #{convnet_s_forward.3} parent=0 // pred_check
    _
  $region7: #{convnet_s_forward.3} parent=0 // pred_check_branch
    %11 = sbr.rel (0) target = $region9
  $region8: #{convnet_s_forward.3} parent=0 // pred_region
    _
  $region9: #{convnet_s_forward.3} parent=0 // pred_fallthru
    _
  // Predicated region
  $region10: #{convnet_s_forward.3} parent=0 // pred_check
    _
  $region11: #{convnet_s_forward.3} parent=0 // pred_check_branch
    %13 = sbr.rel (0) target = $region13
  $region12: #{convnet_s_forward.3} parent=0 // pred_region
    _
  $region13: #{convnet_s_forward.3} parent=0 // pred_fallthru
    _
  %v14 = vld [vmem:[%s1] sm:$0xff]
  %v15 = vld [vmem:[%s1 + $0x8] sm:$0xff]
  %v16 = vld [vmem:[%s1 + $0x10] sm:$0xff]
  %v17 = vld [vmem:[%s1 + $0x18] sm:$0x1]
  %v18 = vld [vmem:[%s0] sm:$0xff]
  %v19 = vld [vmem:[%s0 + $0x8] sm:$0xff]
  %v20 = vld [vmem:[%s0 + $0x10] sm:$0xff]
  %v21 = vld [vmem:[%s0 + $0x18] sm:$0xff]
  %v22 = vld [vmem:[%s0 + $0x20] sm:$0xff]
  %v23 = vld [vmem:[%s0 + $0x28] sm:$0xff]
  %v24 = vld [vmem:[%s0 + $0x30] sm:$0xff]
  %v25 = vld [vmem:[%s0 + $0x38] sm:$0xff]
  %v26 = vld [vmem:[%s0 + $0x40] sm:$0xff]
  %v27 = vld [vmem:[%s0 + $0x48] sm:$0xff]
  %v28 = vld [vmem:[%s0 + $0x50] sm:$0xff]
  %v29 = vld [vmem:[%s0 + $0x58] sm:$0xff]
  %v30 = vld [vmem:[%s0 + $0x60] sm:$0xff]
  %v31 = vld [vmem:[%s0 + $0x68] sm:$0xff]
  %v32 = vld [vmem:[%s0 + $0x70] sm:$0xff]
  %v33 = vld [vmem:[%s0 + $0x78] sm:$0xff]
  %v34 = vld [vmem:[%s0 + $0x80] sm:$0xff]
  %v35 = vld [vmem:[%s0 + $0x88] sm:$0xff]
  %v36 = vld [vmem:[%s0 + $0x90] sm:$0xff]
  %v37 = vld [vmem:[%s0 + $0x98] sm:$0xff]
  %v38 = vld [vmem:[%s0 + $0xa0] sm:$0xff]
  %v39 = vld [vmem:[%s0 + $0xa8] sm:$0xff]
  %v40 = vld [vmem:[%s0 + $0xb0] sm:$0xff]
  %v41 = vld [vmem:[%s0 + $0xb8] sm:$0xff]
  %v42 = vld [vmem:[%s0 + $0xc0] sm:$0xff]
  %v43 = vld [vmem:[%s0 + $0xc8] sm:$0xff]
  %v44 = vld [vmem:[%s0 + $0xd0] sm:$0xff]
  %v45 = vld [vmem:[%s0 + $0xd8] sm:$0xff]
  %v46 = vld [vmem:[%s0 + $0xe0] sm:$0xff]
  %v47 = vld [vmem:[%s0 + $0xe8] sm:$0xff]
  %v48 = vld [vmem:[%s0 + $0xf0] sm:$0xff]
  %v49 = vld [vmem:[%s0 + $0xf8] sm:$0xff]
  %v50 = vld [vmem:[%s0 + $0x100] sm:$0xff]
  %v51 = vld [vmem:[%s0 + $0x108] sm:$0xff]
  %v52 = vld [vmem:[%s0 + $0x110] sm:$0xff]
  %v53 = vld [vmem:[%s0 + $0x118] sm:$0xff]
  %v54 = vld [vmem:[%s0 + $0x120] sm:$0xff]
  %v55 = vld [vmem:[%s0 + $0x128] sm:$0xff]
  %v56 = vld [vmem:[%s0 + $0x130] sm:$0xff]
  %v57 = vld [vmem:[%s0 + $0x138] sm:$0xff]
  %v58 = vld [vmem:[%s0 + $0x140] sm:$0xff]
  %v59 = vld [vmem:[%s0 + $0x148] sm:$0xff]
  %v60 = vld [vmem:[%s0 + $0x150] sm:$0xff]
  %v61 = vld [vmem:[%s0 + $0x158] sm:$0xff]
  %v62 = vld [vmem:[%s0 + $0x160] sm:$0xff]
  %v63 = vld [vmem:[%s0 + $0x168] sm:$0xff]
  %v64 = vld [vmem:[%s0 + $0x170] sm:$0xff]
  %v65 = vld [vmem:[%s0 + $0x178] sm:$0xff]
  %v66 = vld [vmem:[%s0 + $0x180] sm:$0xff]
  %vm67 = vcmask 203776
  %v69 = vsel %vm67, %v18, 0
  %v72 = vsel %vm67, %v19, 0
  %v75 = vsel %vm67, %v20, 0
  %v78 = vsel %vm67, %v21, 0
  %v81 = vsel %vm67, %v22, 0
  %v84 = vsel %vm67, %v23, 0
  %v87 = vsel %vm67, %v24, 0
  %v90 = vsel %vm67, %v25, 0
  %v93 = vsel %vm67, %v26, 0
  %v96 = vsel %vm67, %v27, 0
  %v99 = vsel %vm67, %v28, 0
  %v102 = vsel %vm67, %v29, 0
  %v105 = vsel %vm67, %v30, 0
  %v108 = vsel %vm67, %v31, 0
  %v111 = vsel %vm67, %v32, 0
  %v114 = vsel %vm67, %v33, 0
  %v117 = vsel %vm67, %v34, 0
  %v120 = vsel %vm67, %v35, 0
  %v123 = vsel %vm67, %v36, 0
  %v126 = vsel %vm67, %v37, 0
  %v129 = vsel %vm67, %v38, 0
  %v132 = vsel %vm67, %v39, 0
  %v135 = vsel %vm67, %v40, 0
  %v138 = vsel %vm67, %v41, 0
  %v141 = vsel %vm67, %v42, 0
  %v144 = vsel %vm67, %v43, 0
  %v147 = vsel %vm67, %v44, 0
  %v150 = vsel %vm67, %v45, 0
  %v153 = vsel %vm67, %v46, 0
  %v156 = vsel %vm67, %v47, 0
  %v159 = vsel %vm67, %v48, 0
  %v162 = vsel %vm67, %v49, 0
  %v165 = vsel %vm67, %v50, 0
  %v168 = vsel %vm67, %v51, 0
  %v171 = vsel %vm67, %v52, 0
  %v174 = vsel %vm67, %v53, 0
  %v177 = vsel %vm67, %v54, 0
  %v180 = vsel %vm67, %v55, 0
  %v183 = vsel %vm67, %v56, 0
  %v186 = vsel %vm67, %v57, 0
  %v189 = vsel %vm67, %v58, 0
  %v192 = vsel %vm67, %v59, 0
  %v195 = vsel %vm67, %v60, 0
  %v198 = vsel %vm67, %v61, 0
  %v201 = vsel %vm67, %v62, 0
  %v204 = vsel %vm67, %v63, 0
  %v207 = vsel %vm67, %v64, 0
  %v210 = vsel %vm67, %v65, 0
  %v213 = vsel %vm67, %v66, 0
  %vm215 = vcmask 1040384
  %v217 = vsel %vm215, %v17, 0
  %219 = vmatprep.subr.mxu0 0.0
  %220 = vmatpush1.msra.mxu0 %v14
  %221 = vmatprep.subr.mxu0 0.0
  %222 = vmatpush1.msra.mxu0 %v15
  %223 = vmatprep.subr.mxu0 0.0
  %224 = vmatpush1.msra.mxu0 %v16
  %225 = vmatprep.subr.mxu0 0.0
  %226 = vmatpush1.msra.mxu0 %v217
  %227 = vmatprep.subr.mxu0 0.0
  %228 = vmatpush1.msra.mxu0 0.0
  %229 = vmatprep.subr.mxu0 0.0
  %230 = vmatpush1.msra.mxu0 0.0
  %231 = vmatprep.subr.mxu0 0.0
  %232 = vmatpush1.msra.mxu0 0.0
  %233 = vmatprep.subr.mxu0 0.0
  %234 = vmatpush1.msra.mxu0 0.0
  %235 = vmatprep.subr.mxu0 0.0
  %236 = vmatpush1.msra.mxu0 0.0
  %237 = vmatprep.subr.mxu0 0.0
  %238 = vmatpush1.msra.mxu0 0.0
  %239 = vmatprep.subr.mxu0 0.0
  %240 = vmatpush1.msra.mxu0 0.0
  %241 = vmatprep.subr.mxu0 0.0
  %242 = vmatpush1.msra.mxu0 0.0
  %243 = vmatprep.subr.mxu0 0.0
  %244 = vmatpush1.msra.mxu0 0.0
  %245 = vmatprep.subr.mxu0 0.0
  %246 = vmatpush1.msra.mxu0 0.0
  %247 = vmatprep.subr.mxu0 0.0
  %248 = vmatpush1.msra.mxu0 0.0
  %249 = vmatprep.subr.mxu0 0.0
  %250 = vmatpush1.msra.mxu0 0.0
  %251 = vmatprep.subr.mxu0 0.0
  %252 = vmatpush1.msra.mxu0 0.0
  %253 = vmatprep.subr.mxu0 0.0
  %254 = vmatpush1.msra.mxu0 0.0
  %255 = vmatprep.subr.mxu0 0.0
  %256 = vmatpush1.msra.mxu0 0.0
  %257 = vmatprep.subr.mxu0 0.0
  %258 = vmatpush1.msra.mxu0 0.0
  %259 = vmatprep.subr.mxu0 0.0
  %260 = vmatpush1.msra.mxu0 0.0
  %261 = vmatprep.subr.mxu0 0.0
  %262 = vmatpush1.msra.mxu0 0.0
  %263 = vmatprep.subr.mxu0 0.0
  %264 = vmatpush1.msra.mxu0 0.0
  %265 = vmatprep.subr.mxu0 0.0
  %266 = vmatpush1.msra.mxu0 0.0
  %267 = vmatprep.subr.mxu0 0.0
  %268 = vmatpush1.msra.mxu0 0.0
  %269 = vmatprep.subr.mxu0 0.0
  %270 = vmatpush1.msra.mxu0 0.0
  %271 = vmatprep.subr.mxu0 0.0
  %272 = vmatpush1.msra.mxu0 0.0
  %273 = vmatprep.subr.mxu0 0.0
  %274 = vmatpush1.msra.mxu0 0.0
  %275 = vmatprep.subr.mxu0 0.0
  %276 = vmatpush1.msra.mxu0 0.0
  %277 = vmatprep.subr.mxu0 0.0
  %278 = vmatpush1.msra.mxu0 0.0
  %279 = vmatprep.subr.mxu0 0.0
  %280 = vmatpush1.msra.mxu0 0.0
  %281 = vmatprep.subr.mxu0 0.0
  %282 = vmatpush1.msra.mxu0 0.0
  %283 = vmatprep.mubr.f32.mxu0 0.0
  %284 = vmatmul.mubr.f32.gmra.mrb[0].mxu0 %v69
  %v285 = vpop.f32.mrb[0].mxu0
  %v286 = vadd.f32 0.0, %v285
  %v287 = vpop.f32.mrb[0].mxu0
  %288 = vmatprep.mubr.f32.mxu0 0.0
  %289 = vmatmul.mubr.f32.gmra.mrb[0].mxu0 %v72
  %v290 = vpop.f32.mrb[0].mxu0
  %v291 = vadd.f32 0.0, %v290
  %v292 = vpop.f32.mrb[0].mxu0
  %293 = vmatprep.mubr.f32.mxu0 0.0
  %294 = vmatmul.mubr.f32.gmra.mrb[0].mxu0 %v75
  %v295 = vpop.f32.mrb[0].mxu0
  %v296 = vadd.f32 0.0, %v295
  %v297 = vpop.f32.mrb[0].mxu0
  %298 = vmatprep.mubr.f32.mxu0 0.0
  %299 = vmatmul.mubr.f32.gmra.mrb[0].mxu0 %v78
  %v300 = vpop.f32.mrb[0].mxu0
  %v301 = vadd.f32 0.0, %v300
  %v302 = vpop.f32.mrb[0].mxu0
  %303 = vmatprep.mubr.f32.mxu0 0.0
  %304 = vmatmul.mubr.f32.gmra.mrb[0].mxu0 %v81
  %v305 = vpop.f32.mrb[0].mxu0
  %v306 = vadd.f32 0.0, %v305
  %v307 = vpop.f32.mrb[0].mxu0
  %308 = vmatprep.mubr.f32.mxu0 0.0
  %309 = vmatmul.mubr.f32.gmra.mrb[0].mxu0 %v84
  %v310 = vpop.f32.mrb[0].mxu0
  %v311 = vadd.f32 0.0, %v310
  %v312 = vpop.f32.mrb[0].mxu0
  %313 = vmatprep.mubr.f32.mxu0 0.0
  %314 = vmatmul.mubr.f32.gmra.mrb[0].mxu0 %v87
  %v315 = vpop.f32.mrb[0].mxu0
  %v316 = vadd.f32 0.0, %v315
  %v317 = vpop.f32.mrb[0].mxu0
  %318 = vmatprep.mubr.f32.mxu0 0.0
  %319 = vmatmul.mubr.f32.gmra.mrb[0].mxu0 %v90
  %v320 = vpop.f32.mrb[0].mxu0
  %v321 = vadd.f32 0.0, %v320
  %v322 = vpop.f32.mrb[0].mxu0
  %323 = vmatprep.mubr.f32.mxu0 0.0
  %324 = vmatmul.mubr.f32.gmra.mrb[0].mxu0 %v93
  %v325 = vpop.f32.mrb[0].mxu0
  %v326 = vadd.f32 0.0, %v325
  %v327 = vpop.f32.mrb[0].mxu0
  %328 = vmatprep.mubr.f32.mxu0 0.0
  %329 = vmatmul.mubr.f32.gmra.mrb[0].mxu0 %v96
  %v330 = vpop.f32.mrb[0].mxu0
  %v331 = vadd.f32 0.0, %v330
  %v332 = vpop.f32.mrb[0].mxu0
  %333 = vmatprep.mubr.f32.mxu0 0.0
  %334 = vmatmul.mubr.f32.gmra.mrb[0].mxu0 %v99
  %v335 = vpop.f32.mrb[0].mxu0
  %v336 = vadd.f32 0.0, %v335
  %v337 = vpop.f32.mrb[0].mxu0
  %338 = vmatprep.mubr.f32.mxu0 0.0
  %339 = vmatmul.mubr.f32.gmra.mrb[0].mxu0 %v102
  %v340 = vpop.f32.mrb[0].mxu0
  %v341 = vadd.f32 0.0, %v340
  %v342 = vpop.f32.mrb[0].mxu0
  %343 = vmatprep.mubr.f32.mxu0 0.0
  %344 = vmatmul.mubr.f32.gmra.mrb[0].mxu0 %v105
  %v345 = vpop.f32.mrb[0].mxu0
  %v346 = vadd.f32 0.0, %v345
  %v347 = vpop.f32.mrb[0].mxu0
  %348 = vmatprep.mubr.f32.mxu0 0.0
  %349 = vmatmul.mubr.f32.gmra.mrb[0].mxu0 %v108
  %v350 = vpop.f32.mrb[0].mxu0
  %v351 = vadd.f32 0.0, %v350
  %v352 = vpop.f32.mrb[0].mxu0
  %353 = vmatprep.mubr.f32.mxu0 0.0
  %354 = vmatmul.mubr.f32.gmra.mrb[0].mxu0 %v111
  %v355 = vpop.f32.mrb[0].mxu0
  %v356 = vadd.f32 0.0, %v355
  %v357 = vpop.f32.mrb[0].mxu0
  %358 = vmatprep.mubr.f32.mxu0 0.0
  %359 = vmatmul.mubr.f32.gmra.mrb[0].mxu0 %v114
  %v360 = vpop.f32.mrb[0].mxu0
  %v361 = vadd.f32 0.0, %v360
  %v362 = vpop.f32.mrb[0].mxu0
  %363 = vmatprep.mubr.f32.mxu0 0.0
  %364 = vmatmul.mubr.f32.gmra.mrb[0].mxu0 %v117
  %v365 = vpop.f32.mrb[0].mxu0
  %v366 = vadd.f32 0.0, %v365
  %v367 = vpop.f32.mrb[0].mxu0
  %368 = vmatprep.mubr.f32.mxu0 0.0
  %369 = vmatmul.mubr.f32.gmra.mrb[0].mxu0 %v120
  %v370 = vpop.f32.mrb[0].mxu0
  %v371 = vadd.f32 0.0, %v370
  %v372 = vpop.f32.mrb[0].mxu0
  %373 = vmatprep.mubr.f32.mxu0 0.0
  %374 = vmatmul.mubr.f32.gmra.mrb[0].mxu0 %v123
  %v375 = vpop.f32.mrb[0].mxu0
  %v376 = vadd.f32 0.0, %v375
  %v377 = vpop.f32.mrb[0].mxu0
  %378 = vmatprep.mubr.f32.mxu0 0.0
  %379 = vmatmul.mubr.f32.gmra.mrb[0].mxu0 %v126
  %v380 = vpop.f32.mrb[0].mxu0
  %v381 = vadd.f32 0.0, %v380
  %v382 = vpop.f32.mrb[0].mxu0
  %383 = vmatprep.mubr.f32.mxu0 0.0
  %384 = vmatmul.mubr.f32.gmra.mrb[0].mxu0 %v129
  %v385 = vpop.f32.mrb[0].mxu0
  %v386 = vadd.f32 0.0, %v385
  %v387 = vpop.f32.mrb[0].mxu0
  %388 = vmatprep.mubr.f32.mxu0 0.0
  %389 = vmatmul.mubr.f32.gmra.mrb[0].mxu0 %v132
  %v390 = vpop.f32.mrb[0].mxu0
  %v391 = vadd.f32 0.0, %v390
  %v392 = vpop.f32.mrb[0].mxu0
  %393 = vmatprep.mubr.f32.mxu0 0.0
  %394 = vmatmul.mubr.f32.gmra.mrb[0].mxu0 %v135
  %v395 = vpop.f32.mrb[0].mxu0
  %v396 = vadd.f32 0.0, %v395
  %v397 = vpop.f32.mrb[0].mxu0
  %398 = vmatprep.mubr.f32.mxu0 0.0
  %399 = vmatmul.mubr.f32.gmra.mrb[0].mxu0 %v138
  %v400 = vpop.f32.mrb[0].mxu0
  %v401 = vadd.f32 0.0, %v400
  %v402 = vpop.f32.mrb[0].mxu0
  %403 = vmatprep.mubr.f32.mxu0 0.0
  %404 = vmatmul.mubr.f32.gmra.mrb[0].mxu0 %v141
  %v405 = vpop.f32.mrb[0].mxu0
  %v406 = vadd.f32 0.0, %v405
  %v407 = vpop.f32.mrb[0].mxu0
  %408 = vmatprep.mubr.f32.mxu0 0.0
  %409 = vmatmul.mubr.f32.gmra.mrb[0].mxu0 %v144
  %v410 = vpop.f32.mrb[0].mxu0
  %v411 = vadd.f32 0.0, %v410
  %v412 = vpop.f32.mrb[0].mxu0
  %413 = vmatprep.mubr.f32.mxu0 0.0
  %414 = vmatmul.mubr.f32.gmra.mrb[0].mxu0 %v147
  %v415 = vpop.f32.mrb[0].mxu0
  %v416 = vadd.f32 0.0, %v415
  %v417 = vpop.f32.mrb[0].mxu0
  %418 = vmatprep.mubr.f32.mxu0 0.0
  %419 = vmatmul.mubr.f32.gmra.mrb[0].mxu0 %v150
  %v420 = vpop.f32.mrb[0].mxu0
  %v421 = vadd.f32 0.0, %v420
  %v422 = vpop.f32.mrb[0].mxu0
  %423 = vmatprep.mubr.f32.mxu0 0.0
  %424 = vmatmul.mubr.f32.gmra.mrb[0].mxu0 %v153
  %v425 = vpop.f32.mrb[0].mxu0
  %v426 = vadd.f32 0.0, %v425
  %v427 = vpop.f32.mrb[0].mxu0
  %428 = vmatprep.mubr.f32.mxu0 0.0
  %429 = vmatmul.mubr.f32.gmra.mrb[0].mxu0 %v156
  %v430 = vpop.f32.mrb[0].mxu0
  %v431 = vadd.f32 0.0, %v430
  %v432 = vpop.f32.mrb[0].mxu0
  %433 = vmatprep.mubr.f32.mxu0 0.0
  %434 = vmatmul.mubr.f32.gmra.mrb[0].mxu0 %v159
  %v435 = vpop.f32.mrb[0].mxu0
  %v436 = vadd.f32 0.0, %v435
  %v437 = vpop.f32.mrb[0].mxu0
  %438 = vmatprep.mubr.f32.mxu0 0.0
  %439 = vmatmul.mubr.f32.gmra.mrb[0].mxu0 %v162
  %v440 = vpop.f32.mrb[0].mxu0
  %v441 = vadd.f32 0.0, %v440
  %v442 = vpop.f32.mrb[0].mxu0
  %443 = vmatprep.mubr.f32.mxu0 0.0
  %444 = vmatmul.mubr.f32.gmra.mrb[0].mxu0 %v165
  %v445 = vpop.f32.mrb[0].mxu0
  %v446 = vadd.f32 0.0, %v445
  %v447 = vpop.f32.mrb[0].mxu0
  %448 = vmatprep.mubr.f32.mxu0 0.0
  %449 = vmatmul.mubr.f32.gmra.mrb[0].mxu0 %v168
  %v450 = vpop.f32.mrb[0].mxu0
  %v451 = vadd.f32 0.0, %v450
  %v452 = vpop.f32.mrb[0].mxu0
  %453 = vmatprep.mubr.f32.mxu0 0.0
  %454 = vmatmul.mubr.f32.gmra.mrb[0].mxu0 %v171
  %v455 = vpop.f32.mrb[0].mxu0
  %v456 = vadd.f32 0.0, %v455
  %v457 = vpop.f32.mrb[0].mxu0
  %458 = vmatprep.mubr.f32.mxu0 0.0
  %459 = vmatmul.mubr.f32.gmra.mrb[0].mxu0 %v174
  %v460 = vpop.f32.mrb[0].mxu0
  %v461 = vadd.f32 0.0, %v460
  %v462 = vpop.f32.mrb[0].mxu0
  %463 = vmatprep.mubr.f32.mxu0 0.0
  %464 = vmatmul.mubr.f32.gmra.mrb[0].mxu0 %v177
  %v465 = vpop.f32.mrb[0].mxu0
  %v466 = vadd.f32 0.0, %v465
  %v467 = vpop.f32.mrb[0].mxu0
  %468 = vmatprep.mubr.f32.mxu0 0.0
  %469 = vmatmul.mubr.f32.gmra.mrb[0].mxu0 %v180
  %v470 = vpop.f32.mrb[0].mxu0
  %v471 = vadd.f32 0.0, %v470
  %v472 = vpop.f32.mrb[0].mxu0
  %473 = vmatprep.mubr.f32.mxu0 0.0
  %474 = vmatmul.mubr.f32.gmra.mrb[0].mxu0 %v183
  %v475 = vpop.f32.mrb[0].mxu0
  %v476 = vadd.f32 0.0, %v475
  %v477 = vpop.f32.mrb[0].mxu0
  %478 = vmatprep.mubr.f32.mxu0 0.0
  %479 = vmatmul.mubr.f32.gmra.mrb[0].mxu0 %v186
  %v480 = vpop.f32.mrb[0].mxu0
  %v481 = vadd.f32 0.0, %v480
  %v482 = vpop.f32.mrb[0].mxu0
  %483 = vmatprep.mubr.f32.mxu0 0.0
  %484 = vmatmul.mubr.f32.gmra.mrb[0].mxu0 %v189
  %v485 = vpop.f32.mrb[0].mxu0
  %v486 = vadd.f32 0.0, %v485
  %v487 = vpop.f32.mrb[0].mxu0
  %488 = vmatprep.mubr.f32.mxu0 0.0
  %489 = vmatmul.mubr.f32.gmra.mrb[0].mxu0 %v192
  %v490 = vpop.f32.mrb[0].mxu0
  %v491 = vadd.f32 0.0, %v490
  %v492 = vpop.f32.mrb[0].mxu0
  %493 = vmatprep.mubr.f32.mxu0 0.0
  %494 = vmatmul.mubr.f32.gmra.mrb[0].mxu0 %v195
  %v495 = vpop.f32.mrb[0].mxu0
  %v496 = vadd.f32 0.0, %v495
  %v497 = vpop.f32.mrb[0].mxu0
  %498 = vmatprep.mubr.f32.mxu0 0.0
  %499 = vmatmul.mubr.f32.gmra.mrb[0].mxu0 %v198
  %v500 = vpop.f32.mrb[0].mxu0
  %v501 = vadd.f32 0.0, %v500
  %v502 = vpop.f32.mrb[0].mxu0
  %503 = vmatprep.mubr.f32.mxu0 0.0
  %504 = vmatmul.mubr.f32.gmra.mrb[0].mxu0 %v201
  %v505 = vpop.f32.mrb[0].mxu0
  %v506 = vadd.f32 0.0, %v505
  %v507 = vpop.f32.mrb[0].mxu0
  %508 = vmatprep.mubr.f32.mxu0 0.0
  %509 = vmatmul.mubr.f32.gmra.mrb[0].mxu0 %v204
  %v510 = vpop.f32.mrb[0].mxu0
  %v511 = vadd.f32 0.0, %v510
  %v512 = vpop.f32.mrb[0].mxu0
  %513 = vmatprep.mubr.f32.mxu0 0.0
  %514 = vmatmul.mubr.f32.gmra.mrb[0].mxu0 %v207
  %v515 = vpop.f32.mrb[0].mxu0
  %v516 = vadd.f32 0.0, %v515
  %v517 = vpop.f32.mrb[0].mxu0
  %518 = vmatprep.mubr.f32.mxu0 0.0
  %519 = vmatmul.mubr.f32.gmra.mrb[0].mxu0 %v210
  %v520 = vpop.f32.mrb[0].mxu0
  %v521 = vadd.f32 0.0, %v520
  %v522 = vpop.f32.mrb[0].mxu0
  %523 = vmatprep.mubr.f32.mxu0 0.0
  %524 = vmatmul.mubr.f32.gmra.mrb[0].mxu0 %v213
  %v525 = vpop.f32.mrb[0].mxu0
  %v526 = vadd.f32 0.0, %v525
  %v527 = vpop.f32.mrb[0].mxu0
  %528 = vdwg.mxu0
  %s529 = scalar_lea.vmem %s0, 392
  %v530 = vld [vmem:[%s529] sm:$0xff]
  %v531 = vld [vmem:[%s529 + $0x8] sm:$0xff]
  %v532 = vld [vmem:[%s529 + $0x10] sm:$0xff]
  %v533 = vld [vmem:[%s529 + $0x18] sm:$0xff]
  %v534 = vld [vmem:[%s529 + $0x20] sm:$0xff]
  %v535 = vld [vmem:[%s529 + $0x28] sm:$0xff]
  %v536 = vld [vmem:[%s529 + $0x30] sm:$0xff]
  %v537 = vld [vmem:[%s529 + $0x38] sm:$0xff]
  %v538 = vld [vmem:[%s529 + $0x40] sm:$0xff]
  %v539 = vld [vmem:[%s529 + $0x48] sm:$0xff]
  %v540 = vld [vmem:[%s529 + $0x50] sm:$0xff]
  %v541 = vld [vmem:[%s529 + $0x58] sm:$0xff]
  %v542 = vld [vmem:[%s529 + $0x60] sm:$0xff]
  %v543 = vld [vmem:[%s529 + $0x68] sm:$0xff]
  %v544 = vld [vmem:[%s529 + $0x70] sm:$0xff]
  %v545 = vld [vmem:[%s529 + $0x78] sm:$0xff]
  %v546 = vld [vmem:[%s529 + $0x80] sm:$0xff]
  %v547 = vld [vmem:[%s529 + $0x88] sm:$0xff]
  %v548 = vld [vmem:[%s529 + $0x90] sm:$0xff]
  %v549 = vld [vmem:[%s529 + $0x98] sm:$0xff]
  %v550 = vld [vmem:[%s529 + $0xa0] sm:$0xff]
  %v551 = vld [vmem:[%s529 + $0xa8] sm:$0xff]
  %v552 = vld [vmem:[%s529 + $0xb0] sm:$0xff]
  %v553 = vld [vmem:[%s529 + $0xb8] sm:$0xff]
  %v554 = vld [vmem:[%s529 + $0xc0] sm:$0xff]
  %v555 = vld [vmem:[%s529 + $0xc8] sm:$0xff]
  %v556 = vld [vmem:[%s529 + $0xd0] sm:$0xff]
  %v557 = vld [vmem:[%s529 + $0xd8] sm:$0xff]
  %v558 = vld [vmem:[%s529 + $0xe0] sm:$0xff]
  %v559 = vld [vmem:[%s529 + $0xe8] sm:$0xff]
  %v560 = vld [vmem:[%s529 + $0xf0] sm:$0xff]
  %v561 = vld [vmem:[%s529 + $0xf8] sm:$0xff]
  %v562 = vld [vmem:[%s529 + $0x100] sm:$0xff]
  %v563 = vld [vmem:[%s529 + $0x108] sm:$0xff]
  %v564 = vld [vmem:[%s529 + $0x110] sm:$0xff]
  %v565 = vld [vmem:[%s529 + $0x118] sm:$0xff]
  %v566 = vld [vmem:[%s529 + $0x120] sm:$0xff]
  %v567 = vld [vmem:[%s529 + $0x128] sm:$0xff]
  %v568 = vld [vmem:[%s529 + $0x130] sm:$0xff]
  %v569 = vld [vmem:[%s529 + $0x138] sm:$0xff]
  %v570 = vld [vmem:[%s529 + $0x140] sm:$0xff]
  %v571 = vld [vmem:[%s529 + $0x148] sm:$0xff]
  %v572 = vld [vmem:[%s529 + $0x150] sm:$0xff]
  %v573 = vld [vmem:[%s529 + $0x158] sm:$0xff]
  %v574 = vld [vmem:[%s529 + $0x160] sm:$0xff]
  %v575 = vld [vmem:[%s529 + $0x168] sm:$0xff]
  %v576 = vld [vmem:[%s529 + $0x170] sm:$0xff]
  %v577 = vld [vmem:[%s529 + $0x178] sm:$0xff]
  %v578 = vld [vmem:[%s529 + $0x180] sm:$0xff]
  %v580 = vsel %vm67, %v530, 0
  %v583 = vsel %vm67, %v531, 0
  %v586 = vsel %vm67, %v532, 0
  %v589 = vsel %vm67, %v533, 0
  %v592 = vsel %vm67, %v534, 0
  %v595 = vsel %vm67, %v535, 0
  %v598 = vsel %vm67, %v536, 0
  %v601 = vsel %vm67, %v537, 0
  %v604 = vsel %vm67, %v538, 0
  %v607 = vsel %vm67, %v539, 0
  %v610 = vsel %vm67, %v540, 0
  %v613 = vsel %vm67, %v541, 0
  %v616 = vsel %vm67, %v542, 0
  %v619 = vsel %vm67, %v543, 0
  %v622 = vsel %vm67, %v544, 0
  %v625 = vsel %vm67, %v545, 0
  %v628 = vsel %vm67, %v546, 0
  %v631 = vsel %vm67, %v547, 0
  %v634 = vsel %vm67, %v548, 0
  %v637 = vsel %vm67, %v549, 0
  %v640 = vsel %vm67, %v550, 0
  %v643 = vsel %vm67, %v551, 0
  %v646 = vsel %vm67, %v552, 0
  %v649 = vsel %vm67, %v553, 0
  %v652 = vsel %vm67, %v554, 0
  %v655 = vsel %vm67, %v555, 0
  %v658 = vsel %vm67, %v556, 0
  %v661 = vsel %vm67, %v557, 0
  %v664 = vsel %vm67, %v558, 0
  %v667 = vsel %vm67, %v559, 0
  %v670 = vsel %vm67, %v560, 0
  %v673 = vsel %vm67, %v561, 0
  %v676 = vsel %vm67, %v562, 0
  %v679 = vsel %vm67, %v563, 0
  %v682 = vsel %vm67, %v564, 0
  %v685 = vsel %vm67, %v565, 0
  %v688 = vsel %vm67, %v566, 0
  %v691 = vsel %vm67, %v567, 0
  %v694 = vsel %vm67, %v568, 0
  %v697 = vsel %vm67, %v569, 0
  %v700 = vsel %vm67, %v570, 0
  %v703 = vsel %vm67, %v571, 0
  %v706 = vsel %vm67, %v572, 0
  %v709 = vsel %vm67, %v573, 0
  %v712 = vsel %vm67, %v574, 0
  %v715 = vsel %vm67, %v575, 0
  %v718 = vsel %vm67, %v576, 0
  %v721 = vsel %vm67, %v577, 0
  %v724 = vsel %vm67, %v578, 0
  %726 = vmatprep.subr.mxu0 0.0
  %727 = vmatpush1.msra.mxu0 %v14
  %728 = vmatprep.subr.mxu0 0.0
  %729 = vmatpush1.msra.mxu0 %v15
  %730 = vmatprep.subr.mxu0 0.0
  %731 = vmatpush1.msra.mxu0 %v16
  %732 = vmatprep.subr.mxu0 0.0
  %733 = vmatpush1.msra.mxu0 %v217
  %734 = vmatprep.subr.mxu0 0.0
  %735 = vmatpush1.msra.mxu0 0.0
  %736 = vmatprep.subr.mxu0 0.0
  %737 = vmatpush1.msra.mxu0 0.0
  %738 = vmatprep.subr.mxu0 0.0
  %739 = vmatpush1.msra.mxu0 0.0
  %740 = vmatprep.subr.mxu0 0.0
  %741 = vmatpush1.msra.mxu0 0.0
  %742 = vmatprep.subr.mxu0 0.0
  %743 = vmatpush1.msra.mxu0 0.0
  %744 = vmatprep.subr.mxu0 0.0
  %745 = vmatpush1.msra.mxu0 0.0
  %746 = vmatprep.subr.mxu0 0.0
  %747 = vmatpush1.msra.mxu0 0.0
  %748 = vmatprep.subr.mxu0 0.0
  %749 = vmatpush1.msra.mxu0 0.0
  %750 = vmatprep.subr.mxu0 0.0
  %751 = vmatpush1.msra.mxu0 0.0
  %752 = vmatprep.subr.mxu0 0.0
  %753 = vmatpush1.msra.mxu0 0.0
  %754 = vmatprep.subr.mxu0 0.0
  %755 = vmatpush1.msra.mxu0 0.0
  %756 = vmatprep.subr.mxu0 0.0
  %757 = vmatpush1.msra.mxu0 0.0
  %758 = vmatprep.subr.mxu0 0.0
  %759 = vmatpush1.msra.mxu0 0.0
  %760 = vmatprep.subr.mxu0 0.0
  %761 = vmatpush1.msra.mxu0 0.0
  %762 = vmatprep.subr.mxu0 0.0
  %763 = vmatpush1.msra.mxu0 0.0
  %764 = vmatprep.subr.mxu0 0.0
  %765 = vmatpush1.msra.mxu0 0.0
  %766 = vmatprep.subr.mxu0 0.0
  %767 = vmatpush1.msra.mxu0 0.0
  %768 = vmatprep.subr.mxu0 0.0
  %769 = vmatpush1.msra.mxu0 0.0
  %770 = vmatprep.subr.mxu0 0.0
  %771 = vmatpush1.msra.mxu0 0.0
  %772 = vmatprep.subr.mxu0 0.0
  %773 = vmatpush1.msra.mxu0 0.0
  %774 = vmatprep.subr.mxu0 0.0
  %775 = vmatpush1.msra.mxu0 0.0
  %776 = vmatprep.subr.mxu0 0.0
  %777 = vmatpush1.msra.mxu0 0.0
  %778 = vmatprep.subr.mxu0 0.0
  %779 = vmatpush1.msra.mxu0 0.0
  %780 = vmatprep.subr.mxu0 0.0
  %781 = vmatpush1.msra.mxu0 0.0
  %782 = vmatprep.subr.mxu0 0.0
  %783 = vmatpush1.msra.mxu0 0.0
  %784 = vmatprep.subr.mxu0 0.0
  %785 = vmatpush1.msra.mxu0 0.0
  %786 = vmatprep.subr.mxu0 0.0
  %787 = vmatpush1.msra.mxu0 0.0
  %788 = vmatprep.subr.mxu0 0.0
  %789 = vmatpush1.msra.mxu0 0.0
  %790 = vmatprep.mubr.f32.mxu0 0.0
  %791 = vmatmul.mubr.f32.gmra.mrb[0].mxu0 %v580
  %v792 = vpop.f32.mrb[0].mxu0
  %v793 = vadd.f32 0.0, %v792
  %v794 = vpop.f32.mrb[0].mxu0
  %795 = vmatprep.mubr.f32.mxu0 0.0
  %796 = vmatmul.mubr.f32.gmra.mrb[0].mxu0 %v583
  %v797 = vpop.f32.mrb[0].mxu0
  %v798 = vadd.f32 0.0, %v797
  %v799 = vpop.f32.mrb[0].mxu0
  %800 = vmatprep.mubr.f32.mxu0 0.0
  %801 = vmatmul.mubr.f32.gmra.mrb[0].mxu0 %v586
  %v802 = vpop.f32.mrb[0].mxu0
  %v803 = vadd.f32 0.0, %v802
  %v804 = vpop.f32.mrb[0].mxu0
  %805 = vmatprep.mubr.f32.mxu0 0.0
  %806 = vmatmul.mubr.f32.gmra.mrb[0].mxu0 %v589
  %v807 = vpop.f32.mrb[0].mxu0
  %v808 = vadd.f32 0.0, %v807
  %v809 = vpop.f32.mrb[0].mxu0
  %810 = vmatprep.mubr.f32.mxu0 0.0
  %811 = vmatmul.mubr.f32.gmra.mrb[0].mxu0 %v592
  %v812 = vpop.f32.mrb[0].mxu0
  %v813 = vadd.f32 0.0, %v812
  %v814 = vpop.f32.mrb[0].mxu0
  %815 = vmatprep.mubr.f32.mxu0 0.0
  %816 = vmatmul.mubr.f32.gmra.mrb[0].mxu0 %v595
  %v817 = vpop.f32.mrb[0].mxu0
  %v818 = vadd.f32 0.0, %v817
  %v819 = vpop.f32.mrb[0].mxu0
  %820 = vmatprep.mubr.f32.mxu0 0.0
  %821 = vmatmul.mubr.f32.gmra.mrb[0].mxu0 %v598
  %v822 = vpop.f32.mrb[0].mxu0
  %v823 = vadd.f32 0.0, %v822
  %v824 = vpop.f32.mrb[0].mxu0
  %825 = vmatprep.mubr.f32.mxu0 0.0
  %826 = vmatmul.mubr.f32.gmra.mrb[0].mxu0 %v601
  %v827 = vpop.f32.mrb[0].mxu0
  %v828 = vadd.f32 0.0, %v827
  %v829 = vpop.f32.mrb[0].mxu0
  %830 = vmatprep.mubr.f32.mxu0 0.0
  %831 = vmatmul.mubr.f32.gmra.mrb[0].mxu0 %v604
  %v832 = vpop.f32.mrb[0].mxu0
  %v833 = vadd.f32 0.0, %v832
  %v834 = vpop.f32.mrb[0].mxu0
  %835 = vmatprep.mubr.f32.mxu0 0.0
  %836 = vmatmul.mubr.f32.gmra.mrb[0].mxu0 %v607
  %v837 = vpop.f32.mrb[0].mxu0
  %v838 = vadd.f32 0.0, %v837
  %v839 = vpop.f32.mrb[0].mxu0
  %840 = vmatprep.mubr.f32.mxu0 0.0
  %841 = vmatmul.mubr.f32.gmra.mrb[0].mxu0 %v610
  %v842 = vpop.f32.mrb[0].mxu0
  %v843 = vadd.f32 0.0, %v842
  %v844 = vpop.f32.mrb[0].mxu0
  %845 = vmatprep.mubr.f32.mxu0 0.0
  %846 = vmatmul.mubr.f32.gmra.mrb[0].mxu0 %v613
  %v847 = vpop.f32.mrb[0].mxu0
  %v848 = vadd.f32 0.0, %v847
  %v849 = vpop.f32.mrb[0].mxu0
  %850 = vmatprep.mubr.f32.mxu0 0.0
  %851 = vmatmul.mubr.f32.gmra.mrb[0].mxu0 %v616
  %v852 = vpop.f32.mrb[0].mxu0
  %v853 = vadd.f32 0.0, %v852
  %v854 = vpop.f32.mrb[0].mxu0
  %855 = vmatprep.mubr.f32.mxu0 0.0
  %856 = vmatmul.mubr.f32.gmra.mrb[0].mxu0 %v619
  %v857 = vpop.f32.mrb[0].mxu0
  %v858 = vadd.f32 0.0, %v857
  %v859 = vpop.f32.mrb[0].mxu0
  %860 = vmatprep.mubr.f32.mxu0 0.0
  %861 = vmatmul.mubr.f32.gmra.mrb[0].mxu0 %v622
  %v862 = vpop.f32.mrb[0].mxu0
  %v863 = vadd.f32 0.0, %v862
  %v864 = vpop.f32.mrb[0].mxu0
  %865 = vmatprep.mubr.f32.mxu0 0.0
  %866 = vmatmul.mubr.f32.gmra.mrb[0].mxu0 %v625
  %v867 = vpop.f32.mrb[0].mxu0
  %v868 = vadd.f32 0.0, %v867
  %v869 = vpop.f32.mrb[0].mxu0
  %870 = vmatprep.mubr.f32.mxu0 0.0
  %871 = vmatmul.mubr.f32.gmra.mrb[0].mxu0 %v628
  %v872 = vpop.f32.mrb[0].mxu0
  %v873 = vadd.f32 0.0, %v872
  %v874 = vpop.f32.mrb[0].mxu0
  %875 = vmatprep.mubr.f32.mxu0 0.0
  %876 = vmatmul.mubr.f32.gmra.mrb[0].mxu0 %v631
  %v877 = vpop.f32.mrb[0].mxu0
  %v878 = vadd.f32 0.0, %v877
  %v879 = vpop.f32.mrb[0].mxu0
  %880 = vmatprep.mubr.f32.mxu0 0.0
  %881 = vmatmul.mubr.f32.gmra.mrb[0].mxu0 %v634
  %v882 = vpop.f32.mrb[0].mxu0
  %v883 = vadd.f32 0.0, %v882
  %v884 = vpop.f32.mrb[0].mxu0
  %885 = vmatprep.mubr.f32.mxu0 0.0
  %886 = vmatmul.mubr.f32.gmra.mrb[0].mxu0 %v637
  %v887 = vpop.f32.mrb[0].mxu0
  %v888 = vadd.f32 0.0, %v887
  %v889 = vpop.f32.mrb[0].mxu0
  %890 = vmatprep.mubr.f32.mxu0 0.0
  %891 = vmatmul.mubr.f32.gmra.mrb[0].mxu0 %v640
  %v892 = vpop.f32.mrb[0].mxu0
  %v893 = vadd.f32 0.0, %v892
  %v894 = vpop.f32.mrb[0].mxu0
  %895 = vmatprep.mubr.f32.mxu0 0.0
  %896 = vmatmul.mubr.f32.gmra.mrb[0].mxu0 %v643
  %v897 = vpop.f32.mrb[0].mxu0
  %v898 = vadd.f32 0.0, %v897
  %v899 = vpop.f32.mrb[0].mxu0
  %900 = vmatprep.mubr.f32.mxu0 0.0
  %901 = vmatmul.mubr.f32.gmra.mrb[0].mxu0 %v646
  %v902 = vpop.f32.mrb[0].mxu0
  %v903 = vadd.f32 0.0, %v902
  %v904 = vpop.f32.mrb[0].mxu0
  %905 = vmatprep.mubr.f32.mxu0 0.0
  %906 = vmatmul.mubr.f32.gmra.mrb[0].mxu0 %v649
  %v907 = vpop.f32.mrb[0].mxu0
  %v908 = vadd.f32 0.0, %v907
  %v909 = vpop.f32.mrb[0].mxu0
  %910 = vmatprep.mubr.f32.mxu0 0.0
  %911 = vmatmul.mubr.f32.gmra.mrb[0].mxu0 %v652
  %v912 = vpop.f32.mrb[0].mxu0
  %v913 = vadd.f32 0.0, %v912
  %v914 = vpop.f32.mrb[0].mxu0
  %915 = vmatprep.mubr.f32.mxu0 0.0
  %916 = vmatmul.mubr.f32.gmra.mrb[0].mxu0 %v655
  %v917 = vpop.f32.mrb[0].mxu0
  %v918 = vadd.f32 0.0, %v917
  %v919 = vpop.f32.mrb[0].mxu0
  %920 = vmatprep.mubr.f32.mxu0 0.0
  %921 = vmatmul.mubr.f32.gmra.mrb[0].mxu0 %v658
  %v922 = vpop.f32.mrb[0].mxu0
  %v923 = vadd.f32 0.0, %v922
  %v924 = vpop.f32.mrb[0].mxu0
  %925 = vmatprep.mubr.f32.mxu0 0.0
  %926 = vmatmul.mubr.f32.gmra.mrb[0].mxu0 %v661
  %v927 = vpop.f32.mrb[0].mxu0
  %v928 = vadd.f32 0.0, %v927
  %v929 = vpop.f32.mrb[0].mxu0
  %930 = vmatprep.mubr.f32.mxu0 0.0
  %931 = vmatmul.mubr.f32.gmra.mrb[0].mxu0 %v664
  %v932 = vpop.f32.mrb[0].mxu0
  %v933 = vadd.f32 0.0, %v932
  %v934 = vpop.f32.mrb[0].mxu0
  %935 = vmatprep.mubr.f32.mxu0 0.0
  %936 = vmatmul.mubr.f32.gmra.mrb[0].mxu0 %v667
  %v937 = vpop.f32.mrb[0].mxu0
  %v938 = vadd.f32 0.0, %v937
  %v939 = vpop.f32.mrb[0].mxu0
  %940 = vmatprep.mubr.f32.mxu0 0.0
  %941 = vmatmul.mubr.f32.gmra.mrb[0].mxu0 %v670
  %v942 = vpop.f32.mrb[0].mxu0
  %v943 = vadd.f32 0.0, %v942
  %v944 = vpop.f32.mrb[0].mxu0
  %945 = vmatprep.mubr.f32.mxu0 0.0
  %946 = vmatmul.mubr.f32.gmra.mrb[0].mxu0 %v673
  %v947 = vpop.f32.mrb[0].mxu0
  %v948 = vadd.f32 0.0, %v947
  %v949 = vpop.f32.mrb[0].mxu0
  %950 = vmatprep.mubr.f32.mxu0 0.0
  %951 = vmatmul.mubr.f32.gmra.mrb[0].mxu0 %v676
  %v952 = vpop.f32.mrb[0].mxu0
  %v953 = vadd.f32 0.0, %v952
  %v954 = vpop.f32.mrb[0].mxu0
  %955 = vmatprep.mubr.f32.mxu0 0.0
  %956 = vmatmul.mubr.f32.gmra.mrb[0].mxu0 %v679
  %v957 = vpop.f32.mrb[0].mxu0
  %v958 = vadd.f32 0.0, %v957
  %v959 = vpop.f32.mrb[0].mxu0
  %960 = vmatprep.mubr.f32.mxu0 0.0
  %961 = vmatmul.mubr.f32.gmra.mrb[0].mxu0 %v682
  %v962 = vpop.f32.mrb[0].mxu0
  %v963 = vadd.f32 0.0, %v962
  %v964 = vpop.f32.mrb[0].mxu0
  %965 = vmatprep.mubr.f32.mxu0 0.0
  %966 = vmatmul.mubr.f32.gmra.mrb[0].mxu0 %v685
  %v967 = vpop.f32.mrb[0].mxu0
  %v968 = vadd.f32 0.0, %v967
  %v969 = vpop.f32.mrb[0].mxu0
  %970 = vmatprep.mubr.f32.mxu0 0.0
  %971 = vmatmul.mubr.f32.gmra.mrb[0].mxu0 %v688
  %v972 = vpop.f32.mrb[0].mxu0
  %v973 = vadd.f32 0.0, %v972
  %v974 = vpop.f32.mrb[0].mxu0
  %975 = vmatprep.mubr.f32.mxu0 0.0
  %976 = vmatmul.mubr.f32.gmra.mrb[0].mxu0 %v691
  %v977 = vpop.f32.mrb[0].mxu0
  %v978 = vadd.f32 0.0, %v977
  %v979 = vpop.f32.mrb[0].mxu0
  %980 = vmatprep.mubr.f32.mxu0 0.0
  %981 = vmatmul.mubr.f32.gmra.mrb[0].mxu0 %v694
  %v982 = vpop.f32.mrb[0].mxu0
  %v983 = vadd.f32 0.0, %v982
  %v984 = vpop.f32.mrb[0].mxu0
  %985 = vmatprep.mubr.f32.mxu0 0.0
  %986 = vmatmul.mubr.f32.gmra.mrb[0].mxu0 %v697
  %v987 = vpop.f32.mrb[0].mxu0
  %v988 = vadd.f32 0.0, %v987
  %v989 = vpop.f32.mrb[0].mxu0
  %990 = vmatprep.mubr.f32.mxu0 0.0
  %991 = vmatmul.mubr.f32.gmra.mrb[0].mxu0 %v700
  %v992 = vpop.f32.mrb[0].mxu0
  %v993 = vadd.f32 0.0, %v992
  %v994 = vpop.f32.mrb[0].mxu0
  %995 = vmatprep.mubr.f32.mxu0 0.0
  %996 = vmatmul.mubr.f32.gmra.mrb[0].mxu0 %v703
  %v997 = vpop.f32.mrb[0].mxu0
  %v998 = vadd.f32 0.0, %v997
  %v999 = vpop.f32.mrb[0].mxu0
  %1000 = vmatprep.mubr.f32.mxu0 0.0
  %1001 = vmatmul.mubr.f32.gmra.mrb[0].mxu0 %v706
  %v1002 = vpop.f32.mrb[0].mxu0
  %v1003 = vadd.f32 0.0, %v1002
  %v1004 = vpop.f32.mrb[0].mxu0
  %1005 = vmatprep.mubr.f32.mxu0 0.0
  %1006 = vmatmul.mubr.f32.gmra.mrb[0].mxu0 %v709
  %v1007 = vpop.f32.mrb[0].mxu0
  %v1008 = vadd.f32 0.0, %v1007
  %v1009 = vpop.f32.mrb[0].mxu0
  %1010 = vmatprep.mubr.f32.mxu0 0.0
  %1011 = vmatmul.mubr.f32.gmra.mrb[0].mxu0 %v712
  %v1012 = vpop.f32.mrb[0].mxu0
  %v1013 = vadd.f32 0.0, %v1012
  %v1014 = vpop.f32.mrb[0].mxu0
  %1015 = vmatprep.mubr.f32.mxu0 0.0
  %1016 = vmatmul.mubr.f32.gmra.mrb[0].mxu0 %v715
  %v1017 = vpop.f32.mrb[0].mxu0
  %v1018 = vadd.f32 0.0, %v1017
  %v1019 = vpop.f32.mrb[0].mxu0
  %1020 = vmatprep.mubr.f32.mxu0 0.0
  %1021 = vmatmul.mubr.f32.gmra.mrb[0].mxu0 %v718
  %v1022 = vpop.f32.mrb[0].mxu0
  %v1023 = vadd.f32 0.0, %v1022
  %v1024 = vpop.f32.mrb[0].mxu0
  %1025 = vmatprep.mubr.f32.mxu0 0.0
  %1026 = vmatmul.mubr.f32.gmra.mrb[0].mxu0 %v721
  %v1027 = vpop.f32.mrb[0].mxu0
  %v1028 = vadd.f32 0.0, %v1027
  %v1029 = vpop.f32.mrb[0].mxu0
  %1030 = vmatprep.mubr.f32.mxu0 0.0
  %1031 = vmatmul.mubr.f32.gmra.mrb[0].mxu0 %v724
  %v1032 = vpop.f32.mrb[0].mxu0
  %v1033 = vadd.f32 0.0, %v1032
  %v1034 = vpop.f32.mrb[0].mxu0
  %1035 = vdwg.mxu0
  %s1036 = scalar_lea.vmem %s0, 784
  %v1037 = vld [vmem:[%s1036] sm:$0xff]
  %v1038 = vld [vmem:[%s1036 + $0x8] sm:$0xff]
  %v1039 = vld [vmem:[%s1036 + $0x10] sm:$0xff]
  %v1040 = vld [vmem:[%s1036 + $0x18] sm:$0xff]
  %v1041 = vld [vmem:[%s1036 + $0x20] sm:$0xff]
  %v1042 = vld [vmem:[%s1036 + $0x28] sm:$0xff]
  %v1043 = vld [vmem:[%s1036 + $0x30] sm:$0xff]
  %v1044 = vld [vmem:[%s1036 + $0x38] sm:$0xff]
  %v1045 = vld [vmem:[%s1036 + $0x40] sm:$0xff]
  %v1046 = vld [vmem:[%s1036 + $0x48] sm:$0xff]
  %v1047 = vld [vmem:[%s1036 + $0x50] sm:$0xff]
  %v1048 = vld [vmem:[%s1036 + $0x58] sm:$0xff]
  %v1049 = vld [vmem:[%s1036 + $0x60] sm:$0xff]
  %v1050 = vld [vmem:[%s1036 + $0x68] sm:$0xff]
  %v1051 = vld [vmem:[%s1036 + $0x70] sm:$0xff]
  %v1052 = vld [vmem:[%s1036 + $0x78] sm:$0xff]
  %v1053 = vld [vmem:[%s1036 + $0x80] sm:$0xff]
  %v1054 = vld [vmem:[%s1036 + $0x88] sm:$0xff]
  %v1055 = vld [vmem:[%s1036 + $0x90] sm:$0xff]
  %v1056 = vld [vmem:[%s1036 + $0x98] sm:$0xff]
  %v1057 = vld [vmem:[%s1036 + $0xa0] sm:$0xff]
  %v1058 = vld [vmem:[%s1036 + $0xa8] sm:$0xff]
  %v1059 = vld [vmem:[%s1036 + $0xb0] sm:$0xff]
  %v1060 = vld [vmem:[%s1036 + $0xb8] sm:$0xff]
  %v1061 = vld [vmem:[%s1036 + $0xc0] sm:$0xff]
  %v1062 = vld [vmem:[%s1036 + $0xc8] sm:$0xff]
  %v1063 = vld [vmem:[%s1036 + $0xd0] sm:$0xff]
  %v1064 = vld [vmem:[%s1036 + $0xd8] sm:$0xff]
  %v1065 = vld [vmem:[%s1036 + $0xe0] sm:$0xff]
  %v1066 = vld [vmem:[%s1036 + $0xe8] sm:$0xff]
  %v1067 = vld [vmem:[%s1036 + $0xf0] sm:$0xff]
  %v1068 = vld [vmem:[%s1036 + $0xf8] sm:$0xff]
  %v1069 = vld [vmem:[%s1036 + $0x100] sm:$0xff]
  %v1070 = vld [vmem:[%s1036 + $0x108] sm:$0xff]
  %v1071 = vld [vmem:[%s1036 + $0x110] sm:$0xff]
  %v1072 = vld [vmem:[%s1036 + $0x118] sm:$0xff]
  %v1073 = vld [vmem:[%s1036 + $0x120] sm:$0xff]
  %v1074 = vld [vmem:[%s1036 + $0x128] sm:$0xff]
  %v1075 = vld [vmem:[%s1036 + $0x130] sm:$0xff]
  %v1076 = vld [vmem:[%s1036 + $0x138] sm:$0xff]
  %v1077 = vld [vmem:[%s1036 + $0x140] sm:$0xff]
  %v1078 = vld [vmem:[%s1036 + $0x148] sm:$0xff]
  %v1079 = vld [vmem:[%s1036 + $0x150] sm:$0xff]
  %v1080 = vld [vmem:[%s1036 + $0x158] sm:$0xff]
  %v1081 = vld [vmem:[%s1036 + $0x160] sm:$0xff]
  %v1082 = vld [vmem:[%s1036 + $0x168] sm:$0xff]
  %v1083 = vld [vmem:[%s1036 + $0x170] sm:$0xff]
  %v1084 = vld [vmem:[%s1036 + $0x178] sm:$0xff]
  %v1085 = vld [vmem:[%s1036 + $0x180] sm:$0xff]
  %v1087 = vsel %vm67, %v1037, 0
  %v1090 = vsel %vm67, %v1038, 0
  %v1093 = vsel %vm67, %v1039, 0
  %v1096 = vsel %vm67, %v1040, 0
  %v1099 = vsel %vm67, %v1041, 0
  %v1102 = vsel %vm67, %v1042, 0
  %v1105 = vsel %vm67, %v1043, 0
  %v1108 = vsel %vm67, %v1044, 0
  %v1111 = vsel %vm67, %v1045, 0
  %v1114 = vsel %vm67, %v1046, 0
  %v1117 = vsel %vm67, %v1047, 0
  %v1120 = vsel %vm67, %v1048, 0
  %v1123 = vsel %vm67, %v1049, 0
  %v1126 = vsel %vm67, %v1050, 0
  %v1129 = vsel %vm67, %v1051, 0
  %v1132 = vsel %vm67, %v1052, 0
  %v1135 = vsel %vm67, %v1053, 0
  %v1138 = vsel %vm67, %v1054, 0
  %v1141 = vsel %vm67, %v1055, 0
  %v1144 = vsel %vm67, %v1056, 0
  %v1147 = vsel %vm67, %v1057, 0
  %v1150 = vsel %vm67, %v1058, 0
  %v1153 = vsel %vm67, %v1059, 0
  %v1156 = vsel %vm67, %v1060, 0
  %v1159 = vsel %vm67, %v1061, 0
  %v1162 = vsel %vm67, %v1062, 0
  %v1165 = vsel %vm67, %v1063, 0
  %v1168 = vsel %vm67, %v1064, 0
  %v1171 = vsel %vm67, %v1065, 0
  %v1174 = vsel %vm67, %v1066, 0
  %v1177 = vsel %vm67, %v1067, 0
  %v1180 = vsel %vm67, %v1068, 0
  %v1183 = vsel %vm67, %v1069, 0
  %v1186 = vsel %vm67, %v1070, 0
  %v1189 = vsel %vm67, %v1071, 0
  %v1192 = vsel %vm67, %v1072, 0
  %v1195 = vsel %vm67, %v1073, 0
  %v1198 = vsel %vm67, %v1074, 0
  %v1201 = vsel %vm67, %v1075, 0
  %v1204 = vsel %vm67, %v1076, 0
  %v1207 = vsel %vm67, %v1077, 0
  %v1210 = vsel %vm67, %v1078, 0
  %v1213 = vsel %vm67, %v1079, 0
  %v1216 = vsel %vm67, %v1080, 0
  %v1219 = vsel %vm67, %v1081, 0
  %v1222 = vsel %vm67, %v1082, 0
  %v1225 = vsel %vm67, %v1083, 0
  %v1228 = vsel %vm67, %v1084, 0
  %v1231 = vsel %vm67, %v1085, 0
  %1233 = vmatprep.subr.mxu0 0.0
  %1234 = vmatpush1.msra.mxu0 %v14
  %1235 = vmatprep.subr.mxu0 0.0
  %1236 = vmatpush1.msra.mxu0 %v15
  %1237 = vmatprep.subr.mxu0 0.0
  %1238 = vmatpush1.msra.mxu0 %v16
  %1239 = vmatprep.subr.mxu0 0.0
  %1240 = vmatpush1.msra.mxu0 %v217
  %1241 = vmatprep.subr.mxu0 0.0
  %1242 = vmatpush1.msra.mxu0 0.0
  %1243 = vmatprep.subr.mxu0 0.0
  %1244 = vmatpush1.msra.mxu0 0.0
  %1245 = vmatprep.subr.mxu0 0.0
  %1246 = vmatpush1.msra.mxu0 0.0
  %1247 = vmatprep.subr.mxu0 0.0
  %1248 = vmatpush1.msra.mxu0 0.0
  %1249 = vmatprep.subr.mxu0 0.0
  %1250 = vmatpush1.msra.mxu0 0.0
  %1251 = vmatprep.subr.mxu0 0.0
  %1252 = vmatpush1.msra.mxu0 0.0
  %1253 = vmatprep.subr.mxu0 0.0
  %1254 = vmatpush1.msra.mxu0 0.0
  %1255 = vmatprep.subr.mxu0 0.0
  %1256 = vmatpush1.msra.mxu0 0.0
  %1257 = vmatprep.subr.mxu0 0.0
  %1258 = vmatpush1.msra.mxu0 0.0
  %1259 = vmatprep.subr.mxu0 0.0
  %1260 = vmatpush1.msra.mxu0 0.0
  %1261 = vmatprep.subr.mxu0 0.0
  %1262 = vmatpush1.msra.mxu0 0.0
  %1263 = vmatprep.subr.mxu0 0.0
  %1264 = vmatpush1.msra.mxu0 0.0
  %1265 = vmatprep.subr.mxu0 0.0
  %1266 = vmatpush1.msra.mxu0 0.0
  %1267 = vmatprep.subr.mxu0 0.0
  %1268 = vmatpush1.msra.mxu0 0.0
  %1269 = vmatprep.subr.mxu0 0.0
  %1270 = vmatpush1.msra.mxu0 0.0
  %1271 = vmatprep.subr.mxu0 0.0
  %1272 = vmatpush1.msra.mxu0 0.0
  %1273 = vmatprep.subr.mxu0 0.0
  %1274 = vmatpush1.msra.mxu0 0.0
  %1275 = vmatprep.subr.mxu0 0.0
  %1276 = vmatpush1.msra.mxu0 0.0
  %1277 = vmatprep.subr.mxu0 0.0
  %1278 = vmatpush1.msra.mxu0 0.0
  %1279 = vmatprep.subr.mxu0 0.0
  %1280 = vmatpush1.msra.mxu0 0.0
  %1281 = vmatprep.subr.mxu0 0.0
  %1282 = vmatpush1.msra.mxu0 0.0
  %1283 = vmatprep.subr.mxu0 0.0
  %1284 = vmatpush1.msra.mxu0 0.0
  %1285 = vmatprep.subr.mxu0 0.0
  %1286 = vmatpush1.msra.mxu0 0.0
  %1287 = vmatprep.subr.mxu0 0.0
  %1288 = vmatpush1.msra.mxu0 0.0
  %1289 = vmatprep.subr.mxu0 0.0
  %1290 = vmatpush1.msra.mxu0 0.0
  %1291 = vmatprep.subr.mxu0 0.0
  %1292 = vmatpush1.msra.mxu0 0.0
  %1293 = vmatprep.subr.mxu0 0.0
  %1294 = vmatpush1.msra.mxu0 0.0
  %1295 = vmatprep.subr.mxu0 0.0
  %1296 = vmatpush1.msra.mxu0 0.0
  %1297 = vmatprep.mubr.f32.mxu0 0.0
  %1298 = vmatmul.mubr.f32.gmra.mrb[0].mxu0 %v1087
  %v1299 = vpop.f32.mrb[0].mxu0
  %v1300 = vadd.f32 0.0, %v1299
  %v1301 = vpop.f32.mrb[0].mxu0
  %1302 = vmatprep.mubr.f32.mxu0 0.0
  %1303 = vmatmul.mubr.f32.gmra.mrb[0].mxu0 %v1090
  %v1304 = vpop.f32.mrb[0].mxu0
  %v1305 = vadd.f32 0.0, %v1304
  %v1306 = vpop.f32.mrb[0].mxu0
  %1307 = vmatprep.mubr.f32.mxu0 0.0
  %1308 = vmatmul.mubr.f32.gmra.mrb[0].mxu0 %v1093
  %v1309 = vpop.f32.mrb[0].mxu0
  %v1310 = vadd.f32 0.0, %v1309
  %v1311 = vpop.f32.mrb[0].mxu0
  %1312 = vmatprep.mubr.f32.mxu0 0.0
  %1313 = vmatmul.mubr.f32.gmra.mrb[0].mxu0 %v1096
  %v1314 = vpop.f32.mrb[0].mxu0
  %v1315 = vadd.f32 0.0, %v1314
  %v1316 = vpop.f32.mrb[0].mxu0
  %1317 = vmatprep.mubr.f32.mxu0 0.0
  %1318 = vmatmul.mubr.f32.gmra.mrb[0].mxu0 %v1099
  %v1319 = vpop.f32.mrb[0].mxu0
  %v1320 = vadd.f32 0.0, %v1319
  %v1321 = vpop.f32.mrb[0].mxu0
  %1322 = vmatprep.mubr.f32.mxu0 0.0
  %1323 = vmatmul.mubr.f32.gmra.mrb[0].mxu0 %v1102
  %v1324 = vpop.f32.mrb[0].mxu0
  %v1325 = vadd.f32 0.0, %v1324
  %v1326 = vpop.f32.mrb[0].mxu0
  %1327 = vmatprep.mubr.f32.mxu0 0.0
  %1328 = vmatmul.mubr.f32.gmra.mrb[0].mxu0 %v1105
  %v1329 = vpop.f32.mrb[0].mxu0
  %v1330 = vadd.f32 0.0, %v1329
  %v1331 = vpop.f32.mrb[0].mxu0
  %1332 = vmatprep.mubr.f32.mxu0 0.0
  %1333 = vmatmul.mubr.f32.gmra.mrb[0].mxu0 %v1108
  %v1334 = vpop.f32.mrb[0].mxu0
  %v1335 = vadd.f32 0.0, %v1334
  %v1336 = vpop.f32.mrb[0].mxu0
  %1337 = vmatprep.mubr.f32.mxu0 0.0
  %1338 = vmatmul.mubr.f32.gmra.mrb[0].mxu0 %v1111
  %v1339 = vpop.f32.mrb[0].mxu0
  %v1340 = vadd.f32 0.0, %v1339
  %v1341 = vpop.f32.mrb[0].mxu0
  %1342 = vmatprep.mubr.f32.mxu0 0.0
  %1343 = vmatmul.mubr.f32.gmra.mrb[0].mxu0 %v1114
  %v1344 = vpop.f32.mrb[0].mxu0
  %v1345 = vadd.f32 0.0, %v1344
  %v1346 = vpop.f32.mrb[0].mxu0
  %1347 = vmatprep.mubr.f32.mxu0 0.0
  %1348 = vmatmul.mubr.f32.gmra.mrb[0].mxu0 %v1117
  %v1349 = vpop.f32.mrb[0].mxu0
  %v1350 = vadd.f32 0.0, %v1349
  %v1351 = vpop.f32.mrb[0].mxu0
  %1352 = vmatprep.mubr.f32.mxu0 0.0
  %1353 = vmatmul.mubr.f32.gmra.mrb[0].mxu0 %v1120
  %v1354 = vpop.f32.mrb[0].mxu0
  %v1355 = vadd.f32 0.0, %v1354
  %v1356 = vpop.f32.mrb[0].mxu0
  %1357 = vmatprep.mubr.f32.mxu0 0.0
  %1358 = vmatmul.mubr.f32.gmra.mrb[0].mxu0 %v1123
  %v1359 = vpop.f32.mrb[0].mxu0
  %v1360 = vadd.f32 0.0, %v1359
  %v1361 = vpop.f32.mrb[0].mxu0
  %1362 = vmatprep.mubr.f32.mxu0 0.0
  %1363 = vmatmul.mubr.f32.gmra.mrb[0].mxu0 %v1126
  %v1364 = vpop.f32.mrb[0].mxu0
  %v1365 = vadd.f32 0.0, %v1364
  %v1366 = vpop.f32.mrb[0].mxu0
  %1367 = vmatprep.mubr.f32.mxu0 0.0
  %1368 = vmatmul.mubr.f32.gmra.mrb[0].mxu0 %v1129
  %v1369 = vpop.f32.mrb[0].mxu0
  %v1370 = vadd.f32 0.0, %v1369
  %v1371 = vpop.f32.mrb[0].mxu0
  %1372 = vmatprep.mubr.f32.mxu0 0.0
  %1373 = vmatmul.mubr.f32.gmra.mrb[0].mxu0 %v1132
  %v1374 = vpop.f32.mrb[0].mxu0
  %v1375 = vadd.f32 0.0, %v1374
  %v1376 = vpop.f32.mrb[0].mxu0
  %1377 = vmatprep.mubr.f32.mxu0 0.0
  %1378 = vmatmul.mubr.f32.gmra.mrb[0].mxu0 %v1135
  %v1379 = vpop.f32.mrb[0].mxu0
  %v1380 = vadd.f32 0.0, %v1379
  %v1381 = vpop.f32.mrb[0].mxu0
  %1382 = vmatprep.mubr.f32.mxu0 0.0
  %1383 = vmatmul.mubr.f32.gmra.mrb[0].mxu0 %v1138
  %v1384 = vpop.f32.mrb[0].mxu0
  %v1385 = vadd.f32 0.0, %v1384
  %v1386 = vpop.f32.mrb[0].mxu0
  %1387 = vmatprep.mubr.f32.mxu0 0.0
  %1388 = vmatmul.mubr.f32.gmra.mrb[0].mxu0 %v1141
  %v1389 = vpop.f32.mrb[0].mxu0
  %v1390 = vadd.f32 0.0, %v1389
  %v1391 = vpop.f32.mrb[0].mxu0
  %1392 = vmatprep.mubr.f32.mxu0 0.0
  %1393 = vmatmul.mubr.f32.gmra.mrb[0].mxu0 %v1144
  %v1394 = vpop.f32.mrb[0].mxu0
  %v1395 = vadd.f32 0.0, %v1394
  %v1396 = vpop.f32.mrb[0].mxu0
  %1397 = vmatprep.mubr.f32.mxu0 0.0
  %1398 = vmatmul.mubr.f32.gmra.mrb[0].mxu0 %v1147
  %v1399 = vpop.f32.mrb[0].mxu0
  %v1400 = vadd.f32 0.0, %v1399
  %v1401 = vpop.f32.mrb[0].mxu0
  %1402 = vmatprep.mubr.f32.mxu0 0.0
  %1403 = vmatmul.mubr.f32.gmra.mrb[0].mxu0 %v1150
  %v1404 = vpop.f32.mrb[0].mxu0
  %v1405 = vadd.f32 0.0, %v1404
  %v1406 = vpop.f32.mrb[0].mxu0
  %1407 = vmatprep.mubr.f32.mxu0 0.0
  %1408 = vmatmul.mubr.f32.gmra.mrb[0].mxu0 %v1153
  %v1409 = vpop.f32.mrb[0].mxu0
  %v1410 = vadd.f32 0.0, %v1409
  %v1411 = vpop.f32.mrb[0].mxu0
  %1412 = vmatprep.mubr.f32.mxu0 0.0
  %1413 = vmatmul.mubr.f32.gmra.mrb[0].mxu0 %v1156
  %v1414 = vpop.f32.mrb[0].mxu0
  %v1415 = vadd.f32 0.0, %v1414
  %v1416 = vpop.f32.mrb[0].mxu0
  %1417 = vmatprep.mubr.f32.mxu0 0.0
  %1418 = vmatmul.mubr.f32.gmra.mrb[0].mxu0 %v1159
  %v1419 = vpop.f32.mrb[0].mxu0
  %v1420 = vadd.f32 0.0, %v1419
  %v1421 = vpop.f32.mrb[0].mxu0
  %1422 = vmatprep.mubr.f32.mxu0 0.0
  %1423 = vmatmul.mubr.f32.gmra.mrb[0].mxu0 %v1162
  %v1424 = vpop.f32.mrb[0].mxu0
  %v1425 = vadd.f32 0.0, %v1424
  %v1426 = vpop.f32.mrb[0].mxu0
  %1427 = vmatprep.mubr.f32.mxu0 0.0
  %1428 = vmatmul.mubr.f32.gmra.mrb[0].mxu0 %v1165
  %v1429 = vpop.f32.mrb[0].mxu0
  %v1430 = vadd.f32 0.0, %v1429
  %v1431 = vpop.f32.mrb[0].mxu0
  %1432 = vmatprep.mubr.f32.mxu0 0.0
  %1433 = vmatmul.mubr.f32.gmra.mrb[0].mxu0 %v1168
  %v1434 = vpop.f32.mrb[0].mxu0
  %v1435 = vadd.f32 0.0, %v1434
  %v1436 = vpop.f32.mrb[0].mxu0
  %1437 = vmatprep.mubr.f32.mxu0 0.0
  %1438 = vmatmul.mubr.f32.gmra.mrb[0].mxu0 %v1171
  %v1439 = vpop.f32.mrb[0].mxu0
  %v1440 = vadd.f32 0.0, %v1439
  %v1441 = vpop.f32.mrb[0].mxu0
  %1442 = vmatprep.mubr.f32.mxu0 0.0
  %1443 = vmatmul.mubr.f32.gmra.mrb[0].mxu0 %v1174
  %v1444 = vpop.f32.mrb[0].mxu0
  %v1445 = vadd.f32 0.0, %v1444
  %v1446 = vpop.f32.mrb[0].mxu0
  %1447 = vmatprep.mubr.f32.mxu0 0.0
  %1448 = vmatmul.mubr.f32.gmra.mrb[0].mxu0 %v1177
  %v1449 = vpop.f32.mrb[0].mxu0
  %v1450 = vadd.f32 0.0, %v1449
  %v1451 = vpop.f32.mrb[0].mxu0
  %1452 = vmatprep.mubr.f32.mxu0 0.0
  %1453 = vmatmul.mubr.f32.gmra.mrb[0].mxu0 %v1180
  %v1454 = vpop.f32.mrb[0].mxu0
  %v1455 = vadd.f32 0.0, %v1454
  %v1456 = vpop.f32.mrb[0].mxu0
  %1457 = vmatprep.mubr.f32.mxu0 0.0
  %1458 = vmatmul.mubr.f32.gmra.mrb[0].mxu0 %v1183
  %v1459 = vpop.f32.mrb[0].mxu0
  %v1460 = vadd.f32 0.0, %v1459
  %v1461 = vpop.f32.mrb[0].mxu0
  %1462 = vmatprep.mubr.f32.mxu0 0.0
  %1463 = vmatmul.mubr.f32.gmra.mrb[0].mxu0 %v1186
  %v1464 = vpop.f32.mrb[0].mxu0
  %v1465 = vadd.f32 0.0, %v1464
  %v1466 = vpop.f32.mrb[0].mxu0
  %1467 = vmatprep.mubr.f32.mxu0 0.0
  %1468 = vmatmul.mubr.f32.gmra.mrb[0].mxu0 %v1189
  %v1469 = vpop.f32.mrb[0].mxu0
  %v1470 = vadd.f32 0.0, %v1469
  %v1471 = vpop.f32.mrb[0].mxu0
  %1472 = vmatprep.mubr.f32.mxu0 0.0
  %1473 = vmatmul.mubr.f32.gmra.mrb[0].mxu0 %v1192
  %v1474 = vpop.f32.mrb[0].mxu0
  %v1475 = vadd.f32 0.0, %v1474
  %v1476 = vpop.f32.mrb[0].mxu0
  %1477 = vmatprep.mubr.f32.mxu0 0.0
  %1478 = vmatmul.mubr.f32.gmra.mrb[0].mxu0 %v1195
  %v1479 = vpop.f32.mrb[0].mxu0
  %v1480 = vadd.f32 0.0, %v1479
  %v1481 = vpop.f32.mrb[0].mxu0
  %1482 = vmatprep.mubr.f32.mxu0 0.0
  %1483 = vmatmul.mubr.f32.gmra.mrb[0].mxu0 %v1198
  %v1484 = vpop.f32.mrb[0].mxu0
  %v1485 = vadd.f32 0.0, %v1484
  %v1486 = vpop.f32.mrb[0].mxu0
  %1487 = vmatprep.mubr.f32.mxu0 0.0
  %1488 = vmatmul.mubr.f32.gmra.mrb[0].mxu0 %v1201
  %v1489 = vpop.f32.mrb[0].mxu0
  %v1490 = vadd.f32 0.0, %v1489
  %v1491 = vpop.f32.mrb[0].mxu0
  %1492 = vmatprep.mubr.f32.mxu0 0.0
  %1493 = vmatmul.mubr.f32.gmra.mrb[0].mxu0 %v1204
  %v1494 = vpop.f32.mrb[0].mxu0
  %v1495 = vadd.f32 0.0, %v1494
  %v1496 = vpop.f32.mrb[0].mxu0
  %1497 = vmatprep.mubr.f32.mxu0 0.0
  %1498 = vmatmul.mubr.f32.gmra.mrb[0].mxu0 %v1207
  %v1499 = vpop.f32.mrb[0].mxu0
  %v1500 = vadd.f32 0.0, %v1499
  %v1501 = vpop.f32.mrb[0].mxu0
  %1502 = vmatprep.mubr.f32.mxu0 0.0
  %1503 = vmatmul.mubr.f32.gmra.mrb[0].mxu0 %v1210
  %v1504 = vpop.f32.mrb[0].mxu0
  %v1505 = vadd.f32 0.0, %v1504
  %v1506 = vpop.f32.mrb[0].mxu0
  %1507 = vmatprep.mubr.f32.mxu0 0.0
  %1508 = vmatmul.mubr.f32.gmra.mrb[0].mxu0 %v1213
  %v1509 = vpop.f32.mrb[0].mxu0
  %v1510 = vadd.f32 0.0, %v1509
  %v1511 = vpop.f32.mrb[0].mxu0
  %1512 = vmatprep.mubr.f32.mxu0 0.0
  %1513 = vmatmul.mubr.f32.gmra.mrb[0].mxu0 %v1216
  %v1514 = vpop.f32.mrb[0].mxu0
  %v1515 = vadd.f32 0.0, %v1514
  %v1516 = vpop.f32.mrb[0].mxu0
  %1517 = vmatprep.mubr.f32.mxu0 0.0
  %1518 = vmatmul.mubr.f32.gmra.mrb[0].mxu0 %v1219
  %v1519 = vpop.f32.mrb[0].mxu0
  %v1520 = vadd.f32 0.0, %v1519
  %v1521 = vpop.f32.mrb[0].mxu0
  %1522 = vmatprep.mubr.f32.mxu0 0.0
  %1523 = vmatmul.mubr.f32.gmra.mrb[0].mxu0 %v1222
  %v1524 = vpop.f32.mrb[0].mxu0
  %v1525 = vadd.f32 0.0, %v1524
  %v1526 = vpop.f32.mrb[0].mxu0
  %1527 = vmatprep.mubr.f32.mxu0 0.0
  %1528 = vmatmul.mubr.f32.gmra.mrb[0].mxu0 %v1225
  %v1529 = vpop.f32.mrb[0].mxu0
  %v1530 = vadd.f32 0.0, %v1529
  %v1531 = vpop.f32.mrb[0].mxu0
  %1532 = vmatprep.mubr.f32.mxu0 0.0
  %1533 = vmatmul.mubr.f32.gmra.mrb[0].mxu0 %v1228
  %v1534 = vpop.f32.mrb[0].mxu0
  %v1535 = vadd.f32 0.0, %v1534
  %v1536 = vpop.f32.mrb[0].mxu0
  %1537 = vmatprep.mubr.f32.mxu0 0.0
  %1538 = vmatmul.mubr.f32.gmra.mrb[0].mxu0 %v1231
  %v1539 = vpop.f32.mrb[0].mxu0
  %v1540 = vadd.f32 0.0, %v1539
  %v1541 = vpop.f32.mrb[0].mxu0
  %1542 = vdwg.mxu0
  %s1543 = scalar_lea.vmem %s0, 1176
  %v1544 = vld [vmem:[%s1543] sm:$0xff]
  %v1545 = vld [vmem:[%s1543 + $0x8] sm:$0xff]
  %v1546 = vld [vmem:[%s1543 + $0x10] sm:$0xff]
  %v1547 = vld [vmem:[%s1543 + $0x18] sm:$0xff]
  %v1548 = vld [vmem:[%s1543 + $0x20] sm:$0xff]
  %v1549 = vld [vmem:[%s1543 + $0x28] sm:$0xff]
  %v1550 = vld [vmem:[%s1543 + $0x30] sm:$0xff]
  %v1551 = vld [vmem:[%s1543 + $0x38] sm:$0xff]
  %v1552 = vld [vmem:[%s1543 + $0x40] sm:$0xff]
  %v1553 = vld [vmem:[%s1543 + $0x48] sm:$0xff]
  %v1554 = vld [vmem:[%s1543 + $0x50] sm:$0xff]
  %v1555 = vld [vmem:[%s1543 + $0x58] sm:$0xff]
  %v1556 = vld [vmem:[%s1543 + $0x60] sm:$0xff]
  %v1557 = vld [vmem:[%s1543 + $0x68] sm:$0xff]
  %v1558 = vld [vmem:[%s1543 + $0x70] sm:$0xff]
  %v1559 = vld [vmem:[%s1543 + $0x78] sm:$0xff]
  %v1560 = vld [vmem:[%s1543 + $0x80] sm:$0xff]
  %v1561 = vld [vmem:[%s1543 + $0x88] sm:$0xff]
  %v1562 = vld [vmem:[%s1543 + $0x90] sm:$0xff]
  %v1563 = vld [vmem:[%s1543 + $0x98] sm:$0xff]
  %v1564 = vld [vmem:[%s1543 + $0xa0] sm:$0xff]
  %v1565 = vld [vmem:[%s1543 + $0xa8] sm:$0xff]
  %v1566 = vld [vmem:[%s1543 + $0xb0] sm:$0xff]
  %v1567 = vld [vmem:[%s1543 + $0xb8] sm:$0xff]
  %v1568 = vld [vmem:[%s1543 + $0xc0] sm:$0xff]
  %v1569 = vld [vmem:[%s1543 + $0xc8] sm:$0xff]
  %v1570 = vld [vmem:[%s1543 + $0xd0] sm:$0xff]
  %v1571 = vld [vmem:[%s1543 + $0xd8] sm:$0xff]
  %v1572 = vld [vmem:[%s1543 + $0xe0] sm:$0xff]
  %v1573 = vld [vmem:[%s1543 + $0xe8] sm:$0xff]
  %v1574 = vld [vmem:[%s1543 + $0xf0] sm:$0xff]
  %v1575 = vld [vmem:[%s1543 + $0xf8] sm:$0xff]
  %v1576 = vld [vmem:[%s1543 + $0x100] sm:$0xff]
  %v1577 = vld [vmem:[%s1543 + $0x108] sm:$0xff]
  %v1578 = vld [vmem:[%s1543 + $0x110] sm:$0xff]
  %v1579 = vld [vmem:[%s1543 + $0x118] sm:$0xff]
  %v1580 = vld [vmem:[%s1543 + $0x120] sm:$0xff]
  %v1581 = vld [vmem:[%s1543 + $0x128] sm:$0xff]
  %v1582 = vld [vmem:[%s1543 + $0x130] sm:$0xff]
  %v1583 = vld [vmem:[%s1543 + $0x138] sm:$0xff]
  %v1584 = vld [vmem:[%s1543 + $0x140] sm:$0xff]
  %v1585 = vld [vmem:[%s1543 + $0x148] sm:$0xff]
  %v1586 = vld [vmem:[%s1543 + $0x150] sm:$0xff]
  %v1587 = vld [vmem:[%s1543 + $0x158] sm:$0xff]
  %v1588 = vld [vmem:[%s1543 + $0x160] sm:$0xff]
  %v1589 = vld [vmem:[%s1543 + $0x168] sm:$0xff]
  %v1590 = vld [vmem:[%s1543 + $0x170] sm:$0xff]
  %v1591 = vld [vmem:[%s1543 + $0x178] sm:$0xff]
  %v1592 = vld [vmem:[%s1543 + $0x180] sm:$0xff]
  %v1594 = vsel %vm67, %v1544, 0
  %v1597 = vsel %vm67, %v1545, 0
  %v1600 = vsel %vm67, %v1546, 0
  %v1603 = vsel %vm67, %v1547, 0
  %v1606 = vsel %vm67, %v1548, 0
  %v1609 = vsel %vm67, %v1549, 0
  %v1612 = vsel %vm67, %v1550, 0
  %v1615 = vsel %vm67, %v1551, 0
  %v1618 = vsel %vm67, %v1552, 0
  %v1621 = vsel %vm67, %v1553, 0
  %v1624 = vsel %vm67, %v1554, 0
  %v1627 = vsel %vm67, %v1555, 0
  %v1630 = vsel %vm67, %v1556, 0
  %v1633 = vsel %vm67, %v1557, 0
  %v1636 = vsel %vm67, %v1558, 0
  %v1639 = vsel %vm67, %v1559, 0
  %v1642 = vsel %vm67, %v1560, 0
  %v1645 = vsel %vm67, %v1561, 0
  %v1648 = vsel %vm67, %v1562, 0
  %v1651 = vsel %vm67, %v1563, 0
  %v1654 = vsel %vm67, %v1564, 0
  %v1657 = vsel %vm67, %v1565, 0
  %v1660 = vsel %vm67, %v1566, 0
  %v1663 = vsel %vm67, %v1567, 0
  %v1666 = vsel %vm67, %v1568, 0
  %v1669 = vsel %vm67, %v1569, 0
  %v1672 = vsel %vm67, %v1570, 0
  %v1675 = vsel %vm67, %v1571, 0
  %v1678 = vsel %vm67, %v1572, 0
  %v1681 = vsel %vm67, %v1573, 0
  %v1684 = vsel %vm67, %v1574, 0
  %v1687 = vsel %vm67, %v1575, 0
  %v1690 = vsel %vm67, %v1576, 0
  %v1693 = vsel %vm67, %v1577, 0
  %v1696 = vsel %vm67, %v1578, 0
  %v1699 = vsel %vm67, %v1579, 0
  %v1702 = vsel %vm67, %v1580, 0
  %v1705 = vsel %vm67, %v1581, 0
  %v1708 = vsel %vm67, %v1582, 0
  %v1711 = vsel %vm67, %v1583, 0
  %v1714 = vsel %vm67, %v1584, 0
  %v1717 = vsel %vm67, %v1585, 0
  %v1720 = vsel %vm67, %v1586, 0
  %v1723 = vsel %vm67, %v1587, 0
  %v1726 = vsel %vm67, %v1588, 0
  %v1729 = vsel %vm67, %v1589, 0
  %v1732 = vsel %vm67, %v1590, 0
  %v1735 = vsel %vm67, %v1591, 0
  %v1738 = vsel %vm67, %v1592, 0
  %1740 = vmatprep.subr.mxu0 0.0
  %1741 = vmatpush1.msra.mxu0 %v14
  %1742 = vmatprep.subr.mxu0 0.0
  %1743 = vmatpush1.msra.mxu0 %v15
  %1744 = vmatprep.subr.mxu0 0.0
  %1745 = vmatpush1.msra.mxu0 %v16
  %1746 = vmatprep.subr.mxu0 0.0
  %1747 = vmatpush1.msra.mxu0 %v217
  %1748 = vmatprep.subr.mxu0 0.0
  %1749 = vmatpush1.msra.mxu0 0.0
  %1750 = vmatprep.subr.mxu0 0.0
  %1751 = vmatpush1.msra.mxu0 0.0
  %1752 = vmatprep.subr.mxu0 0.0
  %1753 = vmatpush1.msra.mxu0 0.0
  %1754 = vmatprep.subr.mxu0 0.0
  %1755 = vmatpush1.msra.mxu0 0.0
  %1756 = vmatprep.subr.mxu0 0.0
  %1757 = vmatpush1.msra.mxu0 0.0
  %1758 = vmatprep.subr.mxu0 0.0
  %1759 = vmatpush1.msra.mxu0 0.0
  %1760 = vmatprep.subr.mxu0 0.0
  %1761 = vmatpush1.msra.mxu0 0.0
  %1762 = vmatprep.subr.mxu0 0.0
  %1763 = vmatpush1.msra.mxu0 0.0
  %1764 = vmatprep.subr.mxu0 0.0
  %1765 = vmatpush1.msra.mxu0 0.0
  %1766 = vmatprep.subr.mxu0 0.0
  %1767 = vmatpush1.msra.mxu0 0.0
  %1768 = vmatprep.subr.mxu0 0.0
  %1769 = vmatpush1.msra.mxu0 0.0
  %1770 = vmatprep.subr.mxu0 0.0
  %1771 = vmatpush1.msra.mxu0 0.0
  %1772 = vmatprep.subr.mxu0 0.0
  %1773 = vmatpush1.msra.mxu0 0.0
  %1774 = vmatprep.subr.mxu0 0.0
  %1775 = vmatpush1.msra.mxu0 0.0
  %1776 = vmatprep.subr.mxu0 0.0
  %1777 = vmatpush1.msra.mxu0 0.0
  %1778 = vmatprep.subr.mxu0 0.0
  %1779 = vmatpush1.msra.mxu0 0.0
  %1780 = vmatprep.subr.mxu0 0.0
  %1781 = vmatpush1.msra.mxu0 0.0
  %1782 = vmatprep.subr.mxu0 0.0
  %1783 = vmatpush1.msra.mxu0 0.0
  %1784 = vmatprep.subr.mxu0 0.0
  %1785 = vmatpush1.msra.mxu0 0.0
  %1786 = vmatprep.subr.mxu0 0.0
  %1787 = vmatpush1.msra.mxu0 0.0
  %1788 = vmatprep.subr.mxu0 0.0
  %1789 = vmatpush1.msra.mxu0 0.0
  %1790 = vmatprep.subr.mxu0 0.0
  %1791 = vmatpush1.msra.mxu0 0.0
  %1792 = vmatprep.subr.mxu0 0.0
  %1793 = vmatpush1.msra.mxu0 0.0
  %1794 = vmatprep.subr.mxu0 0.0
  %1795 = vmatpush1.msra.mxu0 0.0
  %1796 = vmatprep.subr.mxu0 0.0
  %1797 = vmatpush1.msra.mxu0 0.0
  %1798 = vmatprep.subr.mxu0 0.0
  %1799 = vmatpush1.msra.mxu0 0.0
  %1800 = vmatprep.subr.mxu0 0.0
  %1801 = vmatpush1.msra.mxu0 0.0
  %1802 = vmatprep.subr.mxu0 0.0
  %1803 = vmatpush1.msra.mxu0 0.0
  %1804 = vmatprep.mubr.f32.mxu0 0.0
  %1805 = vmatmul.mubr.f32.gmra.mrb[0].mxu0 %v1594
  %v1806 = vpop.f32.mrb[0].mxu0
  %v1807 = vadd.f32 0.0, %v1806
  %v1808 = vpop.f32.mrb[0].mxu0
  %1809 = vmatprep.mubr.f32.mxu0 0.0
  %1810 = vmatmul.mubr.f32.gmra.mrb[0].mxu0 %v1597
  %v1811 = vpop.f32.mrb[0].mxu0
  %v1812 = vadd.f32 0.0, %v1811
  %v1813 = vpop.f32.mrb[0].mxu0
  %1814 = vmatprep.mubr.f32.mxu0 0.0
  %1815 = vmatmul.mubr.f32.gmra.mrb[0].mxu0 %v1600
  %v1816 = vpop.f32.mrb[0].mxu0
  %v1817 = vadd.f32 0.0, %v1816
  %v1818 = vpop.f32.mrb[0].mxu0
  %1819 = vmatprep.mubr.f32.mxu0 0.0
  %1820 = vmatmul.mubr.f32.gmra.mrb[0].mxu0 %v1603
  %v1821 = vpop.f32.mrb[0].mxu0
  %v1822 = vadd.f32 0.0, %v1821
  %v1823 = vpop.f32.mrb[0].mxu0
  %1824 = vmatprep.mubr.f32.mxu0 0.0
  %1825 = vmatmul.mubr.f32.gmra.mrb[0].mxu0 %v1606
  %v1826 = vpop.f32.mrb[0].mxu0
  %v1827 = vadd.f32 0.0, %v1826
  %v1828 = vpop.f32.mrb[0].mxu0
  %1829 = vmatprep.mubr.f32.mxu0 0.0
  %1830 = vmatmul.mubr.f32.gmra.mrb[0].mxu0 %v1609
  %v1831 = vpop.f32.mrb[0].mxu0
  %v1832 = vadd.f32 0.0, %v1831
  %v1833 = vpop.f32.mrb[0].mxu0
  %1834 = vmatprep.mubr.f32.mxu0 0.0
  %1835 = vmatmul.mubr.f32.gmra.mrb[0].mxu0 %v1612
  %v1836 = vpop.f32.mrb[0].mxu0
  %v1837 = vadd.f32 0.0, %v1836
  %v1838 = vpop.f32.mrb[0].mxu0
  %1839 = vmatprep.mubr.f32.mxu0 0.0
  %1840 = vmatmul.mubr.f32.gmra.mrb[0].mxu0 %v1615
  %v1841 = vpop.f32.mrb[0].mxu0
  %v1842 = vadd.f32 0.0, %v1841
  %v1843 = vpop.f32.mrb[0].mxu0
  %1844 = vmatprep.mubr.f32.mxu0 0.0
  %1845 = vmatmul.mubr.f32.gmra.mrb[0].mxu0 %v1618
  %v1846 = vpop.f32.mrb[0].mxu0
  %v1847 = vadd.f32 0.0, %v1846
  %v1848 = vpop.f32.mrb[0].mxu0
  %1849 = vmatprep.mubr.f32.mxu0 0.0
  %1850 = vmatmul.mubr.f32.gmra.mrb[0].mxu0 %v1621
  %v1851 = vpop.f32.mrb[0].mxu0
  %v1852 = vadd.f32 0.0, %v1851
  %v1853 = vpop.f32.mrb[0].mxu0
  %1854 = vmatprep.mubr.f32.mxu0 0.0
  %1855 = vmatmul.mubr.f32.gmra.mrb[0].mxu0 %v1624
  %v1856 = vpop.f32.mrb[0].mxu0
  %v1857 = vadd.f32 0.0, %v1856
  %v1858 = vpop.f32.mrb[0].mxu0
  %1859 = vmatprep.mubr.f32.mxu0 0.0
  %1860 = vmatmul.mubr.f32.gmra.mrb[0].mxu0 %v1627
  %v1861 = vpop.f32.mrb[0].mxu0
  %v1862 = vadd.f32 0.0, %v1861
  %v1863 = vpop.f32.mrb[0].mxu0
  %1864 = vmatprep.mubr.f32.mxu0 0.0
  %1865 = vmatmul.mubr.f32.gmra.mrb[0].mxu0 %v1630
  %v1866 = vpop.f32.mrb[0].mxu0
  %v1867 = vadd.f32 0.0, %v1866
  %v1868 = vpop.f32.mrb[0].mxu0
  %1869 = vmatprep.mubr.f32.mxu0 0.0
  %1870 = vmatmul.mubr.f32.gmra.mrb[0].mxu0 %v1633
  %v1871 = vpop.f32.mrb[0].mxu0
  %v1872 = vadd.f32 0.0, %v1871
  %v1873 = vpop.f32.mrb[0].mxu0
  %1874 = vmatprep.mubr.f32.mxu0 0.0
  %1875 = vmatmul.mubr.f32.gmra.mrb[0].mxu0 %v1636
  %v1876 = vpop.f32.mrb[0].mxu0
  %v1877 = vadd.f32 0.0, %v1876
  %v1878 = vpop.f32.mrb[0].mxu0
  %1879 = vmatprep.mubr.f32.mxu0 0.0
  %1880 = vmatmul.mubr.f32.gmra.mrb[0].mxu0 %v1639
  %v1881 = vpop.f32.mrb[0].mxu0
  %v1882 = vadd.f32 0.0, %v1881
  %v1883 = vpop.f32.mrb[0].mxu0
  %1884 = vmatprep.mubr.f32.mxu0 0.0
  %1885 = vmatmul.mubr.f32.gmra.mrb[0].mxu0 %v1642
  %v1886 = vpop.f32.mrb[0].mxu0
  %v1887 = vadd.f32 0.0, %v1886
  %v1888 = vpop.f32.mrb[0].mxu0
  %1889 = vmatprep.mubr.f32.mxu0 0.0
  %1890 = vmatmul.mubr.f32.gmra.mrb[0].mxu0 %v1645
  %v1891 = vpop.f32.mrb[0].mxu0
  %v1892 = vadd.f32 0.0, %v1891
  %v1893 = vpop.f32.mrb[0].mxu0
  %1894 = vmatprep.mubr.f32.mxu0 0.0
  %1895 = vmatmul.mubr.f32.gmra.mrb[0].mxu0 %v1648
  %v1896 = vpop.f32.mrb[0].mxu0
  %v1897 = vadd.f32 0.0, %v1896
  %v1898 = vpop.f32.mrb[0].mxu0
  %1899 = vmatprep.mubr.f32.mxu0 0.0
  %1900 = vmatmul.mubr.f32.gmra.mrb[0].mxu0 %v1651
  %v1901 = vpop.f32.mrb[0].mxu0
  %v1902 = vadd.f32 0.0, %v1901
  %v1903 = vpop.f32.mrb[0].mxu0
  %1904 = vmatprep.mubr.f32.mxu0 0.0
  %1905 = vmatmul.mubr.f32.gmra.mrb[0].mxu0 %v1654
  %v1906 = vpop.f32.mrb[0].mxu0
  %v1907 = vadd.f32 0.0, %v1906
  %v1908 = vpop.f32.mrb[0].mxu0
  %1909 = vmatprep.mubr.f32.mxu0 0.0
  %1910 = vmatmul.mubr.f32.gmra.mrb[0].mxu0 %v1657
  %v1911 = vpop.f32.mrb[0].mxu0
  %v1912 = vadd.f32 0.0, %v1911
  %v1913 = vpop.f32.mrb[0].mxu0
  %1914 = vmatprep.mubr.f32.mxu0 0.0
  %1915 = vmatmul.mubr.f32.gmra.mrb[0].mxu0 %v1660
  %v1916 = vpop.f32.mrb[0].mxu0
  %v1917 = vadd.f32 0.0, %v1916
  %v1918 = vpop.f32.mrb[0].mxu0
  %1919 = vmatprep.mubr.f32.mxu0 0.0
  %1920 = vmatmul.mubr.f32.gmra.mrb[0].mxu0 %v1663
  %v1921 = vpop.f32.mrb[0].mxu0
  %v1922 = vadd.f32 0.0, %v1921
  %v1923 = vpop.f32.mrb[0].mxu0
  %1924 = vmatprep.mubr.f32.mxu0 0.0
  %1925 = vmatmul.mubr.f32.gmra.mrb[0].mxu0 %v1666
  %v1926 = vpop.f32.mrb[0].mxu0
  %v1927 = vadd.f32 0.0, %v1926
  %v1928 = vpop.f32.mrb[0].mxu0
  %1929 = vmatprep.mubr.f32.mxu0 0.0
  %1930 = vmatmul.mubr.f32.gmra.mrb[0].mxu0 %v1669
  %v1931 = vpop.f32.mrb[0].mxu0
  %v1932 = vadd.f32 0.0, %v1931
  %v1933 = vpop.f32.mrb[0].mxu0
  %1934 = vmatprep.mubr.f32.mxu0 0.0
  %1935 = vmatmul.mubr.f32.gmra.mrb[0].mxu0 %v1672
  %v1936 = vpop.f32.mrb[0].mxu0
  %v1937 = vadd.f32 0.0, %v1936
  %v1938 = vpop.f32.mrb[0].mxu0
  %1939 = vmatprep.mubr.f32.mxu0 0.0
  %1940 = vmatmul.mubr.f32.gmra.mrb[0].mxu0 %v1675
  %v1941 = vpop.f32.mrb[0].mxu0
  %v1942 = vadd.f32 0.0, %v1941
  %v1943 = vpop.f32.mrb[0].mxu0
  %1944 = vmatprep.mubr.f32.mxu0 0.0
  %1945 = vmatmul.mubr.f32.gmra.mrb[0].mxu0 %v1678
  %v1946 = vpop.f32.mrb[0].mxu0
  %v1947 = vadd.f32 0.0, %v1946
  %v1948 = vpop.f32.mrb[0].mxu0
  %1949 = vmatprep.mubr.f32.mxu0 0.0
  %1950 = vmatmul.mubr.f32.gmra.mrb[0].mxu0 %v1681
  %v1951 = vpop.f32.mrb[0].mxu0
  %v1952 = vadd.f32 0.0, %v1951
  %v1953 = vpop.f32.mrb[0].mxu0
  %1954 = vmatprep.mubr.f32.mxu0 0.0
  %1955 = vmatmul.mubr.f32.gmra.mrb[0].mxu0 %v1684
  %v1956 = vpop.f32.mrb[0].mxu0
  %v1957 = vadd.f32 0.0, %v1956
  %v1958 = vpop.f32.mrb[0].mxu0
  %1959 = vmatprep.mubr.f32.mxu0 0.0
  %1960 = vmatmul.mubr.f32.gmra.mrb[0].mxu0 %v1687
  %v1961 = vpop.f32.mrb[0].mxu0
  %v1962 = vadd.f32 0.0, %v1961
  %v1963 = vpop.f32.mrb[0].mxu0
  %1964 = vmatprep.mubr.f32.mxu0 0.0
  %1965 = vmatmul.mubr.f32.gmra.mrb[0].mxu0 %v1690
  %v1966 = vpop.f32.mrb[0].mxu0
  %v1967 = vadd.f32 0.0, %v1966
  %v1968 = vpop.f32.mrb[0].mxu0
  %1969 = vmatprep.mubr.f32.mxu0 0.0
  %1970 = vmatmul.mubr.f32.gmra.mrb[0].mxu0 %v1693
  %v1971 = vpop.f32.mrb[0].mxu0
  %v1972 = vadd.f32 0.0, %v1971
  %v1973 = vpop.f32.mrb[0].mxu0
  %1974 = vmatprep.mubr.f32.mxu0 0.0
  %1975 = vmatmul.mubr.f32.gmra.mrb[0].mxu0 %v1696
  %v1976 = vpop.f32.mrb[0].mxu0
  %v1977 = vadd.f32 0.0, %v1976
  %v1978 = vpop.f32.mrb[0].mxu0
  %1979 = vmatprep.mubr.f32.mxu0 0.0
  %1980 = vmatmul.mubr.f32.gmra.mrb[0].mxu0 %v1699
  %v1981 = vpop.f32.mrb[0].mxu0
  %v1982 = vadd.f32 0.0, %v1981
  %v1983 = vpop.f32.mrb[0].mxu0
  %1984 = vmatprep.mubr.f32.mxu0 0.0
  %1985 = vmatmul.mubr.f32.gmra.mrb[0].mxu0 %v1702
  %v1986 = vpop.f32.mrb[0].mxu0
  %v1987 = vadd.f32 0.0, %v1986
  %v1988 = vpop.f32.mrb[0].mxu0
  %1989 = vmatprep.mubr.f32.mxu0 0.0
  %1990 = vmatmul.mubr.f32.gmra.mrb[0].mxu0 %v1705
  %v1991 = vpop.f32.mrb[0].mxu0
  %v1992 = vadd.f32 0.0, %v1991
  %v1993 = vpop.f32.mrb[0].mxu0
  %1994 = vmatprep.mubr.f32.mxu0 0.0
  %1995 = vmatmul.mubr.f32.gmra.mrb[0].mxu0 %v1708
  %v1996 = vpop.f32.mrb[0].mxu0
  %v1997 = vadd.f32 0.0, %v1996
  %v1998 = vpop.f32.mrb[0].mxu0
  %1999 = vmatprep.mubr.f32.mxu0 0.0
  %2000 = vmatmul.mubr.f32.gmra.mrb[0].mxu0 %v1711
  %v2001 = vpop.f32.mrb[0].mxu0
  %v2002 = vadd.f32 0.0, %v2001
  %v2003 = vpop.f32.mrb[0].mxu0
  %2004 = vmatprep.mubr.f32.mxu0 0.0
  %2005 = vmatmul.mubr.f32.gmra.mrb[0].mxu0 %v1714
  %v2006 = vpop.f32.mrb[0].mxu0
  %v2007 = vadd.f32 0.0, %v2006
  %v2008 = vpop.f32.mrb[0].mxu0
  %2009 = vmatprep.mubr.f32.mxu0 0.0
  %2010 = vmatmul.mubr.f32.gmra.mrb[0].mxu0 %v1717
  %v2011 = vpop.f32.mrb[0].mxu0
  %v2012 = vadd.f32 0.0, %v2011
  %v2013 = vpop.f32.mrb[0].mxu0
  %2014 = vmatprep.mubr.f32.mxu0 0.0
  %2015 = vmatmul.mubr.f32.gmra.mrb[0].mxu0 %v1720
  %v2016 = vpop.f32.mrb[0].mxu0
  %v2017 = vadd.f32 0.0, %v2016
  %v2018 = vpop.f32.mrb[0].mxu0
  %2019 = vmatprep.mubr.f32.mxu0 0.0
  %2020 = vmatmul.mubr.f32.gmra.mrb[0].mxu0 %v1723
  %v2021 = vpop.f32.mrb[0].mxu0
  %v2022 = vadd.f32 0.0, %v2021
  %v2023 = vpop.f32.mrb[0].mxu0
  %2024 = vmatprep.mubr.f32.mxu0 0.0
  %2025 = vmatmul.mubr.f32.gmra.mrb[0].mxu0 %v1726
  %v2026 = vpop.f32.mrb[0].mxu0
  %v2027 = vadd.f32 0.0, %v2026
  %v2028 = vpop.f32.mrb[0].mxu0
  %2029 = vmatprep.mubr.f32.mxu0 0.0
  %2030 = vmatmul.mubr.f32.gmra.mrb[0].mxu0 %v1729
  %v2031 = vpop.f32.mrb[0].mxu0
  %v2032 = vadd.f32 0.0, %v2031
  %v2033 = vpop.f32.mrb[0].mxu0
  %2034 = vmatprep.mubr.f32.mxu0 0.0
  %2035 = vmatmul.mubr.f32.gmra.mrb[0].mxu0 %v1732
  %v2036 = vpop.f32.mrb[0].mxu0
  %v2037 = vadd.f32 0.0, %v2036
  %v2038 = vpop.f32.mrb[0].mxu0
  %2039 = vmatprep.mubr.f32.mxu0 0.0
  %2040 = vmatmul.mubr.f32.gmra.mrb[0].mxu0 %v1735
  %v2041 = vpop.f32.mrb[0].mxu0
  %v2042 = vadd.f32 0.0, %v2041
  %v2043 = vpop.f32.mrb[0].mxu0
  %2044 = vmatprep.mubr.f32.mxu0 0.0
  %2045 = vmatmul.mubr.f32.gmra.mrb[0].mxu0 %v1738
  %v2046 = vpop.f32.mrb[0].mxu0
  %v2047 = vadd.f32 0.0, %v2046
  %v2048 = vpop.f32.mrb[0].mxu0
  %2049 = vdwg.mxu0
  %v2050 = vmax.f32 %v286, %v793
  %v2051 = vmax.f32 %v291, %v798
  %v2052 = vmax.f32 %v296, %v803
  %v2053 = vmax.f32 %v301, %v808
  %v2054 = vmax.f32 %v306, %v813
  %v2055 = vmax.f32 %v311, %v818
  %v2056 = vmax.f32 %v316, %v823
  %v2057 = vmax.f32 %v321, %v828
  %v2058 = vmax.f32 %v326, %v833
  %v2059 = vmax.f32 %v331, %v838
  %v2060 = vmax.f32 %v336, %v843
  %v2061 = vmax.f32 %v341, %v848
  %v2062 = vmax.f32 %v346, %v853
  %v2063 = vmax.f32 %v351, %v858
  %v2064 = vmax.f32 %v356, %v863
  %v2065 = vmax.f32 %v361, %v868
  %v2066 = vmax.f32 %v366, %v873
  %v2067 = vmax.f32 %v371, %v878
  %v2068 = vmax.f32 %v376, %v883
  %v2069 = vmax.f32 %v381, %v888
  %v2070 = vmax.f32 %v386, %v893
  %v2071 = vmax.f32 %v391, %v898
  %v2072 = vmax.f32 %v396, %v903
  %v2073 = vmax.f32 %v401, %v908
  %v2074 = vmax.f32 %v406, %v913
  %v2075 = vmax.f32 %v411, %v918
  %v2076 = vmax.f32 %v416, %v923
  %v2077 = vmax.f32 %v421, %v928
  %v2078 = vmax.f32 %v426, %v933
  %v2079 = vmax.f32 %v431, %v938
  %v2080 = vmax.f32 %v436, %v943
  %v2081 = vmax.f32 %v441, %v948
  %v2082 = vmax.f32 %v446, %v953
  %v2083 = vmax.f32 %v451, %v958
  %v2084 = vmax.f32 %v456, %v963
  %v2085 = vmax.f32 %v461, %v968
  %v2086 = vmax.f32 %v466, %v973
  %v2087 = vmax.f32 %v471, %v978
  %v2088 = vmax.f32 %v476, %v983
  %v2089 = vmax.f32 %v481, %v988
  %v2090 = vmax.f32 %v486, %v993
  %v2091 = vmax.f32 %v491, %v998
  %v2092 = vmax.f32 %v496, %v1003
  %v2093 = vmax.f32 %v501, %v1008
  %v2094 = vmax.f32 %v506, %v1013
  %v2095 = vmax.f32 %v511, %v1018
  %v2096 = vmax.f32 %v516, %v1023
  %v2097 = vmax.f32 %v521, %v1028
  %v2098 = vmax.f32 %v526, %v1033
  %v2099 = vmax.f32 %v1300, %v1807
  %v2100 = vmax.f32 %v1305, %v1812
  %v2101 = vmax.f32 %v1310, %v1817
  %v2102 = vmax.f32 %v1315, %v1822
  %v2103 = vmax.f32 %v1320, %v1827
  %v2104 = vmax.f32 %v1325, %v1832
  %v2105 = vmax.f32 %v1330, %v1837
  %v2106 = vmax.f32 %v1335, %v1842
  %v2107 = vmax.f32 %v1340, %v1847
  %v2108 = vmax.f32 %v1345, %v1852
  %v2109 = vmax.f32 %v1350, %v1857
  %v2110 = vmax.f32 %v1355, %v1862
  %v2111 = vmax.f32 %v1360, %v1867
  %v2112 = vmax.f32 %v1365, %v1872
  %v2113 = vmax.f32 %v1370, %v1877
  %v2114 = vmax.f32 %v1375, %v1882
  %v2115 = vmax.f32 %v1380, %v1887
  %v2116 = vmax.f32 %v1385, %v1892
  %v2117 = vmax.f32 %v1390, %v1897
  %v2118 = vmax.f32 %v1395, %v1902
  %v2119 = vmax.f32 %v1400, %v1907
  %v2120 = vmax.f32 %v1405, %v1912
  %v2121 = vmax.f32 %v1410, %v1917
  %v2122 = vmax.f32 %v1415, %v1922
  %v2123 = vmax.f32 %v1420, %v1927
  %v2124 = vmax.f32 %v1425, %v1932
  %v2125 = vmax.f32 %v1430, %v1937
  %v2126 = vmax.f32 %v1435, %v1942
  %v2127 = vmax.f32 %v1440, %v1947
  %v2128 = vmax.f32 %v1445, %v1952
  %v2129 = vmax.f32 %v1450, %v1957
  %v2130 = vmax.f32 %v1455, %v1962
  %v2131 = vmax.f32 %v1460, %v1967
  %v2132 = vmax.f32 %v1465, %v1972
  %v2133 = vmax.f32 %v1470, %v1977
  %v2134 = vmax.f32 %v1475, %v1982
  %v2135 = vmax.f32 %v1480, %v1987
  %v2136 = vmax.f32 %v1485, %v1992
  %v2137 = vmax.f32 %v1490, %v1997
  %v2138 = vmax.f32 %v1495, %v2002
  %v2139 = vmax.f32 %v1500, %v2007
  %v2140 = vmax.f32 %v1505, %v2012
  %v2141 = vmax.f32 %v1510, %v2017
  %v2142 = vmax.f32 %v1515, %v2022
  %v2143 = vmax.f32 %v1520, %v2027
  %v2144 = vmax.f32 %v1525, %v2032
  %v2145 = vmax.f32 %v1530, %v2037
  %v2146 = vmax.f32 %v1535, %v2042
  %v2147 = vmax.f32 %v1540, %v2047
  %v2148 = vmax.f32 %v2050, %v2099
  %v2149 = vmax.f32 %v2051, %v2100
  %v2150 = vmax.f32 %v2052, %v2101
  %v2151 = vmax.f32 %v2053, %v2102
  %v2152 = vmax.f32 %v2054, %v2103
  %v2153 = vmax.f32 %v2055, %v2104
  %v2154 = vmax.f32 %v2056, %v2105
  %v2155 = vmax.f32 %v2057, %v2106
  %v2156 = vmax.f32 %v2058, %v2107
  %v2157 = vmax.f32 %v2059, %v2108
  %v2158 = vmax.f32 %v2060, %v2109
  %v2159 = vmax.f32 %v2061, %v2110
  %v2160 = vmax.f32 %v2062, %v2111
  %v2161 = vmax.f32 %v2063, %v2112
  %v2162 = vmax.f32 %v2064, %v2113
  %v2163 = vmax.f32 %v2065, %v2114
  %v2164 = vmax.f32 %v2066, %v2115
  %v2165 = vmax.f32 %v2067, %v2116
  %v2166 = vmax.f32 %v2068, %v2117
  %v2167 = vmax.f32 %v2069, %v2118
  %v2168 = vmax.f32 %v2070, %v2119
  %v2169 = vmax.f32 %v2071, %v2120
  %v2170 = vmax.f32 %v2072, %v2121
  %v2171 = vmax.f32 %v2073, %v2122
  %v2172 = vmax.f32 %v2074, %v2123
  %v2173 = vmax.f32 %v2075, %v2124
  %v2174 = vmax.f32 %v2076, %v2125
  %v2175 = vmax.f32 %v2077, %v2126
  %v2176 = vmax.f32 %v2078, %v2127
  %v2177 = vmax.f32 %v2079, %v2128
  %v2178 = vmax.f32 %v2080, %v2129
  %v2179 = vmax.f32 %v2081, %v2130
  %v2180 = vmax.f32 %v2082, %v2131
  %v2181 = vmax.f32 %v2083, %v2132
  %v2182 = vmax.f32 %v2084, %v2133
  %v2183 = vmax.f32 %v2085, %v2134
  %v2184 = vmax.f32 %v2086, %v2135
  %v2185 = vmax.f32 %v2087, %v2136
  %v2186 = vmax.f32 %v2088, %v2137
  %v2187 = vmax.f32 %v2089, %v2138
  %v2188 = vmax.f32 %v2090, %v2139
  %v2189 = vmax.f32 %v2091, %v2140
  %v2190 = vmax.f32 %v2092, %v2141
  %v2191 = vmax.f32 %v2093, %v2142
  %v2192 = vmax.f32 %v2094, %v2143
  %v2193 = vmax.f32 %v2095, %v2144
  %v2194 = vmax.f32 %v2096, %v2145
  %v2195 = vmax.f32 %v2097, %v2146
  %v2196 = vmax.f32 %v2098, %v2147
  %v2197 = vld [vmem:[%s2] sm:$0x1]
  %v2199 = vlaneseq
  %v2200 = vshrl.u32 %v2199, 7
  %v2201 = vsub.s32 0, %v2200
  %v2202 = vrot.slane %v2197, %v2201
  %v2204 = vadd.f32 %v2148, %v2202
  %v2205 = vadd.f32 %v2149, %v2202
  %v2206 = vadd.f32 %v2150, %v2202
  %v2207 = vadd.f32 %v2151, %v2202
  %v2208 = vadd.f32 %v2152, %v2202
  %v2209 = vadd.f32 %v2153, %v2202
  %v2210 = vadd.f32 %v2154, %v2202
  %v2211 = vadd.f32 %v2155, %v2202
  %v2212 = vadd.f32 %v2156, %v2202
  %v2213 = vadd.f32 %v2157, %v2202
  %v2214 = vadd.f32 %v2158, %v2202
  %v2215 = vadd.f32 %v2159, %v2202
  %v2216 = vadd.f32 %v2160, %v2202
  %v2217 = vadd.f32 %v2161, %v2202
  %v2218 = vadd.f32 %v2162, %v2202
  %v2219 = vadd.f32 %v2163, %v2202
  %v2220 = vadd.f32 %v2164, %v2202
  %v2221 = vadd.f32 %v2165, %v2202
  %v2222 = vadd.f32 %v2166, %v2202
  %v2223 = vadd.f32 %v2167, %v2202
  %v2224 = vadd.f32 %v2168, %v2202
  %v2225 = vadd.f32 %v2169, %v2202
  %v2226 = vadd.f32 %v2170, %v2202
  %v2227 = vadd.f32 %v2171, %v2202
  %v2228 = vadd.f32 %v2172, %v2202
  %v2229 = vadd.f32 %v2173, %v2202
  %v2230 = vadd.f32 %v2174, %v2202
  %v2231 = vadd.f32 %v2175, %v2202
  %v2232 = vadd.f32 %v2176, %v2202
  %v2233 = vadd.f32 %v2177, %v2202
  %v2234 = vadd.f32 %v2178, %v2202
  %v2235 = vadd.f32 %v2179, %v2202
  %v2236 = vadd.f32 %v2180, %v2202
  %v2237 = vadd.f32 %v2181, %v2202
  %v2238 = vadd.f32 %v2182, %v2202
  %v2239 = vadd.f32 %v2183, %v2202
  %v2240 = vadd.f32 %v2184, %v2202
  %v2241 = vadd.f32 %v2185, %v2202
  %v2242 = vadd.f32 %v2186, %v2202
  %v2243 = vadd.f32 %v2187, %v2202
  %v2244 = vadd.f32 %v2188, %v2202
  %v2245 = vadd.f32 %v2189, %v2202
  %v2246 = vadd.f32 %v2190, %v2202
  %v2247 = vadd.f32 %v2191, %v2202
  %v2248 = vadd.f32 %v2192, %v2202
  %v2249 = vadd.f32 %v2193, %v2202
  %v2250 = vadd.f32 %v2194, %v2202
  %v2251 = vadd.f32 %v2195, %v2202
  %v2252 = vadd.f32 %v2196, %v2202
  %v2253 = vmax.f32 %v2204, 0.0
  %v2254 = vmax.f32 %v2205, 0.0
  %v2255 = vmax.f32 %v2206, 0.0
  %v2256 = vmax.f32 %v2207, 0.0
  %v2257 = vmax.f32 %v2208, 0.0
  %v2258 = vmax.f32 %v2209, 0.0
  %v2259 = vmax.f32 %v2210, 0.0
  %v2260 = vmax.f32 %v2211, 0.0
  %v2261 = vmax.f32 %v2212, 0.0
  %v2262 = vmax.f32 %v2213, 0.0
  %v2263 = vmax.f32 %v2214, 0.0
  %v2264 = vmax.f32 %v2215, 0.0
  %v2265 = vmax.f32 %v2216, 0.0
  %v2266 = vmax.f32 %v2217, 0.0
  %v2267 = vmax.f32 %v2218, 0.0
  %v2268 = vmax.f32 %v2219, 0.0
  %v2269 = vmax.f32 %v2220, 0.0
  %v2270 = vmax.f32 %v2221, 0.0
  %v2271 = vmax.f32 %v2222, 0.0
  %v2272 = vmax.f32 %v2223, 0.0
  %v2273 = vmax.f32 %v2224, 0.0
  %v2274 = vmax.f32 %v2225, 0.0
  %v2275 = vmax.f32 %v2226, 0.0
  %v2276 = vmax.f32 %v2227, 0.0
  %v2277 = vmax.f32 %v2228, 0.0
  %v2278 = vmax.f32 %v2229, 0.0
  %v2279 = vmax.f32 %v2230, 0.0
  %v2280 = vmax.f32 %v2231, 0.0
  %v2281 = vmax.f32 %v2232, 0.0
  %v2282 = vmax.f32 %v2233, 0.0
  %v2283 = vmax.f32 %v2234, 0.0
  %v2284 = vmax.f32 %v2235, 0.0
  %v2285 = vmax.f32 %v2236, 0.0
  %v2286 = vmax.f32 %v2237, 0.0
  %v2287 = vmax.f32 %v2238, 0.0
  %v2288 = vmax.f32 %v2239, 0.0
  %v2289 = vmax.f32 %v2240, 0.0
  %v2290 = vmax.f32 %v2241, 0.0
  %v2291 = vmax.f32 %v2242, 0.0
  %v2292 = vmax.f32 %v2243, 0.0
  %v2293 = vmax.f32 %v2244, 0.0
  %v2294 = vmax.f32 %v2245, 0.0
  %v2295 = vmax.f32 %v2246, 0.0
  %v2296 = vmax.f32 %v2247, 0.0
  %v2297 = vmax.f32 %v2248, 0.0
  %v2298 = vmax.f32 %v2249, 0.0
  %v2299 = vmax.f32 %v2250, 0.0
  %v2300 = vmax.f32 %v2251, 0.0
  %v2301 = vmax.f32 %v2252, 0.0
  %vm2302 = vcmask 261120
  %2303 = vst.msk [vmem:[%s3] sm:$0xff] %vm2302, %v2253
  %2304 = vst.msk [vmem:[%s3 + $0x8] sm:$0xff] %vm2302, %v2254
  %2305 = vst.msk [vmem:[%s3 + $0x10] sm:$0xff] %vm2302, %v2255
  %2306 = vst.msk [vmem:[%s3 + $0x18] sm:$0xff] %vm2302, %v2256
  %2307 = vst.msk [vmem:[%s3 + $0x20] sm:$0xff] %vm2302, %v2257
  %2308 = vst.msk [vmem:[%s3 + $0x28] sm:$0xff] %vm2302, %v2258
  %2309 = vst.msk [vmem:[%s3 + $0x30] sm:$0xff] %vm2302, %v2259
  %2310 = vst.msk [vmem:[%s3 + $0x38] sm:$0xff] %vm2302, %v2260
  %2311 = vst.msk [vmem:[%s3 + $0x40] sm:$0xff] %vm2302, %v2261
  %2312 = vst.msk [vmem:[%s3 + $0x48] sm:$0xff] %vm2302, %v2262
  %2313 = vst.msk [vmem:[%s3 + $0x50] sm:$0xff] %vm2302, %v2263
  %2314 = vst.msk [vmem:[%s3 + $0x58] sm:$0xff] %vm2302, %v2264
  %2315 = vst.msk [vmem:[%s3 + $0x60] sm:$0xff] %vm2302, %v2265
  %2316 = vst.msk [vmem:[%s3 + $0x68] sm:$0xff] %vm2302, %v2266
  %2317 = vst.msk [vmem:[%s3 + $0x70] sm:$0xff] %vm2302, %v2267
  %2318 = vst.msk [vmem:[%s3 + $0x78] sm:$0xff] %vm2302, %v2268
  %2319 = vst.msk [vmem:[%s3 + $0x80] sm:$0xff] %vm2302, %v2269
  %2320 = vst.msk [vmem:[%s3 + $0x88] sm:$0xff] %vm2302, %v2270
  %2321 = vst.msk [vmem:[%s3 + $0x90] sm:$0xff] %vm2302, %v2271
  %2322 = vst.msk [vmem:[%s3 + $0x98] sm:$0xff] %vm2302, %v2272
  %2323 = vst.msk [vmem:[%s3 + $0xa0] sm:$0xff] %vm2302, %v2273
  %2324 = vst.msk [vmem:[%s3 + $0xa8] sm:$0xff] %vm2302, %v2274
  %2325 = vst.msk [vmem:[%s3 + $0xb0] sm:$0xff] %vm2302, %v2275
  %2326 = vst.msk [vmem:[%s3 + $0xb8] sm:$0xff] %vm2302, %v2276
  %2327 = vst.msk [vmem:[%s3 + $0xc0] sm:$0xff] %vm2302, %v2277
  %2328 = vst.msk [vmem:[%s3 + $0xc8] sm:$0xff] %vm2302, %v2278
  %2329 = vst.msk [vmem:[%s3 + $0xd0] sm:$0xff] %vm2302, %v2279
  %2330 = vst.msk [vmem:[%s3 + $0xd8] sm:$0xff] %vm2302, %v2280
  %2331 = vst.msk [vmem:[%s3 + $0xe0] sm:$0xff] %vm2302, %v2281
  %2332 = vst.msk [vmem:[%s3 + $0xe8] sm:$0xff] %vm2302, %v2282
  %2333 = vst.msk [vmem:[%s3 + $0xf0] sm:$0xff] %vm2302, %v2283
  %2334 = vst.msk [vmem:[%s3 + $0xf8] sm:$0xff] %vm2302, %v2284
  %2335 = vst.msk [vmem:[%s3 + $0x100] sm:$0xff] %vm2302, %v2285
  %2336 = vst.msk [vmem:[%s3 + $0x108] sm:$0xff] %vm2302, %v2286
  %2337 = vst.msk [vmem:[%s3 + $0x110] sm:$0xff] %vm2302, %v2287
  %2338 = vst.msk [vmem:[%s3 + $0x118] sm:$0xff] %vm2302, %v2288
  %2339 = vst.msk [vmem:[%s3 + $0x120] sm:$0xff] %vm2302, %v2289
  %2340 = vst.msk [vmem:[%s3 + $0x128] sm:$0xff] %vm2302, %v2290
  %2341 = vst.msk [vmem:[%s3 + $0x130] sm:$0xff] %vm2302, %v2291
  %2342 = vst.msk [vmem:[%s3 + $0x138] sm:$0xff] %vm2302, %v2292
  %2343 = vst.msk [vmem:[%s3 + $0x140] sm:$0xff] %vm2302, %v2293
  %2344 = vst.msk [vmem:[%s3 + $0x148] sm:$0xff] %vm2302, %v2294
  %2345 = vst.msk [vmem:[%s3 + $0x150] sm:$0xff] %vm2302, %v2295
  %2346 = vst.msk [vmem:[%s3 + $0x158] sm:$0xff] %vm2302, %v2296
  %2347 = vst.msk [vmem:[%s3 + $0x160] sm:$0xff] %vm2302, %v2297
  %2348 = vst.msk [vmem:[%s3 + $0x168] sm:$0xff] %vm2302, %v2298
  %2349 = vst.msk [vmem:[%s3 + $0x170] sm:$0xff] %vm2302, %v2299
  %2350 = vst.msk [vmem:[%s3 + $0x178] sm:$0xff] %vm2302, %v2300
  %2351 = vst.msk [vmem:[%s3 + $0x180] sm:$0xff] %vm2302, %v2301
  // Predicated region
  $region14: #{convnet_s_forward.3} parent=0 // pred_check
    _
  $region15: #{convnet_s_forward.3} parent=0 // pred_check_branch
    %2353 = sbr.rel (0) target = $region17
  $region16: #{convnet_s_forward.3} parent=0 // pred_region
    _
  $region17: #{convnet_s_forward.3} parent=0 // pred_fallthru
    _
  // Predicated region
  $region18: #{convnet_s_forward.3} parent=0 // pred_check
    _
  $region19: #{convnet_s_forward.3} parent=0 // pred_check_branch
    %2355 = sbr.rel (0) target = $region21
  $region20: #{convnet_s_forward.3} parent=0 // pred_region
    _
  $region21: #{convnet_s_forward.3} parent=0 // pred_fallthru
    _

// kernel: convnet_s_forward.4
$region0: #{convnet_s_forward.4}
  #allocation0 [shape = 'u32[]', space=smem, size = 0x4, offset = 0x4, fixed_abs, tag = 'smem constant byte address 0x4 - core index']
  #allocation1 [shape = 'u32[144,128]{1,0:T(1,128)}', space=vmem, size = 0x12000, scoped, tag = 'internal scratch']
  %s0 = inlined_call_operand.vmem [shape: f32[4,98,800], index: 0, kind: input, shape index: {}]
  %s1 = inlined_call_operand.vmem [shape: f32[800,64], index: 1, kind: input, shape index: {}]
  %s2 = inlined_call_operand.vmem [shape: f32[1,64], index: 2, kind: input, shape index: {}]
  %s3 = inlined_call_operand.vmem [shape: f32[98,64], index: 3, kind: output, shape index: {}]
  %s4 = sld [smem:[#allocation0]]
  $region22: #{convnet_s_forward.4} parent=0
    _
  %s6 = ssub.s32 1, %s4
  %s7 = scalar_select 0, %s6, %s4
  // Predicated region
  $region2: #{convnet_s_forward.4} parent=0 // pred_check
    _
  $region3: #{convnet_s_forward.4} parent=0 // pred_check_branch
    %9 = sbr.rel (0) target = $region5
  $region4: #{convnet_s_forward.4} parent=0 // pred_region
    _
  $region5: #{convnet_s_forward.4} parent=0 // pred_fallthru
    _
  // Predicated region
  $region6: #{convnet_s_forward.4} parent=0 // pred_check
    _
  $region7: #{convnet_s_forward.4} parent=0 // pred_check_branch
    %11 = sbr.rel (0) target = $region9
  $region8: #{convnet_s_forward.4} parent=0 // pred_region
    _
  $region9: #{convnet_s_forward.4} parent=0 // pred_fallthru
    _
  // Predicated region
  $region10: #{convnet_s_forward.4} parent=0 // pred_check
    _
  $region11: #{convnet_s_forward.4} parent=0 // pred_check_branch
    %13 = sbr.rel (0) target = $region13
  $region12: #{convnet_s_forward.4} parent=0 // pred_region
    _
  $region13: #{convnet_s_forward.4} parent=0 // pred_fallthru
    _
  %v14 = vld [vmem:[%s1] sm:$0xff]
  %v15 = vld [vmem:[%s1 + $0x8] sm:$0xff]
  %v16 = vld [vmem:[%s1 + $0x10] sm:$0xff]
  %v17 = vld [vmem:[%s1 + $0x18] sm:$0xff]
  %v18 = vld [vmem:[%s1 + $0x20] sm:$0xff]
  %v19 = vld [vmem:[%s1 + $0x28] sm:$0xff]
  %v20 = vld [vmem:[%s1 + $0x30] sm:$0xff]
  %v21 = vld [vmem:[%s1 + $0x38] sm:$0xff]
  %v22 = vld [vmem:[%s1 + $0x40] sm:$0xff]
  %v23 = vld [vmem:[%s1 + $0x48] sm:$0xff]
  %v24 = vld [vmem:[%s1 + $0x50] sm:$0xff]
  %v25 = vld [vmem:[%s1 + $0x58] sm:$0xff]
  %v26 = vld [vmem:[%s1 + $0x60] sm:$0xff]
  %v27 = vld [vmem:[%s1 + $0x68] sm:$0xff]
  %v28 = vld [vmem:[%s1 + $0x70] sm:$0xff]
  %v29 = vld [vmem:[%s1 + $0x78] sm:$0xff]
  %v30 = vld [vmem:[%s1 + $0x80] sm:$0xff]
  %v31 = vld [vmem:[%s1 + $0x88] sm:$0xff]
  %v32 = vld [vmem:[%s1 + $0x90] sm:$0xff]
  %v33 = vld [vmem:[%s1 + $0x98] sm:$0xff]
  %v34 = vld [vmem:[%s1 + $0xa0] sm:$0xff]
  %v35 = vld [vmem:[%s1 + $0xa8] sm:$0xff]
  %v36 = vld [vmem:[%s1 + $0xb0] sm:$0xff]
  %v37 = vld [vmem:[%s1 + $0xb8] sm:$0xff]
  %v38 = vld [vmem:[%s1 + $0xc0] sm:$0xff]
  %v39 = vld [vmem:[%s1 + $0xc8] sm:$0xff]
  %v40 = vld [vmem:[%s1 + $0xd0] sm:$0xff]
  %v41 = vld [vmem:[%s1 + $0xd8] sm:$0xff]
  %v42 = vld [vmem:[%s1 + $0xe0] sm:$0xff]
  %v43 = vld [vmem:[%s1 + $0xe8] sm:$0xff]
  %v44 = vld [vmem:[%s1 + $0xf0] sm:$0xff]
  %v45 = vld [vmem:[%s1 + $0xf8] sm:$0xff]
  %v46 = vld [vmem:[%s1 + $0x100] sm:$0xff]
  %v47 = vld [vmem:[%s1 + $0x108] sm:$0xff]
  %v48 = vld [vmem:[%s1 + $0x110] sm:$0xff]
  %v49 = vld [vmem:[%s1 + $0x118] sm:$0xff]
  %v50 = vld [vmem:[%s1 + $0x120] sm:$0xff]
  %v51 = vld [vmem:[%s1 + $0x128] sm:$0xff]
  %v52 = vld [vmem:[%s1 + $0x130] sm:$0xff]
  %v53 = vld [vmem:[%s1 + $0x138] sm:$0xff]
  %v54 = vld [vmem:[%s1 + $0x140] sm:$0xff]
  %v55 = vld [vmem:[%s1 + $0x148] sm:$0xff]
  %v56 = vld [vmem:[%s1 + $0x150] sm:$0xff]
  %v57 = vld [vmem:[%s1 + $0x158] sm:$0xff]
  %v58 = vld [vmem:[%s1 + $0x160] sm:$0xff]
  %v59 = vld [vmem:[%s1 + $0x168] sm:$0xff]
  %v60 = vld [vmem:[%s1 + $0x170] sm:$0xff]
  %v61 = vld [vmem:[%s1 + $0x178] sm:$0xff]
  %v62 = vld [vmem:[%s1 + $0x180] sm:$0xff]
  %v63 = vld [vmem:[%s1 + $0x188] sm:$0xff]
  %v64 = vld [vmem:[%s1 + $0x190] sm:$0xff]
  %v65 = vld [vmem:[%s1 + $0x198] sm:$0xff]
  %v66 = vld [vmem:[%s1 + $0x1a0] sm:$0xff]
  %v67 = vld [vmem:[%s1 + $0x1a8] sm:$0xff]
  %v68 = vld [vmem:[%s1 + $0x1b0] sm:$0xff]
  %v69 = vld [vmem:[%s1 + $0x1b8] sm:$0xff]
  %v70 = vld [vmem:[%s1 + $0x1c0] sm:$0xff]
  %v71 = vld [vmem:[%s1 + $0x1c8] sm:$0xff]
  %v72 = vld [vmem:[%s1 + $0x1d0] sm:$0xff]
  %v73 = vld [vmem:[%s1 + $0x1d8] sm:$0xff]
  %v74 = vld [vmem:[%s1 + $0x1e0] sm:$0xff]
  %v75 = vld [vmem:[%s1 + $0x1e8] sm:$0xff]
  %v76 = vld [vmem:[%s1 + $0x1f0] sm:$0xff]
  %v77 = vld [vmem:[%s1 + $0x1f8] sm:$0xff]
  %v78 = vld [vmem:[%s1 + $0x200] sm:$0xff]
  %v79 = vld [vmem:[%s1 + $0x208] sm:$0xff]
  %v80 = vld [vmem:[%s1 + $0x210] sm:$0xff]
  %v81 = vld [vmem:[%s1 + $0x218] sm:$0xff]
  %v82 = vld [vmem:[%s1 + $0x220] sm:$0xff]
  %v83 = vld [vmem:[%s1 + $0x228] sm:$0xff]
  %v84 = vld [vmem:[%s1 + $0x230] sm:$0xff]
  %v85 = vld [vmem:[%s1 + $0x238] sm:$0xff]
  %v86 = vld [vmem:[%s1 + $0x240] sm:$0xff]
  %v87 = vld [vmem:[%s1 + $0x248] sm:$0xff]
  %v88 = vld [vmem:[%s1 + $0x250] sm:$0xff]
  %v89 = vld [vmem:[%s1 + $0x258] sm:$0xff]
  %v90 = vld [vmem:[%s1 + $0x260] sm:$0xff]
  %v91 = vld [vmem:[%s1 + $0x268] sm:$0xff]
  %v92 = vld [vmem:[%s1 + $0x270] sm:$0xff]
  %v93 = vld [vmem:[%s1 + $0x278] sm:$0xff]
  %v94 = vld [vmem:[%s1 + $0x280] sm:$0xff]
  %v95 = vld [vmem:[%s1 + $0x288] sm:$0xff]
  %v96 = vld [vmem:[%s1 + $0x290] sm:$0xff]
  %v97 = vld [vmem:[%s1 + $0x298] sm:$0xff]
  %v98 = vld [vmem:[%s1 + $0x2a0] sm:$0xff]
  %v99 = vld [vmem:[%s1 + $0x2a8] sm:$0xff]
  %v100 = vld [vmem:[%s1 + $0x2b0] sm:$0xff]
  %v101 = vld [vmem:[%s1 + $0x2b8] sm:$0xff]
  %v102 = vld [vmem:[%s1 + $0x2c0] sm:$0xff]
  %v103 = vld [vmem:[%s1 + $0x2c8] sm:$0xff]
  %v104 = vld [vmem:[%s1 + $0x2d0] sm:$0xff]
  %v105 = vld [vmem:[%s1 + $0x2d8] sm:$0xff]
  %v106 = vld [vmem:[%s1 + $0x2e0] sm:$0xff]
  %v107 = vld [vmem:[%s1 + $0x2e8] sm:$0xff]
  %v108 = vld [vmem:[%s1 + $0x2f0] sm:$0xff]
  %v109 = vld [vmem:[%s1 + $0x2f8] sm:$0xff]
  %v110 = vld [vmem:[%s1 + $0x300] sm:$0xff]
  %v111 = vld [vmem:[%s1 + $0x308] sm:$0xff]
  %v112 = vld [vmem:[%s1 + $0x310] sm:$0xff]
  %v113 = vld [vmem:[%s1 + $0x318] sm:$0xff]
  %v114 = vld [vmem:[%s0] sm:$0xff]
  %v115 = vld [vmem:[%s0 + $0x8] sm:$0xff]
  %v116 = vld [vmem:[%s0 + $0x10] sm:$0xff]
  %v117 = vld [vmem:[%s0 + $0x18] sm:$0xff]
  %v118 = vld [vmem:[%s0 + $0x20] sm:$0xff]
  %v119 = vld [vmem:[%s0 + $0x28] sm:$0xff]
  %v120 = vld [vmem:[%s0 + $0x30] sm:$0xff]
  %v121 = vld [vmem:[%s0 + $0x38] sm:$0xff]
  %v122 = vld [vmem:[%s0 + $0x40] sm:$0xff]
  %v123 = vld [vmem:[%s0 + $0x48] sm:$0xff]
  %v124 = vld [vmem:[%s0 + $0x50] sm:$0xff]
  %v125 = vld [vmem:[%s0 + $0x58] sm:$0xff]
  %v126 = vld [vmem:[%s0 + $0x60] sm:$0xff]
  %v127 = vld [vmem:[%s0 + $0x68] sm:$0xff]
  %v128 = vld [vmem:[%s0 + $0x70] sm:$0xff]
  %v129 = vld [vmem:[%s0 + $0x78] sm:$0xff]
  %v130 = vld [vmem:[%s0 + $0x80] sm:$0xff]
  %v131 = vld [vmem:[%s0 + $0x88] sm:$0xff]
  %v132 = vld [vmem:[%s0 + $0x90] sm:$0xff]
  %v133 = vld [vmem:[%s0 + $0x98] sm:$0xff]
  %v134 = vld [vmem:[%s0 + $0xa0] sm:$0xff]
  %v135 = vld [vmem:[%s0 + $0xa8] sm:$0xff]
  %v136 = vld [vmem:[%s0 + $0xb0] sm:$0xff]
  %v137 = vld [vmem:[%s0 + $0xb8] sm:$0xff]
  %v138 = vld [vmem:[%s0 + $0xc0] sm:$0xff]
  %v139 = vld [vmem:[%s0 + $0xc8] sm:$0xff]
  %v140 = vld [vmem:[%s0 + $0xd0] sm:$0xff]
  %v141 = vld [vmem:[%s0 + $0xd8] sm:$0xff]
  %v142 = vld [vmem:[%s0 + $0xe0] sm:$0xff]
  %v143 = vld [vmem:[%s0 + $0xe8] sm:$0xff]
  %v144 = vld [vmem:[%s0 + $0xf0] sm:$0xff]
  %v145 = vld [vmem:[%s0 + $0xf8] sm:$0xff]
  %v146 = vld [vmem:[%s0 + $0x100] sm:$0xff]
  %v147 = vld [vmem:[%s0 + $0x108] sm:$0xff]
  %v148 = vld [vmem:[%s0 + $0x110] sm:$0xff]
  %v149 = vld [vmem:[%s0 + $0x118] sm:$0xff]
  %v150 = vld [vmem:[%s0 + $0x120] sm:$0xff]
  %v151 = vld [vmem:[%s0 + $0x128] sm:$0xff]
  %v152 = vld [vmem:[%s0 + $0x130] sm:$0xff]
  %v153 = vld [vmem:[%s0 + $0x138] sm:$0xff]
  %v154 = vld [vmem:[%s0 + $0x140] sm:$0xff]
  %v155 = vld [vmem:[%s0 + $0x148] sm:$0xff]
  %v156 = vld [vmem:[%s0 + $0x150] sm:$0xff]
  %v157 = vld [vmem:[%s0 + $0x158] sm:$0xff]
  %v158 = vld [vmem:[%s0 + $0x160] sm:$0xff]
  %v159 = vld [vmem:[%s0 + $0x168] sm:$0xff]
  %v160 = vld [vmem:[%s0 + $0x170] sm:$0xff]
  %v161 = vld [vmem:[%s0 + $0x178] sm:$0xff]
  %v162 = vld [vmem:[%s0 + $0x180] sm:$0xff]
  %v163 = vld [vmem:[%s0 + $0x188] sm:$0xff]
  %v164 = vld [vmem:[%s0 + $0x190] sm:$0xff]
  %v165 = vld [vmem:[%s0 + $0x198] sm:$0xff]
  %v166 = vld [vmem:[%s0 + $0x1a0] sm:$0xff]
  %v167 = vld [vmem:[%s0 + $0x1a8] sm:$0xff]
  %v168 = vld [vmem:[%s0 + $0x1b0] sm:$0xff]
  %v169 = vld [vmem:[%s0 + $0x1b8] sm:$0xff]
  %v170 = vld [vmem:[%s0 + $0x1c0] sm:$0xff]
  %v171 = vld [vmem:[%s0 + $0x1c8] sm:$0xff]
  %v172 = vld [vmem:[%s0 + $0x1d0] sm:$0xff]
  %v173 = vld [vmem:[%s0 + $0x1d8] sm:$0xff]
  %v174 = vld [vmem:[%s0 + $0x1e0] sm:$0xff]
  %v175 = vld [vmem:[%s0 + $0x1e8] sm:$0xff]
  %v176 = vld [vmem:[%s0 + $0x1f0] sm:$0xff]
  %v177 = vld [vmem:[%s0 + $0x1f8] sm:$0xff]
  %v178 = vld [vmem:[%s0 + $0x200] sm:$0xff]
  %v179 = vld [vmem:[%s0 + $0x208] sm:$0xff]
  %v180 = vld [vmem:[%s0 + $0x210] sm:$0xff]
  %v181 = vld [vmem:[%s0 + $0x218] sm:$0xff]
  %v182 = vld [vmem:[%s0 + $0x220] sm:$0xff]
  %v183 = vld [vmem:[%s0 + $0x228] sm:$0xff]
  %v184 = vld [vmem:[%s0 + $0x230] sm:$0xff]
  %v185 = vld [vmem:[%s0 + $0x238] sm:$0xff]
  %v186 = vld [vmem:[%s0 + $0x240] sm:$0xff]
  %v187 = vld [vmem:[%s0 + $0x248] sm:$0xff]
  %v188 = vld [vmem:[%s0 + $0x250] sm:$0xff]
  %v189 = vld [vmem:[%s0 + $0x258] sm:$0xff]
  %v190 = vld [vmem:[%s0 + $0x260] sm:$0xff]
  %v191 = vld [vmem:[%s0 + $0x268] sm:$0xff]
  %v192 = vld [vmem:[%s0 + $0x270] sm:$0xff]
  %v193 = vld [vmem:[%s0 + $0x278] sm:$0xff]
  %v194 = vld [vmem:[%s0 + $0x280] sm:$0xff]
  %v195 = vld [vmem:[%s0 + $0x288] sm:$0xff]
  %v196 = vld [vmem:[%s0 + $0x290] sm:$0xff]
  %v197 = vld [vmem:[%s0 + $0x298] sm:$0xff]
  %v198 = vld [vmem:[%s0 + $0x2a0] sm:$0x3]
  %v199 = vld [vmem:[%s0 + $0x2a8] sm:$0x3]
  %v200 = vld [vmem:[%s0 + $0x2b0] sm:$0x3]
  %v201 = vld [vmem:[%s0 + $0x2b8] sm:$0x3]
  %v202 = vld [vmem:[%s0 + $0x2c0] sm:$0x3]
  %v203 = vld [vmem:[%s0 + $0x2c8] sm:$0x3]
  %v204 = vld [vmem:[%s0 + $0x2d0] sm:$0x3]
  %vm205 = vcmask 261120
  %v207 = vsel %vm205, %v120, 0
  %v210 = vsel %vm205, %v127, 0
  %v213 = vsel %vm205, %v134, 0
  %v216 = vsel %vm205, %v141, 0
  %v219 = vsel %vm205, %v148, 0
  %v222 = vsel %vm205, %v155, 0
  %v225 = vsel %vm205, %v162, 0
  %v228 = vsel %vm205, %v169, 0
  %v231 = vsel %vm205, %v176, 0
  %v234 = vsel %vm205, %v183, 0
  %v237 = vsel %vm205, %v190, 0
  %v240 = vsel %vm205, %v197, 0
  %v243 = vsel %vm205, %v204, 0
  %245 = vmatprep.subr.mxu0 0.0
  %246 = vmatpush1.msra.mxu0 %v14
  %247 = vmatprep.subr.mxu0 0.0
  %248 = vmatpush1.msra.mxu0 %v15
  %249 = vmatprep.subr.mxu0 0.0
  %250 = vmatpush1.msra.mxu0 %v16
  %251 = vmatprep.subr.mxu0 0.0
  %252 = vmatpush1.msra.mxu0 %v17
  %253 = vmatprep.subr.mxu0 0.0
  %254 = vmatpush1.msra.mxu0 %v18
  %255 = vmatprep.subr.mxu0 0.0
  %256 = vmatpush1.msra.mxu0 %v19
  %257 = vmatprep.subr.mxu0 0.0
  %258 = vmatpush1.msra.mxu0 %v20
  %259 = vmatprep.subr.mxu0 0.0
  %260 = vmatpush1.msra.mxu0 %v21
  %261 = vmatprep.subr.mxu0 0.0
  %262 = vmatpush1.msra.mxu0 %v22
  %263 = vmatprep.subr.mxu0 0.0
  %264 = vmatpush1.msra.mxu0 %v23
  %265 = vmatprep.subr.mxu0 0.0
  %266 = vmatpush1.msra.mxu0 %v24
  %267 = vmatprep.subr.mxu0 0.0
  %268 = vmatpush1.msra.mxu0 %v25
  %269 = vmatprep.subr.mxu0 0.0
  %270 = vmatpush1.msra.mxu0 %v26
  %271 = vmatprep.subr.mxu0 0.0
  %272 = vmatpush1.msra.mxu0 %v27
  %273 = vmatprep.subr.mxu0 0.0
  %274 = vmatpush1.msra.mxu0 %v28
  %275 = vmatprep.subr.mxu0 0.0
  %276 = vmatpush1.msra.mxu0 %v29
  %277 = vmatprep.subr.mxu0 0.0
  %278 = vmatpush1.msra.mxu0 %v30
  %279 = vmatprep.subr.mxu0 0.0
  %280 = vmatpush1.msra.mxu0 %v31
  %281 = vmatprep.subr.mxu0 0.0
  %282 = vmatpush1.msra.mxu0 %v32
  %283 = vmatprep.subr.mxu0 0.0
  %284 = vmatpush1.msra.mxu0 %v33
  %285 = vmatprep.subr.mxu0 0.0
  %286 = vmatpush1.msra.mxu0 %v34
  %287 = vmatprep.subr.mxu0 0.0
  %288 = vmatpush1.msra.mxu0 %v35
  %289 = vmatprep.subr.mxu0 0.0
  %290 = vmatpush1.msra.mxu0 %v36
  %291 = vmatprep.subr.mxu0 0.0
  %292 = vmatpush1.msra.mxu0 %v37
  %293 = vmatprep.subr.mxu0 0.0
  %294 = vmatpush1.msra.mxu0 %v38
  %295 = vmatprep.subr.mxu0 0.0
  %296 = vmatpush1.msra.mxu0 %v39
  %297 = vmatprep.subr.mxu0 0.0
  %298 = vmatpush1.msra.mxu0 %v40
  %299 = vmatprep.subr.mxu0 0.0
  %300 = vmatpush1.msra.mxu0 %v41
  %301 = vmatprep.subr.mxu0 0.0
  %302 = vmatpush1.msra.mxu0 %v42
  %303 = vmatprep.subr.mxu0 0.0
  %304 = vmatpush1.msra.mxu0 %v43
  %305 = vmatprep.subr.mxu0 0.0
  %306 = vmatpush1.msra.mxu0 %v44
  %307 = vmatprep.subr.mxu0 0.0
  %308 = vmatpush1.msra.mxu0 %v45
  %309 = vmatprep.mubr.f32.mxu0 %v115
  %310 = vmatmul.mubr.f32.gmra.mrb[0].mxu0 %v114
  %v311 = vpop.f32.mrb[0].mxu0
  %v312 = vadd.f32 0.0, %v311
  %v313 = vpop.f32.mrb[0].mxu0
  %314 = vmatprep.mubr.f32.mxu0 %v122
  %315 = vmatmul.mubr.f32.gmra.mrb[0].mxu0 %v121
  %v316 = vpop.f32.mrb[0].mxu0
  %v317 = vadd.f32 0.0, %v316
  %v318 = vpop.f32.mrb[0].mxu0
  %319 = vmatprep.mubr.f32.mxu0 %v129
  %320 = vmatmul.mubr.f32.gmra.mrb[0].mxu0 %v128
  %v321 = vpop.f32.mrb[0].mxu0
  %v322 = vadd.f32 0.0, %v321
  %v323 = vpop.f32.mrb[0].mxu0
  %324 = vmatprep.mubr.f32.mxu0 %v136
  %325 = vmatmul.mubr.f32.gmra.mrb[0].mxu0 %v135
  %v326 = vpop.f32.mrb[0].mxu0
  %v327 = vadd.f32 0.0, %v326
  %v328 = vpop.f32.mrb[0].mxu0
  %329 = vmatprep.mubr.f32.mxu0 %v143
  %330 = vmatmul.mubr.f32.gmra.mrb[0].mxu0 %v142
  %v331 = vpop.f32.mrb[0].mxu0
  %v332 = vadd.f32 0.0, %v331
  %v333 = vpop.f32.mrb[0].mxu0
  %334 = vmatprep.mubr.f32.mxu0 %v150
  %335 = vmatmul.mubr.f32.gmra.mrb[0].mxu0 %v149
  %v336 = vpop.f32.mrb[0].mxu0
  %v337 = vadd.f32 0.0, %v336
  %v338 = vpop.f32.mrb[0].mxu0
  %339 = vmatprep.mubr.f32.mxu0 %v157
  %340 = vmatmul.mubr.f32.gmra.mrb[0].mxu0 %v156
  %v341 = vpop.f32.mrb[0].mxu0
  %v342 = vadd.f32 0.0, %v341
  %v343 = vpop.f32.mrb[0].mxu0
  %344 = vmatprep.mubr.f32.mxu0 %v164
  %345 = vmatmul.mubr.f32.gmra.mrb[0].mxu0 %v163
  %v346 = vpop.f32.mrb[0].mxu0
  %v347 = vadd.f32 0.0, %v346
  %v348 = vpop.f32.mrb[0].mxu0
  %349 = vmatprep.mubr.f32.mxu0 %v171
  %350 = vmatmul.mubr.f32.gmra.mrb[0].mxu0 %v170
  %v351 = vpop.f32.mrb[0].mxu0
  %v352 = vadd.f32 0.0, %v351
  %v353 = vpop.f32.mrb[0].mxu0
  %354 = vmatprep.mubr.f32.mxu0 %v178
  %355 = vmatmul.mubr.f32.gmra.mrb[0].mxu0 %v177
  %v356 = vpop.f32.mrb[0].mxu0
  %v357 = vadd.f32 0.0, %v356
  %v358 = vpop.f32.mrb[0].mxu0
  %359 = vmatprep.mubr.f32.mxu0 %v185
  %360 = vmatmul.mubr.f32.gmra.mrb[0].mxu0 %v184
  %v361 = vpop.f32.mrb[0].mxu0
  %v362 = vadd.f32 0.0, %v361
  %v363 = vpop.f32.mrb[0].mxu0
  %364 = vmatprep.mubr.f32.mxu0 %v192
  %365 = vmatmul.mubr.f32.gmra.mrb[0].mxu0 %v191
  %v366 = vpop.f32.mrb[0].mxu0
  %v367 = vadd.f32 0.0, %v366
  %v368 = vpop.f32.mrb[0].mxu0
  %369 = vmatprep.mubr.f32.mxu0 %v199
  %370 = vmatmul.mubr.f32.gmra.mrb[0].mxu0 %v198
  %v371 = vpop.f32.mrb[0].mxu0
  %v372 = vadd.f32 0.0, %v371
  %v373 = vpop.f32.mrb[0].mxu0
  %374 = vdwg.mxu0
  %375 = vmatprep.subr.mxu0 0.0
  %376 = vmatpush1.msra.mxu0 %v46
  %377 = vmatprep.subr.mxu0 0.0
  %378 = vmatpush1.msra.mxu0 %v47
  %379 = vmatprep.subr.mxu0 0.0
  %380 = vmatpush1.msra.mxu0 %v48
  %381 = vmatprep.subr.mxu0 0.0
  %382 = vmatpush1.msra.mxu0 %v49
  %383 = vmatprep.subr.mxu0 0.0
  %384 = vmatpush1.msra.mxu0 %v50
  %385 = vmatprep.subr.mxu0 0.0
  %386 = vmatpush1.msra.mxu0 %v51
  %387 = vmatprep.subr.mxu0 0.0
  %388 = vmatpush1.msra.mxu0 %v52
  %389 = vmatprep.subr.mxu0 0.0
  %390 = vmatpush1.msra.mxu0 %v53
  %391 = vmatprep.subr.mxu0 0.0
  %392 = vmatpush1.msra.mxu0 %v54
  %393 = vmatprep.subr.mxu0 0.0
  %394 = vmatpush1.msra.mxu0 %v55
  %395 = vmatprep.subr.mxu0 0.0
  %396 = vmatpush1.msra.mxu0 %v56
  %397 = vmatprep.subr.mxu0 0.0
  %398 = vmatpush1.msra.mxu0 %v57
  %399 = vmatprep.subr.mxu0 0.0
  %400 = vmatpush1.msra.mxu0 %v58
  %401 = vmatprep.subr.mxu0 0.0
  %402 = vmatpush1.msra.mxu0 %v59
  %403 = vmatprep.subr.mxu0 0.0
  %404 = vmatpush1.msra.mxu0 %v60
  %405 = vmatprep.subr.mxu0 0.0
  %406 = vmatpush1.msra.mxu0 %v61
  %407 = vmatprep.subr.mxu0 0.0
  %408 = vmatpush1.msra.mxu0 %v62
  %409 = vmatprep.subr.mxu0 0.0
  %410 = vmatpush1.msra.mxu0 %v63
  %411 = vmatprep.subr.mxu0 0.0
  %412 = vmatpush1.msra.mxu0 %v64
  %413 = vmatprep.subr.mxu0 0.0
  %414 = vmatpush1.msra.mxu0 %v65
  %415 = vmatprep.subr.mxu0 0.0
  %416 = vmatpush1.msra.mxu0 %v66
  %417 = vmatprep.subr.mxu0 0.0
  %418 = vmatpush1.msra.mxu0 %v67
  %419 = vmatprep.subr.mxu0 0.0
  %420 = vmatpush1.msra.mxu0 %v68
  %421 = vmatprep.subr.mxu0 0.0
  %422 = vmatpush1.msra.mxu0 %v69
  %423 = vmatprep.subr.mxu0 0.0
  %424 = vmatpush1.msra.mxu0 %v70
  %425 = vmatprep.subr.mxu0 0.0
  %426 = vmatpush1.msra.mxu0 %v71
  %427 = vmatprep.subr.mxu0 0.0
  %428 = vmatpush1.msra.mxu0 %v72
  %429 = vmatprep.subr.mxu0 0.0
  %430 = vmatpush1.msra.mxu0 %v73
  %431 = vmatprep.subr.mxu0 0.0
  %432 = vmatpush1.msra.mxu0 %v74
  %433 = vmatprep.subr.mxu0 0.0
  %434 = vmatpush1.msra.mxu0 %v75
  %435 = vmatprep.subr.mxu0 0.0
  %436 = vmatpush1.msra.mxu0 %v76
  %437 = vmatprep.subr.mxu0 0.0
  %438 = vmatpush1.msra.mxu0 %v77
  %439 = vmatprep.mubr.f32.mxu0 %v117
  %440 = vmatmul.mubr.f32.gmra.mrb[0].mxu0 %v116
  %v441 = vpop.f32.mrb[0].mxu0
  %v442 = vadd.f32 %v312, %v441
  %v443 = vpop.f32.mrb[0].mxu0
  %444 = vmatprep.mubr.f32.mxu0 %v124
  %445 = vmatmul.mubr.f32.gmra.mrb[0].mxu0 %v123
  %v446 = vpop.f32.mrb[0].mxu0
  %v447 = vadd.f32 %v317, %v446
  %v448 = vpop.f32.mrb[0].mxu0
  %449 = vmatprep.mubr.f32.mxu0 %v131
  %450 = vmatmul.mubr.f32.gmra.mrb[0].mxu0 %v130
  %v451 = vpop.f32.mrb[0].mxu0
  %v452 = vadd.f32 %v322, %v451
  %v453 = vpop.f32.mrb[0].mxu0
  %454 = vmatprep.mubr.f32.mxu0 %v138
  %455 = vmatmul.mubr.f32.gmra.mrb[0].mxu0 %v137
  %v456 = vpop.f32.mrb[0].mxu0
  %v457 = vadd.f32 %v327, %v456
  %v458 = vpop.f32.mrb[0].mxu0
  %459 = vmatprep.mubr.f32.mxu0 %v145
  %460 = vmatmul.mubr.f32.gmra.mrb[0].mxu0 %v144
  %v461 = vpop.f32.mrb[0].mxu0
  %v462 = vadd.f32 %v332, %v461
  %v463 = vpop.f32.mrb[0].mxu0
  %464 = vmatprep.mubr.f32.mxu0 %v152
  %465 = vmatmul.mubr.f32.gmra.mrb[0].mxu0 %v151
  %v466 = vpop.f32.mrb[0].mxu0
  %v467 = vadd.f32 %v337, %v466
  %v468 = vpop.f32.mrb[0].mxu0
  %469 = vmatprep.mubr.f32.mxu0 %v159
  %470 = vmatmul.mubr.f32.gmra.mrb[0].mxu0 %v158
  %v471 = vpop.f32.mrb[0].mxu0
  %v472 = vadd.f32 %v342, %v471
  %v473 = vpop.f32.mrb[0].mxu0
  %474 = vmatprep.mubr.f32.mxu0 %v166
  %475 = vmatmul.mubr.f32.gmra.mrb[0].mxu0 %v165
  %v476 = vpop.f32.mrb[0].mxu0
  %v477 = vadd.f32 %v347, %v476
  %v478 = vpop.f32.mrb[0].mxu0
  %479 = vmatprep.mubr.f32.mxu0 %v173
  %480 = vmatmul.mubr.f32.gmra.mrb[0].mxu0 %v172
  %v481 = vpop.f32.mrb[0].mxu0
  %v482 = vadd.f32 %v352, %v481
  %v483 = vpop.f32.mrb[0].mxu0
  %484 = vmatprep.mubr.f32.mxu0 %v180
  %485 = vmatmul.mubr.f32.gmra.mrb[0].mxu0 %v179
  %v486 = vpop.f32.mrb[0].mxu0
  %v487 = vadd.f32 %v357, %v486
  %v488 = vpop.f32.mrb[0].mxu0
  %489 = vmatprep.mubr.f32.mxu0 %v187
  %490 = vmatmul.mubr.f32.gmra.mrb[0].mxu0 %v186
  %v491 = vpop.f32.mrb[0].mxu0
  %v492 = vadd.f32 %v362, %v491
  %v493 = vpop.f32.mrb[0].mxu0
  %494 = vmatprep.mubr.f32.mxu0 %v194
  %495 = vmatmul.mubr.f32.gmra.mrb[0].mxu0 %v193
  %v496 = vpop.f32.mrb[0].mxu0
  %v497 = vadd.f32 %v367, %v496
  %v498 = vpop.f32.mrb[0].mxu0
  %499 = vmatprep.mubr.f32.mxu0 %v201
  %500 = vmatmul.mubr.f32.gmra.mrb[0].mxu0 %v200
  %v501 = vpop.f32.mrb[0].mxu0
  %v502 = vadd.f32 %v372, %v501
  %v503 = vpop.f32.mrb[0].mxu0
  %504 = vdwg.mxu0
  %505 = vmatprep.subr.mxu0 0.0
  %506 = vmatpush1.msra.mxu0 %v78
  %507 = vmatprep.subr.mxu0 0.0
  %508 = vmatpush1.msra.mxu0 %v79
  %509 = vmatprep.subr.mxu0 0.0
  %510 = vmatpush1.msra.mxu0 %v80
  %511 = vmatprep.subr.mxu0 0.0
  %512 = vmatpush1.msra.mxu0 %v81
  %513 = vmatprep.subr.mxu0 0.0
  %514 = vmatpush1.msra.mxu0 %v82
  %515 = vmatprep.subr.mxu0 0.0
  %516 = vmatpush1.msra.mxu0 %v83
  %517 = vmatprep.subr.mxu0 0.0
  %518 = vmatpush1.msra.mxu0 %v84
  %519 = vmatprep.subr.mxu0 0.0
  %520 = vmatpush1.msra.mxu0 %v85
  %521 = vmatprep.subr.mxu0 0.0
  %522 = vmatpush1.msra.mxu0 %v86
  %523 = vmatprep.subr.mxu0 0.0
  %524 = vmatpush1.msra.mxu0 %v87
  %525 = vmatprep.subr.mxu0 0.0
  %526 = vmatpush1.msra.mxu0 %v88
  %527 = vmatprep.subr.mxu0 0.0
  %528 = vmatpush1.msra.mxu0 %v89
  %529 = vmatprep.subr.mxu0 0.0
  %530 = vmatpush1.msra.mxu0 %v90
  %531 = vmatprep.subr.mxu0 0.0
  %532 = vmatpush1.msra.mxu0 %v91
  %533 = vmatprep.subr.mxu0 0.0
  %534 = vmatpush1.msra.mxu0 %v92
  %535 = vmatprep.subr.mxu0 0.0
  %536 = vmatpush1.msra.mxu0 %v93
  %537 = vmatprep.subr.mxu0 0.0
  %538 = vmatpush1.msra.mxu0 %v94
  %539 = vmatprep.subr.mxu0 0.0
  %540 = vmatpush1.msra.mxu0 %v95
  %541 = vmatprep.subr.mxu0 0.0
  %542 = vmatpush1.msra.mxu0 %v96
  %543 = vmatprep.subr.mxu0 0.0
  %544 = vmatpush1.msra.mxu0 %v97
  %545 = vmatprep.subr.mxu0 0.0
  %546 = vmatpush1.msra.mxu0 %v98
  %547 = vmatprep.subr.mxu0 0.0
  %548 = vmatpush1.msra.mxu0 %v99
  %549 = vmatprep.subr.mxu0 0.0
  %550 = vmatpush1.msra.mxu0 %v100
  %551 = vmatprep.subr.mxu0 0.0
  %552 = vmatpush1.msra.mxu0 %v101
  %553 = vmatprep.subr.mxu0 0.0
  %554 = vmatpush1.msra.mxu0 %v102
  %555 = vmatprep.subr.mxu0 0.0
  %556 = vmatpush1.msra.mxu0 %v103
  %557 = vmatprep.subr.mxu0 0.0
  %558 = vmatpush1.msra.mxu0 %v104
  %559 = vmatprep.subr.mxu0 0.0
  %560 = vmatpush1.msra.mxu0 %v105
  %561 = vmatprep.subr.mxu0 0.0
  %562 = vmatpush1.msra.mxu0 %v106
  %563 = vmatprep.subr.mxu0 0.0
  %564 = vmatpush1.msra.mxu0 %v107
  %565 = vmatprep.subr.mxu0 0.0
  %566 = vmatpush1.msra.mxu0 %v108
  %567 = vmatprep.subr.mxu0 0.0
  %568 = vmatpush1.msra.mxu0 %v109
  %569 = vmatprep.mubr.f32.mxu0 %v119
  %570 = vmatmul.mubr.f32.gmra.mrb[0].mxu0 %v118
  %v571 = vpop.f32.mrb[0].mxu0
  %v572 = vadd.f32 %v442, %v571
  %v573 = vpop.f32.mrb[0].mxu0
  %574 = vmatprep.mubr.f32.mxu0 %v126
  %575 = vmatmul.mubr.f32.gmra.mrb[0].mxu0 %v125
  %v576 = vpop.f32.mrb[0].mxu0
  %v577 = vadd.f32 %v447, %v576
  %v578 = vpop.f32.mrb[0].mxu0
  %579 = vmatprep.mubr.f32.mxu0 %v133
  %580 = vmatmul.mubr.f32.gmra.mrb[0].mxu0 %v132
  %v581 = vpop.f32.mrb[0].mxu0
  %v582 = vadd.f32 %v452, %v581
  %v583 = vpop.f32.mrb[0].mxu0
  %584 = vmatprep.mubr.f32.mxu0 %v140
  %585 = vmatmul.mubr.f32.gmra.mrb[0].mxu0 %v139
  %v586 = vpop.f32.mrb[0].mxu0
  %v587 = vadd.f32 %v457, %v586
  %v588 = vpop.f32.mrb[0].mxu0
  %589 = vmatprep.mubr.f32.mxu0 %v147
  %590 = vmatmul.mubr.f32.gmra.mrb[0].mxu0 %v146
  %v591 = vpop.f32.mrb[0].mxu0
  %v592 = vadd.f32 %v462, %v591
  %v593 = vpop.f32.mrb[0].mxu0
  %594 = vmatprep.mubr.f32.mxu0 %v154
  %595 = vmatmul.mubr.f32.gmra.mrb[0].mxu0 %v153
  %v596 = vpop.f32.mrb[0].mxu0
  %v597 = vadd.f32 %v467, %v596
  %v598 = vpop.f32.mrb[0].mxu0
  %599 = vmatprep.mubr.f32.mxu0 %v161
  %600 = vmatmul.mubr.f32.gmra.mrb[0].mxu0 %v160
  %v601 = vpop.f32.mrb[0].mxu0
  %v602 = vadd.f32 %v472, %v601
  %v603 = vpop.f32.mrb[0].mxu0
  %604 = vmatprep.mubr.f32.mxu0 %v168
  %605 = vmatmul.mubr.f32.gmra.mrb[0].mxu0 %v167
  %v606 = vpop.f32.mrb[0].mxu0
  %v607 = vadd.f32 %v477, %v606
  %v608 = vpop.f32.mrb[0].mxu0
  %609 = vmatprep.mubr.f32.mxu0 %v175
  %610 = vmatmul.mubr.f32.gmra.mrb[0].mxu0 %v174
  %v611 = vpop.f32.mrb[0].mxu0
  %v612 = vadd.f32 %v482, %v611
  %v613 = vpop.f32.mrb[0].mxu0
  %614 = vmatprep.mubr.f32.mxu0 %v182
  %615 = vmatmul.mubr.f32.gmra.mrb[0].mxu0 %v181
  %v616 = vpop.f32.mrb[0].mxu0
  %v617 = vadd.f32 %v487, %v616
  %v618 = vpop.f32.mrb[0].mxu0
  %619 = vmatprep.mubr.f32.mxu0 %v189
  %620 = vmatmul.mubr.f32.gmra.mrb[0].mxu0 %v188
  %v621 = vpop.f32.mrb[0].mxu0
  %v622 = vadd.f32 %v492, %v621
  %v623 = vpop.f32.mrb[0].mxu0
  %624 = vmatprep.mubr.f32.mxu0 %v196
  %625 = vmatmul.mubr.f32.gmra.mrb[0].mxu0 %v195
  %v626 = vpop.f32.mrb[0].mxu0
  %v627 = vadd.f32 %v497, %v626
  %v628 = vpop.f32.mrb[0].mxu0
  %629 = vmatprep.mubr.f32.mxu0 %v203
  %630 = vmatmul.mubr.f32.gmra.mrb[0].mxu0 %v202
  %v631 = vpop.f32.mrb[0].mxu0
  %v632 = vadd.f32 %v502, %v631
  %v633 = vpop.f32.mrb[0].mxu0
  %634 = vdwg.mxu0
  %635 = vmatprep.subr.mxu0 0.0
  %636 = vmatpush1.msra.mxu0 %v110
  %637 = vmatprep.subr.mxu0 0.0
  %638 = vmatpush1.msra.mxu0 %v111
  %639 = vmatprep.subr.mxu0 0.0
  %640 = vmatpush1.msra.mxu0 %v112
  %641 = vmatprep.subr.mxu0 0.0
  %642 = vmatpush1.msra.mxu0 %v113
  %643 = vmatprep.subr.mxu0 0.0
  %644 = vmatpush1.msra.mxu0 0.0
  %645 = vmatprep.subr.mxu0 0.0
  %646 = vmatpush1.msra.mxu0 0.0
  %647 = vmatprep.subr.mxu0 0.0
  %648 = vmatpush1.msra.mxu0 0.0
  %649 = vmatprep.subr.mxu0 0.0
  %650 = vmatpush1.msra.mxu0 0.0
  %651 = vmatprep.subr.mxu0 0.0
  %652 = vmatpush1.msra.mxu0 0.0
  %653 = vmatprep.subr.mxu0 0.0
  %654 = vmatpush1.msra.mxu0 0.0
  %655 = vmatprep.subr.mxu0 0.0
  %656 = vmatpush1.msra.mxu0 0.0
  %657 = vmatprep.subr.mxu0 0.0
  %658 = vmatpush1.msra.mxu0 0.0
  %659 = vmatprep.subr.mxu0 0.0
  %660 = vmatpush1.msra.mxu0 0.0
  %661 = vmatprep.subr.mxu0 0.0
  %662 = vmatpush1.msra.mxu0 0.0
  %663 = vmatprep.subr.mxu0 0.0
  %664 = vmatpush1.msra.mxu0 0.0
  %665 = vmatprep.subr.mxu0 0.0
  %666 = vmatpush1.msra.mxu0 0.0
  %667 = vmatprep.subr.mxu0 0.0
  %668 = vmatpush1.msra.mxu0 0.0
  %669 = vmatprep.subr.mxu0 0.0
  %670 = vmatpush1.msra.mxu0 0.0
  %671 = vmatprep.subr.mxu0 0.0
  %672 = vmatpush1.msra.mxu0 0.0
  %673 = vmatprep.subr.mxu0 0.0
  %674 = vmatpush1.msra.mxu0 0.0
  %675 = vmatprep.subr.mxu0 0.0
  %676 = vmatpush1.msra.mxu0 0.0
  %677 = vmatprep.subr.mxu0 0.0
  %678 = vmatpush1.msra.mxu0 0.0
  %679 = vmatprep.subr.mxu0 0.0
  %680 = vmatpush1.msra.mxu0 0.0
  %681 = vmatprep.subr.mxu0 0.0
  %682 = vmatpush1.msra.mxu0 0.0
  %683 = vmatprep.subr.mxu0 0.0
  %684 = vmatpush1.msra.mxu0 0.0
  %685 = vmatprep.subr.mxu0 0.0
  %686 = vmatpush1.msra.mxu0 0.0
  %687 = vmatprep.subr.mxu0 0.0
  %688 = vmatpush1.msra.mxu0 0.0
  %689 = vmatprep.subr.mxu0 0.0
  %690 = vmatpush1.msra.mxu0 0.0
  %691 = vmatprep.subr.mxu0 0.0
  %692 = vmatpush1.msra.mxu0 0.0
  %693 = vmatprep.subr.mxu0 0.0
  %694 = vmatpush1.msra.mxu0 0.0
  %695 = vmatprep.subr.mxu0 0.0
  %696 = vmatpush1.msra.mxu0 0.0
  %697 = vmatprep.subr.mxu0 0.0
  %698 = vmatpush1.msra.mxu0 0.0
  %699 = vmatprep.mubr.f32.mxu0 0.0
  %700 = vmatmul.mubr.f32.gmra.mrb[0].mxu0 %v207
  %v701 = vpop.f32.mrb[0].mxu0
  %v702 = vadd.f32 %v572, %v701
  %v703 = vpop.f32.mrb[0].mxu0
  %704 = vmatprep.mubr.f32.mxu0 0.0
  %705 = vmatmul.mubr.f32.gmra.mrb[0].mxu0 %v210
  %v706 = vpop.f32.mrb[0].mxu0
  %v707 = vadd.f32 %v577, %v706
  %v708 = vpop.f32.mrb[0].mxu0
  %709 = vmatprep.mubr.f32.mxu0 0.0
  %710 = vmatmul.mubr.f32.gmra.mrb[0].mxu0 %v213
  %v711 = vpop.f32.mrb[0].mxu0
  %v712 = vadd.f32 %v582, %v711
  %v713 = vpop.f32.mrb[0].mxu0
  %714 = vmatprep.mubr.f32.mxu0 0.0
  %715 = vmatmul.mubr.f32.gmra.mrb[0].mxu0 %v216
  %v716 = vpop.f32.mrb[0].mxu0
  %v717 = vadd.f32 %v587, %v716
  %v718 = vpop.f32.mrb[0].mxu0
  %719 = vmatprep.mubr.f32.mxu0 0.0
  %720 = vmatmul.mubr.f32.gmra.mrb[0].mxu0 %v219
  %v721 = vpop.f32.mrb[0].mxu0
  %v722 = vadd.f32 %v592, %v721
  %v723 = vpop.f32.mrb[0].mxu0
  %724 = vmatprep.mubr.f32.mxu0 0.0
  %725 = vmatmul.mubr.f32.gmra.mrb[0].mxu0 %v222
  %v726 = vpop.f32.mrb[0].mxu0
  %v727 = vadd.f32 %v597, %v726
  %v728 = vpop.f32.mrb[0].mxu0
  %729 = vmatprep.mubr.f32.mxu0 0.0
  %730 = vmatmul.mubr.f32.gmra.mrb[0].mxu0 %v225
  %v731 = vpop.f32.mrb[0].mxu0
  %v732 = vadd.f32 %v602, %v731
  %v733 = vpop.f32.mrb[0].mxu0
  %734 = vmatprep.mubr.f32.mxu0 0.0
  %735 = vmatmul.mubr.f32.gmra.mrb[0].mxu0 %v228
  %v736 = vpop.f32.mrb[0].mxu0
  %v737 = vadd.f32 %v607, %v736
  %v738 = vpop.f32.mrb[0].mxu0
  %739 = vmatprep.mubr.f32.mxu0 0.0
  %740 = vmatmul.mubr.f32.gmra.mrb[0].mxu0 %v231
  %v741 = vpop.f32.mrb[0].mxu0
  %v742 = vadd.f32 %v612, %v741
  %v743 = vpop.f32.mrb[0].mxu0
  %744 = vmatprep.mubr.f32.mxu0 0.0
  %745 = vmatmul.mubr.f32.gmra.mrb[0].mxu0 %v234
  %v746 = vpop.f32.mrb[0].mxu0
  %v747 = vadd.f32 %v617, %v746
  %v748 = vpop.f32.mrb[0].mxu0
  %749 = vmatprep.mubr.f32.mxu0 0.0
  %750 = vmatmul.mubr.f32.gmra.mrb[0].mxu0 %v237
  %v751 = vpop.f32.mrb[0].mxu0
  %v752 = vadd.f32 %v622, %v751
  %v753 = vpop.f32.mrb[0].mxu0
  %754 = vmatprep.mubr.f32.mxu0 0.0
  %755 = vmatmul.mubr.f32.gmra.mrb[0].mxu0 %v240
  %v756 = vpop.f32.mrb[0].mxu0
  %v757 = vadd.f32 %v627, %v756
  %v758 = vpop.f32.mrb[0].mxu0
  %759 = vmatprep.mubr.f32.mxu0 0.0
  %760 = vmatmul.mubr.f32.gmra.mrb[0].mxu0 %v243
  %v761 = vpop.f32.mrb[0].mxu0
  %v762 = vadd.f32 %v632, %v761
  %v763 = vpop.f32.mrb[0].mxu0
  %764 = vdwg.mxu0
  %s765 = scalar_lea.vmem %s0, 728
  %v766 = vld [vmem:[%s765] sm:$0xff]
  %v767 = vld [vmem:[%s765 + $0x8] sm:$0xff]
  %v768 = vld [vmem:[%s765 + $0x10] sm:$0xff]
  %v769 = vld [vmem:[%s765 + $0x18] sm:$0xff]
  %v770 = vld [vmem:[%s765 + $0x20] sm:$0xff]
  %v771 = vld [vmem:[%s765 + $0x28] sm:$0xff]
  %v772 = vld [vmem:[%s765 + $0x30] sm:$0xff]
  %v773 = vld [vmem:[%s765 + $0x38] sm:$0xff]
  %v774 = vld [vmem:[%s765 + $0x40] sm:$0xff]
  %v775 = vld [vmem:[%s765 + $0x48] sm:$0xff]
  %v776 = vld [vmem:[%s765 + $0x50] sm:$0xff]
  %v777 = vld [vmem:[%s765 + $0x58] sm:$0xff]
  %v778 = vld [vmem:[%s765 + $0x60] sm:$0xff]
  %v779 = vld [vmem:[%s765 + $0x68] sm:$0xff]
  %v780 = vld [vmem:[%s765 + $0x70] sm:$0xff]
  %v781 = vld [vmem:[%s765 + $0x78] sm:$0xff]
  %v782 = vld [vmem:[%s765 + $0x80] sm:$0xff]
  %v783 = vld [vmem:[%s765 + $0x88] sm:$0xff]
  %v784 = vld [vmem:[%s765 + $0x90] sm:$0xff]
  %v785 = vld [vmem:[%s765 + $0x98] sm:$0xff]
  %v786 = vld [vmem:[%s765 + $0xa0] sm:$0xff]
  %v787 = vld [vmem:[%s765 + $0xa8] sm:$0xff]
  %v788 = vld [vmem:[%s765 + $0xb0] sm:$0xff]
  %v789 = vld [vmem:[%s765 + $0xb8] sm:$0xff]
  %v790 = vld [vmem:[%s765 + $0xc0] sm:$0xff]
  %v791 = vld [vmem:[%s765 + $0xc8] sm:$0xff]
  %v792 = vld [vmem:[%s765 + $0xd0] sm:$0xff]
  %v793 = vld [vmem:[%s765 + $0xd8] sm:$0xff]
  %v794 = vld [vmem:[%s765 + $0xe0] sm:$0xff]
  %v795 = vld [vmem:[%s765 + $0xe8] sm:$0xff]
  %v796 = vld [vmem:[%s765 + $0xf0] sm:$0xff]
  %v797 = vld [vmem:[%s765 + $0xf8] sm:$0xff]
  %v798 = vld [vmem:[%s765 + $0x100] sm:$0xff]
  %v799 = vld [vmem:[%s765 + $0x108] sm:$0xff]
  %v800 = vld [vmem:[%s765 + $0x110] sm:$0xff]
  %v801 = vld [vmem:[%s765 + $0x118] sm:$0xff]
  %v802 = vld [vmem:[%s765 + $0x120] sm:$0xff]
  %v803 = vld [vmem:[%s765 + $0x128] sm:$0xff]
  %v804 = vld [vmem:[%s765 + $0x130] sm:$0xff]
  %v805 = vld [vmem:[%s765 + $0x138] sm:$0xff]
  %v806 = vld [vmem:[%s765 + $0x140] sm:$0xff]
  %v807 = vld [vmem:[%s765 + $0x148] sm:$0xff]
  %v808 = vld [vmem:[%s765 + $0x150] sm:$0xff]
  %v809 = vld [vmem:[%s765 + $0x158] sm:$0xff]
  %v810 = vld [vmem:[%s765 + $0x160] sm:$0xff]
  %v811 = vld [vmem:[%s765 + $0x168] sm:$0xff]
  %v812 = vld [vmem:[%s765 + $0x170] sm:$0xff]
  %v813 = vld [vmem:[%s765 + $0x178] sm:$0xff]
  %v814 = vld [vmem:[%s765 + $0x180] sm:$0xff]
  %v815 = vld [vmem:[%s765 + $0x188] sm:$0xff]
  %v816 = vld [vmem:[%s765 + $0x190] sm:$0xff]
  %v817 = vld [vmem:[%s765 + $0x198] sm:$0xff]
  %v818 = vld [vmem:[%s765 + $0x1a0] sm:$0xff]
  %v819 = vld [vmem:[%s765 + $0x1a8] sm:$0xff]
  %v820 = vld [vmem:[%s765 + $0x1b0] sm:$0xff]
  %v821 = vld [vmem:[%s765 + $0x1b8] sm:$0xff]
  %v822 = vld [vmem:[%s765 + $0x1c0] sm:$0xff]
  %v823 = vld [vmem:[%s765 + $0x1c8] sm:$0xff]
  %v824 = vld [vmem:[%s765 + $0x1d0] sm:$0xff]
  %v825 = vld [vmem:[%s765 + $0x1d8] sm:$0xff]
  %v826 = vld [vmem:[%s765 + $0x1e0] sm:$0xff]
  %v827 = vld [vmem:[%s765 + $0x1e8] sm:$0xff]
  %v828 = vld [vmem:[%s765 + $0x1f0] sm:$0xff]
  %v829 = vld [vmem:[%s765 + $0x1f8] sm:$0xff]
  %v830 = vld [vmem:[%s765 + $0x200] sm:$0xff]
  %v831 = vld [vmem:[%s765 + $0x208] sm:$0xff]
  %v832 = vld [vmem:[%s765 + $0x210] sm:$0xff]
  %v833 = vld [vmem:[%s765 + $0x218] sm:$0xff]
  %v834 = vld [vmem:[%s765 + $0x220] sm:$0xff]
  %v835 = vld [vmem:[%s765 + $0x228] sm:$0xff]
  %v836 = vld [vmem:[%s765 + $0x230] sm:$0xff]
  %v837 = vld [vmem:[%s765 + $0x238] sm:$0xff]
  %v838 = vld [vmem:[%s765 + $0x240] sm:$0xff]
  %v839 = vld [vmem:[%s765 + $0x248] sm:$0xff]
  %v840 = vld [vmem:[%s765 + $0x250] sm:$0xff]
  %v841 = vld [vmem:[%s765 + $0x258] sm:$0xff]
  %v842 = vld [vmem:[%s765 + $0x260] sm:$0xff]
  %v843 = vld [vmem:[%s765 + $0x268] sm:$0xff]
  %v844 = vld [vmem:[%s765 + $0x270] sm:$0xff]
  %v845 = vld [vmem:[%s765 + $0x278] sm:$0xff]
  %v846 = vld [vmem:[%s765 + $0x280] sm:$0xff]
  %v847 = vld [vmem:[%s765 + $0x288] sm:$0xff]
  %v848 = vld [vmem:[%s765 + $0x290] sm:$0xff]
  %v849 = vld [vmem:[%s765 + $0x298] sm:$0xff]
  %v850 = vld [vmem:[%s765 + $0x2a0] sm:$0x3]
  %v851 = vld [vmem:[%s765 + $0x2a8] sm:$0x3]
  %v852 = vld [vmem:[%s765 + $0x2b0] sm:$0x3]
  %v853 = vld [vmem:[%s765 + $0x2b8] sm:$0x3]
  %v854 = vld [vmem:[%s765 + $0x2c0] sm:$0x3]
  %v855 = vld [vmem:[%s765 + $0x2c8] sm:$0x3]
  %v856 = vld [vmem:[%s765 + $0x2d0] sm:$0x3]
  %v858 = vsel %vm205, %v772, 0
  %v861 = vsel %vm205, %v779, 0
  %v864 = vsel %vm205, %v786, 0
  %v867 = vsel %vm205, %v793, 0
  %v870 = vsel %vm205, %v800, 0
  %v873 = vsel %vm205, %v807, 0
  %v876 = vsel %vm205, %v814, 0
  %v879 = vsel %vm205, %v821, 0
  %v882 = vsel %vm205, %v828, 0
  %v885 = vsel %vm205, %v835, 0
  %v888 = vsel %vm205, %v842, 0
  %v891 = vsel %vm205, %v849, 0
  %v894 = vsel %vm205, %v856, 0
  %896 = vmatprep.subr.mxu0 0.0
  %897 = vmatpush1.msra.mxu0 %v14
  %898 = vmatprep.subr.mxu0 0.0
  %899 = vmatpush1.msra.mxu0 %v15
  %900 = vmatprep.subr.mxu0 0.0
  %901 = vmatpush1.msra.mxu0 %v16
  %902 = vmatprep.subr.mxu0 0.0
  %903 = vmatpush1.msra.mxu0 %v17
  %904 = vmatprep.subr.mxu0 0.0
  %905 = vmatpush1.msra.mxu0 %v18
  %906 = vmatprep.subr.mxu0 0.0
  %907 = vmatpush1.msra.mxu0 %v19
  %908 = vmatprep.subr.mxu0 0.0
  %909 = vmatpush1.msra.mxu0 %v20
  %910 = vmatprep.subr.mxu0 0.0
  %911 = vmatpush1.msra.mxu0 %v21
  %912 = vmatprep.subr.mxu0 0.0
  %913 = vmatpush1.msra.mxu0 %v22
  %914 = vmatprep.subr.mxu0 0.0
  %915 = vmatpush1.msra.mxu0 %v23
  %916 = vmatprep.subr.mxu0 0.0
  %917 = vmatpush1.msra.mxu0 %v24
  %918 = vmatprep.subr.mxu0 0.0
  %919 = vmatpush1.msra.mxu0 %v25
  %920 = vmatprep.subr.mxu0 0.0
  %921 = vmatpush1.msra.mxu0 %v26
  %922 = vmatprep.subr.mxu0 0.0
  %923 = vmatpush1.msra.mxu0 %v27
  %924 = vmatprep.subr.mxu0 0.0
  %925 = vmatpush1.msra.mxu0 %v28
  %926 = vmatprep.subr.mxu0 0.0
  %927 = vmatpush1.msra.mxu0 %v29
  %928 = vmatprep.subr.mxu0 0.0
  %929 = vmatpush1.msra.mxu0 %v30
  %930 = vmatprep.subr.mxu0 0.0
  %931 = vmatpush1.msra.mxu0 %v31
  %932 = vmatprep.subr.mxu0 0.0
  %933 = vmatpush1.msra.mxu0 %v32
  %934 = vmatprep.subr.mxu0 0.0
  %935 = vmatpush1.msra.mxu0 %v33
  %936 = vmatprep.subr.mxu0 0.0
  %937 = vmatpush1.msra.mxu0 %v34
  %938 = vmatprep.subr.mxu0 0.0
  %939 = vmatpush1.msra.mxu0 %v35
  %940 = vmatprep.subr.mxu0 0.0
  %941 = vmatpush1.msra.mxu0 %v36
  %942 = vmatprep.subr.mxu0 0.0
  %943 = vmatpush1.msra.mxu0 %v37
  %944 = vmatprep.subr.mxu0 0.0
  %945 = vmatpush1.msra.mxu0 %v38
  %946 = vmatprep.subr.mxu0 0.0
  %947 = vmatpush1.msra.mxu0 %v39
  %948 = vmatprep.subr.mxu0 0.0
  %949 = vmatpush1.msra.mxu0 %v40
  %950 = vmatprep.subr.mxu0 0.0
  %951 = vmatpush1.msra.mxu0 %v41
  %952 = vmatprep.subr.mxu0 0.0
  %953 = vmatpush1.msra.mxu0 %v42
  %954 = vmatprep.subr.mxu0 0.0
  %955 = vmatpush1.msra.mxu0 %v43
  %956 = vmatprep.subr.mxu0 0.0
  %957 = vmatpush1.msra.mxu0 %v44
  %958 = vmatprep.subr.mxu0 0.0
  %959 = vmatpush1.msra.mxu0 %v45
  %960 = vmatprep.mubr.f32.mxu0 %v767
  %961 = vmatmul.mubr.f32.gmra.mrb[0].mxu0 %v766
  %v962 = vpop.f32.mrb[0].mxu0
  %v963 = vadd.f32 0.0, %v962
  %v964 = vpop.f32.mrb[0].mxu0
  %965 = vmatprep.mubr.f32.mxu0 %v774
  %966 = vmatmul.mubr.f32.gmra.mrb[0].mxu0 %v773
  %v967 = vpop.f32.mrb[0].mxu0
  %v968 = vadd.f32 0.0, %v967
  %v969 = vpop.f32.mrb[0].mxu0
  %970 = vmatprep.mubr.f32.mxu0 %v781
  %971 = vmatmul.mubr.f32.gmra.mrb[0].mxu0 %v780
  %v972 = vpop.f32.mrb[0].mxu0
  %v973 = vadd.f32 0.0, %v972
  %v974 = vpop.f32.mrb[0].mxu0
  %975 = vmatprep.mubr.f32.mxu0 %v788
  %976 = vmatmul.mubr.f32.gmra.mrb[0].mxu0 %v787
  %v977 = vpop.f32.mrb[0].mxu0
  %v978 = vadd.f32 0.0, %v977
  %v979 = vpop.f32.mrb[0].mxu0
  %980 = vmatprep.mubr.f32.mxu0 %v795
  %981 = vmatmul.mubr.f32.gmra.mrb[0].mxu0 %v794
  %v982 = vpop.f32.mrb[0].mxu0
  %v983 = vadd.f32 0.0, %v982
  %v984 = vpop.f32.mrb[0].mxu0
  %985 = vmatprep.mubr.f32.mxu0 %v802
  %986 = vmatmul.mubr.f32.gmra.mrb[0].mxu0 %v801
  %v987 = vpop.f32.mrb[0].mxu0
  %v988 = vadd.f32 0.0, %v987
  %v989 = vpop.f32.mrb[0].mxu0
  %990 = vmatprep.mubr.f32.mxu0 %v809
  %991 = vmatmul.mubr.f32.gmra.mrb[0].mxu0 %v808
  %v992 = vpop.f32.mrb[0].mxu0
  %v993 = vadd.f32 0.0, %v992
  %v994 = vpop.f32.mrb[0].mxu0
  %995 = vmatprep.mubr.f32.mxu0 %v816
  %996 = vmatmul.mubr.f32.gmra.mrb[0].mxu0 %v815
  %v997 = vpop.f32.mrb[0].mxu0
  %v998 = vadd.f32 0.0, %v997
  %v999 = vpop.f32.mrb[0].mxu0
  %1000 = vmatprep.mubr.f32.mxu0 %v823
  %1001 = vmatmul.mubr.f32.gmra.mrb[0].mxu0 %v822
  %v1002 = vpop.f32.mrb[0].mxu0
  %v1003 = vadd.f32 0.0, %v1002
  %v1004 = vpop.f32.mrb[0].mxu0
  %1005 = vmatprep.mubr.f32.mxu0 %v830
  %1006 = vmatmul.mubr.f32.gmra.mrb[0].mxu0 %v829
  %v1007 = vpop.f32.mrb[0].mxu0
  %v1008 = vadd.f32 0.0, %v1007
  %v1009 = vpop.f32.mrb[0].mxu0
  %1010 = vmatprep.mubr.f32.mxu0 %v837
  %1011 = vmatmul.mubr.f32.gmra.mrb[0].mxu0 %v836
  %v1012 = vpop.f32.mrb[0].mxu0
  %v1013 = vadd.f32 0.0, %v1012
  %v1014 = vpop.f32.mrb[0].mxu0
  %1015 = vmatprep.mubr.f32.mxu0 %v844
  %1016 = vmatmul.mubr.f32.gmra.mrb[0].mxu0 %v843
  %v1017 = vpop.f32.mrb[0].mxu0
  %v1018 = vadd.f32 0.0, %v1017
  %v1019 = vpop.f32.mrb[0].mxu0
  %1020 = vmatprep.mubr.f32.mxu0 %v851
  %1021 = vmatmul.mubr.f32.gmra.mrb[0].mxu0 %v850
  %v1022 = vpop.f32.mrb[0].mxu0
  %v1023 = vadd.f32 0.0, %v1022
  %v1024 = vpop.f32.mrb[0].mxu0
  %1025 = vdwg.mxu0
  %1026 = vmatprep.subr.mxu0 0.0
  %1027 = vmatpush1.msra.mxu0 %v46
  %1028 = vmatprep.subr.mxu0 0.0
  %1029 = vmatpush1.msra.mxu0 %v47
  %1030 = vmatprep.subr.mxu0 0.0
  %1031 = vmatpush1.msra.mxu0 %v48
  %1032 = vmatprep.subr.mxu0 0.0
  %1033 = vmatpush1.msra.mxu0 %v49
  %1034 = vmatprep.subr.mxu0 0.0
  %1035 = vmatpush1.msra.mxu0 %v50
  %1036 = vmatprep.subr.mxu0 0.0
  %1037 = vmatpush1.msra.mxu0 %v51
  %1038 = vmatprep.subr.mxu0 0.0
  %1039 = vmatpush1.msra.mxu0 %v52
  %1040 = vmatprep.subr.mxu0 0.0
  %1041 = vmatpush1.msra.mxu0 %v53
  %1042 = vmatprep.subr.mxu0 0.0
  %1043 = vmatpush1.msra.mxu0 %v54
  %1044 = vmatprep.subr.mxu0 0.0
  %1045 = vmatpush1.msra.mxu0 %v55
  %1046 = vmatprep.subr.mxu0 0.0
  %1047 = vmatpush1.msra.mxu0 %v56
  %1048 = vmatprep.subr.mxu0 0.0
  %1049 = vmatpush1.msra.mxu0 %v57
  %1050 = vmatprep.subr.mxu0 0.0
  %1051 = vmatpush1.msra.mxu0 %v58
  %1052 = vmatprep.subr.mxu0 0.0
  %1053 = vmatpush1.msra.mxu0 %v59
  %1054 = vmatprep.subr.mxu0 0.0
  %1055 = vmatpush1.msra.mxu0 %v60
  %1056 = vmatprep.subr.mxu0 0.0
  %1057 = vmatpush1.msra.mxu0 %v61
  %1058 = vmatprep.subr.mxu0 0.0
  %1059 = vmatpush1.msra.mxu0 %v62
  %1060 = vmatprep.subr.mxu0 0.0
  %1061 = vmatpush1.msra.mxu0 %v63
  %1062 = vmatprep.subr.mxu0 0.0
  %1063 = vmatpush1.msra.mxu0 %v64
  %1064 = vmatprep.subr.mxu0 0.0
  %1065 = vmatpush1.msra.mxu0 %v65
  %1066 = vmatprep.subr.mxu0 0.0
  %1067 = vmatpush1.msra.mxu0 %v66
  %1068 = vmatprep.subr.mxu0 0.0
  %1069 = vmatpush1.msra.mxu0 %v67
  %1070 = vmatprep.subr.mxu0 0.0
  %1071 = vmatpush1.msra.mxu0 %v68
  %1072 = vmatprep.subr.mxu0 0.0
  %1073 = vmatpush1.msra.mxu0 %v69
  %1074 = vmatprep.subr.mxu0 0.0
  %1075 = vmatpush1.msra.mxu0 %v70
  %1076 = vmatprep.subr.mxu0 0.0
  %1077 = vmatpush1.msra.mxu0 %v71
  %1078 = vmatprep.subr.mxu0 0.0
  %1079 = vmatpush1.msra.mxu0 %v72
  %1080 = vmatprep.subr.mxu0 0.0
  %1081 = vmatpush1.msra.mxu0 %v73
  %1082 = vmatprep.subr.mxu0 0.0
  %1083 = vmatpush1.msra.mxu0 %v74
  %1084 = vmatprep.subr.mxu0 0.0
  %1085 = vmatpush1.msra.mxu0 %v75
  %1086 = vmatprep.subr.mxu0 0.0
  %1087 = vmatpush1.msra.mxu0 %v76
  %1088 = vmatprep.subr.mxu0 0.0
  %1089 = vmatpush1.msra.mxu0 %v77
  %1090 = vmatprep.mubr.f32.mxu0 %v769
  %1091 = vmatmul.mubr.f32.gmra.mrb[0].mxu0 %v768
  %v1092 = vpop.f32.mrb[0].mxu0
  %v1093 = vadd.f32 %v963, %v1092
  %v1094 = vpop.f32.mrb[0].mxu0
  %1095 = vmatprep.mubr.f32.mxu0 %v776
  %1096 = vmatmul.mubr.f32.gmra.mrb[0].mxu0 %v775
  %v1097 = vpop.f32.mrb[0].mxu0
  %v1098 = vadd.f32 %v968, %v1097
  %v1099 = vpop.f32.mrb[0].mxu0
  %1100 = vmatprep.mubr.f32.mxu0 %v783
  %1101 = vmatmul.mubr.f32.gmra.mrb[0].mxu0 %v782
  %v1102 = vpop.f32.mrb[0].mxu0
  %v1103 = vadd.f32 %v973, %v1102
  %v1104 = vpop.f32.mrb[0].mxu0
  %1105 = vmatprep.mubr.f32.mxu0 %v790
  %1106 = vmatmul.mubr.f32.gmra.mrb[0].mxu0 %v789
  %v1107 = vpop.f32.mrb[0].mxu0
  %v1108 = vadd.f32 %v978, %v1107
  %v1109 = vpop.f32.mrb[0].mxu0
  %1110 = vmatprep.mubr.f32.mxu0 %v797
  %1111 = vmatmul.mubr.f32.gmra.mrb[0].mxu0 %v796
  %v1112 = vpop.f32.mrb[0].mxu0
  %v1113 = vadd.f32 %v983, %v1112
  %v1114 = vpop.f32.mrb[0].mxu0
  %1115 = vmatprep.mubr.f32.mxu0 %v804
  %1116 = vmatmul.mubr.f32.gmra.mrb[0].mxu0 %v803
  %v1117 = vpop.f32.mrb[0].mxu0
  %v1118 = vadd.f32 %v988, %v1117
  %v1119 = vpop.f32.mrb[0].mxu0
  %1120 = vmatprep.mubr.f32.mxu0 %v811
  %1121 = vmatmul.mubr.f32.gmra.mrb[0].mxu0 %v810
  %v1122 = vpop.f32.mrb[0].mxu0
  %v1123 = vadd.f32 %v993, %v1122
  %v1124 = vpop.f32.mrb[0].mxu0
  %1125 = vmatprep.mubr.f32.mxu0 %v818
  %1126 = vmatmul.mubr.f32.gmra.mrb[0].mxu0 %v817
  %v1127 = vpop.f32.mrb[0].mxu0
  %v1128 = vadd.f32 %v998, %v1127
  %v1129 = vpop.f32.mrb[0].mxu0
  %1130 = vmatprep.mubr.f32.mxu0 %v825
  %1131 = vmatmul.mubr.f32.gmra.mrb[0].mxu0 %v824
  %v1132 = vpop.f32.mrb[0].mxu0
  %v1133 = vadd.f32 %v1003, %v1132
  %v1134 = vpop.f32.mrb[0].mxu0
  %1135 = vmatprep.mubr.f32.mxu0 %v832
  %1136 = vmatmul.mubr.f32.gmra.mrb[0].mxu0 %v831
  %v1137 = vpop.f32.mrb[0].mxu0
  %v1138 = vadd.f32 %v1008, %v1137
  %v1139 = vpop.f32.mrb[0].mxu0
  %1140 = vmatprep.mubr.f32.mxu0 %v839
  %1141 = vmatmul.mubr.f32.gmra.mrb[0].mxu0 %v838
  %v1142 = vpop.f32.mrb[0].mxu0
  %v1143 = vadd.f32 %v1013, %v1142
  %v1144 = vpop.f32.mrb[0].mxu0
  %1145 = vmatprep.mubr.f32.mxu0 %v846
  %1146 = vmatmul.mubr.f32.gmra.mrb[0].mxu0 %v845
  %v1147 = vpop.f32.mrb[0].mxu0
  %v1148 = vadd.f32 %v1018, %v1147
  %v1149 = vpop.f32.mrb[0].mxu0
  %1150 = vmatprep.mubr.f32.mxu0 %v853
  %1151 = vmatmul.mubr.f32.gmra.mrb[0].mxu0 %v852
  %v1152 = vpop.f32.mrb[0].mxu0
  %v1153 = vadd.f32 %v1023, %v1152
  %v1154 = vpop.f32.mrb[0].mxu0
  %1155 = vdwg.mxu0
  %1156 = vmatprep.subr.mxu0 0.0
  %1157 = vmatpush1.msra.mxu0 %v78
  %1158 = vmatprep.subr.mxu0 0.0
  %1159 = vmatpush1.msra.mxu0 %v79
  %1160 = vmatprep.subr.mxu0 0.0
  %1161 = vmatpush1.msra.mxu0 %v80
  %1162 = vmatprep.subr.mxu0 0.0
  %1163 = vmatpush1.msra.mxu0 %v81
  %1164 = vmatprep.subr.mxu0 0.0
  %1165 = vmatpush1.msra.mxu0 %v82
  %1166 = vmatprep.subr.mxu0 0.0
  %1167 = vmatpush1.msra.mxu0 %v83
  %1168 = vmatprep.subr.mxu0 0.0
  %1169 = vmatpush1.msra.mxu0 %v84
  %1170 = vmatprep.subr.mxu0 0.0
  %1171 = vmatpush1.msra.mxu0 %v85
  %1172 = vmatprep.subr.mxu0 0.0
  %1173 = vmatpush1.msra.mxu0 %v86
  %1174 = vmatprep.subr.mxu0 0.0
  %1175 = vmatpush1.msra.mxu0 %v87
  %1176 = vmatprep.subr.mxu0 0.0
  %1177 = vmatpush1.msra.mxu0 %v88
  %1178 = vmatprep.subr.mxu0 0.0
  %1179 = vmatpush1.msra.mxu0 %v89
  %1180 = vmatprep.subr.mxu0 0.0
  %1181 = vmatpush1.msra.mxu0 %v90
  %1182 = vmatprep.subr.mxu0 0.0
  %1183 = vmatpush1.msra.mxu0 %v91
  %1184 = vmatprep.subr.mxu0 0.0
  %1185 = vmatpush1.msra.mxu0 %v92
  %1186 = vmatprep.subr.mxu0 0.0
  %1187 = vmatpush1.msra.mxu0 %v93
  %1188 = vmatprep.subr.mxu0 0.0
  %1189 = vmatpush1.msra.mxu0 %v94
  %1190 = vmatprep.subr.mxu0 0.0
  %1191 = vmatpush1.msra.mxu0 %v95
  %1192 = vmatprep.subr.mxu0 0.0
  %1193 = vmatpush1.msra.mxu0 %v96
  %1194 = vmatprep.subr.mxu0 0.0
  %1195 = vmatpush1.msra.mxu0 %v97
  %1196 = vmatprep.subr.mxu0 0.0
  %1197 = vmatpush1.msra.mxu0 %v98
  %1198 = vmatprep.subr.mxu0 0.0
  %1199 = vmatpush1.msra.mxu0 %v99
  %1200 = vmatprep.subr.mxu0 0.0
  %1201 = vmatpush1.msra.mxu0 %v100
  %1202 = vmatprep.subr.mxu0 0.0
  %1203 = vmatpush1.msra.mxu0 %v101
  %1204 = vmatprep.subr.mxu0 0.0
  %1205 = vmatpush1.msra.mxu0 %v102
  %1206 = vmatprep.subr.mxu0 0.0
  %1207 = vmatpush1.msra.mxu0 %v103
  %1208 = vmatprep.subr.mxu0 0.0
  %1209 = vmatpush1.msra.mxu0 %v104
  %1210 = vmatprep.subr.mxu0 0.0
  %1211 = vmatpush1.msra.mxu0 %v105
  %1212 = vmatprep.subr.mxu0 0.0
  %1213 = vmatpush1.msra.mxu0 %v106
  %1214 = vmatprep.subr.mxu0 0.0
  %1215 = vmatpush1.msra.mxu0 %v107
  %1216 = vmatprep.subr.mxu0 0.0
  %1217 = vmatpush1.msra.mxu0 %v108
  %1218 = vmatprep.subr.mxu0 0.0
  %1219 = vmatpush1.msra.mxu0 %v109
  %1220 = vmatprep.mubr.f32.mxu0 %v771
  %1221 = vmatmul.mubr.f32.gmra.mrb[0].mxu0 %v770
  %v1222 = vpop.f32.mrb[0].mxu0
  %v1223 = vadd.f32 %v1093, %v1222
  %v1224 = vpop.f32.mrb[0].mxu0
  %1225 = vmatprep.mubr.f32.mxu0 %v778
  %1226 = vmatmul.mubr.f32.gmra.mrb[0].mxu0 %v777
  %v1227 = vpop.f32.mrb[0].mxu0
  %v1228 = vadd.f32 %v1098, %v1227
  %v1229 = vpop.f32.mrb[0].mxu0
  %1230 = vmatprep.mubr.f32.mxu0 %v785
  %1231 = vmatmul.mubr.f32.gmra.mrb[0].mxu0 %v784
  %v1232 = vpop.f32.mrb[0].mxu0
  %v1233 = vadd.f32 %v1103, %v1232
  %v1234 = vpop.f32.mrb[0].mxu0
  %1235 = vmatprep.mubr.f32.mxu0 %v792
  %1236 = vmatmul.mubr.f32.gmra.mrb[0].mxu0 %v791
  %v1237 = vpop.f32.mrb[0].mxu0
  %v1238 = vadd.f32 %v1108, %v1237
  %v1239 = vpop.f32.mrb[0].mxu0
  %1240 = vmatprep.mubr.f32.mxu0 %v799
  %1241 = vmatmul.mubr.f32.gmra.mrb[0].mxu0 %v798
  %v1242 = vpop.f32.mrb[0].mxu0
  %v1243 = vadd.f32 %v1113, %v1242
  %v1244 = vpop.f32.mrb[0].mxu0
  %1245 = vmatprep.mubr.f32.mxu0 %v806
  %1246 = vmatmul.mubr.f32.gmra.mrb[0].mxu0 %v805
  %v1247 = vpop.f32.mrb[0].mxu0
  %v1248 = vadd.f32 %v1118, %v1247
  %v1249 = vpop.f32.mrb[0].mxu0
  %1250 = vmatprep.mubr.f32.mxu0 %v813
  %1251 = vmatmul.mubr.f32.gmra.mrb[0].mxu0 %v812
  %v1252 = vpop.f32.mrb[0].mxu0
  %v1253 = vadd.f32 %v1123, %v1252
  %v1254 = vpop.f32.mrb[0].mxu0
  %1255 = vmatprep.mubr.f32.mxu0 %v820
  %1256 = vmatmul.mubr.f32.gmra.mrb[0].mxu0 %v819
  %v1257 = vpop.f32.mrb[0].mxu0
  %v1258 = vadd.f32 %v1128, %v1257
  %v1259 = vpop.f32.mrb[0].mxu0
  %1260 = vmatprep.mubr.f32.mxu0 %v827
  %1261 = vmatmul.mubr.f32.gmra.mrb[0].mxu0 %v826
  %v1262 = vpop.f32.mrb[0].mxu0
  %v1263 = vadd.f32 %v1133, %v1262
  %v1264 = vpop.f32.mrb[0].mxu0
  %1265 = vmatprep.mubr.f32.mxu0 %v834
  %1266 = vmatmul.mubr.f32.gmra.mrb[0].mxu0 %v833
  %v1267 = vpop.f32.mrb[0].mxu0
  %v1268 = vadd.f32 %v1138, %v1267
  %v1269 = vpop.f32.mrb[0].mxu0
  %1270 = vmatprep.mubr.f32.mxu0 %v841
  %1271 = vmatmul.mubr.f32.gmra.mrb[0].mxu0 %v840
  %v1272 = vpop.f32.mrb[0].mxu0
  %v1273 = vadd.f32 %v1143, %v1272
  %v1274 = vpop.f32.mrb[0].mxu0
  %1275 = vmatprep.mubr.f32.mxu0 %v848
  %1276 = vmatmul.mubr.f32.gmra.mrb[0].mxu0 %v847
  %v1277 = vpop.f32.mrb[0].mxu0
  %v1278 = vadd.f32 %v1148, %v1277
  %v1279 = vpop.f32.mrb[0].mxu0
  %1280 = vmatprep.mubr.f32.mxu0 %v855
  %1281 = vmatmul.mubr.f32.gmra.mrb[0].mxu0 %v854
  %v1282 = vpop.f32.mrb[0].mxu0
  %v1283 = vadd.f32 %v1153, %v1282
  %v1284 = vpop.f32.mrb[0].mxu0
  %1285 = vdwg.mxu0
  %1286 = vmatprep.subr.mxu0 0.0
  %1287 = vmatpush1.msra.mxu0 %v110
  %1288 = vmatprep.subr.mxu0 0.0
  %1289 = vmatpush1.msra.mxu0 %v111
  %1290 = vmatprep.subr.mxu0 0.0
  %1291 = vmatpush1.msra.mxu0 %v112
  %1292 = vmatprep.subr.mxu0 0.0
  %1293 = vmatpush1.msra.mxu0 %v113
  %1294 = vmatprep.subr.mxu0 0.0
  %1295 = vmatpush1.msra.mxu0 0.0
  %1296 = vmatprep.subr.mxu0 0.0
  %1297 = vmatpush1.msra.mxu0 0.0
  %1298 = vmatprep.subr.mxu0 0.0
  %1299 = vmatpush1.msra.mxu0 0.0
  %1300 = vmatprep.subr.mxu0 0.0
  %1301 = vmatpush1.msra.mxu0 0.0
  %1302 = vmatprep.subr.mxu0 0.0
  %1303 = vmatpush1.msra.mxu0 0.0
  %1304 = vmatprep.subr.mxu0 0.0
  %1305 = vmatpush1.msra.mxu0 0.0
  %1306 = vmatprep.subr.mxu0 0.0
  %1307 = vmatpush1.msra.mxu0 0.0
  %1308 = vmatprep.subr.mxu0 0.0
  %1309 = vmatpush1.msra.mxu0 0.0
  %1310 = vmatprep.subr.mxu0 0.0
  %1311 = vmatpush1.msra.mxu0 0.0
  %1312 = vmatprep.subr.mxu0 0.0
  %1313 = vmatpush1.msra.mxu0 0.0
  %1314 = vmatprep.subr.mxu0 0.0
  %1315 = vmatpush1.msra.mxu0 0.0
  %1316 = vmatprep.subr.mxu0 0.0
  %1317 = vmatpush1.msra.mxu0 0.0
  %1318 = vmatprep.subr.mxu0 0.0
  %1319 = vmatpush1.msra.mxu0 0.0
  %1320 = vmatprep.subr.mxu0 0.0
  %1321 = vmatpush1.msra.mxu0 0.0
  %1322 = vmatprep.subr.mxu0 0.0
  %1323 = vmatpush1.msra.mxu0 0.0
  %1324 = vmatprep.subr.mxu0 0.0
  %1325 = vmatpush1.msra.mxu0 0.0
  %1326 = vmatprep.subr.mxu0 0.0
  %1327 = vmatpush1.msra.mxu0 0.0
  %1328 = vmatprep.subr.mxu0 0.0
  %1329 = vmatpush1.msra.mxu0 0.0
  %1330 = vmatprep.subr.mxu0 0.0
  %1331 = vmatpush1.msra.mxu0 0.0
  %1332 = vmatprep.subr.mxu0 0.0
  %1333 = vmatpush1.msra.mxu0 0.0
  %1334 = vmatprep.subr.mxu0 0.0
  %1335 = vmatpush1.msra.mxu0 0.0
  %1336 = vmatprep.subr.mxu0 0.0
  %1337 = vmatpush1.msra.mxu0 0.0
  %1338 = vmatprep.subr.mxu0 0.0
  %1339 = vmatpush1.msra.mxu0 0.0
  %1340 = vmatprep.subr.mxu0 0.0
  %1341 = vmatpush1.msra.mxu0 0.0
  %1342 = vmatprep.subr.mxu0 0.0
  %1343 = vmatpush1.msra.mxu0 0.0
  %1344 = vmatprep.subr.mxu0 0.0
  %1345 = vmatpush1.msra.mxu0 0.0
  %1346 = vmatprep.subr.mxu0 0.0
  %1347 = vmatpush1.msra.mxu0 0.0
  %1348 = vmatprep.subr.mxu0 0.0
  %1349 = vmatpush1.msra.mxu0 0.0
  %1350 = vmatprep.mubr.f32.mxu0 0.0
  %1351 = vmatmul.mubr.f32.gmra.mrb[0].mxu0 %v858
  %v1352 = vpop.f32.mrb[0].mxu0
  %v1353 = vadd.f32 %v1223, %v1352
  %v1354 = vpop.f32.mrb[0].mxu0
  %1355 = vmatprep.mubr.f32.mxu0 0.0
  %1356 = vmatmul.mubr.f32.gmra.mrb[0].mxu0 %v861
  %v1357 = vpop.f32.mrb[0].mxu0
  %v1358 = vadd.f32 %v1228, %v1357
  %v1359 = vpop.f32.mrb[0].mxu0
  %1360 = vmatprep.mubr.f32.mxu0 0.0
  %1361 = vmatmul.mubr.f32.gmra.mrb[0].mxu0 %v864
  %v1362 = vpop.f32.mrb[0].mxu0
  %v1363 = vadd.f32 %v1233, %v1362
  %v1364 = vpop.f32.mrb[0].mxu0
  %1365 = vmatprep.mubr.f32.mxu0 0.0
  %1366 = vmatmul.mubr.f32.gmra.mrb[0].mxu0 %v867
  %v1367 = vpop.f32.mrb[0].mxu0
  %v1368 = vadd.f32 %v1238, %v1367
  %v1369 = vpop.f32.mrb[0].mxu0
  %1370 = vmatprep.mubr.f32.mxu0 0.0
  %1371 = vmatmul.mubr.f32.gmra.mrb[0].mxu0 %v870
  %v1372 = vpop.f32.mrb[0].mxu0
  %v1373 = vadd.f32 %v1243, %v1372
  %v1374 = vpop.f32.mrb[0].mxu0
  %1375 = vmatprep.mubr.f32.mxu0 0.0
  %1376 = vmatmul.mubr.f32.gmra.mrb[0].mxu0 %v873
  %v1377 = vpop.f32.mrb[0].mxu0
  %v1378 = vadd.f32 %v1248, %v1377
  %v1379 = vpop.f32.mrb[0].mxu0
  %1380 = vmatprep.mubr.f32.mxu0 0.0
  %1381 = vmatmul.mubr.f32.gmra.mrb[0].mxu0 %v876
  %v1382 = vpop.f32.mrb[0].mxu0
  %v1383 = vadd.f32 %v1253, %v1382
  %v1384 = vpop.f32.mrb[0].mxu0
  %1385 = vmatprep.mubr.f32.mxu0 0.0
  %1386 = vmatmul.mubr.f32.gmra.mrb[0].mxu0 %v879
  %v1387 = vpop.f32.mrb[0].mxu0
  %v1388 = vadd.f32 %v1258, %v1387
  %v1389 = vpop.f32.mrb[0].mxu0
  %1390 = vmatprep.mubr.f32.mxu0 0.0
  %1391 = vmatmul.mubr.f32.gmra.mrb[0].mxu0 %v882
  %v1392 = vpop.f32.mrb[0].mxu0
  %v1393 = vadd.f32 %v1263, %v1392
  %v1394 = vpop.f32.mrb[0].mxu0
  %1395 = vmatprep.mubr.f32.mxu0 0.0
  %1396 = vmatmul.mubr.f32.gmra.mrb[0].mxu0 %v885
  %v1397 = vpop.f32.mrb[0].mxu0
  %v1398 = vadd.f32 %v1268, %v1397
  %v1399 = vpop.f32.mrb[0].mxu0
  %1400 = vmatprep.mubr.f32.mxu0 0.0
  %1401 = vmatmul.mubr.f32.gmra.mrb[0].mxu0 %v888
  %v1402 = vpop.f32.mrb[0].mxu0
  %v1403 = vadd.f32 %v1273, %v1402
  %v1404 = vpop.f32.mrb[0].mxu0
  %1405 = vmatprep.mubr.f32.mxu0 0.0
  %1406 = vmatmul.mubr.f32.gmra.mrb[0].mxu0 %v891
  %v1407 = vpop.f32.mrb[0].mxu0
  %v1408 = vadd.f32 %v1278, %v1407
  %v1409 = vpop.f32.mrb[0].mxu0
  %1410 = vmatprep.mubr.f32.mxu0 0.0
  %1411 = vmatmul.mubr.f32.gmra.mrb[0].mxu0 %v894
  %v1412 = vpop.f32.mrb[0].mxu0
  %v1413 = vadd.f32 %v1283, %v1412
  %v1414 = vpop.f32.mrb[0].mxu0
  %1415 = vdwg.mxu0
  %s1416 = scalar_lea.vmem %s0, 1456
  %v1417 = vld [vmem:[%s1416] sm:$0xff]
  %v1418 = vld [vmem:[%s1416 + $0x8] sm:$0xff]
  %v1419 = vld [vmem:[%s1416 + $0x10] sm:$0xff]
  %v1420 = vld [vmem:[%s1416 + $0x18] sm:$0xff]
  %v1421 = vld [vmem:[%s1416 + $0x20] sm:$0xff]
  %v1422 = vld [vmem:[%s1416 + $0x28] sm:$0xff]
  %v1423 = vld [vmem:[%s1416 + $0x30] sm:$0xff]
  %v1424 = vld [vmem:[%s1416 + $0x38] sm:$0xff]
  %v1425 = vld [vmem:[%s1416 + $0x40] sm:$0xff]
  %v1426 = vld [vmem:[%s1416 + $0x48] sm:$0xff]
  %v1427 = vld [vmem:[%s1416 + $0x50] sm:$0xff]
  %v1428 = vld [vmem:[%s1416 + $0x58] sm:$0xff]
  %v1429 = vld [vmem:[%s1416 + $0x60] sm:$0xff]
  %v1430 = vld [vmem:[%s1416 + $0x68] sm:$0xff]
  %v1431 = vld [vmem:[%s1416 + $0x70] sm:$0xff]
  %v1432 = vld [vmem:[%s1416 + $0x78] sm:$0xff]
  %v1433 = vld [vmem:[%s1416 + $0x80] sm:$0xff]
  %v1434 = vld [vmem:[%s1416 + $0x88] sm:$0xff]
  %v1435 = vld [vmem:[%s1416 + $0x90] sm:$0xff]
  %v1436 = vld [vmem:[%s1416 + $0x98] sm:$0xff]
  %v1437 = vld [vmem:[%s1416 + $0xa0] sm:$0xff]
  %v1438 = vld [vmem:[%s1416 + $0xa8] sm:$0xff]
  %v1439 = vld [vmem:[%s1416 + $0xb0] sm:$0xff]
  %v1440 = vld [vmem:[%s1416 + $0xb8] sm:$0xff]
  %v1441 = vld [vmem:[%s1416 + $0xc0] sm:$0xff]
  %v1442 = vld [vmem:[%s1416 + $0xc8] sm:$0xff]
  %v1443 = vld [vmem:[%s1416 + $0xd0] sm:$0xff]
  %v1444 = vld [vmem:[%s1416 + $0xd8] sm:$0xff]
  %v1445 = vld [vmem:[%s1416 + $0xe0] sm:$0xff]
  %v1446 = vld [vmem:[%s1416 + $0xe8] sm:$0xff]
  %v1447 = vld [vmem:[%s1416 + $0xf0] sm:$0xff]
  %v1448 = vld [vmem:[%s1416 + $0xf8] sm:$0xff]
  %v1449 = vld [vmem:[%s1416 + $0x100] sm:$0xff]
  %v1450 = vld [vmem:[%s1416 + $0x108] sm:$0xff]
  %v1451 = vld [vmem:[%s1416 + $0x110] sm:$0xff]
  %v1452 = vld [vmem:[%s1416 + $0x118] sm:$0xff]
  %v1453 = vld [vmem:[%s1416 + $0x120] sm:$0xff]
  %v1454 = vld [vmem:[%s1416 + $0x128] sm:$0xff]
  %v1455 = vld [vmem:[%s1416 + $0x130] sm:$0xff]
  %v1456 = vld [vmem:[%s1416 + $0x138] sm:$0xff]
  %v1457 = vld [vmem:[%s1416 + $0x140] sm:$0xff]
  %v1458 = vld [vmem:[%s1416 + $0x148] sm:$0xff]
  %v1459 = vld [vmem:[%s1416 + $0x150] sm:$0xff]
  %v1460 = vld [vmem:[%s1416 + $0x158] sm:$0xff]
  %v1461 = vld [vmem:[%s1416 + $0x160] sm:$0xff]
  %v1462 = vld [vmem:[%s1416 + $0x168] sm:$0xff]
  %v1463 = vld [vmem:[%s1416 + $0x170] sm:$0xff]
  %v1464 = vld [vmem:[%s1416 + $0x178] sm:$0xff]
  %v1465 = vld [vmem:[%s1416 + $0x180] sm:$0xff]
  %v1466 = vld [vmem:[%s1416 + $0x188] sm:$0xff]
  %v1467 = vld [vmem:[%s1416 + $0x190] sm:$0xff]
  %v1468 = vld [vmem:[%s1416 + $0x198] sm:$0xff]
  %v1469 = vld [vmem:[%s1416 + $0x1a0] sm:$0xff]
  %v1470 = vld [vmem:[%s1416 + $0x1a8] sm:$0xff]
  %v1471 = vld [vmem:[%s1416 + $0x1b0] sm:$0xff]
  %v1472 = vld [vmem:[%s1416 + $0x1b8] sm:$0xff]
  %v1473 = vld [vmem:[%s1416 + $0x1c0] sm:$0xff]
  %v1474 = vld [vmem:[%s1416 + $0x1c8] sm:$0xff]
  %v1475 = vld [vmem:[%s1416 + $0x1d0] sm:$0xff]
  %v1476 = vld [vmem:[%s1416 + $0x1d8] sm:$0xff]
  %v1477 = vld [vmem:[%s1416 + $0x1e0] sm:$0xff]
  %v1478 = vld [vmem:[%s1416 + $0x1e8] sm:$0xff]
  %v1479 = vld [vmem:[%s1416 + $0x1f0] sm:$0xff]
  %v1480 = vld [vmem:[%s1416 + $0x1f8] sm:$0xff]
  %v1481 = vld [vmem:[%s1416 + $0x200] sm:$0xff]
  %v1482 = vld [vmem:[%s1416 + $0x208] sm:$0xff]
  %v1483 = vld [vmem:[%s1416 + $0x210] sm:$0xff]
  %v1484 = vld [vmem:[%s1416 + $0x218] sm:$0xff]
  %v1485 = vld [vmem:[%s1416 + $0x220] sm:$0xff]
  %v1486 = vld [vmem:[%s1416 + $0x228] sm:$0xff]
  %v1487 = vld [vmem:[%s1416 + $0x230] sm:$0xff]
  %v1488 = vld [vmem:[%s1416 + $0x238] sm:$0xff]
  %v1489 = vld [vmem:[%s1416 + $0x240] sm:$0xff]
  %v1490 = vld [vmem:[%s1416 + $0x248] sm:$0xff]
  %v1491 = vld [vmem:[%s1416 + $0x250] sm:$0xff]
  %v1492 = vld [vmem:[%s1416 + $0x258] sm:$0xff]
  %v1493 = vld [vmem:[%s1416 + $0x260] sm:$0xff]
  %v1494 = vld [vmem:[%s1416 + $0x268] sm:$0xff]
  %v1495 = vld [vmem:[%s1416 + $0x270] sm:$0xff]
  %v1496 = vld [vmem:[%s1416 + $0x278] sm:$0xff]
  %v1497 = vld [vmem:[%s1416 + $0x280] sm:$0xff]
  %v1498 = vld [vmem:[%s1416 + $0x288] sm:$0xff]
  %v1499 = vld [vmem:[%s1416 + $0x290] sm:$0xff]
  %v1500 = vld [vmem:[%s1416 + $0x298] sm:$0xff]
  %v1501 = vld [vmem:[%s1416 + $0x2a0] sm:$0x3]
  %v1502 = vld [vmem:[%s1416 + $0x2a8] sm:$0x3]
  %v1503 = vld [vmem:[%s1416 + $0x2b0] sm:$0x3]
  %v1504 = vld [vmem:[%s1416 + $0x2b8] sm:$0x3]
  %v1505 = vld [vmem:[%s1416 + $0x2c0] sm:$0x3]
  %v1506 = vld [vmem:[%s1416 + $0x2c8] sm:$0x3]
  %v1507 = vld [vmem:[%s1416 + $0x2d0] sm:$0x3]
  %v1509 = vsel %vm205, %v1423, 0
  %v1512 = vsel %vm205, %v1430, 0
  %v1515 = vsel %vm205, %v1437, 0
  %v1518 = vsel %vm205, %v1444, 0
  %v1521 = vsel %vm205, %v1451, 0
  %v1524 = vsel %vm205, %v1458, 0
  %v1527 = vsel %vm205, %v1465, 0
  %v1530 = vsel %vm205, %v1472, 0
  %v1533 = vsel %vm205, %v1479, 0
  %v1536 = vsel %vm205, %v1486, 0
  %v1539 = vsel %vm205, %v1493, 0
  %v1542 = vsel %vm205, %v1500, 0
  %v1545 = vsel %vm205, %v1507, 0
  %1547 = vmatprep.subr.mxu0 0.0
  %1548 = vmatpush1.msra.mxu0 %v14
  %1549 = vmatprep.subr.mxu0 0.0
  %1550 = vmatpush1.msra.mxu0 %v15
  %1551 = vmatprep.subr.mxu0 0.0
  %1552 = vmatpush1.msra.mxu0 %v16
  %1553 = vmatprep.subr.mxu0 0.0
  %1554 = vmatpush1.msra.mxu0 %v17
  %1555 = vmatprep.subr.mxu0 0.0
  %1556 = vmatpush1.msra.mxu0 %v18
  %1557 = vmatprep.subr.mxu0 0.0
  %1558 = vmatpush1.msra.mxu0 %v19
  %1559 = vmatprep.subr.mxu0 0.0
  %1560 = vmatpush1.msra.mxu0 %v20
  %1561 = vmatprep.subr.mxu0 0.0
  %1562 = vmatpush1.msra.mxu0 %v21
  %1563 = vmatprep.subr.mxu0 0.0
  %1564 = vmatpush1.msra.mxu0 %v22
  %1565 = vmatprep.subr.mxu0 0.0
  %1566 = vmatpush1.msra.mxu0 %v23
  %1567 = vmatprep.subr.mxu0 0.0
  %1568 = vmatpush1.msra.mxu0 %v24
  %1569 = vmatprep.subr.mxu0 0.0
  %1570 = vmatpush1.msra.mxu0 %v25
  %1571 = vmatprep.subr.mxu0 0.0
  %1572 = vmatpush1.msra.mxu0 %v26
  %1573 = vmatprep.subr.mxu0 0.0
  %1574 = vmatpush1.msra.mxu0 %v27
  %1575 = vmatprep.subr.mxu0 0.0
  %1576 = vmatpush1.msra.mxu0 %v28
  %1577 = vmatprep.subr.mxu0 0.0
  %1578 = vmatpush1.msra.mxu0 %v29
  %1579 = vmatprep.subr.mxu0 0.0
  %1580 = vmatpush1.msra.mxu0 %v30
  %1581 = vmatprep.subr.mxu0 0.0
  %1582 = vmatpush1.msra.mxu0 %v31
  %1583 = vmatprep.subr.mxu0 0.0
  %1584 = vmatpush1.msra.mxu0 %v32
  %1585 = vmatprep.subr.mxu0 0.0
  %1586 = vmatpush1.msra.mxu0 %v33
  %1587 = vmatprep.subr.mxu0 0.0
  %1588 = vmatpush1.msra.mxu0 %v34
  %1589 = vmatprep.subr.mxu0 0.0
  %1590 = vmatpush1.msra.mxu0 %v35
  %1591 = vmatprep.subr.mxu0 0.0
  %1592 = vmatpush1.msra.mxu0 %v36
  %1593 = vmatprep.subr.mxu0 0.0
  %1594 = vmatpush1.msra.mxu0 %v37
  %1595 = vmatprep.subr.mxu0 0.0
  %1596 = vmatpush1.msra.mxu0 %v38
  %1597 = vmatprep.subr.mxu0 0.0
  %1598 = vmatpush1.msra.mxu0 %v39
  %1599 = vmatprep.subr.mxu0 0.0
  %1600 = vmatpush1.msra.mxu0 %v40
  %1601 = vmatprep.subr.mxu0 0.0
  %1602 = vmatpush1.msra.mxu0 %v41
  %1603 = vmatprep.subr.mxu0 0.0
  %1604 = vmatpush1.msra.mxu0 %v42
  %1605 = vmatprep.subr.mxu0 0.0
  %1606 = vmatpush1.msra.mxu0 %v43
  %1607 = vmatprep.subr.mxu0 0.0
  %1608 = vmatpush1.msra.mxu0 %v44
  %1609 = vmatprep.subr.mxu0 0.0
  %1610 = vmatpush1.msra.mxu0 %v45
  %1611 = vmatprep.mubr.f32.mxu0 %v1418
  %1612 = vmatmul.mubr.f32.gmra.mrb[0].mxu0 %v1417
  %v1613 = vpop.f32.mrb[0].mxu0
  %v1614 = vadd.f32 0.0, %v1613
  %v1615 = vpop.f32.mrb[0].mxu0
  %1616 = vmatprep.mubr.f32.mxu0 %v1425
  %1617 = vmatmul.mubr.f32.gmra.mrb[0].mxu0 %v1424
  %v1618 = vpop.f32.mrb[0].mxu0
  %v1619 = vadd.f32 0.0, %v1618
  %v1620 = vpop.f32.mrb[0].mxu0
  %1621 = vmatprep.mubr.f32.mxu0 %v1432
  %1622 = vmatmul.mubr.f32.gmra.mrb[0].mxu0 %v1431
  %v1623 = vpop.f32.mrb[0].mxu0
  %v1624 = vadd.f32 0.0, %v1623
  %v1625 = vpop.f32.mrb[0].mxu0
  %1626 = vmatprep.mubr.f32.mxu0 %v1439
  %1627 = vmatmul.mubr.f32.gmra.mrb[0].mxu0 %v1438
  %v1628 = vpop.f32.mrb[0].mxu0
  %v1629 = vadd.f32 0.0, %v1628
  %v1630 = vpop.f32.mrb[0].mxu0
  %1631 = vmatprep.mubr.f32.mxu0 %v1446
  %1632 = vmatmul.mubr.f32.gmra.mrb[0].mxu0 %v1445
  %v1633 = vpop.f32.mrb[0].mxu0
  %v1634 = vadd.f32 0.0, %v1633
  %v1635 = vpop.f32.mrb[0].mxu0
  %1636 = vmatprep.mubr.f32.mxu0 %v1453
  %1637 = vmatmul.mubr.f32.gmra.mrb[0].mxu0 %v1452
  %v1638 = vpop.f32.mrb[0].mxu0
  %v1639 = vadd.f32 0.0, %v1638
  %v1640 = vpop.f32.mrb[0].mxu0
  %1641 = vmatprep.mubr.f32.mxu0 %v1460
  %1642 = vmatmul.mubr.f32.gmra.mrb[0].mxu0 %v1459
  %v1643 = vpop.f32.mrb[0].mxu0
  %v1644 = vadd.f32 0.0, %v1643
  %v1645 = vpop.f32.mrb[0].mxu0
  %1646 = vmatprep.mubr.f32.mxu0 %v1467
  %1647 = vmatmul.mubr.f32.gmra.mrb[0].mxu0 %v1466
  %v1648 = vpop.f32.mrb[0].mxu0
  %v1649 = vadd.f32 0.0, %v1648
  %v1650 = vpop.f32.mrb[0].mxu0
  %1651 = vmatprep.mubr.f32.mxu0 %v1474
  %1652 = vmatmul.mubr.f32.gmra.mrb[0].mxu0 %v1473
  %v1653 = vpop.f32.mrb[0].mxu0
  %v1654 = vadd.f32 0.0, %v1653
  %v1655 = vpop.f32.mrb[0].mxu0
  %1656 = vmatprep.mubr.f32.mxu0 %v1481
  %1657 = vmatmul.mubr.f32.gmra.mrb[0].mxu0 %v1480
  %v1658 = vpop.f32.mrb[0].mxu0
  %v1659 = vadd.f32 0.0, %v1658
  %v1660 = vpop.f32.mrb[0].mxu0
  %1661 = vmatprep.mubr.f32.mxu0 %v1488
  %1662 = vmatmul.mubr.f32.gmra.mrb[0].mxu0 %v1487
  %v1663 = vpop.f32.mrb[0].mxu0
  %v1664 = vadd.f32 0.0, %v1663
  %v1665 = vpop.f32.mrb[0].mxu0
  %1666 = vmatprep.mubr.f32.mxu0 %v1495
  %1667 = vmatmul.mubr.f32.gmra.mrb[0].mxu0 %v1494
  %v1668 = vpop.f32.mrb[0].mxu0
  %v1669 = vadd.f32 0.0, %v1668
  %v1670 = vpop.f32.mrb[0].mxu0
  %1671 = vmatprep.mubr.f32.mxu0 %v1502
  %1672 = vmatmul.mubr.f32.gmra.mrb[0].mxu0 %v1501
  %v1673 = vpop.f32.mrb[0].mxu0
  %v1674 = vadd.f32 0.0, %v1673
  %v1675 = vpop.f32.mrb[0].mxu0
  %1676 = vdwg.mxu0
  %1677 = vmatprep.subr.mxu0 0.0
  %1678 = vmatpush1.msra.mxu0 %v46
  %1679 = vmatprep.subr.mxu0 0.0
  %1680 = vmatpush1.msra.mxu0 %v47
  %1681 = vmatprep.subr.mxu0 0.0
  %1682 = vmatpush1.msra.mxu0 %v48
  %1683 = vmatprep.subr.mxu0 0.0
  %1684 = vmatpush1.msra.mxu0 %v49
  %1685 = vmatprep.subr.mxu0 0.0
  %1686 = vmatpush1.msra.mxu0 %v50
  %1687 = vmatprep.subr.mxu0 0.0
  %1688 = vmatpush1.msra.mxu0 %v51
  %1689 = vmatprep.subr.mxu0 0.0
  %1690 = vmatpush1.msra.mxu0 %v52
  %1691 = vmatprep.subr.mxu0 0.0
  %1692 = vmatpush1.msra.mxu0 %v53
  %1693 = vmatprep.subr.mxu0 0.0
  %1694 = vmatpush1.msra.mxu0 %v54
  %1695 = vmatprep.subr.mxu0 0.0
  %1696 = vmatpush1.msra.mxu0 %v55
  %1697 = vmatprep.subr.mxu0 0.0
  %1698 = vmatpush1.msra.mxu0 %v56
  %1699 = vmatprep.subr.mxu0 0.0
  %1700 = vmatpush1.msra.mxu0 %v57
  %1701 = vmatprep.subr.mxu0 0.0
  %1702 = vmatpush1.msra.mxu0 %v58
  %1703 = vmatprep.subr.mxu0 0.0
  %1704 = vmatpush1.msra.mxu0 %v59
  %1705 = vmatprep.subr.mxu0 0.0
  %1706 = vmatpush1.msra.mxu0 %v60
  %1707 = vmatprep.subr.mxu0 0.0
  %1708 = vmatpush1.msra.mxu0 %v61
  %1709 = vmatprep.subr.mxu0 0.0
  %1710 = vmatpush1.msra.mxu0 %v62
  %1711 = vmatprep.subr.mxu0 0.0
  %1712 = vmatpush1.msra.mxu0 %v63
  %1713 = vmatprep.subr.mxu0 0.0
  %1714 = vmatpush1.msra.mxu0 %v64
  %1715 = vmatprep.subr.mxu0 0.0
  %1716 = vmatpush1.msra.mxu0 %v65
  %1717 = vmatprep.subr.mxu0 0.0
  %1718 = vmatpush1.msra.mxu0 %v66
  %1719 = vmatprep.subr.mxu0 0.0
  %1720 = vmatpush1.msra.mxu0 %v67
  %1721 = vmatprep.subr.mxu0 0.0
  %1722 = vmatpush1.msra.mxu0 %v68
  %1723 = vmatprep.subr.mxu0 0.0
  %1724 = vmatpush1.msra.mxu0 %v69
  %1725 = vmatprep.subr.mxu0 0.0
  %1726 = vmatpush1.msra.mxu0 %v70
  %1727 = vmatprep.subr.mxu0 0.0
  %1728 = vmatpush1.msra.mxu0 %v71
  %1729 = vmatprep.subr.mxu0 0.0
  %1730 = vmatpush1.msra.mxu0 %v72
  %1731 = vmatprep.subr.mxu0 0.0
  %1732 = vmatpush1.msra.mxu0 %v73
  %1733 = vmatprep.subr.mxu0 0.0
  %1734 = vmatpush1.msra.mxu0 %v74
  %1735 = vmatprep.subr.mxu0 0.0
  %1736 = vmatpush1.msra.mxu0 %v75
  %1737 = vmatprep.subr.mxu0 0.0
  %1738 = vmatpush1.msra.mxu0 %v76
  %1739 = vmatprep.subr.mxu0 0.0
  %1740 = vmatpush1.msra.mxu0 %v77
  %1741 = vmatprep.mubr.f32.mxu0 %v1420
  %1742 = vmatmul.mubr.f32.gmra.mrb[0].mxu0 %v1419
  %v1743 = vpop.f32.mrb[0].mxu0
  %v1744 = vadd.f32 %v1614, %v1743
  %v1745 = vpop.f32.mrb[0].mxu0
  %1746 = vmatprep.mubr.f32.mxu0 %v1427
  %1747 = vmatmul.mubr.f32.gmra.mrb[0].mxu0 %v1426
  %v1748 = vpop.f32.mrb[0].mxu0
  %v1749 = vadd.f32 %v1619, %v1748
  %v1750 = vpop.f32.mrb[0].mxu0
  %1751 = vmatprep.mubr.f32.mxu0 %v1434
  %1752 = vmatmul.mubr.f32.gmra.mrb[0].mxu0 %v1433
  %v1753 = vpop.f32.mrb[0].mxu0
  %v1754 = vadd.f32 %v1624, %v1753
  %v1755 = vpop.f32.mrb[0].mxu0
  %1756 = vmatprep.mubr.f32.mxu0 %v1441
  %1757 = vmatmul.mubr.f32.gmra.mrb[0].mxu0 %v1440
  %v1758 = vpop.f32.mrb[0].mxu0
  %v1759 = vadd.f32 %v1629, %v1758
  %v1760 = vpop.f32.mrb[0].mxu0
  %1761 = vmatprep.mubr.f32.mxu0 %v1448
  %1762 = vmatmul.mubr.f32.gmra.mrb[0].mxu0 %v1447
  %v1763 = vpop.f32.mrb[0].mxu0
  %v1764 = vadd.f32 %v1634, %v1763
  %v1765 = vpop.f32.mrb[0].mxu0
  %1766 = vmatprep.mubr.f32.mxu0 %v1455
  %1767 = vmatmul.mubr.f32.gmra.mrb[0].mxu0 %v1454
  %v1768 = vpop.f32.mrb[0].mxu0
  %v1769 = vadd.f32 %v1639, %v1768
  %v1770 = vpop.f32.mrb[0].mxu0
  %1771 = vmatprep.mubr.f32.mxu0 %v1462
  %1772 = vmatmul.mubr.f32.gmra.mrb[0].mxu0 %v1461
  %v1773 = vpop.f32.mrb[0].mxu0
  %v1774 = vadd.f32 %v1644, %v1773
  %v1775 = vpop.f32.mrb[0].mxu0
  %1776 = vmatprep.mubr.f32.mxu0 %v1469
  %1777 = vmatmul.mubr.f32.gmra.mrb[0].mxu0 %v1468
  %v1778 = vpop.f32.mrb[0].mxu0
  %v1779 = vadd.f32 %v1649, %v1778
  %v1780 = vpop.f32.mrb[0].mxu0
  %1781 = vmatprep.mubr.f32.mxu0 %v1476
  %1782 = vmatmul.mubr.f32.gmra.mrb[0].mxu0 %v1475
  %v1783 = vpop.f32.mrb[0].mxu0
  %v1784 = vadd.f32 %v1654, %v1783
  %v1785 = vpop.f32.mrb[0].mxu0
  %1786 = vmatprep.mubr.f32.mxu0 %v1483
  %1787 = vmatmul.mubr.f32.gmra.mrb[0].mxu0 %v1482
  %v1788 = vpop.f32.mrb[0].mxu0
  %v1789 = vadd.f32 %v1659, %v1788
  %v1790 = vpop.f32.mrb[0].mxu0
  %1791 = vmatprep.mubr.f32.mxu0 %v1490
  %1792 = vmatmul.mubr.f32.gmra.mrb[0].mxu0 %v1489
  %v1793 = vpop.f32.mrb[0].mxu0
  %v1794 = vadd.f32 %v1664, %v1793
  %v1795 = vpop.f32.mrb[0].mxu0
  %1796 = vmatprep.mubr.f32.mxu0 %v1497
  %1797 = vmatmul.mubr.f32.gmra.mrb[0].mxu0 %v1496
  %v1798 = vpop.f32.mrb[0].mxu0
  %v1799 = vadd.f32 %v1669, %v1798
  %v1800 = vpop.f32.mrb[0].mxu0
  %1801 = vmatprep.mubr.f32.mxu0 %v1504
  %1802 = vmatmul.mubr.f32.gmra.mrb[0].mxu0 %v1503
  %v1803 = vpop.f32.mrb[0].mxu0
  %v1804 = vadd.f32 %v1674, %v1803
  %v1805 = vpop.f32.mrb[0].mxu0
  %1806 = vdwg.mxu0
  %1807 = vmatprep.subr.mxu0 0.0
  %1808 = vmatpush1.msra.mxu0 %v78
  %1809 = vmatprep.subr.mxu0 0.0
  %1810 = vmatpush1.msra.mxu0 %v79
  %1811 = vmatprep.subr.mxu0 0.0
  %1812 = vmatpush1.msra.mxu0 %v80
  %1813 = vmatprep.subr.mxu0 0.0
  %1814 = vmatpush1.msra.mxu0 %v81
  %1815 = vmatprep.subr.mxu0 0.0
  %1816 = vmatpush1.msra.mxu0 %v82
  %1817 = vmatprep.subr.mxu0 0.0
  %1818 = vmatpush1.msra.mxu0 %v83
  %1819 = vmatprep.subr.mxu0 0.0
  %1820 = vmatpush1.msra.mxu0 %v84
  %1821 = vmatprep.subr.mxu0 0.0
  %1822 = vmatpush1.msra.mxu0 %v85
  %1823 = vmatprep.subr.mxu0 0.0
  %1824 = vmatpush1.msra.mxu0 %v86
  %1825 = vmatprep.subr.mxu0 0.0
  %1826 = vmatpush1.msra.mxu0 %v87
  %1827 = vmatprep.subr.mxu0 0.0
  %1828 = vmatpush1.msra.mxu0 %v88
  %1829 = vmatprep.subr.mxu0 0.0
  %1830 = vmatpush1.msra.mxu0 %v89
  %1831 = vmatprep.subr.mxu0 0.0
  %1832 = vmatpush1.msra.mxu0 %v90
  %1833 = vmatprep.subr.mxu0 0.0
  %1834 = vmatpush1.msra.mxu0 %v91
  %1835 = vmatprep.subr.mxu0 0.0
  %1836 = vmatpush1.msra.mxu0 %v92
  %1837 = vmatprep.subr.mxu0 0.0
  %1838 = vmatpush1.msra.mxu0 %v93
  %1839 = vmatprep.subr.mxu0 0.0
  %1840 = vmatpush1.msra.mxu0 %v94
  %1841 = vmatprep.subr.mxu0 0.0
  %1842 = vmatpush1.msra.mxu0 %v95
  %1843 = vmatprep.subr.mxu0 0.0
  %1844 = vmatpush1.msra.mxu0 %v96
  %1845 = vmatprep.subr.mxu0 0.0
  %1846 = vmatpush1.msra.mxu0 %v97
  %1847 = vmatprep.subr.mxu0 0.0
  %1848 = vmatpush1.msra.mxu0 %v98
  %1849 = vmatprep.subr.mxu0 0.0
  %1850 = vmatpush1.msra.mxu0 %v99
  %1851 = vmatprep.subr.mxu0 0.0
  %1852 = vmatpush1.msra.mxu0 %v100
  %1853 = vmatprep.subr.mxu0 0.0
  %1854 = vmatpush1.msra.mxu0 %v101
  %1855 = vmatprep.subr.mxu0 0.0
  %1856 = vmatpush1.msra.mxu0 %v102
  %1857 = vmatprep.subr.mxu0 0.0
  %1858 = vmatpush1.msra.mxu0 %v103
  %1859 = vmatprep.subr.mxu0 0.0
  %1860 = vmatpush1.msra.mxu0 %v104
  %1861 = vmatprep.subr.mxu0 0.0
  %1862 = vmatpush1.msra.mxu0 %v105
  %1863 = vmatprep.subr.mxu0 0.0
  %1864 = vmatpush1.msra.mxu0 %v106
  %1865 = vmatprep.subr.mxu0 0.0
  %1866 = vmatpush1.msra.mxu0 %v107
  %1867 = vmatprep.subr.mxu0 0.0
  %1868 = vmatpush1.msra.mxu0 %v108
  %1869 = vmatprep.subr.mxu0 0.0
  %1870 = vmatpush1.msra.mxu0 %v109
  %1871 = vmatprep.mubr.f32.mxu0 %v1422
  %1872 = vmatmul.mubr.f32.gmra.mrb[0].mxu0 %v1421
  %v1873 = vpop.f32.mrb[0].mxu0
  %v1874 = vadd.f32 %v1744, %v1873
  %v1875 = vpop.f32.mrb[0].mxu0
  %1876 = vmatprep.mubr.f32.mxu0 %v1429
  %1877 = vmatmul.mubr.f32.gmra.mrb[0].mxu0 %v1428
  %v1878 = vpop.f32.mrb[0].mxu0
  %v1879 = vadd.f32 %v1749, %v1878
  %v1880 = vpop.f32.mrb[0].mxu0
  %1881 = vmatprep.mubr.f32.mxu0 %v1436
  %1882 = vmatmul.mubr.f32.gmra.mrb[0].mxu0 %v1435
  %v1883 = vpop.f32.mrb[0].mxu0
  %v1884 = vadd.f32 %v1754, %v1883
  %v1885 = vpop.f32.mrb[0].mxu0
  %1886 = vmatprep.mubr.f32.mxu0 %v1443
  %1887 = vmatmul.mubr.f32.gmra.mrb[0].mxu0 %v1442
  %v1888 = vpop.f32.mrb[0].mxu0
  %v1889 = vadd.f32 %v1759, %v1888
  %v1890 = vpop.f32.mrb[0].mxu0
  %1891 = vmatprep.mubr.f32.mxu0 %v1450
  %1892 = vmatmul.mubr.f32.gmra.mrb[0].mxu0 %v1449
  %v1893 = vpop.f32.mrb[0].mxu0
  %v1894 = vadd.f32 %v1764, %v1893
  %v1895 = vpop.f32.mrb[0].mxu0
  %1896 = vmatprep.mubr.f32.mxu0 %v1457
  %1897 = vmatmul.mubr.f32.gmra.mrb[0].mxu0 %v1456
  %v1898 = vpop.f32.mrb[0].mxu0
  %v1899 = vadd.f32 %v1769, %v1898
  %v1900 = vpop.f32.mrb[0].mxu0
  %1901 = vmatprep.mubr.f32.mxu0 %v1464
  %1902 = vmatmul.mubr.f32.gmra.mrb[0].mxu0 %v1463
  %v1903 = vpop.f32.mrb[0].mxu0
  %v1904 = vadd.f32 %v1774, %v1903
  %v1905 = vpop.f32.mrb[0].mxu0
  %1906 = vmatprep.mubr.f32.mxu0 %v1471
  %1907 = vmatmul.mubr.f32.gmra.mrb[0].mxu0 %v1470
  %v1908 = vpop.f32.mrb[0].mxu0
  %v1909 = vadd.f32 %v1779, %v1908
  %v1910 = vpop.f32.mrb[0].mxu0
  %1911 = vmatprep.mubr.f32.mxu0 %v1478
  %1912 = vmatmul.mubr.f32.gmra.mrb[0].mxu0 %v1477
  %v1913 = vpop.f32.mrb[0].mxu0
  %v1914 = vadd.f32 %v1784, %v1913
  %v1915 = vpop.f32.mrb[0].mxu0
  %1916 = vmatprep.mubr.f32.mxu0 %v1485
  %1917 = vmatmul.mubr.f32.gmra.mrb[0].mxu0 %v1484
  %v1918 = vpop.f32.mrb[0].mxu0
  %v1919 = vadd.f32 %v1789, %v1918
  %v1920 = vpop.f32.mrb[0].mxu0
  %1921 = vmatprep.mubr.f32.mxu0 %v1492
  %1922 = vmatmul.mubr.f32.gmra.mrb[0].mxu0 %v1491
  %v1923 = vpop.f32.mrb[0].mxu0
  %v1924 = vadd.f32 %v1794, %v1923
  %v1925 = vpop.f32.mrb[0].mxu0
  %1926 = vmatprep.mubr.f32.mxu0 %v1499
  %1927 = vmatmul.mubr.f32.gmra.mrb[0].mxu0 %v1498
  %v1928 = vpop.f32.mrb[0].mxu0
  %v1929 = vadd.f32 %v1799, %v1928
  %v1930 = vpop.f32.mrb[0].mxu0
  %1931 = vmatprep.mubr.f32.mxu0 %v1506
  %1932 = vmatmul.mubr.f32.gmra.mrb[0].mxu0 %v1505
  %v1933 = vpop.f32.mrb[0].mxu0
  %v1934 = vadd.f32 %v1804, %v1933
  %v1935 = vpop.f32.mrb[0].mxu0
  %1936 = vdwg.mxu0
  %1937 = vmatprep.subr.mxu0 0.0
  %1938 = vmatpush1.msra.mxu0 %v110
  %1939 = vmatprep.subr.mxu0 0.0
  %1940 = vmatpush1.msra.mxu0 %v111
  %1941 = vmatprep.subr.mxu0 0.0
  %1942 = vmatpush1.msra.mxu0 %v112
  %1943 = vmatprep.subr.mxu0 0.0
  %1944 = vmatpush1.msra.mxu0 %v113
  %1945 = vmatprep.subr.mxu0 0.0
  %1946 = vmatpush1.msra.mxu0 0.0
  %1947 = vmatprep.subr.mxu0 0.0
  %1948 = vmatpush1.msra.mxu0 0.0
  %1949 = vmatprep.subr.mxu0 0.0
  %1950 = vmatpush1.msra.mxu0 0.0
  %1951 = vmatprep.subr.mxu0 0.0
  %1952 = vmatpush1.msra.mxu0 0.0
  %1953 = vmatprep.subr.mxu0 0.0
  %1954 = vmatpush1.msra.mxu0 0.0
  %1955 = vmatprep.subr.mxu0 0.0
  %1956 = vmatpush1.msra.mxu0 0.0
  %1957 = vmatprep.subr.mxu0 0.0
  %1958 = vmatpush1.msra.mxu0 0.0
  %1959 = vmatprep.subr.mxu0 0.0
  %1960 = vmatpush1.msra.mxu0 0.0
  %1961 = vmatprep.subr.mxu0 0.0
  %1962 = vmatpush1.msra.mxu0 0.0
  %1963 = vmatprep.subr.mxu0 0.0
  %1964 = vmatpush1.msra.mxu0 0.0
  %1965 = vmatprep.subr.mxu0 0.0
  %1966 = vmatpush1.msra.mxu0 0.0
  %1967 = vmatprep.subr.mxu0 0.0
  %1968 = vmatpush1.msra.mxu0 0.0
  %1969 = vmatprep.subr.mxu0 0.0
  %1970 = vmatpush1.msra.mxu0 0.0
  %1971 = vmatprep.subr.mxu0 0.0
  %1972 = vmatpush1.msra.mxu0 0.0
  %1973 = vmatprep.subr.mxu0 0.0
  %1974 = vmatpush1.msra.mxu0 0.0
  %1975 = vmatprep.subr.mxu0 0.0
  %1976 = vmatpush1.msra.mxu0 0.0
  %1977 = vmatprep.subr.mxu0 0.0
  %1978 = vmatpush1.msra.mxu0 0.0
  %1979 = vmatprep.subr.mxu0 0.0
  %1980 = vmatpush1.msra.mxu0 0.0
  %1981 = vmatprep.subr.mxu0 0.0
  %1982 = vmatpush1.msra.mxu0 0.0
  %1983 = vmatprep.subr.mxu0 0.0
  %1984 = vmatpush1.msra.mxu0 0.0
  %1985 = vmatprep.subr.mxu0 0.0
  %1986 = vmatpush1.msra.mxu0 0.0
  %1987 = vmatprep.subr.mxu0 0.0
  %1988 = vmatpush1.msra.mxu0 0.0
  %1989 = vmatprep.subr.mxu0 0.0
  %1990 = vmatpush1.msra.mxu0 0.0
  %1991 = vmatprep.subr.mxu0 0.0
  %1992 = vmatpush1.msra.mxu0 0.0
  %1993 = vmatprep.subr.mxu0 0.0
  %1994 = vmatpush1.msra.mxu0 0.0
  %1995 = vmatprep.subr.mxu0 0.0
  %1996 = vmatpush1.msra.mxu0 0.0
  %1997 = vmatprep.subr.mxu0 0.0
  %1998 = vmatpush1.msra.mxu0 0.0
  %1999 = vmatprep.subr.mxu0 0.0
  %2000 = vmatpush1.msra.mxu0 0.0
  %2001 = vmatprep.mubr.f32.mxu0 0.0
  %2002 = vmatmul.mubr.f32.gmra.mrb[0].mxu0 %v1509
  %v2003 = vpop.f32.mrb[0].mxu0
  %v2004 = vadd.f32 %v1874, %v2003
  %v2005 = vpop.f32.mrb[0].mxu0
  %2006 = vmatprep.mubr.f32.mxu0 0.0
  %2007 = vmatmul.mubr.f32.gmra.mrb[0].mxu0 %v1512
  %v2008 = vpop.f32.mrb[0].mxu0
  %v2009 = vadd.f32 %v1879, %v2008
  %v2010 = vpop.f32.mrb[0].mxu0
  %2011 = vmatprep.mubr.f32.mxu0 0.0
  %2012 = vmatmul.mubr.f32.gmra.mrb[0].mxu0 %v1515
  %v2013 = vpop.f32.mrb[0].mxu0
  %v2014 = vadd.f32 %v1884, %v2013
  %v2015 = vpop.f32.mrb[0].mxu0
  %2016 = vmatprep.mubr.f32.mxu0 0.0
  %2017 = vmatmul.mubr.f32.gmra.mrb[0].mxu0 %v1518
  %v2018 = vpop.f32.mrb[0].mxu0
  %v2019 = vadd.f32 %v1889, %v2018
  %v2020 = vpop.f32.mrb[0].mxu0
  %2021 = vmatprep.mubr.f32.mxu0 0.0
  %2022 = vmatmul.mubr.f32.gmra.mrb[0].mxu0 %v1521
  %v2023 = vpop.f32.mrb[0].mxu0
  %v2024 = vadd.f32 %v1894, %v2023
  %v2025 = vpop.f32.mrb[0].mxu0
  %2026 = vmatprep.mubr.f32.mxu0 0.0
  %2027 = vmatmul.mubr.f32.gmra.mrb[0].mxu0 %v1524
  %v2028 = vpop.f32.mrb[0].mxu0
  %v2029 = vadd.f32 %v1899, %v2028
  %v2030 = vpop.f32.mrb[0].mxu0
  %2031 = vmatprep.mubr.f32.mxu0 0.0
  %2032 = vmatmul.mubr.f32.gmra.mrb[0].mxu0 %v1527
  %v2033 = vpop.f32.mrb[0].mxu0
  %v2034 = vadd.f32 %v1904, %v2033
  %v2035 = vpop.f32.mrb[0].mxu0
  %2036 = vmatprep.mubr.f32.mxu0 0.0
  %2037 = vmatmul.mubr.f32.gmra.mrb[0].mxu0 %v1530
  %v2038 = vpop.f32.mrb[0].mxu0
  %v2039 = vadd.f32 %v1909, %v2038
  %v2040 = vpop.f32.mrb[0].mxu0
  %2041 = vmatprep.mubr.f32.mxu0 0.0
  %2042 = vmatmul.mubr.f32.gmra.mrb[0].mxu0 %v1533
  %v2043 = vpop.f32.mrb[0].mxu0
  %v2044 = vadd.f32 %v1914, %v2043
  %v2045 = vpop.f32.mrb[0].mxu0
  %2046 = vmatprep.mubr.f32.mxu0 0.0
  %2047 = vmatmul.mubr.f32.gmra.mrb[0].mxu0 %v1536
  %v2048 = vpop.f32.mrb[0].mxu0
  %v2049 = vadd.f32 %v1919, %v2048
  %v2050 = vpop.f32.mrb[0].mxu0
  %2051 = vmatprep.mubr.f32.mxu0 0.0
  %2052 = vmatmul.mubr.f32.gmra.mrb[0].mxu0 %v1539
  %v2053 = vpop.f32.mrb[0].mxu0
  %v2054 = vadd.f32 %v1924, %v2053
  %v2055 = vpop.f32.mrb[0].mxu0
  %2056 = vmatprep.mubr.f32.mxu0 0.0
  %2057 = vmatmul.mubr.f32.gmra.mrb[0].mxu0 %v1542
  %v2058 = vpop.f32.mrb[0].mxu0
  %v2059 = vadd.f32 %v1929, %v2058
  %v2060 = vpop.f32.mrb[0].mxu0
  %2061 = vmatprep.mubr.f32.mxu0 0.0
  %2062 = vmatmul.mubr.f32.gmra.mrb[0].mxu0 %v1545
  %v2063 = vpop.f32.mrb[0].mxu0
  %v2064 = vadd.f32 %v1934, %v2063
  %v2065 = vpop.f32.mrb[0].mxu0
  %2066 = vdwg.mxu0
  %s2067 = scalar_lea.vmem %s0, 2184
  %v2068 = vld [vmem:[%s2067] sm:$0xff]
  %v2069 = vld [vmem:[%s2067 + $0x8] sm:$0xff]
  %v2070 = vld [vmem:[%s2067 + $0x10] sm:$0xff]
  %v2071 = vld [vmem:[%s2067 + $0x18] sm:$0xff]
  %v2072 = vld [vmem:[%s2067 + $0x20] sm:$0xff]
  %v2073 = vld [vmem:[%s2067 + $0x28] sm:$0xff]
  %v2074 = vld [vmem:[%s2067 + $0x30] sm:$0xff]
  %v2075 = vld [vmem:[%s2067 + $0x38] sm:$0xff]
  %v2076 = vld [vmem:[%s2067 + $0x40] sm:$0xff]
  %v2077 = vld [vmem:[%s2067 + $0x48] sm:$0xff]
  %v2078 = vld [vmem:[%s2067 + $0x50] sm:$0xff]
  %v2079 = vld [vmem:[%s2067 + $0x58] sm:$0xff]
  %v2080 = vld [vmem:[%s2067 + $0x60] sm:$0xff]
  %v2081 = vld [vmem:[%s2067 + $0x68] sm:$0xff]
  %v2082 = vld [vmem:[%s2067 + $0x70] sm:$0xff]
  %v2083 = vld [vmem:[%s2067 + $0x78] sm:$0xff]
  %v2084 = vld [vmem:[%s2067 + $0x80] sm:$0xff]
  %v2085 = vld [vmem:[%s2067 + $0x88] sm:$0xff]
  %v2086 = vld [vmem:[%s2067 + $0x90] sm:$0xff]
  %v2087 = vld [vmem:[%s2067 + $0x98] sm:$0xff]
  %v2088 = vld [vmem:[%s2067 + $0xa0] sm:$0xff]
  %v2089 = vld [vmem:[%s2067 + $0xa8] sm:$0xff]
  %v2090 = vld [vmem:[%s2067 + $0xb0] sm:$0xff]
  %v2091 = vld [vmem:[%s2067 + $0xb8] sm:$0xff]
  %v2092 = vld [vmem:[%s2067 + $0xc0] sm:$0xff]
  %v2093 = vld [vmem:[%s2067 + $0xc8] sm:$0xff]
  %v2094 = vld [vmem:[%s2067 + $0xd0] sm:$0xff]
  %v2095 = vld [vmem:[%s2067 + $0xd8] sm:$0xff]
  %v2096 = vld [vmem:[%s2067 + $0xe0] sm:$0xff]
  %v2097 = vld [vmem:[%s2067 + $0xe8] sm:$0xff]
  %v2098 = vld [vmem:[%s2067 + $0xf0] sm:$0xff]
  %v2099 = vld [vmem:[%s2067 + $0xf8] sm:$0xff]
  %v2100 = vld [vmem:[%s2067 + $0x100] sm:$0xff]
  %v2101 = vld [vmem:[%s2067 + $0x108] sm:$0xff]
  %v2102 = vld [vmem:[%s2067 + $0x110] sm:$0xff]
  %v2103 = vld [vmem:[%s2067 + $0x118] sm:$0xff]
  %v2104 = vld [vmem:[%s2067 + $0x120] sm:$0xff]
  %v2105 = vld [vmem:[%s2067 + $0x128] sm:$0xff]
  %v2106 = vld [vmem:[%s2067 + $0x130] sm:$0xff]
  %v2107 = vld [vmem:[%s2067 + $0x138] sm:$0xff]
  %v2108 = vld [vmem:[%s2067 + $0x140] sm:$0xff]
  %v2109 = vld [vmem:[%s2067 + $0x148] sm:$0xff]
  %v2110 = vld [vmem:[%s2067 + $0x150] sm:$0xff]
  %v2111 = vld [vmem:[%s2067 + $0x158] sm:$0xff]
  %v2112 = vld [vmem:[%s2067 + $0x160] sm:$0xff]
  %v2113 = vld [vmem:[%s2067 + $0x168] sm:$0xff]
  %v2114 = vld [vmem:[%s2067 + $0x170] sm:$0xff]
  %v2115 = vld [vmem:[%s2067 + $0x178] sm:$0xff]
  %v2116 = vld [vmem:[%s2067 + $0x180] sm:$0xff]
  %v2117 = vld [vmem:[%s2067 + $0x188] sm:$0xff]
  %v2118 = vld [vmem:[%s2067 + $0x190] sm:$0xff]
  %v2119 = vld [vmem:[%s2067 + $0x198] sm:$0xff]
  %v2120 = vld [vmem:[%s2067 + $0x1a0] sm:$0xff]
  %v2121 = vld [vmem:[%s2067 + $0x1a8] sm:$0xff]
  %v2122 = vld [vmem:[%s2067 + $0x1b0] sm:$0xff]
  %v2123 = vld [vmem:[%s2067 + $0x1b8] sm:$0xff]
  %v2124 = vld [vmem:[%s2067 + $0x1c0] sm:$0xff]
  %v2125 = vld [vmem:[%s2067 + $0x1c8] sm:$0xff]
  %v2126 = vld [vmem:[%s2067 + $0x1d0] sm:$0xff]
  %v2127 = vld [vmem:[%s2067 + $0x1d8] sm:$0xff]
  %v2128 = vld [vmem:[%s2067 + $0x1e0] sm:$0xff]
  %v2129 = vld [vmem:[%s2067 + $0x1e8] sm:$0xff]
  %v2130 = vld [vmem:[%s2067 + $0x1f0] sm:$0xff]
  %v2131 = vld [vmem:[%s2067 + $0x1f8] sm:$0xff]
  %v2132 = vld [vmem:[%s2067 + $0x200] sm:$0xff]
  %v2133 = vld [vmem:[%s2067 + $0x208] sm:$0xff]
  %v2134 = vld [vmem:[%s2067 + $0x210] sm:$0xff]
  %v2135 = vld [vmem:[%s2067 + $0x218] sm:$0xff]
  %v2136 = vld [vmem:[%s2067 + $0x220] sm:$0xff]
  %v2137 = vld [vmem:[%s2067 + $0x228] sm:$0xff]
  %v2138 = vld [vmem:[%s2067 + $0x230] sm:$0xff]
  %v2139 = vld [vmem:[%s2067 + $0x238] sm:$0xff]
  %v2140 = vld [vmem:[%s2067 + $0x240] sm:$0xff]
  %v2141 = vld [vmem:[%s2067 + $0x248] sm:$0xff]
  %v2142 = vld [vmem:[%s2067 + $0x250] sm:$0xff]
  %v2143 = vld [vmem:[%s2067 + $0x258] sm:$0xff]
  %v2144 = vld [vmem:[%s2067 + $0x260] sm:$0xff]
  %v2145 = vld [vmem:[%s2067 + $0x268] sm:$0xff]
  %v2146 = vld [vmem:[%s2067 + $0x270] sm:$0xff]
  %v2147 = vld [vmem:[%s2067 + $0x278] sm:$0xff]
  %v2148 = vld [vmem:[%s2067 + $0x280] sm:$0xff]
  %v2149 = vld [vmem:[%s2067 + $0x288] sm:$0xff]
  %v2150 = vld [vmem:[%s2067 + $0x290] sm:$0xff]
  %v2151 = vld [vmem:[%s2067 + $0x298] sm:$0xff]
  %v2152 = vld [vmem:[%s2067 + $0x2a0] sm:$0x3]
  %v2153 = vld [vmem:[%s2067 + $0x2a8] sm:$0x3]
  %v2154 = vld [vmem:[%s2067 + $0x2b0] sm:$0x3]
  %v2155 = vld [vmem:[%s2067 + $0x2b8] sm:$0x3]
  %v2156 = vld [vmem:[%s2067 + $0x2c0] sm:$0x3]
  %v2157 = vld [vmem:[%s2067 + $0x2c8] sm:$0x3]
  %v2158 = vld [vmem:[%s2067 + $0x2d0] sm:$0x3]
  %v2160 = vsel %vm205, %v2074, 0
  %v2163 = vsel %vm205, %v2081, 0
  %v2166 = vsel %vm205, %v2088, 0
  %v2169 = vsel %vm205, %v2095, 0
  %v2172 = vsel %vm205, %v2102, 0
  %v2175 = vsel %vm205, %v2109, 0
  %v2178 = vsel %vm205, %v2116, 0
  %v2181 = vsel %vm205, %v2123, 0
  %v2184 = vsel %vm205, %v2130, 0
  %v2187 = vsel %vm205, %v2137, 0
  %v2190 = vsel %vm205, %v2144, 0
  %v2193 = vsel %vm205, %v2151, 0
  %v2196 = vsel %vm205, %v2158, 0
  %2198 = vmatprep.subr.mxu0 0.0
  %2199 = vmatpush1.msra.mxu0 %v14
  %2200 = vmatprep.subr.mxu0 0.0
  %2201 = vmatpush1.msra.mxu0 %v15
  %2202 = vmatprep.subr.mxu0 0.0
  %2203 = vmatpush1.msra.mxu0 %v16
  %2204 = vmatprep.subr.mxu0 0.0
  %2205 = vmatpush1.msra.mxu0 %v17
  %2206 = vmatprep.subr.mxu0 0.0
  %2207 = vmatpush1.msra.mxu0 %v18
  %2208 = vmatprep.subr.mxu0 0.0
  %2209 = vmatpush1.msra.mxu0 %v19
  %2210 = vmatprep.subr.mxu0 0.0
  %2211 = vmatpush1.msra.mxu0 %v20
  %2212 = vmatprep.subr.mxu0 0.0
  %2213 = vmatpush1.msra.mxu0 %v21
  %2214 = vmatprep.subr.mxu0 0.0
  %2215 = vmatpush1.msra.mxu0 %v22
  %2216 = vmatprep.subr.mxu0 0.0
  %2217 = vmatpush1.msra.mxu0 %v23
  %2218 = vmatprep.subr.mxu0 0.0
  %2219 = vmatpush1.msra.mxu0 %v24
  %2220 = vmatprep.subr.mxu0 0.0
  %2221 = vmatpush1.msra.mxu0 %v25
  %2222 = vmatprep.subr.mxu0 0.0
  %2223 = vmatpush1.msra.mxu0 %v26
  %2224 = vmatprep.subr.mxu0 0.0
  %2225 = vmatpush1.msra.mxu0 %v27
  %2226 = vmatprep.subr.mxu0 0.0
  %2227 = vmatpush1.msra.mxu0 %v28
  %2228 = vmatprep.subr.mxu0 0.0
  %2229 = vmatpush1.msra.mxu0 %v29
  %2230 = vmatprep.subr.mxu0 0.0
  %2231 = vmatpush1.msra.mxu0 %v30
  %2232 = vmatprep.subr.mxu0 0.0
  %2233 = vmatpush1.msra.mxu0 %v31
  %2234 = vmatprep.subr.mxu0 0.0
  %2235 = vmatpush1.msra.mxu0 %v32
  %2236 = vmatprep.subr.mxu0 0.0
  %2237 = vmatpush1.msra.mxu0 %v33
  %2238 = vmatprep.subr.mxu0 0.0
  %2239 = vmatpush1.msra.mxu0 %v34
  %2240 = vmatprep.subr.mxu0 0.0
  %2241 = vmatpush1.msra.mxu0 %v35
  %2242 = vmatprep.subr.mxu0 0.0
  %2243 = vmatpush1.msra.mxu0 %v36
  %2244 = vmatprep.subr.mxu0 0.0
  %2245 = vmatpush1.msra.mxu0 %v37
  %2246 = vmatprep.subr.mxu0 0.0
  %2247 = vmatpush1.msra.mxu0 %v38
  %2248 = vmatprep.subr.mxu0 0.0
  %2249 = vmatpush1.msra.mxu0 %v39
  %2250 = vmatprep.subr.mxu0 0.0
  %2251 = vmatpush1.msra.mxu0 %v40
  %2252 = vmatprep.subr.mxu0 0.0
  %2253 = vmatpush1.msra.mxu0 %v41
  %2254 = vmatprep.subr.mxu0 0.0
  %2255 = vmatpush1.msra.mxu0 %v42
  %2256 = vmatprep.subr.mxu0 0.0
  %2257 = vmatpush1.msra.mxu0 %v43
  %2258 = vmatprep.subr.mxu0 0.0
  %2259 = vmatpush1.msra.mxu0 %v44
  %2260 = vmatprep.subr.mxu0 0.0
  %2261 = vmatpush1.msra.mxu0 %v45
  %2262 = vmatprep.mubr.f32.mxu0 %v2069
  %2263 = vmatmul.mubr.f32.gmra.mrb[0].mxu0 %v2068
  %v2264 = vpop.f32.mrb[0].mxu0
  %v2265 = vadd.f32 0.0, %v2264
  %v2266 = vpop.f32.mrb[0].mxu0
  %2267 = vmatprep.mubr.f32.mxu0 %v2076
  %2268 = vmatmul.mubr.f32.gmra.mrb[0].mxu0 %v2075
  %v2269 = vpop.f32.mrb[0].mxu0
  %v2270 = vadd.f32 0.0, %v2269
  %v2271 = vpop.f32.mrb[0].mxu0
  %2272 = vmatprep.mubr.f32.mxu0 %v2083
  %2273 = vmatmul.mubr.f32.gmra.mrb[0].mxu0 %v2082
  %v2274 = vpop.f32.mrb[0].mxu0
  %v2275 = vadd.f32 0.0, %v2274
  %v2276 = vpop.f32.mrb[0].mxu0
  %2277 = vmatprep.mubr.f32.mxu0 %v2090
  %2278 = vmatmul.mubr.f32.gmra.mrb[0].mxu0 %v2089
  %v2279 = vpop.f32.mrb[0].mxu0
  %v2280 = vadd.f32 0.0, %v2279
  %v2281 = vpop.f32.mrb[0].mxu0
  %2282 = vmatprep.mubr.f32.mxu0 %v2097
  %2283 = vmatmul.mubr.f32.gmra.mrb[0].mxu0 %v2096
  %v2284 = vpop.f32.mrb[0].mxu0
  %v2285 = vadd.f32 0.0, %v2284
  %v2286 = vpop.f32.mrb[0].mxu0
  %2287 = vmatprep.mubr.f32.mxu0 %v2104
  %2288 = vmatmul.mubr.f32.gmra.mrb[0].mxu0 %v2103
  %v2289 = vpop.f32.mrb[0].mxu0
  %v2290 = vadd.f32 0.0, %v2289
  %v2291 = vpop.f32.mrb[0].mxu0
  %2292 = vmatprep.mubr.f32.mxu0 %v2111
  %2293 = vmatmul.mubr.f32.gmra.mrb[0].mxu0 %v2110
  %v2294 = vpop.f32.mrb[0].mxu0
  %v2295 = vadd.f32 0.0, %v2294
  %v2296 = vpop.f32.mrb[0].mxu0
  %2297 = vmatprep.mubr.f32.mxu0 %v2118
  %2298 = vmatmul.mubr.f32.gmra.mrb[0].mxu0 %v2117
  %v2299 = vpop.f32.mrb[0].mxu0
  %v2300 = vadd.f32 0.0, %v2299
  %v2301 = vpop.f32.mrb[0].mxu0
  %2302 = vmatprep.mubr.f32.mxu0 %v2125
  %2303 = vmatmul.mubr.f32.gmra.mrb[0].mxu0 %v2124
  %v2304 = vpop.f32.mrb[0].mxu0
  %v2305 = vadd.f32 0.0, %v2304
  %v2306 = vpop.f32.mrb[0].mxu0
  %2307 = vmatprep.mubr.f32.mxu0 %v2132
  %2308 = vmatmul.mubr.f32.gmra.mrb[0].mxu0 %v2131
  %v2309 = vpop.f32.mrb[0].mxu0
  %v2310 = vadd.f32 0.0, %v2309
  %v2311 = vpop.f32.mrb[0].mxu0
  %2312 = vmatprep.mubr.f32.mxu0 %v2139
  %2313 = vmatmul.mubr.f32.gmra.mrb[0].mxu0 %v2138
  %v2314 = vpop.f32.mrb[0].mxu0
  %v2315 = vadd.f32 0.0, %v2314
  %v2316 = vpop.f32.mrb[0].mxu0
  %2317 = vmatprep.mubr.f32.mxu0 %v2146
  %2318 = vmatmul.mubr.f32.gmra.mrb[0].mxu0 %v2145
  %v2319 = vpop.f32.mrb[0].mxu0
  %v2320 = vadd.f32 0.0, %v2319
  %v2321 = vpop.f32.mrb[0].mxu0
  %2322 = vmatprep.mubr.f32.mxu0 %v2153
  %2323 = vmatmul.mubr.f32.gmra.mrb[0].mxu0 %v2152
  %v2324 = vpop.f32.mrb[0].mxu0
  %v2325 = vadd.f32 0.0, %v2324
  %v2326 = vpop.f32.mrb[0].mxu0
  %2327 = vdwg.mxu0
  %2328 = vmatprep.subr.mxu0 0.0
  %2329 = vmatpush1.msra.mxu0 %v46
  %2330 = vmatprep.subr.mxu0 0.0
  %2331 = vmatpush1.msra.mxu0 %v47
  %2332 = vmatprep.subr.mxu0 0.0
  %2333 = vmatpush1.msra.mxu0 %v48
  %2334 = vmatprep.subr.mxu0 0.0
  %2335 = vmatpush1.msra.mxu0 %v49
  %2336 = vmatprep.subr.mxu0 0.0
  %2337 = vmatpush1.msra.mxu0 %v50
  %2338 = vmatprep.subr.mxu0 0.0
  %2339 = vmatpush1.msra.mxu0 %v51
  %2340 = vmatprep.subr.mxu0 0.0
  %2341 = vmatpush1.msra.mxu0 %v52
  %2342 = vmatprep.subr.mxu0 0.0
  %2343 = vmatpush1.msra.mxu0 %v53
  %2344 = vmatprep.subr.mxu0 0.0
  %2345 = vmatpush1.msra.mxu0 %v54
  %2346 = vmatprep.subr.mxu0 0.0
  %2347 = vmatpush1.msra.mxu0 %v55
  %2348 = vmatprep.subr.mxu0 0.0
  %2349 = vmatpush1.msra.mxu0 %v56
  %2350 = vmatprep.subr.mxu0 0.0
  %2351 = vmatpush1.msra.mxu0 %v57
  %2352 = vmatprep.subr.mxu0 0.0
  %2353 = vmatpush1.msra.mxu0 %v58
  %2354 = vmatprep.subr.mxu0 0.0
  %2355 = vmatpush1.msra.mxu0 %v59
  %2356 = vmatprep.subr.mxu0 0.0
  %2357 = vmatpush1.msra.mxu0 %v60
  %2358 = vmatprep.subr.mxu0 0.0
  %2359 = vmatpush1.msra.mxu0 %v61
  %2360 = vmatprep.subr.mxu0 0.0
  %2361 = vmatpush1.msra.mxu0 %v62
  %2362 = vmatprep.subr.mxu0 0.0
  %2363 = vmatpush1.msra.mxu0 %v63
  %2364 = vmatprep.subr.mxu0 0.0
  %2365 = vmatpush1.msra.mxu0 %v64
  %2366 = vmatprep.subr.mxu0 0.0
  %2367 = vmatpush1.msra.mxu0 %v65
  %2368 = vmatprep.subr.mxu0 0.0
  %2369 = vmatpush1.msra.mxu0 %v66
  %2370 = vmatprep.subr.mxu0 0.0
  %2371 = vmatpush1.msra.mxu0 %v67
  %2372 = vmatprep.subr.mxu0 0.0
  %2373 = vmatpush1.msra.mxu0 %v68
  %2374 = vmatprep.subr.mxu0 0.0
  %2375 = vmatpush1.msra.mxu0 %v69
  %2376 = vmatprep.subr.mxu0 0.0
  %2377 = vmatpush1.msra.mxu0 %v70
  %2378 = vmatprep.subr.mxu0 0.0
  %2379 = vmatpush1.msra.mxu0 %v71
  %2380 = vmatprep.subr.mxu0 0.0
  %2381 = vmatpush1.msra.mxu0 %v72
  %2382 = vmatprep.subr.mxu0 0.0
  %2383 = vmatpush1.msra.mxu0 %v73
  %2384 = vmatprep.subr.mxu0 0.0
  %2385 = vmatpush1.msra.mxu0 %v74
  %2386 = vmatprep.subr.mxu0 0.0
  %2387 = vmatpush1.msra.mxu0 %v75
  %2388 = vmatprep.subr.mxu0 0.0
  %2389 = vmatpush1.msra.mxu0 %v76
  %2390 = vmatprep.subr.mxu0 0.0
  %2391 = vmatpush1.msra.mxu0 %v77
  %2392 = vmatprep.mubr.f32.mxu0 %v2071
  %2393 = vmatmul.mubr.f32.gmra.mrb[0].mxu0 %v2070
  %v2394 = vpop.f32.mrb[0].mxu0
  %v2395 = vadd.f32 %v2265, %v2394
  %v2396 = vpop.f32.mrb[0].mxu0
  %2397 = vmatprep.mubr.f32.mxu0 %v2078
  %2398 = vmatmul.mubr.f32.gmra.mrb[0].mxu0 %v2077
  %v2399 = vpop.f32.mrb[0].mxu0
  %v2400 = vadd.f32 %v2270, %v2399
  %v2401 = vpop.f32.mrb[0].mxu0
  %2402 = vmatprep.mubr.f32.mxu0 %v2085
  %2403 = vmatmul.mubr.f32.gmra.mrb[0].mxu0 %v2084
  %v2404 = vpop.f32.mrb[0].mxu0
  %v2405 = vadd.f32 %v2275, %v2404
  %v2406 = vpop.f32.mrb[0].mxu0
  %2407 = vmatprep.mubr.f32.mxu0 %v2092
  %2408 = vmatmul.mubr.f32.gmra.mrb[0].mxu0 %v2091
  %v2409 = vpop.f32.mrb[0].mxu0
  %v2410 = vadd.f32 %v2280, %v2409
  %v2411 = vpop.f32.mrb[0].mxu0
  %2412 = vmatprep.mubr.f32.mxu0 %v2099
  %2413 = vmatmul.mubr.f32.gmra.mrb[0].mxu0 %v2098
  %v2414 = vpop.f32.mrb[0].mxu0
  %v2415 = vadd.f32 %v2285, %v2414
  %v2416 = vpop.f32.mrb[0].mxu0
  %2417 = vmatprep.mubr.f32.mxu0 %v2106
  %2418 = vmatmul.mubr.f32.gmra.mrb[0].mxu0 %v2105
  %v2419 = vpop.f32.mrb[0].mxu0
  %v2420 = vadd.f32 %v2290, %v2419
  %v2421 = vpop.f32.mrb[0].mxu0
  %2422 = vmatprep.mubr.f32.mxu0 %v2113
  %2423 = vmatmul.mubr.f32.gmra.mrb[0].mxu0 %v2112
  %v2424 = vpop.f32.mrb[0].mxu0
  %v2425 = vadd.f32 %v2295, %v2424
  %v2426 = vpop.f32.mrb[0].mxu0
  %2427 = vmatprep.mubr.f32.mxu0 %v2120
  %2428 = vmatmul.mubr.f32.gmra.mrb[0].mxu0 %v2119
  %v2429 = vpop.f32.mrb[0].mxu0
  %v2430 = vadd.f32 %v2300, %v2429
  %v2431 = vpop.f32.mrb[0].mxu0
  %2432 = vmatprep.mubr.f32.mxu0 %v2127
  %2433 = vmatmul.mubr.f32.gmra.mrb[0].mxu0 %v2126
  %v2434 = vpop.f32.mrb[0].mxu0
  %v2435 = vadd.f32 %v2305, %v2434
  %v2436 = vpop.f32.mrb[0].mxu0
  %2437 = vmatprep.mubr.f32.mxu0 %v2134
  %2438 = vmatmul.mubr.f32.gmra.mrb[0].mxu0 %v2133
  %v2439 = vpop.f32.mrb[0].mxu0
  %v2440 = vadd.f32 %v2310, %v2439
  %v2441 = vpop.f32.mrb[0].mxu0
  %2442 = vmatprep.mubr.f32.mxu0 %v2141
  %2443 = vmatmul.mubr.f32.gmra.mrb[0].mxu0 %v2140
  %v2444 = vpop.f32.mrb[0].mxu0
  %v2445 = vadd.f32 %v2315, %v2444
  %v2446 = vpop.f32.mrb[0].mxu0
  %2447 = vmatprep.mubr.f32.mxu0 %v2148
  %2448 = vmatmul.mubr.f32.gmra.mrb[0].mxu0 %v2147
  %v2449 = vpop.f32.mrb[0].mxu0
  %v2450 = vadd.f32 %v2320, %v2449
  %v2451 = vpop.f32.mrb[0].mxu0
  %2452 = vmatprep.mubr.f32.mxu0 %v2155
  %2453 = vmatmul.mubr.f32.gmra.mrb[0].mxu0 %v2154
  %v2454 = vpop.f32.mrb[0].mxu0
  %v2455 = vadd.f32 %v2325, %v2454
  %v2456 = vpop.f32.mrb[0].mxu0
  %2457 = vdwg.mxu0
  %2458 = vmatprep.subr.mxu0 0.0
  %2459 = vmatpush1.msra.mxu0 %v78
  %2460 = vmatprep.subr.mxu0 0.0
  %2461 = vmatpush1.msra.mxu0 %v79
  %2462 = vmatprep.subr.mxu0 0.0
  %2463 = vmatpush1.msra.mxu0 %v80
  %2464 = vmatprep.subr.mxu0 0.0
  %2465 = vmatpush1.msra.mxu0 %v81
  %2466 = vmatprep.subr.mxu0 0.0
  %2467 = vmatpush1.msra.mxu0 %v82
  %2468 = vmatprep.subr.mxu0 0.0
  %2469 = vmatpush1.msra.mxu0 %v83
  %2470 = vmatprep.subr.mxu0 0.0
  %2471 = vmatpush1.msra.mxu0 %v84
  %2472 = vmatprep.subr.mxu0 0.0
  %2473 = vmatpush1.msra.mxu0 %v85
  %2474 = vmatprep.subr.mxu0 0.0
  %2475 = vmatpush1.msra.mxu0 %v86
  %2476 = vmatprep.subr.mxu0 0.0
  %2477 = vmatpush1.msra.mxu0 %v87
  %2478 = vmatprep.subr.mxu0 0.0
  %2479 = vmatpush1.msra.mxu0 %v88
  %2480 = vmatprep.subr.mxu0 0.0
  %2481 = vmatpush1.msra.mxu0 %v89
  %2482 = vmatprep.subr.mxu0 0.0
  %2483 = vmatpush1.msra.mxu0 %v90
  %2484 = vmatprep.subr.mxu0 0.0
  %2485 = vmatpush1.msra.mxu0 %v91
  %2486 = vmatprep.subr.mxu0 0.0
  %2487 = vmatpush1.msra.mxu0 %v92
  %2488 = vmatprep.subr.mxu0 0.0
  %2489 = vmatpush1.msra.mxu0 %v93
  %2490 = vmatprep.subr.mxu0 0.0
  %2491 = vmatpush1.msra.mxu0 %v94
  %2492 = vmatprep.subr.mxu0 0.0
  %2493 = vmatpush1.msra.mxu0 %v95
  %2494 = vmatprep.subr.mxu0 0.0
  %2495 = vmatpush1.msra.mxu0 %v96
  %2496 = vmatprep.subr.mxu0 0.0
  %2497 = vmatpush1.msra.mxu0 %v97
  %2498 = vmatprep.subr.mxu0 0.0
  %2499 = vmatpush1.msra.mxu0 %v98
  %2500 = vmatprep.subr.mxu0 0.0
  %2501 = vmatpush1.msra.mxu0 %v99
  %2502 = vmatprep.subr.mxu0 0.0
  %2503 = vmatpush1.msra.mxu0 %v100
  %2504 = vmatprep.subr.mxu0 0.0
  %2505 = vmatpush1.msra.mxu0 %v101
  %2506 = vmatprep.subr.mxu0 0.0
  %2507 = vmatpush1.msra.mxu0 %v102
  %2508 = vmatprep.subr.mxu0 0.0
  %2509 = vmatpush1.msra.mxu0 %v103
  %2510 = vmatprep.subr.mxu0 0.0
  %2511 = vmatpush1.msra.mxu0 %v104
  %2512 = vmatprep.subr.mxu0 0.0
  %2513 = vmatpush1.msra.mxu0 %v105
  %2514 = vmatprep.subr.mxu0 0.0
  %2515 = vmatpush1.msra.mxu0 %v106
  %2516 = vmatprep.subr.mxu0 0.0
  %2517 = vmatpush1.msra.mxu0 %v107
  %2518 = vmatprep.subr.mxu0 0.0
  %2519 = vmatpush1.msra.mxu0 %v108
  %2520 = vmatprep.subr.mxu0 0.0
  %2521 = vmatpush1.msra.mxu0 %v109
  %2522 = vmatprep.mubr.f32.mxu0 %v2073
  %2523 = vmatmul.mubr.f32.gmra.mrb[0].mxu0 %v2072
  %v2524 = vpop.f32.mrb[0].mxu0
  %v2525 = vadd.f32 %v2395, %v2524
  %v2526 = vpop.f32.mrb[0].mxu0
  %2527 = vmatprep.mubr.f32.mxu0 %v2080
  %2528 = vmatmul.mubr.f32.gmra.mrb[0].mxu0 %v2079
  %v2529 = vpop.f32.mrb[0].mxu0
  %v2530 = vadd.f32 %v2400, %v2529
  %v2531 = vpop.f32.mrb[0].mxu0
  %2532 = vmatprep.mubr.f32.mxu0 %v2087
  %2533 = vmatmul.mubr.f32.gmra.mrb[0].mxu0 %v2086
  %v2534 = vpop.f32.mrb[0].mxu0
  %v2535 = vadd.f32 %v2405, %v2534
  %v2536 = vpop.f32.mrb[0].mxu0
  %2537 = vmatprep.mubr.f32.mxu0 %v2094
  %2538 = vmatmul.mubr.f32.gmra.mrb[0].mxu0 %v2093
  %v2539 = vpop.f32.mrb[0].mxu0
  %v2540 = vadd.f32 %v2410, %v2539
  %v2541 = vpop.f32.mrb[0].mxu0
  %2542 = vmatprep.mubr.f32.mxu0 %v2101
  %2543 = vmatmul.mubr.f32.gmra.mrb[0].mxu0 %v2100
  %v2544 = vpop.f32.mrb[0].mxu0
  %v2545 = vadd.f32 %v2415, %v2544
  %v2546 = vpop.f32.mrb[0].mxu0
  %2547 = vmatprep.mubr.f32.mxu0 %v2108
  %2548 = vmatmul.mubr.f32.gmra.mrb[0].mxu0 %v2107
  %v2549 = vpop.f32.mrb[0].mxu0
  %v2550 = vadd.f32 %v2420, %v2549
  %v2551 = vpop.f32.mrb[0].mxu0
  %2552 = vmatprep.mubr.f32.mxu0 %v2115
  %2553 = vmatmul.mubr.f32.gmra.mrb[0].mxu0 %v2114
  %v2554 = vpop.f32.mrb[0].mxu0
  %v2555 = vadd.f32 %v2425, %v2554
  %v2556 = vpop.f32.mrb[0].mxu0
  %2557 = vmatprep.mubr.f32.mxu0 %v2122
  %2558 = vmatmul.mubr.f32.gmra.mrb[0].mxu0 %v2121
  %v2559 = vpop.f32.mrb[0].mxu0
  %v2560 = vadd.f32 %v2430, %v2559
  %v2561 = vpop.f32.mrb[0].mxu0
  %2562 = vmatprep.mubr.f32.mxu0 %v2129
  %2563 = vmatmul.mubr.f32.gmra.mrb[0].mxu0 %v2128
  %v2564 = vpop.f32.mrb[0].mxu0
  %v2565 = vadd.f32 %v2435, %v2564
  %v2566 = vpop.f32.mrb[0].mxu0
  %2567 = vmatprep.mubr.f32.mxu0 %v2136
  %2568 = vmatmul.mubr.f32.gmra.mrb[0].mxu0 %v2135
  %v2569 = vpop.f32.mrb[0].mxu0
  %v2570 = vadd.f32 %v2440, %v2569
  %v2571 = vpop.f32.mrb[0].mxu0
  %2572 = vmatprep.mubr.f32.mxu0 %v2143
  %2573 = vmatmul.mubr.f32.gmra.mrb[0].mxu0 %v2142
  %v2574 = vpop.f32.mrb[0].mxu0
  %v2575 = vadd.f32 %v2445, %v2574
  %v2576 = vpop.f32.mrb[0].mxu0
  %2577 = vmatprep.mubr.f32.mxu0 %v2150
  %2578 = vmatmul.mubr.f32.gmra.mrb[0].mxu0 %v2149
  %v2579 = vpop.f32.mrb[0].mxu0
  %v2580 = vadd.f32 %v2450, %v2579
  %v2581 = vpop.f32.mrb[0].mxu0
  %2582 = vmatprep.mubr.f32.mxu0 %v2157
  %2583 = vmatmul.mubr.f32.gmra.mrb[0].mxu0 %v2156
  %v2584 = vpop.f32.mrb[0].mxu0
  %v2585 = vadd.f32 %v2455, %v2584
  %v2586 = vpop.f32.mrb[0].mxu0
  %2587 = vdwg.mxu0
  %2588 = vmatprep.subr.mxu0 0.0
  %2589 = vmatpush1.msra.mxu0 %v110
  %2590 = vmatprep.subr.mxu0 0.0
  %2591 = vmatpush1.msra.mxu0 %v111
  %2592 = vmatprep.subr.mxu0 0.0
  %2593 = vmatpush1.msra.mxu0 %v112
  %2594 = vmatprep.subr.mxu0 0.0
  %2595 = vmatpush1.msra.mxu0 %v113
  %2596 = vmatprep.subr.mxu0 0.0
  %2597 = vmatpush1.msra.mxu0 0.0
  %2598 = vmatprep.subr.mxu0 0.0
  %2599 = vmatpush1.msra.mxu0 0.0
  %2600 = vmatprep.subr.mxu0 0.0
  %2601 = vmatpush1.msra.mxu0 0.0
  %2602 = vmatprep.subr.mxu0 0.0
  %2603 = vmatpush1.msra.mxu0 0.0
  %2604 = vmatprep.subr.mxu0 0.0
  %2605 = vmatpush1.msra.mxu0 0.0
  %2606 = vmatprep.subr.mxu0 0.0
  %2607 = vmatpush1.msra.mxu0 0.0
  %2608 = vmatprep.subr.mxu0 0.0
  %2609 = vmatpush1.msra.mxu0 0.0
  %2610 = vmatprep.subr.mxu0 0.0
  %2611 = vmatpush1.msra.mxu0 0.0
  %2612 = vmatprep.subr.mxu0 0.0
  %2613 = vmatpush1.msra.mxu0 0.0
  %2614 = vmatprep.subr.mxu0 0.0
  %2615 = vmatpush1.msra.mxu0 0.0
  %2616 = vmatprep.subr.mxu0 0.0
  %2617 = vmatpush1.msra.mxu0 0.0
  %2618 = vmatprep.subr.mxu0 0.0
  %2619 = vmatpush1.msra.mxu0 0.0
  %2620 = vmatprep.subr.mxu0 0.0
  %2621 = vmatpush1.msra.mxu0 0.0
  %2622 = vmatprep.subr.mxu0 0.0
  %2623 = vmatpush1.msra.mxu0 0.0
  %2624 = vmatprep.subr.mxu0 0.0
  %2625 = vmatpush1.msra.mxu0 0.0
  %2626 = vmatprep.subr.mxu0 0.0
  %2627 = vmatpush1.msra.mxu0 0.0
  %2628 = vmatprep.subr.mxu0 0.0
  %2629 = vmatpush1.msra.mxu0 0.0
  %2630 = vmatprep.subr.mxu0 0.0
  %2631 = vmatpush1.msra.mxu0 0.0
  %2632 = vmatprep.subr.mxu0 0.0
  %2633 = vmatpush1.msra.mxu0 0.0
  %2634 = vmatprep.subr.mxu0 0.0
  %2635 = vmatpush1.msra.mxu0 0.0
  %2636 = vmatprep.subr.mxu0 0.0
  %2637 = vmatpush1.msra.mxu0 0.0
  %2638 = vmatprep.subr.mxu0 0.0
  %2639 = vmatpush1.msra.mxu0 0.0
  %2640 = vmatprep.subr.mxu0 0.0
  %2641 = vmatpush1.msra.mxu0 0.0
  %2642 = vmatprep.subr.mxu0 0.0
  %2643 = vmatpush1.msra.mxu0 0.0
  %2644 = vmatprep.subr.mxu0 0.0
  %2645 = vmatpush1.msra.mxu0 0.0
  %2646 = vmatprep.subr.mxu0 0.0
  %2647 = vmatpush1.msra.mxu0 0.0
  %2648 = vmatprep.subr.mxu0 0.0
  %2649 = vmatpush1.msra.mxu0 0.0
  %2650 = vmatprep.subr.mxu0 0.0
  %2651 = vmatpush1.msra.mxu0 0.0
  %2652 = vmatprep.mubr.f32.mxu0 0.0
  %2653 = vmatmul.mubr.f32.gmra.mrb[0].mxu0 %v2160
  %v2654 = vpop.f32.mrb[0].mxu0
  %v2655 = vadd.f32 %v2525, %v2654
  %v2656 = vpop.f32.mrb[0].mxu0
  %2657 = vmatprep.mubr.f32.mxu0 0.0
  %2658 = vmatmul.mubr.f32.gmra.mrb[0].mxu0 %v2163
  %v2659 = vpop.f32.mrb[0].mxu0
  %v2660 = vadd.f32 %v2530, %v2659
  %v2661 = vpop.f32.mrb[0].mxu0
  %2662 = vmatprep.mubr.f32.mxu0 0.0
  %2663 = vmatmul.mubr.f32.gmra.mrb[0].mxu0 %v2166
  %v2664 = vpop.f32.mrb[0].mxu0
  %v2665 = vadd.f32 %v2535, %v2664
  %v2666 = vpop.f32.mrb[0].mxu0
  %2667 = vmatprep.mubr.f32.mxu0 0.0
  %2668 = vmatmul.mubr.f32.gmra.mrb[0].mxu0 %v2169
  %v2669 = vpop.f32.mrb[0].mxu0
  %v2670 = vadd.f32 %v2540, %v2669
  %v2671 = vpop.f32.mrb[0].mxu0
  %2672 = vmatprep.mubr.f32.mxu0 0.0
  %2673 = vmatmul.mubr.f32.gmra.mrb[0].mxu0 %v2172
  %v2674 = vpop.f32.mrb[0].mxu0
  %v2675 = vadd.f32 %v2545, %v2674
  %v2676 = vpop.f32.mrb[0].mxu0
  %2677 = vmatprep.mubr.f32.mxu0 0.0
  %2678 = vmatmul.mubr.f32.gmra.mrb[0].mxu0 %v2175
  %v2679 = vpop.f32.mrb[0].mxu0
  %v2680 = vadd.f32 %v2550, %v2679
  %v2681 = vpop.f32.mrb[0].mxu0
  %2682 = vmatprep.mubr.f32.mxu0 0.0
  %2683 = vmatmul.mubr.f32.gmra.mrb[0].mxu0 %v2178
  %v2684 = vpop.f32.mrb[0].mxu0
  %v2685 = vadd.f32 %v2555, %v2684
  %v2686 = vpop.f32.mrb[0].mxu0
  %2687 = vmatprep.mubr.f32.mxu0 0.0
  %2688 = vmatmul.mubr.f32.gmra.mrb[0].mxu0 %v2181
  %v2689 = vpop.f32.mrb[0].mxu0
  %v2690 = vadd.f32 %v2560, %v2689
  %v2691 = vpop.f32.mrb[0].mxu0
  %2692 = vmatprep.mubr.f32.mxu0 0.0
  %2693 = vmatmul.mubr.f32.gmra.mrb[0].mxu0 %v2184
  %v2694 = vpop.f32.mrb[0].mxu0
  %v2695 = vadd.f32 %v2565, %v2694
  %v2696 = vpop.f32.mrb[0].mxu0
  %2697 = vmatprep.mubr.f32.mxu0 0.0
  %2698 = vmatmul.mubr.f32.gmra.mrb[0].mxu0 %v2187
  %v2699 = vpop.f32.mrb[0].mxu0
  %v2700 = vadd.f32 %v2570, %v2699
  %v2701 = vpop.f32.mrb[0].mxu0
  %2702 = vmatprep.mubr.f32.mxu0 0.0
  %2703 = vmatmul.mubr.f32.gmra.mrb[0].mxu0 %v2190
  %v2704 = vpop.f32.mrb[0].mxu0
  %v2705 = vadd.f32 %v2575, %v2704
  %v2706 = vpop.f32.mrb[0].mxu0
  %2707 = vmatprep.mubr.f32.mxu0 0.0
  %2708 = vmatmul.mubr.f32.gmra.mrb[0].mxu0 %v2193
  %v2709 = vpop.f32.mrb[0].mxu0
  %v2710 = vadd.f32 %v2580, %v2709
  %v2711 = vpop.f32.mrb[0].mxu0
  %2712 = vmatprep.mubr.f32.mxu0 0.0
  %2713 = vmatmul.mubr.f32.gmra.mrb[0].mxu0 %v2196
  %v2714 = vpop.f32.mrb[0].mxu0
  %v2715 = vadd.f32 %v2585, %v2714
  %v2716 = vpop.f32.mrb[0].mxu0
  %2717 = vdwg.mxu0
  %v2718 = vmax.f32 %v702, %v1353
  %v2719 = vmax.f32 %v707, %v1358
  %v2720 = vmax.f32 %v712, %v1363
  %v2721 = vmax.f32 %v717, %v1368
  %v2722 = vmax.f32 %v722, %v1373
  %v2723 = vmax.f32 %v727, %v1378
  %v2724 = vmax.f32 %v732, %v1383
  %v2725 = vmax.f32 %v737, %v1388
  %v2726 = vmax.f32 %v742, %v1393
  %v2727 = vmax.f32 %v747, %v1398
  %v2728 = vmax.f32 %v752, %v1403
  %v2729 = vmax.f32 %v757, %v1408
  %v2730 = vmax.f32 %v762, %v1413
  %v2731 = vmax.f32 %v2004, %v2655
  %v2732 = vmax.f32 %v2009, %v2660
  %v2733 = vmax.f32 %v2014, %v2665
  %v2734 = vmax.f32 %v2019, %v2670
  %v2735 = vmax.f32 %v2024, %v2675
  %v2736 = vmax.f32 %v2029, %v2680
  %v2737 = vmax.f32 %v2034, %v2685
  %v2738 = vmax.f32 %v2039, %v2690
  %v2739 = vmax.f32 %v2044, %v2695
  %v2740 = vmax.f32 %v2049, %v2700
  %v2741 = vmax.f32 %v2054, %v2705
  %v2742 = vmax.f32 %v2059, %v2710
  %v2743 = vmax.f32 %v2064, %v2715
  %v2744 = vmax.f32 %v2718, %v2731
  %v2745 = vmax.f32 %v2719, %v2732
  %v2746 = vmax.f32 %v2720, %v2733
  %v2747 = vmax.f32 %v2721, %v2734
  %v2748 = vmax.f32 %v2722, %v2735
  %v2749 = vmax.f32 %v2723, %v2736
  %v2750 = vmax.f32 %v2724, %v2737
  %v2751 = vmax.f32 %v2725, %v2738
  %v2752 = vmax.f32 %v2726, %v2739
  %v2753 = vmax.f32 %v2727, %v2740
  %v2754 = vmax.f32 %v2728, %v2741
  %v2755 = vmax.f32 %v2729, %v2742
  %v2756 = vmax.f32 %v2730, %v2743
  %v2757 = vld [vmem:[%s2] sm:$0x1]
  %v2759 = vlaneseq
  %v2760 = vshrl.u32 %v2759, 7
  %v2761 = vsub.s32 0, %v2760
  %v2762 = vrot.slane %v2757, %v2761
  %v2764 = vadd.f32 %v2744, %v2762
  %v2765 = vadd.f32 %v2745, %v2762
  %v2766 = vadd.f32 %v2746, %v2762
  %v2767 = vadd.f32 %v2747, %v2762
  %v2768 = vadd.f32 %v2748, %v2762
  %v2769 = vadd.f32 %v2749, %v2762
  %v2770 = vadd.f32 %v2750, %v2762
  %v2771 = vadd.f32 %v2751, %v2762
  %v2772 = vadd.f32 %v2752, %v2762
  %v2773 = vadd.f32 %v2753, %v2762
  %v2774 = vadd.f32 %v2754, %v2762
  %v2775 = vadd.f32 %v2755, %v2762
  %v2776 = vadd.f32 %v2756, %v2762
  %v2777 = vmax.f32 %v2764, 0.0
  %v2778 = vmax.f32 %v2765, 0.0
  %v2779 = vmax.f32 %v2766, 0.0
  %v2780 = vmax.f32 %v2767, 0.0
  %v2781 = vmax.f32 %v2768, 0.0
  %v2782 = vmax.f32 %v2769, 0.0
  %v2783 = vmax.f32 %v2770, 0.0
  %v2784 = vmax.f32 %v2771, 0.0
  %v2785 = vmax.f32 %v2772, 0.0
  %v2786 = vmax.f32 %v2773, 0.0
  %v2787 = vmax.f32 %v2774, 0.0
  %v2788 = vmax.f32 %v2775, 0.0
  %v2789 = vmax.f32 %v2776, 0.0
  %vm2790 = vcmask 523264
  %2791 = vst.msk [vmem:[%s3] sm:$0xff] %vm2790, %v2777
  %2792 = vst.msk [vmem:[%s3 + $0x8] sm:$0xff] %vm2790, %v2778
  %2793 = vst.msk [vmem:[%s3 + $0x10] sm:$0xff] %vm2790, %v2779
  %2794 = vst.msk [vmem:[%s3 + $0x18] sm:$0xff] %vm2790, %v2780
  %2795 = vst.msk [vmem:[%s3 + $0x20] sm:$0xff] %vm2790, %v2781
  %2796 = vst.msk [vmem:[%s3 + $0x28] sm:$0xff] %vm2790, %v2782
  %2797 = vst.msk [vmem:[%s3 + $0x30] sm:$0xff] %vm2790, %v2783
  %2798 = vst.msk [vmem:[%s3 + $0x38] sm:$0xff] %vm2790, %v2784
  %2799 = vst.msk [vmem:[%s3 + $0x40] sm:$0xff] %vm2790, %v2785
  %2800 = vst.msk [vmem:[%s3 + $0x48] sm:$0xff] %vm2790, %v2786
  %2801 = vst.msk [vmem:[%s3 + $0x50] sm:$0xff] %vm2790, %v2787
  %2802 = vst.msk [vmem:[%s3 + $0x58] sm:$0xff] %vm2790, %v2788
  %vm2803 = vcmask 517120
  %2804 = vst.msk [vmem:[%s3 + $0x60] sm:$0x3] %vm2803, %v2789
  // Predicated region
  $region14: #{convnet_s_forward.4} parent=0 // pred_check
    _
  $region15: #{convnet_s_forward.4} parent=0 // pred_check_branch
    %2806 = sbr.rel (0) target = $region17
  $region16: #{convnet_s_forward.4} parent=0 // pred_region
    _
  $region17: #{convnet_s_forward.4} parent=0 // pred_fallthru
    _
  // Predicated region
  $region18: #{convnet_s_forward.4} parent=0 // pred_check
    _
  $region19: #{convnet_s_forward.4} parent=0 // pred_check_branch
    %2808 = sbr.rel (0) target = $region21
  $region20: #{convnet_s_forward.4} parent=0 // pred_region
    _
  $region21: #{convnet_s_forward.4} parent=0 // pred_fallthru
    _

// kernel: convnet_s_forward.5
$region0: #{convnet_s_forward.5}
  #allocation0 [shape = 'u32[]', space=smem, size = 0x4, offset = 0x4, fixed_abs, tag = 'smem constant byte address 0x4 - core index']
  #allocation1 [shape = 'u32[144,128]{1,0:T(1,128)}', space=vmem, size = 0x12000, scoped, tag = 'internal scratch']
  #allocation2 [shape = 'f32[2,1000]{1,0:T(2,128)}', space=vmem, size = 0x2000, scoped, tag = 'scratch operand']
  %s0 = inlined_call_operand.vmem [shape: f32[2,3200], index: 0, kind: input, shape index: {}]
  %s1 = inlined_call_operand.vmem [shape: f32[3200,1000], index: 1, kind: input, shape index: {}]
  %s2 = inlined_call_operand.vmem [shape: f32[1,1000], index: 2, kind: input, shape index: {}]
  %s3 = inlined_call_operand.vmem [shape: f32[1000,2], index: 3, kind: input, shape index: {}]
  %s4 = inlined_call_operand.vmem [shape: f32[1,2], index: 4, kind: input, shape index: {}]
  %s5 = inlined_call_operand.hbm [shape: f32[2,2], index: 5, kind: output, shape index: {}]
  %s6 = sld [smem:[#allocation0]]
  $region61: #{convnet_s_forward.5} parent=0
    _
  %s8 = ssub.s32 1, %s6
  %s9 = scalar_select 0, %s8, %s6
  $region1: #{convnet_s_forward.5} parent=0
    #allocation3 [shape = 'u8[1024]{0}', space=vmem, size = 0x400, scoped, tag = 'output window, operand 0, single buffered']
    #allocation4 [shape = 's32[2]{0}', space=sflag, size = 0x8, scoped, tag = 'scoped memory for convnet_s_forward.5']
    %10 = vsyncpa [#allocation4], 0
    loop: start=0, step=1, limit=7
    $region2: #{convnet_s_forward.5} parent=1 // loop_pre_header
      _
    $region3: #{convnet_s_forward.5} parent=1 // loop_header
      %s12 = sphi 0, %s16
      %p13 = scmp.ge.s32.totalorder %s12, 7
      %s22 = sphi 0, %s24
      %s25 = sphi 0, %s22
      %s26 = sphi 0, %s25
      %s42 = sphi 0, %s26
      %s48 = sphi 0, %s50
      %s51 = sphi 0, %s48
      %s52 = sphi 0, %s51
      %s68 = sphi 0, %s52
      %s72 = sphi 0, %s72
      %s74 = sphi 0, %s72
      %s75 = sphi 0, %s74
      %s89 = sphi 0, %s75
      %s93 = sphi 0, %s93
      %s95 = sphi 0, %s93
      %s96 = sphi 0, %s95
      %s110 = sphi 0, %s96
      %s114 = sphi 0, %s114
      %s116 = sphi 0, %s114
      %s117 = sphi 0, %s116
      %s131 = sphi 0, %s117
      %s135 = sphi 0, %s135
      %s137 = sphi 0, %s135
      %s138 = sphi 0, %s137
      %s152 = sphi 0, %s138
    $region4: #{convnet_s_forward.5} parent=1 // loop_header_branch
      %15 = sbr.rel (%p13) target = $region8
    $region5: #{convnet_s_forward.5} parent=1 // loop_body
      %s17 = ssub.s32 %s12, 1
      %s18 = ssub.s32 %s12, 2
      %s19 = sadd.s32 %s12, 1
      %s20 = ssub.s32 %s12, %s19
      %p21 = scmp.eq.s32.totalorder %s20, 0
      %s23 = sadd.s32 %s22, 1
      %s24 = scalar_select %p21, %s22, %s23
      %p27 = pneg %p21
      %p28 = scmp.eq.s32.totalorder %s12, 4
      %p29 = por %p27, %p28
      %p30 = scmp.ne.s32.totalorder %s22, %s25
      %p31 = scmp.eq.s32.totalorder %s12, 0
      %p32 = por %p30, %p31
      %p33 = scmp.ne.s32.totalorder %s22, %s25
      %p34 = scmp.eq.s32.totalorder %s17, 4
      %p35 = por %p33, %p34
      %p36 = scmp.ne.s32.totalorder %s25, %s26
      %p37 = scmp.eq.s32.totalorder %s17, 0
      %p38 = por %p36, %p37
      %p39 = scmp.ne.s32.totalorder %s25, %s26
      %p40 = scmp.eq.s32.totalorder %s18, 4
      %p41 = por %p39, %p40
      %p43 = scmp.ne.s32.totalorder %s26, %s42
      %p44 = scmp.eq.s32.totalorder %s18, 0
      %p45 = por %p43, %p44
      %s46 = ssub.s32 %s12, %s19
      %p47 = scmp.eq.s32.totalorder %s46, 0
      %s49 = sadd.s32 %s48, 1
      %s50 = scalar_select %p47, %s48, %s49
      %p53 = pneg %p47
      %p54 = scmp.eq.s32.totalorder %s12, 4
      %p55 = por %p53, %p54
      %p56 = scmp.ne.s32.totalorder %s48, %s51
      %p57 = scmp.eq.s32.totalorder %s12, 0
      %p58 = por %p56, %p57
      %p59 = scmp.ne.s32.totalorder %s48, %s51
      %p60 = scmp.eq.s32.totalorder %s17, 4
      %p61 = por %p59, %p60
      %p62 = scmp.ne.s32.totalorder %s51, %s52
      %p63 = scmp.eq.s32.totalorder %s17, 0
      %p64 = por %p62, %p63
      %p65 = scmp.ne.s32.totalorder %s51, %s52
      %p66 = scmp.eq.s32.totalorder %s18, 4
      %p67 = por %p65, %p66
      %p69 = scmp.ne.s32.totalorder %s52, %s68
      %p70 = scmp.eq.s32.totalorder %s18, 0
      %p71 = por %p69, %p70
      %s73 = sadd.s32 %s72, 1
      %p76 = scmp.eq.s32.totalorder %s12, 4
      %p77 = scmp.ne.s32.totalorder %s72, %s74
      %p78 = scmp.eq.s32.totalorder %s12, 0
      %p79 = por %p77, %p78
      %p80 = scmp.ne.s32.totalorder %s72, %s74
      %p81 = scmp.eq.s32.totalorder %s17, 4
      %p82 = por %p80, %p81
      %p83 = scmp.ne.s32.totalorder %s74, %s75
      %p84 = scmp.eq.s32.totalorder %s17, 0
      %p85 = por %p83, %p84
      %p86 = scmp.ne.s32.totalorder %s74, %s75
      %p87 = scmp.eq.s32.totalorder %s18, 4
      %p88 = por %p86, %p87
      %p90 = scmp.ne.s32.totalorder %s75, %s89
      %p91 = scmp.eq.s32.totalorder %s18, 0
      %p92 = por %p90, %p91
      %s94 = sadd.s32 %s93, 1
      %p97 = scmp.eq.s32.totalorder %s12, 4
      %p98 = scmp.ne.s32.totalorder %s93, %s95
      %p99 = scmp.eq.s32.totalorder %s12, 0
      %p100 = por %p98, %p99
      %p101 = scmp.ne.s32.totalorder %s93, %s95
      %p102 = scmp.eq.s32.totalorder %s17, 4
      %p103 = por %p101, %p102
      %p104 = scmp.ne.s32.totalorder %s95, %s96
      %p105 = scmp.eq.s32.totalorder %s17, 0
      %p106 = por %p104, %p105
      %p107 = scmp.ne.s32.totalorder %s95, %s96
      %p108 = scmp.eq.s32.totalorder %s18, 4
      %p109 = por %p107, %p108
      %p111 = scmp.ne.s32.totalorder %s96, %s110
      %p112 = scmp.eq.s32.totalorder %s18, 0
      %p113 = por %p111, %p112
      %s115 = sadd.s32 %s114, 1
      %p118 = scmp.eq.s32.totalorder %s12, 4
      %p119 = scmp.ne.s32.totalorder %s114, %s116
      %p120 = scmp.eq.s32.totalorder %s12, 0
      %p121 = por %p119, %p120
      %p122 = scmp.ne.s32.totalorder %s114, %s116
      %p123 = scmp.eq.s32.totalorder %s17, 4
      %p124 = por %p122, %p123
      %p125 = scmp.ne.s32.totalorder %s116, %s117
      %p126 = scmp.eq.s32.totalorder %s17, 0
      %p127 = por %p125, %p126
      %p128 = scmp.ne.s32.totalorder %s116, %s117
      %p129 = scmp.eq.s32.totalorder %s18, 4
      %p130 = por %p128, %p129
      %p132 = scmp.ne.s32.totalorder %s117, %s131
      %p133 = scmp.eq.s32.totalorder %s18, 0
      %p134 = por %p132, %p133
      %s136 = sadd.s32 %s135, 1
      %p139 = scmp.eq.s32.totalorder %s12, 4
      %p140 = scmp.ne.s32.totalorder %s135, %s137
      %p141 = scmp.eq.s32.totalorder %s12, 0
      %p142 = por %p140, %p141
      %p143 = scmp.ne.s32.totalorder %s135, %s137
      %p144 = scmp.eq.s32.totalorder %s17, 4
      %p145 = por %p143, %p144
      %p146 = scmp.ne.s32.totalorder %s137, %s138
      %p147 = scmp.eq.s32.totalorder %s17, 0
      %p148 = por %p146, %p147
      %p149 = scmp.ne.s32.totalorder %s137, %s138
      %p150 = scmp.eq.s32.totalorder %s18, 4
      %p151 = por %p149, %p150
      %p153 = scmp.ne.s32.totalorder %s138, %s152
      %p154 = scmp.eq.s32.totalorder %s18, 0
      %p155 = por %p153, %p154
      %p156 = scmp.le.s32.totalorder 1, %s12
      %p157 = scmp.lt.s32.totalorder %s12, 6
      %p158 = pnand %p156, %p157
      %p159 = pneg %p158
      // Predicated region
      $region9: #{convnet_s_forward.5} parent=5 // pred_check
        _
      $region10: #{convnet_s_forward.5} parent=5 // pred_check_branch
        %161 = sbr.rel (%p158) target = $region12
      $region11: #{convnet_s_forward.5} parent=5 // pred_region
        %s162 = ssub.s32 %s12, 1
        // Predicated region
        $region13: #{convnet_s_forward.5} parent=11 // pred_check
          %p163 = pneg %p85
        $region14: #{convnet_s_forward.5} parent=11 // pred_check_branch
          %165 = sbr.rel (%p163) target = $region16
        $region15: #{convnet_s_forward.5} parent=11 // pred_region
          _
        $region16: #{convnet_s_forward.5} parent=11 // pred_fallthru
          _
        // Predicated region
        $region17: #{convnet_s_forward.5} parent=11 // pred_check
          %p166 = pneg %p106
        $region18: #{convnet_s_forward.5} parent=11 // pred_check_branch
          %168 = sbr.rel (%p166) target = $region20
        $region19: #{convnet_s_forward.5} parent=11 // pred_region
          _
        $region20: #{convnet_s_forward.5} parent=11 // pred_fallthru
          _
        // Predicated region
        $region21: #{convnet_s_forward.5} parent=11 // pred_check
          %p169 = pneg %p127
        $region22: #{convnet_s_forward.5} parent=11 // pred_check_branch
          %171 = sbr.rel (%p169) target = $region24
        $region23: #{convnet_s_forward.5} parent=11 // pred_region
          _
        $region24: #{convnet_s_forward.5} parent=11 // pred_fallthru
          _
      $region12: #{convnet_s_forward.5} parent=5 // pred_fallthru
        _
      %p172 = scmp.lt.s32.totalorder %s12, 5
      // Predicated region
      $region25: #{convnet_s_forward.5} parent=5 // pred_check
        %p173 = pneg %p172
      $region26: #{convnet_s_forward.5} parent=5 // pred_check_branch
        %175 = sbr.rel (%p173) target = $region28
      $region27: #{convnet_s_forward.5} parent=5 // pred_region
        // Predicated region
        $region29: #{convnet_s_forward.5} parent=27 // pred_check
          %p176 = pneg %p32
        $region30: #{convnet_s_forward.5} parent=27 // pred_check_branch
          %178 = sbr.rel (%p176) target = $region32
        $region31: #{convnet_s_forward.5} parent=27 // pred_region
          %s179 = smul.u32 5, %s12
          %p180 = scmp.lt.s32.totalorder %s179, 24
          %s181 = scalar_select %p180, %s179, 24
          %s182 = smul.addr %s181, 2
          %s183 = scalar_lea.vmem %s0, %s182
          %s184 = smul.u32 5, %s12
        $region32: #{convnet_s_forward.5} parent=27 // pred_fallthru
          _
        // Predicated region
        $region33: #{convnet_s_forward.5} parent=27 // pred_check
          %p185 = pneg %p58
        $region34: #{convnet_s_forward.5} parent=27 // pred_check_branch
          %187 = sbr.rel (%p185) target = $region36
        $region35: #{convnet_s_forward.5} parent=27 // pred_region
          %s188 = smul.u32 80, %s12
          %p189 = scmp.lt.s32.totalorder %s188, 399
          %s190 = scalar_select %p189, %s188, 399
          %s191 = smul.addr %s190, 8
          %s192 = smul.addr %s191, 8
          %s193 = scalar_lea.vmem %s1, %s192
          %s194 = smul.u32 80, %s12
        $region36: #{convnet_s_forward.5} parent=27 // pred_fallthru
          _
      $region28: #{convnet_s_forward.5} parent=5 // pred_fallthru
        _
      %p195 = scmp.le.s32.totalorder 1, %s12
      %p196 = scmp.lt.s32.totalorder %s12, 6
      %p197 = pnand %p195, %p196
      %p198 = pneg %p197
      // Predicated region
      $region37: #{convnet_s_forward.5} parent=5 // pred_check
        _
      $region38: #{convnet_s_forward.5} parent=5 // pred_check_branch
        %200 = sbr.rel (%p197) target = $region40
      $region39: #{convnet_s_forward.5} parent=5 // pred_region
        %s201 = ssub.s32 %s12, 1
        %s202 = smul.u32 5, %s17
        %p203 = scmp.lt.s32.totalorder %s202, 24
        %s204 = scalar_select %p203, %s202, 24
        %s205 = smul.addr %s204, 2
        %s206 = scalar_lea.vmem %s0, %s205
        %p207 = pneg %p38
        %p208 = pneg %p35
        %s209 = smul.u32 80, %s17
        %p210 = scmp.lt.s32.totalorder %s209, 399
        %s211 = scalar_select %p210, %s209, 399
        %s212 = smul.addr %s211, 8
        %s213 = smul.addr %s212, 8
        %s214 = scalar_lea.vmem %s1, %s213
        %p215 = pneg %p64
        %p216 = pneg %p61
        %p217 = pneg %p85
        %p218 = pneg %p82
        %p219 = pneg %p106
        %p220 = pneg %p103
        %p221 = pneg %p127
        %p222 = pneg %p124
        %p223 = pneg %p148
        %p224 = pneg %p145
        %s225 = smul.u32 5, %s17
        %p226 = scmp.lt.s32.totalorder %s225, 24
        %s227 = scalar_select %p226, %s225, 24
        %s228 = smul.addr %s227, 2
        %s229 = scalar_lea.vmem %s0, %s228
        %s230 = smul.u32 5, %s17
        %s231 = smul.u32 80, %s17
        %p232 = scmp.lt.s32.totalorder %s231, 399
        %s233 = scalar_select %p232, %s231, 399
        %s234 = smul.addr %s233, 8
        %s235 = smul.addr %s234, 8
        %s236 = scalar_lea.vmem %s1, %s235
        %s237 = smul.u32 80, %s17
        %p238 = scmp.eq.s32.totalorder %s17, 0
        // Predicated region
        $region41: #{convnet_s_forward.5} parent=39 // pred_check
          %p239 = pneg %p238
        $region42: #{convnet_s_forward.5} parent=39 // pred_check_branch
          %241 = sbr.rel (%p239) target = $region44
        $region43: #{convnet_s_forward.5} parent=39 // pred_region
          %242 = vst [vmem:[#allocation2] sm:$0xff] 0.0
          %vm243 = vcmask 1041408
          %vm244 = vcmask 1043458
          %vm245 = vmor %vm244, %vm243
          %vm246 = vcmask 1045508
          %vm247 = vmor %vm246, %vm245
          %vm248 = vcmask 850950
          %vm249 = vmor %vm248, %vm247
          %250 = vst.msk [vmem:[#allocation2 + $0x8] sm:$0xff] %vm249, 0.0
        $region44: #{convnet_s_forward.5} parent=39 // pred_fallthru
          _
        %v251 = vld [vmem:[#allocation2] sm:$0xff]
        %v252 = vld [vmem:[#allocation2 + $0x8] sm:$0xff]
        %v253 = vld [vmem:[%s229] sm:$0xff]
        %v254 = vld [vmem:[%s229 + $0x8] sm:$0x3]
        %v255 = vld [vmem:[%s236] sm:$0xff]
        %v256 = vld [vmem:[%s236 + $0x8] sm:$0xff]
        %v257 = vld [vmem:[%s236 + $0x10] sm:$0xff]
        %v258 = vld [vmem:[%s236 + $0x18] sm:$0xff]
        %v259 = vld [vmem:[%s236 + $0x20] sm:$0xff]
        %v260 = vld [vmem:[%s236 + $0x28] sm:$0xff]
        %v261 = vld [vmem:[%s236 + $0x30] sm:$0xff]
        %v262 = vld [vmem:[%s236 + $0x38] sm:$0xff]
        %v263 = vld [vmem:[%s236 + $0x40] sm:$0xff]
        %v264 = vld [vmem:[%s236 + $0x48] sm:$0xff]
        %v265 = vld [vmem:[%s236 + $0x50] sm:$0xff]
        %v266 = vld [vmem:[%s236 + $0x58] sm:$0xff]
        %v267 = vld [vmem:[%s236 + $0x60] sm:$0xff]
        %v268 = vld [vmem:[%s236 + $0x68] sm:$0xff]
        %v269 = vld [vmem:[%s236 + $0x70] sm:$0xff]
        %v270 = vld [vmem:[%s236 + $0x78] sm:$0xff]
        %v271 = vld [vmem:[%s236 + $0x80] sm:$0xff]
        %v272 = vld [vmem:[%s236 + $0x88] sm:$0xff]
        %v273 = vld [vmem:[%s236 + $0x90] sm:$0xff]
        %v274 = vld [vmem:[%s236 + $0x98] sm:$0xff]
        %v275 = vld [vmem:[%s236 + $0xa0] sm:$0xff]
        %v276 = vld [vmem:[%s236 + $0xa8] sm:$0xff]
        %v277 = vld [vmem:[%s236 + $0xb0] sm:$0xff]
        %v278 = vld [vmem:[%s236 + $0xb8] sm:$0xff]
        %v279 = vld [vmem:[%s236 + $0xc0] sm:$0xff]
        %v280 = vld [vmem:[%s236 + $0xc8] sm:$0xff]
        %v281 = vld [vmem:[%s236 + $0xd0] sm:$0xff]
        %v282 = vld [vmem:[%s236 + $0xd8] sm:$0xff]
        %v283 = vld [vmem:[%s236 + $0xe0] sm:$0xff]
        %v284 = vld [vmem:[%s236 + $0xe8] sm:$0xff]
        %v285 = vld [vmem:[%s236 + $0xf0] sm:$0xff]
        %v286 = vld [vmem:[%s236 + $0xf8] sm:$0xff]
        %v287 = vld [vmem:[%s236 + $0x100] sm:$0xff]
        %v288 = vld [vmem:[%s236 + $0x108] sm:$0xff]
        %v289 = vld [vmem:[%s236 + $0x110] sm:$0xff]
        %v290 = vld [vmem:[%s236 + $0x118] sm:$0xff]
        %v291 = vld [vmem:[%s236 + $0x120] sm:$0xff]
        %v292 = vld [vmem:[%s236 + $0x128] sm:$0xff]
        %v293 = vld [vmem:[%s236 + $0x130] sm:$0xff]
        %v294 = vld [vmem:[%s236 + $0x138] sm:$0xff]
        %v295 = vld [vmem:[%s236 + $0x140] sm:$0xff]
        %v296 = vld [vmem:[%s236 + $0x148] sm:$0xff]
        %v297 = vld [vmem:[%s236 + $0x150] sm:$0xff]
        %v298 = vld [vmem:[%s236 + $0x158] sm:$0xff]
        %v299 = vld [vmem:[%s236 + $0x160] sm:$0xff]
        %v300 = vld [vmem:[%s236 + $0x168] sm:$0xff]
        %v301 = vld [vmem:[%s236 + $0x170] sm:$0xff]
        %v302 = vld [vmem:[%s236 + $0x178] sm:$0xff]
        %v303 = vld [vmem:[%s236 + $0x180] sm:$0xff]
        %v304 = vld [vmem:[%s236 + $0x188] sm:$0xff]
        %v305 = vld [vmem:[%s236 + $0x190] sm:$0xff]
        %v306 = vld [vmem:[%s236 + $0x198] sm:$0xff]
        %v307 = vld [vmem:[%s236 + $0x1a0] sm:$0xff]
        %v308 = vld [vmem:[%s236 + $0x1a8] sm:$0xff]
        %v309 = vld [vmem:[%s236 + $0x1b0] sm:$0xff]
        %v310 = vld [vmem:[%s236 + $0x1b8] sm:$0xff]
        %v311 = vld [vmem:[%s236 + $0x1c0] sm:$0xff]
        %v312 = vld [vmem:[%s236 + $0x1c8] sm:$0xff]
        %v313 = vld [vmem:[%s236 + $0x1d0] sm:$0xff]
        %v314 = vld [vmem:[%s236 + $0x1d8] sm:$0xff]
        %v315 = vld [vmem:[%s236 + $0x1e0] sm:$0xff]
        %v316 = vld [vmem:[%s236 + $0x1e8] sm:$0xff]
        %v317 = vld [vmem:[%s236 + $0x1f0] sm:$0xff]
        %v318 = vld [vmem:[%s236 + $0x1f8] sm:$0xff]
        %v319 = vld [vmem:[%s236 + $0x200] sm:$0xff]
        %v320 = vld [vmem:[%s236 + $0x208] sm:$0xff]
        %v321 = vld [vmem:[%s236 + $0x210] sm:$0xff]
        %v322 = vld [vmem:[%s236 + $0x218] sm:$0xff]
        %v323 = vld [vmem:[%s236 + $0x220] sm:$0xff]
        %v324 = vld [vmem:[%s236 + $0x228] sm:$0xff]
        %v325 = vld [vmem:[%s236 + $0x230] sm:$0xff]
        %v326 = vld [vmem:[%s236 + $0x238] sm:$0xff]
        %v327 = vld [vmem:[%s236 + $0x240] sm:$0xff]
        %v328 = vld [vmem:[%s236 + $0x248] sm:$0xff]
        %v329 = vld [vmem:[%s236 + $0x250] sm:$0xff]
        %v330 = vld [vmem:[%s236 + $0x258] sm:$0xff]
        %v331 = vld [vmem:[%s236 + $0x260] sm:$0xff]
        %v332 = vld [vmem:[%s236 + $0x268] sm:$0xff]
        %v333 = vld [vmem:[%s236 + $0x270] sm:$0xff]
        %v334 = vld [vmem:[%s236 + $0x278] sm:$0xff]
        %v335 = vld [vmem:[%s236 + $0x280] sm:$0xff]
        %v336 = vld [vmem:[%s236 + $0x288] sm:$0xff]
        %v337 = vld [vmem:[%s236 + $0x290] sm:$0xff]
        %v338 = vld [vmem:[%s236 + $0x298] sm:$0xff]
        %v339 = vld [vmem:[%s236 + $0x2a0] sm:$0xff]
        %v340 = vld [vmem:[%s236 + $0x2a8] sm:$0xff]
        %v341 = vld [vmem:[%s236 + $0x2b0] sm:$0xff]
        %v342 = vld [vmem:[%s236 + $0x2b8] sm:$0xff]
        %v343 = vld [vmem:[%s236 + $0x2c0] sm:$0xff]
        %v344 = vld [vmem:[%s236 + $0x2c8] sm:$0xff]
        %v345 = vld [vmem:[%s236 + $0x2d0] sm:$0xff]
        %v346 = vld [vmem:[%s236 + $0x2d8] sm:$0xff]
        %v347 = vld [vmem:[%s236 + $0x2e0] sm:$0xff]
        %v348 = vld [vmem:[%s236 + $0x2e8] sm:$0xff]
        %v349 = vld [vmem:[%s236 + $0x2f0] sm:$0xff]
        %v350 = vld [vmem:[%s236 + $0x2f8] sm:$0xff]
        %v351 = vld [vmem:[%s236 + $0x300] sm:$0xff]
        %v352 = vld [vmem:[%s236 + $0x308] sm:$0xff]
        %v353 = vld [vmem:[%s236 + $0x310] sm:$0xff]
        %v354 = vld [vmem:[%s236 + $0x318] sm:$0xff]
        %v355 = vld [vmem:[%s236 + $0x320] sm:$0xff]
        %v356 = vld [vmem:[%s236 + $0x328] sm:$0xff]
        %v357 = vld [vmem:[%s236 + $0x330] sm:$0xff]
        %v358 = vld [vmem:[%s236 + $0x338] sm:$0xff]
        %v359 = vld [vmem:[%s236 + $0x340] sm:$0xff]
        %v360 = vld [vmem:[%s236 + $0x348] sm:$0xff]
        %v361 = vld [vmem:[%s236 + $0x350] sm:$0xff]
        %v362 = vld [vmem:[%s236 + $0x358] sm:$0xff]
        %v363 = vld [vmem:[%s236 + $0x360] sm:$0xff]
        %v364 = vld [vmem:[%s236 + $0x368] sm:$0xff]
        %v365 = vld [vmem:[%s236 + $0x370] sm:$0xff]
        %v366 = vld [vmem:[%s236 + $0x378] sm:$0xff]
        %v367 = vld [vmem:[%s236 + $0x380] sm:$0xff]
        %v368 = vld [vmem:[%s236 + $0x388] sm:$0xff]
        %v369 = vld [vmem:[%s236 + $0x390] sm:$0xff]
        %v370 = vld [vmem:[%s236 + $0x398] sm:$0xff]
        %v371 = vld [vmem:[%s236 + $0x3a0] sm:$0xff]
        %v372 = vld [vmem:[%s236 + $0x3a8] sm:$0xff]
        %v373 = vld [vmem:[%s236 + $0x3b0] sm:$0xff]
        %v374 = vld [vmem:[%s236 + $0x3b8] sm:$0xff]
        %v375 = vld [vmem:[%s236 + $0x3c0] sm:$0xff]
        %v376 = vld [vmem:[%s236 + $0x3c8] sm:$0xff]
        %v377 = vld [vmem:[%s236 + $0x3d0] sm:$0xff]
        %v378 = vld [vmem:[%s236 + $0x3d8] sm:$0xff]
        %v379 = vld [vmem:[%s236 + $0x3e0] sm:$0xff]
        %v380 = vld [vmem:[%s236 + $0x3e8] sm:$0xff]
        %v381 = vld [vmem:[%s236 + $0x3f0] sm:$0xff]
        %v382 = vld [vmem:[%s236 + $0x3f8] sm:$0xff]
        %v383 = vld [vmem:[%s236 + $0x400] sm:$0xff]
        %v384 = vld [vmem:[%s236 + $0x408] sm:$0xff]
        %v385 = vld [vmem:[%s236 + $0x410] sm:$0xff]
        %v386 = vld [vmem:[%s236 + $0x418] sm:$0xff]
        %v387 = vld [vmem:[%s236 + $0x420] sm:$0xff]
        %v388 = vld [vmem:[%s236 + $0x428] sm:$0xff]
        %v389 = vld [vmem:[%s236 + $0x430] sm:$0xff]
        %v390 = vld [vmem:[%s236 + $0x438] sm:$0xff]
        %v391 = vld [vmem:[%s236 + $0x440] sm:$0xff]
        %v392 = vld [vmem:[%s236 + $0x448] sm:$0xff]
        %v393 = vld [vmem:[%s236 + $0x450] sm:$0xff]
        %v394 = vld [vmem:[%s236 + $0x458] sm:$0xff]
        %v395 = vld [vmem:[%s236 + $0x460] sm:$0xff]
        %v396 = vld [vmem:[%s236 + $0x468] sm:$0xff]
        %v397 = vld [vmem:[%s236 + $0x470] sm:$0xff]
        %v398 = vld [vmem:[%s236 + $0x478] sm:$0xff]
        %v399 = vld [vmem:[%s236 + $0x480] sm:$0xff]
        %v400 = vld [vmem:[%s236 + $0x488] sm:$0xff]
        %v401 = vld [vmem:[%s236 + $0x490] sm:$0xff]
        %v402 = vld [vmem:[%s236 + $0x498] sm:$0xff]
        %v403 = vld [vmem:[%s236 + $0x4a0] sm:$0xff]
        %v404 = vld [vmem:[%s236 + $0x4a8] sm:$0xff]
        %v405 = vld [vmem:[%s236 + $0x4b0] sm:$0xff]
        %v406 = vld [vmem:[%s236 + $0x4b8] sm:$0xff]
        %v407 = vld [vmem:[%s236 + $0x4c0] sm:$0xff]
        %v408 = vld [vmem:[%s236 + $0x4c8] sm:$0xff]
        %v409 = vld [vmem:[%s236 + $0x4d0] sm:$0xff]
        %v410 = vld [vmem:[%s236 + $0x4d8] sm:$0xff]
        %v411 = vld [vmem:[%s236 + $0x4e0] sm:$0xff]
        %v412 = vld [vmem:[%s236 + $0x4e8] sm:$0xff]
        %v413 = vld [vmem:[%s236 + $0x4f0] sm:$0xff]
        %v414 = vld [vmem:[%s236 + $0x4f8] sm:$0xff]
        %v415 = vld [vmem:[%s236 + $0x500] sm:$0xff]
        %v416 = vld [vmem:[%s236 + $0x508] sm:$0xff]
        %v417 = vld [vmem:[%s236 + $0x510] sm:$0xff]
        %v418 = vld [vmem:[%s236 + $0x518] sm:$0xff]
        %v419 = vld [vmem:[%s236 + $0x520] sm:$0xff]
        %v420 = vld [vmem:[%s236 + $0x528] sm:$0xff]
        %v421 = vld [vmem:[%s236 + $0x530] sm:$0xff]
        %v422 = vld [vmem:[%s236 + $0x538] sm:$0xff]
        %v423 = vld [vmem:[%s236 + $0x540] sm:$0xff]
        %v424 = vld [vmem:[%s236 + $0x548] sm:$0xff]
        %v425 = vld [vmem:[%s236 + $0x550] sm:$0xff]
        %v426 = vld [vmem:[%s236 + $0x558] sm:$0xff]
        %v427 = vld [vmem:[%s236 + $0x560] sm:$0xff]
        %v428 = vld [vmem:[%s236 + $0x568] sm:$0xff]
        %v429 = vld [vmem:[%s236 + $0x570] sm:$0xff]
        %v430 = vld [vmem:[%s236 + $0x578] sm:$0xff]
        %v431 = vld [vmem:[%s236 + $0x580] sm:$0xff]
        %v432 = vld [vmem:[%s236 + $0x588] sm:$0xff]
        %v433 = vld [vmem:[%s236 + $0x590] sm:$0xff]
        %v434 = vld [vmem:[%s236 + $0x598] sm:$0xff]
        %v435 = vld [vmem:[%s236 + $0x5a0] sm:$0xff]
        %v436 = vld [vmem:[%s236 + $0x5a8] sm:$0xff]
        %v437 = vld [vmem:[%s236 + $0x5b0] sm:$0xff]
        %v438 = vld [vmem:[%s236 + $0x5b8] sm:$0xff]
        %v439 = vld [vmem:[%s236 + $0x5c0] sm:$0xff]
        %v440 = vld [vmem:[%s236 + $0x5c8] sm:$0xff]
        %v441 = vld [vmem:[%s236 + $0x5d0] sm:$0xff]
        %v442 = vld [vmem:[%s236 + $0x5d8] sm:$0xff]
        %v443 = vld [vmem:[%s236 + $0x5e0] sm:$0xff]
        %v444 = vld [vmem:[%s236 + $0x5e8] sm:$0xff]
        %v445 = vld [vmem:[%s236 + $0x5f0] sm:$0xff]
        %v446 = vld [vmem:[%s236 + $0x5f8] sm:$0xff]
        %v447 = vld [vmem:[%s236 + $0x600] sm:$0xff]
        %v448 = vld [vmem:[%s236 + $0x608] sm:$0xff]
        %v449 = vld [vmem:[%s236 + $0x610] sm:$0xff]
        %v450 = vld [vmem:[%s236 + $0x618] sm:$0xff]
        %v451 = vld [vmem:[%s236 + $0x620] sm:$0xff]
        %v452 = vld [vmem:[%s236 + $0x628] sm:$0xff]
        %v453 = vld [vmem:[%s236 + $0x630] sm:$0xff]
        %v454 = vld [vmem:[%s236 + $0x638] sm:$0xff]
        %v455 = vld [vmem:[%s236 + $0x640] sm:$0xff]
        %v456 = vld [vmem:[%s236 + $0x648] sm:$0xff]
        %v457 = vld [vmem:[%s236 + $0x650] sm:$0xff]
        %v458 = vld [vmem:[%s236 + $0x658] sm:$0xff]
        %v459 = vld [vmem:[%s236 + $0x660] sm:$0xff]
        %v460 = vld [vmem:[%s236 + $0x668] sm:$0xff]
        %v461 = vld [vmem:[%s236 + $0x670] sm:$0xff]
        %v462 = vld [vmem:[%s236 + $0x678] sm:$0xff]
        %v463 = vld [vmem:[%s236 + $0x680] sm:$0xff]
        %v464 = vld [vmem:[%s236 + $0x688] sm:$0xff]
        %v465 = vld [vmem:[%s236 + $0x690] sm:$0xff]
        %v466 = vld [vmem:[%s236 + $0x698] sm:$0xff]
        %v467 = vld [vmem:[%s236 + $0x6a0] sm:$0xff]
        %v468 = vld [vmem:[%s236 + $0x6a8] sm:$0xff]
        %v469 = vld [vmem:[%s236 + $0x6b0] sm:$0xff]
        %v470 = vld [vmem:[%s236 + $0x6b8] sm:$0xff]
        %v471 = vld [vmem:[%s236 + $0x6c0] sm:$0xff]
        %v472 = vld [vmem:[%s236 + $0x6c8] sm:$0xff]
        %v473 = vld [vmem:[%s236 + $0x6d0] sm:$0xff]
        %v474 = vld [vmem:[%s236 + $0x6d8] sm:$0xff]
        %v475 = vld [vmem:[%s236 + $0x6e0] sm:$0xff]
        %v476 = vld [vmem:[%s236 + $0x6e8] sm:$0xff]
        %v477 = vld [vmem:[%s236 + $0x6f0] sm:$0xff]
        %v478 = vld [vmem:[%s236 + $0x6f8] sm:$0xff]
        %v479 = vld [vmem:[%s236 + $0x700] sm:$0xff]
        %v480 = vld [vmem:[%s236 + $0x708] sm:$0xff]
        %v481 = vld [vmem:[%s236 + $0x710] sm:$0xff]
        %v482 = vld [vmem:[%s236 + $0x718] sm:$0xff]
        %v483 = vld [vmem:[%s236 + $0x720] sm:$0xff]
        %v484 = vld [vmem:[%s236 + $0x728] sm:$0xff]
        %v485 = vld [vmem:[%s236 + $0x730] sm:$0xff]
        %v486 = vld [vmem:[%s236 + $0x738] sm:$0xff]
        %v487 = vld [vmem:[%s236 + $0x740] sm:$0xff]
        %v488 = vld [vmem:[%s236 + $0x748] sm:$0xff]
        %v489 = vld [vmem:[%s236 + $0x750] sm:$0xff]
        %v490 = vld [vmem:[%s236 + $0x758] sm:$0xff]
        %v491 = vld [vmem:[%s236 + $0x760] sm:$0xff]
        %v492 = vld [vmem:[%s236 + $0x768] sm:$0xff]
        %v493 = vld [vmem:[%s236 + $0x770] sm:$0xff]
        %v494 = vld [vmem:[%s236 + $0x778] sm:$0xff]
        %v495 = vld [vmem:[%s236 + $0x780] sm:$0xff]
        %v496 = vld [vmem:[%s236 + $0x788] sm:$0xff]
        %v497 = vld [vmem:[%s236 + $0x790] sm:$0xff]
        %v498 = vld [vmem:[%s236 + $0x798] sm:$0xff]
        %v499 = vld [vmem:[%s236 + $0x7a0] sm:$0xff]
        %v500 = vld [vmem:[%s236 + $0x7a8] sm:$0xff]
        %v501 = vld [vmem:[%s236 + $0x7b0] sm:$0xff]
        %v502 = vld [vmem:[%s236 + $0x7b8] sm:$0xff]
        %v503 = vld [vmem:[%s236 + $0x7c0] sm:$0xff]
        %v504 = vld [vmem:[%s236 + $0x7c8] sm:$0xff]
        %v505 = vld [vmem:[%s236 + $0x7d0] sm:$0xff]
        %v506 = vld [vmem:[%s236 + $0x7d8] sm:$0xff]
        %v507 = vld [vmem:[%s236 + $0x7e0] sm:$0xff]
        %v508 = vld [vmem:[%s236 + $0x7e8] sm:$0xff]
        %v509 = vld [vmem:[%s236 + $0x7f0] sm:$0xff]
        %v510 = vld [vmem:[%s236 + $0x7f8] sm:$0xff]
        %v511 = vld [vmem:[%s236 + $0x800] sm:$0xff]
        %v512 = vld [vmem:[%s236 + $0x808] sm:$0xff]
        %v513 = vld [vmem:[%s236 + $0x810] sm:$0xff]
        %v514 = vld [vmem:[%s236 + $0x818] sm:$0xff]
        %v515 = vld [vmem:[%s236 + $0x820] sm:$0xff]
        %v516 = vld [vmem:[%s236 + $0x828] sm:$0xff]
        %v517 = vld [vmem:[%s236 + $0x830] sm:$0xff]
        %v518 = vld [vmem:[%s236 + $0x838] sm:$0xff]
        %v519 = vld [vmem:[%s236 + $0x840] sm:$0xff]
        %v520 = vld [vmem:[%s236 + $0x848] sm:$0xff]
        %v521 = vld [vmem:[%s236 + $0x850] sm:$0xff]
        %v522 = vld [vmem:[%s236 + $0x858] sm:$0xff]
        %v523 = vld [vmem:[%s236 + $0x860] sm:$0xff]
        %v524 = vld [vmem:[%s236 + $0x868] sm:$0xff]
        %v525 = vld [vmem:[%s236 + $0x870] sm:$0xff]
        %v526 = vld [vmem:[%s236 + $0x878] sm:$0xff]
        %v527 = vld [vmem:[%s236 + $0x880] sm:$0xff]
        %v528 = vld [vmem:[%s236 + $0x888] sm:$0xff]
        %v529 = vld [vmem:[%s236 + $0x890] sm:$0xff]
        %v530 = vld [vmem:[%s236 + $0x898] sm:$0xff]
        %v531 = vld [vmem:[%s236 + $0x8a0] sm:$0xff]
        %v532 = vld [vmem:[%s236 + $0x8a8] sm:$0xff]
        %v533 = vld [vmem:[%s236 + $0x8b0] sm:$0xff]
        %v534 = vld [vmem:[%s236 + $0x8b8] sm:$0xff]
        %v535 = vld [vmem:[%s236 + $0x8c0] sm:$0xff]
        %v536 = vld [vmem:[%s236 + $0x8c8] sm:$0xff]
        %v537 = vld [vmem:[%s236 + $0x8d0] sm:$0xff]
        %v538 = vld [vmem:[%s236 + $0x8d8] sm:$0xff]
        %v539 = vld [vmem:[%s236 + $0x8e0] sm:$0xff]
        %v540 = vld [vmem:[%s236 + $0x8e8] sm:$0xff]
        %v541 = vld [vmem:[%s236 + $0x8f0] sm:$0xff]
        %v542 = vld [vmem:[%s236 + $0x8f8] sm:$0xff]
        %v543 = vld [vmem:[%s236 + $0x900] sm:$0xff]
        %v544 = vld [vmem:[%s236 + $0x908] sm:$0xff]
        %v545 = vld [vmem:[%s236 + $0x910] sm:$0xff]
        %v546 = vld [vmem:[%s236 + $0x918] sm:$0xff]
        %v547 = vld [vmem:[%s236 + $0x920] sm:$0xff]
        %v548 = vld [vmem:[%s236 + $0x928] sm:$0xff]
        %v549 = vld [vmem:[%s236 + $0x930] sm:$0xff]
        %v550 = vld [vmem:[%s236 + $0x938] sm:$0xff]
        %v551 = vld [vmem:[%s236 + $0x940] sm:$0xff]
        %v552 = vld [vmem:[%s236 + $0x948] sm:$0xff]
        %v553 = vld [vmem:[%s236 + $0x950] sm:$0xff]
        %v554 = vld [vmem:[%s236 + $0x958] sm:$0xff]
        %v555 = vld [vmem:[%s236 + $0x960] sm:$0xff]
        %v556 = vld [vmem:[%s236 + $0x968] sm:$0xff]
        %v557 = vld [vmem:[%s236 + $0x970] sm:$0xff]
        %v558 = vld [vmem:[%s236 + $0x978] sm:$0xff]
        %v559 = vld [vmem:[%s236 + $0x980] sm:$0xff]
        %v560 = vld [vmem:[%s236 + $0x988] sm:$0xff]
        %v561 = vld [vmem:[%s236 + $0x990] sm:$0xff]
        %v562 = vld [vmem:[%s236 + $0x998] sm:$0xff]
        %v563 = vld [vmem:[%s236 + $0x9a0] sm:$0xff]
        %v564 = vld [vmem:[%s236 + $0x9a8] sm:$0xff]
        %v565 = vld [vmem:[%s236 + $0x9b0] sm:$0xff]
        %v566 = vld [vmem:[%s236 + $0x9b8] sm:$0xff]
        %v567 = vld [vmem:[%s236 + $0x9c0] sm:$0xff]
        %v568 = vld [vmem:[%s236 + $0x9c8] sm:$0xff]
        %v569 = vld [vmem:[%s236 + $0x9d0] sm:$0xff]
        %v570 = vld [vmem:[%s236 + $0x9d8] sm:$0xff]
        %v571 = vld [vmem:[%s236 + $0x9e0] sm:$0xff]
        %v572 = vld [vmem:[%s236 + $0x9e8] sm:$0xff]
        %v573 = vld [vmem:[%s236 + $0x9f0] sm:$0xff]
        %v574 = vld [vmem:[%s236 + $0x9f8] sm:$0xff]
        %v575 = vld [vmem:[%s236 + $0xa00] sm:$0xff]
        %v576 = vld [vmem:[%s236 + $0xa08] sm:$0xff]
        %v577 = vld [vmem:[%s236 + $0xa10] sm:$0xff]
        %v578 = vld [vmem:[%s236 + $0xa18] sm:$0xff]
        %v579 = vld [vmem:[%s236 + $0xa20] sm:$0xff]
        %v580 = vld [vmem:[%s236 + $0xa28] sm:$0xff]
        %v581 = vld [vmem:[%s236 + $0xa30] sm:$0xff]
        %v582 = vld [vmem:[%s236 + $0xa38] sm:$0xff]
        %v583 = vld [vmem:[%s236 + $0xa40] sm:$0xff]
        %v584 = vld [vmem:[%s236 + $0xa48] sm:$0xff]
        %v585 = vld [vmem:[%s236 + $0xa50] sm:$0xff]
        %v586 = vld [vmem:[%s236 + $0xa58] sm:$0xff]
        %v587 = vld [vmem:[%s236 + $0xa60] sm:$0xff]
        %v588 = vld [vmem:[%s236 + $0xa68] sm:$0xff]
        %v589 = vld [vmem:[%s236 + $0xa70] sm:$0xff]
        %v590 = vld [vmem:[%s236 + $0xa78] sm:$0xff]
        %v591 = vld [vmem:[%s236 + $0xa80] sm:$0xff]
        %v592 = vld [vmem:[%s236 + $0xa88] sm:$0xff]
        %v593 = vld [vmem:[%s236 + $0xa90] sm:$0xff]
        %v594 = vld [vmem:[%s236 + $0xa98] sm:$0xff]
        %v595 = vld [vmem:[%s236 + $0xaa0] sm:$0xff]
        %v596 = vld [vmem:[%s236 + $0xaa8] sm:$0xff]
        %v597 = vld [vmem:[%s236 + $0xab0] sm:$0xff]
        %v598 = vld [vmem:[%s236 + $0xab8] sm:$0xff]
        %v599 = vld [vmem:[%s236 + $0xac0] sm:$0xff]
        %v600 = vld [vmem:[%s236 + $0xac8] sm:$0xff]
        %v601 = vld [vmem:[%s236 + $0xad0] sm:$0xff]
        %v602 = vld [vmem:[%s236 + $0xad8] sm:$0xff]
        %v603 = vld [vmem:[%s236 + $0xae0] sm:$0xff]
        %v604 = vld [vmem:[%s236 + $0xae8] sm:$0xff]
        %v605 = vld [vmem:[%s236 + $0xaf0] sm:$0xff]
        %v606 = vld [vmem:[%s236 + $0xaf8] sm:$0xff]
        %v607 = vld [vmem:[%s236 + $0xb00] sm:$0xff]
        %v608 = vld [vmem:[%s236 + $0xb08] sm:$0xff]
        %v609 = vld [vmem:[%s236 + $0xb10] sm:$0xff]
        %v610 = vld [vmem:[%s236 + $0xb18] sm:$0xff]
        %v611 = vld [vmem:[%s236 + $0xb20] sm:$0xff]
        %v612 = vld [vmem:[%s236 + $0xb28] sm:$0xff]
        %v613 = vld [vmem:[%s236 + $0xb30] sm:$0xff]
        %v614 = vld [vmem:[%s236 + $0xb38] sm:$0xff]
        %v615 = vld [vmem:[%s236 + $0xb40] sm:$0xff]
        %v616 = vld [vmem:[%s236 + $0xb48] sm:$0xff]
        %v617 = vld [vmem:[%s236 + $0xb50] sm:$0xff]
        %v618 = vld [vmem:[%s236 + $0xb58] sm:$0xff]
        %v619 = vld [vmem:[%s236 + $0xb60] sm:$0xff]
        %v620 = vld [vmem:[%s236 + $0xb68] sm:$0xff]
        %v621 = vld [vmem:[%s236 + $0xb70] sm:$0xff]
        %v622 = vld [vmem:[%s236 + $0xb78] sm:$0xff]
        %v623 = vld [vmem:[%s236 + $0xb80] sm:$0xff]
        %v624 = vld [vmem:[%s236 + $0xb88] sm:$0xff]
        %v625 = vld [vmem:[%s236 + $0xb90] sm:$0xff]
        %v626 = vld [vmem:[%s236 + $0xb98] sm:$0xff]
        %v627 = vld [vmem:[%s236 + $0xba0] sm:$0xff]
        %v628 = vld [vmem:[%s236 + $0xba8] sm:$0xff]
        %v629 = vld [vmem:[%s236 + $0xbb0] sm:$0xff]
        %v630 = vld [vmem:[%s236 + $0xbb8] sm:$0xff]
        %v631 = vld [vmem:[%s236 + $0xbc0] sm:$0xff]
        %v632 = vld [vmem:[%s236 + $0xbc8] sm:$0xff]
        %v633 = vld [vmem:[%s236 + $0xbd0] sm:$0xff]
        %v634 = vld [vmem:[%s236 + $0xbd8] sm:$0xff]
        %v635 = vld [vmem:[%s236 + $0xbe0] sm:$0xff]
        %v636 = vld [vmem:[%s236 + $0xbe8] sm:$0xff]
        %v637 = vld [vmem:[%s236 + $0xbf0] sm:$0xff]
        %v638 = vld [vmem:[%s236 + $0xbf8] sm:$0xff]
        %v639 = vld [vmem:[%s236 + $0xc00] sm:$0xff]
        %v640 = vld [vmem:[%s236 + $0xc08] sm:$0xff]
        %v641 = vld [vmem:[%s236 + $0xc10] sm:$0xff]
        %v642 = vld [vmem:[%s236 + $0xc18] sm:$0xff]
        %v643 = vld [vmem:[%s236 + $0xc20] sm:$0xff]
        %v644 = vld [vmem:[%s236 + $0xc28] sm:$0xff]
        %v645 = vld [vmem:[%s236 + $0xc30] sm:$0xff]
        %v646 = vld [vmem:[%s236 + $0xc38] sm:$0xff]
        %v647 = vld [vmem:[%s236 + $0xc40] sm:$0xff]
        %v648 = vld [vmem:[%s236 + $0xc48] sm:$0xff]
        %v649 = vld [vmem:[%s236 + $0xc50] sm:$0xff]
        %v650 = vld [vmem:[%s236 + $0xc58] sm:$0xff]
        %v651 = vld [vmem:[%s236 + $0xc60] sm:$0xff]
        %v652 = vld [vmem:[%s236 + $0xc68] sm:$0xff]
        %v653 = vld [vmem:[%s236 + $0xc70] sm:$0xff]
        %v654 = vld [vmem:[%s236 + $0xc78] sm:$0xff]
        %v655 = vld [vmem:[%s236 + $0xc80] sm:$0xff]
        %v656 = vld [vmem:[%s236 + $0xc88] sm:$0xff]
        %v657 = vld [vmem:[%s236 + $0xc90] sm:$0xff]
        %v658 = vld [vmem:[%s236 + $0xc98] sm:$0xff]
        %v659 = vld [vmem:[%s236 + $0xca0] sm:$0xff]
        %v660 = vld [vmem:[%s236 + $0xca8] sm:$0xff]
        %v661 = vld [vmem:[%s236 + $0xcb0] sm:$0xff]
        %v662 = vld [vmem:[%s236 + $0xcb8] sm:$0xff]
        %v663 = vld [vmem:[%s236 + $0xcc0] sm:$0xff]
        %v664 = vld [vmem:[%s236 + $0xcc8] sm:$0xff]
        %v665 = vld [vmem:[%s236 + $0xcd0] sm:$0xff]
        %v666 = vld [vmem:[%s236 + $0xcd8] sm:$0xff]
        %v667 = vld [vmem:[%s236 + $0xce0] sm:$0xff]
        %v668 = vld [vmem:[%s236 + $0xce8] sm:$0xff]
        %v669 = vld [vmem:[%s236 + $0xcf0] sm:$0xff]
        %v670 = vld [vmem:[%s236 + $0xcf8] sm:$0xff]
        %v671 = vld [vmem:[%s236 + $0xd00] sm:$0xff]
        %v672 = vld [vmem:[%s236 + $0xd08] sm:$0xff]
        %v673 = vld [vmem:[%s236 + $0xd10] sm:$0xff]
        %v674 = vld [vmem:[%s236 + $0xd18] sm:$0xff]
        %v675 = vld [vmem:[%s236 + $0xd20] sm:$0xff]
        %v676 = vld [vmem:[%s236 + $0xd28] sm:$0xff]
        %v677 = vld [vmem:[%s236 + $0xd30] sm:$0xff]
        %v678 = vld [vmem:[%s236 + $0xd38] sm:$0xff]
        %v679 = vld [vmem:[%s236 + $0xd40] sm:$0xff]
        %v680 = vld [vmem:[%s236 + $0xd48] sm:$0xff]
        %v681 = vld [vmem:[%s236 + $0xd50] sm:$0xff]
        %v682 = vld [vmem:[%s236 + $0xd58] sm:$0xff]
        %v683 = vld [vmem:[%s236 + $0xd60] sm:$0xff]
        %v684 = vld [vmem:[%s236 + $0xd68] sm:$0xff]
        %v685 = vld [vmem:[%s236 + $0xd70] sm:$0xff]
        %v686 = vld [vmem:[%s236 + $0xd78] sm:$0xff]
        %v687 = vld [vmem:[%s236 + $0xd80] sm:$0xff]
        %v688 = vld [vmem:[%s236 + $0xd88] sm:$0xff]
        %v689 = vld [vmem:[%s236 + $0xd90] sm:$0xff]
        %v690 = vld [vmem:[%s236 + $0xd98] sm:$0xff]
        %v691 = vld [vmem:[%s236 + $0xda0] sm:$0xff]
        %v692 = vld [vmem:[%s236 + $0xda8] sm:$0xff]
        %v693 = vld [vmem:[%s236 + $0xdb0] sm:$0xff]
        %v694 = vld [vmem:[%s236 + $0xdb8] sm:$0xff]
        %v695 = vld [vmem:[%s236 + $0xdc0] sm:$0xff]
        %v696 = vld [vmem:[%s236 + $0xdc8] sm:$0xff]
        %v697 = vld [vmem:[%s236 + $0xdd0] sm:$0xff]
        %v698 = vld [vmem:[%s236 + $0xdd8] sm:$0xff]
        %v699 = vld [vmem:[%s236 + $0xde0] sm:$0xff]
        %v700 = vld [vmem:[%s236 + $0xde8] sm:$0xff]
        %v701 = vld [vmem:[%s236 + $0xdf0] sm:$0xff]
        %v702 = vld [vmem:[%s236 + $0xdf8] sm:$0xff]
        %v703 = vld [vmem:[%s236 + $0xe00] sm:$0xff]
        %v704 = vld [vmem:[%s236 + $0xe08] sm:$0xff]
        %v705 = vld [vmem:[%s236 + $0xe10] sm:$0xff]
        %v706 = vld [vmem:[%s236 + $0xe18] sm:$0xff]
        %v707 = vld [vmem:[%s236 + $0xe20] sm:$0xff]
        %v708 = vld [vmem:[%s236 + $0xe28] sm:$0xff]
        %v709 = vld [vmem:[%s236 + $0xe30] sm:$0xff]
        %v710 = vld [vmem:[%s236 + $0xe38] sm:$0xff]
        %v711 = vld [vmem:[%s236 + $0xe40] sm:$0xff]
        %v712 = vld [vmem:[%s236 + $0xe48] sm:$0xff]
        %v713 = vld [vmem:[%s236 + $0xe50] sm:$0xff]
        %v714 = vld [vmem:[%s236 + $0xe58] sm:$0xff]
        %v715 = vld [vmem:[%s236 + $0xe60] sm:$0xff]
        %v716 = vld [vmem:[%s236 + $0xe68] sm:$0xff]
        %v717 = vld [vmem:[%s236 + $0xe70] sm:$0xff]
        %v718 = vld [vmem:[%s236 + $0xe78] sm:$0xff]
        %v719 = vld [vmem:[%s236 + $0xe80] sm:$0xff]
        %v720 = vld [vmem:[%s236 + $0xe88] sm:$0xff]
        %v721 = vld [vmem:[%s236 + $0xe90] sm:$0xff]
        %v722 = vld [vmem:[%s236 + $0xe98] sm:$0xff]
        %v723 = vld [vmem:[%s236 + $0xea0] sm:$0xff]
        %v724 = vld [vmem:[%s236 + $0xea8] sm:$0xff]
        %v725 = vld [vmem:[%s236 + $0xeb0] sm:$0xff]
        %v726 = vld [vmem:[%s236 + $0xeb8] sm:$0xff]
        %v727 = vld [vmem:[%s236 + $0xec0] sm:$0xff]
        %v728 = vld [vmem:[%s236 + $0xec8] sm:$0xff]
        %v729 = vld [vmem:[%s236 + $0xed0] sm:$0xff]
        %v730 = vld [vmem:[%s236 + $0xed8] sm:$0xff]
        %v731 = vld [vmem:[%s236 + $0xee0] sm:$0xff]
        %v732 = vld [vmem:[%s236 + $0xee8] sm:$0xff]
        %v733 = vld [vmem:[%s236 + $0xef0] sm:$0xff]
        %v734 = vld [vmem:[%s236 + $0xef8] sm:$0xff]
        %v735 = vld [vmem:[%s236 + $0xf00] sm:$0xff]
        %v736 = vld [vmem:[%s236 + $0xf08] sm:$0xff]
        %v737 = vld [vmem:[%s236 + $0xf10] sm:$0xff]
        %v738 = vld [vmem:[%s236 + $0xf18] sm:$0xff]
        %v739 = vld [vmem:[%s236 + $0xf20] sm:$0xff]
        %v740 = vld [vmem:[%s236 + $0xf28] sm:$0xff]
        %v741 = vld [vmem:[%s236 + $0xf30] sm:$0xff]
        %v742 = vld [vmem:[%s236 + $0xf38] sm:$0xff]
        %v743 = vld [vmem:[%s236 + $0xf40] sm:$0xff]
        %v744 = vld [vmem:[%s236 + $0xf48] sm:$0xff]
        %v745 = vld [vmem:[%s236 + $0xf50] sm:$0xff]
        %v746 = vld [vmem:[%s236 + $0xf58] sm:$0xff]
        %v747 = vld [vmem:[%s236 + $0xf60] sm:$0xff]
        %v748 = vld [vmem:[%s236 + $0xf68] sm:$0xff]
        %v749 = vld [vmem:[%s236 + $0xf70] sm:$0xff]
        %v750 = vld [vmem:[%s236 + $0xf78] sm:$0xff]
        %v751 = vld [vmem:[%s236 + $0xf80] sm:$0xff]
        %v752 = vld [vmem:[%s236 + $0xf88] sm:$0xff]
        %v753 = vld [vmem:[%s236 + $0xf90] sm:$0xff]
        %v754 = vld [vmem:[%s236 + $0xf98] sm:$0xff]
        %v755 = vld [vmem:[%s236 + $0xfa0] sm:$0xff]
        %v756 = vld [vmem:[%s236 + $0xfa8] sm:$0xff]
        %v757 = vld [vmem:[%s236 + $0xfb0] sm:$0xff]
        %v758 = vld [vmem:[%s236 + $0xfb8] sm:$0xff]
        %v759 = vld [vmem:[%s236 + $0xfc0] sm:$0xff]
        %v760 = vld [vmem:[%s236 + $0xfc8] sm:$0xff]
        %v761 = vld [vmem:[%s236 + $0xfd0] sm:$0xff]
        %v762 = vld [vmem:[%s236 + $0xfd8] sm:$0xff]
        %v763 = vld [vmem:[%s236 + $0xfe0] sm:$0xff]
        %v764 = vld [vmem:[%s236 + $0xfe8] sm:$0xff]
        %v765 = vld [vmem:[%s236 + $0xff0] sm:$0xff]
        %v766 = vld [vmem:[%s236 + $0xff8] sm:$0xff]
        %v767 = vld [vmem:[%s236 + $0x1000] sm:$0xff]
        %v768 = vld [vmem:[%s236 + $0x1008] sm:$0xff]
        %v769 = vld [vmem:[%s236 + $0x1010] sm:$0xff]
        %v770 = vld [vmem:[%s236 + $0x1018] sm:$0xff]
        %v771 = vld [vmem:[%s236 + $0x1020] sm:$0xff]
        %v772 = vld [vmem:[%s236 + $0x1028] sm:$0xff]
        %v773 = vld [vmem:[%s236 + $0x1030] sm:$0xff]
        %v774 = vld [vmem:[%s236 + $0x1038] sm:$0xff]
        %v775 = vld [vmem:[%s236 + $0x1040] sm:$0xff]
        %v776 = vld [vmem:[%s236 + $0x1048] sm:$0xff]
        %v777 = vld [vmem:[%s236 + $0x1050] sm:$0xff]
        %v778 = vld [vmem:[%s236 + $0x1058] sm:$0xff]
        %v779 = vld [vmem:[%s236 + $0x1060] sm:$0xff]
        %v780 = vld [vmem:[%s236 + $0x1068] sm:$0xff]
        %v781 = vld [vmem:[%s236 + $0x1070] sm:$0xff]
        %v782 = vld [vmem:[%s236 + $0x1078] sm:$0xff]
        %v783 = vld [vmem:[%s236 + $0x1080] sm:$0xff]
        %v784 = vld [vmem:[%s236 + $0x1088] sm:$0xff]
        %v785 = vld [vmem:[%s236 + $0x1090] sm:$0xff]
        %v786 = vld [vmem:[%s236 + $0x1098] sm:$0xff]
        %v787 = vld [vmem:[%s236 + $0x10a0] sm:$0xff]
        %v788 = vld [vmem:[%s236 + $0x10a8] sm:$0xff]
        %v789 = vld [vmem:[%s236 + $0x10b0] sm:$0xff]
        %v790 = vld [vmem:[%s236 + $0x10b8] sm:$0xff]
        %v791 = vld [vmem:[%s236 + $0x10c0] sm:$0xff]
        %v792 = vld [vmem:[%s236 + $0x10c8] sm:$0xff]
        %v793 = vld [vmem:[%s236 + $0x10d0] sm:$0xff]
        %v794 = vld [vmem:[%s236 + $0x10d8] sm:$0xff]
        %v795 = vld [vmem:[%s236 + $0x10e0] sm:$0xff]
        %v796 = vld [vmem:[%s236 + $0x10e8] sm:$0xff]
        %v797 = vld [vmem:[%s236 + $0x10f0] sm:$0xff]
        %v798 = vld [vmem:[%s236 + $0x10f8] sm:$0xff]
        %v799 = vld [vmem:[%s236 + $0x1100] sm:$0xff]
        %v800 = vld [vmem:[%s236 + $0x1108] sm:$0xff]
        %v801 = vld [vmem:[%s236 + $0x1110] sm:$0xff]
        %v802 = vld [vmem:[%s236 + $0x1118] sm:$0xff]
        %v803 = vld [vmem:[%s236 + $0x1120] sm:$0xff]
        %v804 = vld [vmem:[%s236 + $0x1128] sm:$0xff]
        %v805 = vld [vmem:[%s236 + $0x1130] sm:$0xff]
        %v806 = vld [vmem:[%s236 + $0x1138] sm:$0xff]
        %v807 = vld [vmem:[%s236 + $0x1140] sm:$0xff]
        %v808 = vld [vmem:[%s236 + $0x1148] sm:$0xff]
        %v809 = vld [vmem:[%s236 + $0x1150] sm:$0xff]
        %v810 = vld [vmem:[%s236 + $0x1158] sm:$0xff]
        %v811 = vld [vmem:[%s236 + $0x1160] sm:$0xff]
        %v812 = vld [vmem:[%s236 + $0x1168] sm:$0xff]
        %v813 = vld [vmem:[%s236 + $0x1170] sm:$0xff]
        %v814 = vld [vmem:[%s236 + $0x1178] sm:$0xff]
        %v815 = vld [vmem:[%s236 + $0x1180] sm:$0xff]
        %v816 = vld [vmem:[%s236 + $0x1188] sm:$0xff]
        %v817 = vld [vmem:[%s236 + $0x1190] sm:$0xff]
        %v818 = vld [vmem:[%s236 + $0x1198] sm:$0xff]
        %v819 = vld [vmem:[%s236 + $0x11a0] sm:$0xff]
        %v820 = vld [vmem:[%s236 + $0x11a8] sm:$0xff]
        %v821 = vld [vmem:[%s236 + $0x11b0] sm:$0xff]
        %v822 = vld [vmem:[%s236 + $0x11b8] sm:$0xff]
        %v823 = vld [vmem:[%s236 + $0x11c0] sm:$0xff]
        %v824 = vld [vmem:[%s236 + $0x11c8] sm:$0xff]
        %v825 = vld [vmem:[%s236 + $0x11d0] sm:$0xff]
        %v826 = vld [vmem:[%s236 + $0x11d8] sm:$0xff]
        %v827 = vld [vmem:[%s236 + $0x11e0] sm:$0xff]
        %v828 = vld [vmem:[%s236 + $0x11e8] sm:$0xff]
        %v829 = vld [vmem:[%s236 + $0x11f0] sm:$0xff]
        %v830 = vld [vmem:[%s236 + $0x11f8] sm:$0xff]
        %v831 = vld [vmem:[%s236 + $0x1200] sm:$0xff]
        %v832 = vld [vmem:[%s236 + $0x1208] sm:$0xff]
        %v833 = vld [vmem:[%s236 + $0x1210] sm:$0xff]
        %v834 = vld [vmem:[%s236 + $0x1218] sm:$0xff]
        %v835 = vld [vmem:[%s236 + $0x1220] sm:$0xff]
        %v836 = vld [vmem:[%s236 + $0x1228] sm:$0xff]
        %v837 = vld [vmem:[%s236 + $0x1230] sm:$0xff]
        %v838 = vld [vmem:[%s236 + $0x1238] sm:$0xff]
        %v839 = vld [vmem:[%s236 + $0x1240] sm:$0xff]
        %v840 = vld [vmem:[%s236 + $0x1248] sm:$0xff]
        %v841 = vld [vmem:[%s236 + $0x1250] sm:$0xff]
        %v842 = vld [vmem:[%s236 + $0x1258] sm:$0xff]
        %v843 = vld [vmem:[%s236 + $0x1260] sm:$0xff]
        %v844 = vld [vmem:[%s236 + $0x1268] sm:$0xff]
        %v845 = vld [vmem:[%s236 + $0x1270] sm:$0xff]
        %v846 = vld [vmem:[%s236 + $0x1278] sm:$0xff]
        %v847 = vld [vmem:[%s236 + $0x1280] sm:$0xff]
        %v848 = vld [vmem:[%s236 + $0x1288] sm:$0xff]
        %v849 = vld [vmem:[%s236 + $0x1290] sm:$0xff]
        %v850 = vld [vmem:[%s236 + $0x1298] sm:$0xff]
        %v851 = vld [vmem:[%s236 + $0x12a0] sm:$0xff]
        %v852 = vld [vmem:[%s236 + $0x12a8] sm:$0xff]
        %v853 = vld [vmem:[%s236 + $0x12b0] sm:$0xff]
        %v854 = vld [vmem:[%s236 + $0x12b8] sm:$0xff]
        %v855 = vld [vmem:[%s236 + $0x12c0] sm:$0xff]
        %v856 = vld [vmem:[%s236 + $0x12c8] sm:$0xff]
        %v857 = vld [vmem:[%s236 + $0x12d0] sm:$0xff]
        %v858 = vld [vmem:[%s236 + $0x12d8] sm:$0xff]
        %v859 = vld [vmem:[%s236 + $0x12e0] sm:$0xff]
        %v860 = vld [vmem:[%s236 + $0x12e8] sm:$0xff]
        %v861 = vld [vmem:[%s236 + $0x12f0] sm:$0xff]
        %v862 = vld [vmem:[%s236 + $0x12f8] sm:$0xff]
        %v863 = vld [vmem:[%s236 + $0x1300] sm:$0xff]
        %v864 = vld [vmem:[%s236 + $0x1308] sm:$0xff]
        %v865 = vld [vmem:[%s236 + $0x1310] sm:$0xff]
        %v866 = vld [vmem:[%s236 + $0x1318] sm:$0xff]
        %v867 = vld [vmem:[%s236 + $0x1320] sm:$0xff]
        %v868 = vld [vmem:[%s236 + $0x1328] sm:$0xff]
        %v869 = vld [vmem:[%s236 + $0x1330] sm:$0xff]
        %v870 = vld [vmem:[%s236 + $0x1338] sm:$0xff]
        %v871 = vld [vmem:[%s236 + $0x1340] sm:$0xff]
        %v872 = vld [vmem:[%s236 + $0x1348] sm:$0xff]
        %v873 = vld [vmem:[%s236 + $0x1350] sm:$0xff]
        %v874 = vld [vmem:[%s236 + $0x1358] sm:$0xff]
        %v875 = vld [vmem:[%s236 + $0x1360] sm:$0xff]
        %v876 = vld [vmem:[%s236 + $0x1368] sm:$0xff]
        %v877 = vld [vmem:[%s236 + $0x1370] sm:$0xff]
        %v878 = vld [vmem:[%s236 + $0x1378] sm:$0xff]
        %v879 = vld [vmem:[%s236 + $0x1380] sm:$0xff]
        %v880 = vld [vmem:[%s236 + $0x1388] sm:$0xff]
        %v881 = vld [vmem:[%s236 + $0x1390] sm:$0xff]
        %v882 = vld [vmem:[%s236 + $0x1398] sm:$0xff]
        %v883 = vld [vmem:[%s236 + $0x13a0] sm:$0xff]
        %v884 = vld [vmem:[%s236 + $0x13a8] sm:$0xff]
        %v885 = vld [vmem:[%s236 + $0x13b0] sm:$0xff]
        %v886 = vld [vmem:[%s236 + $0x13b8] sm:$0xff]
        %v887 = vld [vmem:[%s236 + $0x13c0] sm:$0xff]
        %v888 = vld [vmem:[%s236 + $0x13c8] sm:$0xff]
        %v889 = vld [vmem:[%s236 + $0x13d0] sm:$0xff]
        %v890 = vld [vmem:[%s236 + $0x13d8] sm:$0xff]
        %v891 = vld [vmem:[%s236 + $0x13e0] sm:$0xff]
        %v892 = vld [vmem:[%s236 + $0x13e8] sm:$0xff]
        %v893 = vld [vmem:[%s236 + $0x13f0] sm:$0xff]
        %v894 = vld [vmem:[%s236 + $0x13f8] sm:$0xff]
        %v897 = vcombine.high %v253, %v253
        %v899 = vunpack.c.l.s4 1983009808
        %v900 = vunpack.c.0.s8 %v899
        %v901 = vlaneseq
        %v902 = vshrl.u32 %v901, 7
        %v903 = vsub.s32 %v900, %v902
        %v904 = vrot.slane %v253, %v903
        %v906 = vunpack.c.l.s4 1983009808
        %v907 = vunpack.c.0.s8 %v906
        %v908 = vlaneseq
        %v909 = vshrl.u32 %v908, 7
        %v910 = vsub.s32 %v907, %v909
        %v911 = vrot.slane %v897, %v910
        %v912 = vcombine.high %v904, %v904
        %v913 = vcombine.high %v911, %v911
        %v915 = vunpack.c.l.s4 1983009808
        %v916 = vunpack.c.0.s8 %v915
        %v917 = vlaneseq
        %v918 = vshrl.u32 %v917, 7
        %v919 = vsub.s32 %v916, %v918
        %v920 = vrot.slane %v254, %v919
        %926 = vmatprep.subr.mxu0 %v256
        %927 = vmatpush1.msra.mxu0 %v255
        %928 = vmatprep.subr.mxu0 %v264
        %929 = vmatpush1.msra.mxu0 %v263
        %930 = vmatprep.subr.mxu0 %v272
        %931 = vmatpush1.msra.mxu0 %v271
        %932 = vmatprep.subr.mxu0 %v280
        %933 = vmatpush1.msra.mxu0 %v279
        %934 = vmatprep.subr.mxu0 %v288
        %935 = vmatpush1.msra.mxu0 %v287
        %936 = vmatprep.subr.mxu0 %v296
        %937 = vmatpush1.msra.mxu0 %v295
        %938 = vmatprep.subr.mxu0 %v304
        %939 = vmatpush1.msra.mxu0 %v303
        %940 = vmatprep.subr.mxu0 %v312
        %941 = vmatpush1.msra.mxu0 %v311
        %942 = vmatprep.subr.mxu0 %v320
        %943 = vmatpush1.msra.mxu0 %v319
        %944 = vmatprep.subr.mxu0 %v328
        %945 = vmatpush1.msra.mxu0 %v327
        %946 = vmatprep.subr.mxu0 %v336
        %947 = vmatpush1.msra.mxu0 %v335
        %948 = vmatprep.subr.mxu0 %v344
        %949 = vmatpush1.msra.mxu0 %v343
        %950 = vmatprep.subr.mxu0 %v352
        %951 = vmatpush1.msra.mxu0 %v351
        %952 = vmatprep.subr.mxu0 %v360
        %953 = vmatpush1.msra.mxu0 %v359
        %954 = vmatprep.subr.mxu0 %v368
        %955 = vmatpush1.msra.mxu0 %v367
        %956 = vmatprep.subr.mxu0 %v376
        %957 = vmatpush1.msra.mxu0 %v375
        %958 = vmatprep.subr.mxu0 %v384
        %959 = vmatpush1.msra.mxu0 %v383
        %960 = vmatprep.subr.mxu0 %v392
        %961 = vmatpush1.msra.mxu0 %v391
        %962 = vmatprep.subr.mxu0 %v400
        %963 = vmatpush1.msra.mxu0 %v399
        %964 = vmatprep.subr.mxu0 %v408
        %965 = vmatpush1.msra.mxu0 %v407
        %966 = vmatprep.subr.mxu0 %v416
        %967 = vmatpush1.msra.mxu0 %v415
        %968 = vmatprep.subr.mxu0 %v424
        %969 = vmatpush1.msra.mxu0 %v423
        %970 = vmatprep.subr.mxu0 %v432
        %971 = vmatpush1.msra.mxu0 %v431
        %972 = vmatprep.subr.mxu0 %v440
        %973 = vmatpush1.msra.mxu0 %v439
        %974 = vmatprep.subr.mxu0 %v448
        %975 = vmatpush1.msra.mxu0 %v447
        %976 = vmatprep.subr.mxu0 %v456
        %977 = vmatpush1.msra.mxu0 %v455
        %978 = vmatprep.subr.mxu0 %v464
        %979 = vmatpush1.msra.mxu0 %v463
        %980 = vmatprep.subr.mxu0 %v472
        %981 = vmatpush1.msra.mxu0 %v471
        %982 = vmatprep.subr.mxu0 %v480
        %983 = vmatpush1.msra.mxu0 %v479
        %984 = vmatprep.subr.mxu0 %v488
        %985 = vmatpush1.msra.mxu0 %v487
        %986 = vmatprep.subr.mxu0 %v496
        %987 = vmatpush1.msra.mxu0 %v495
        %988 = vmatprep.subr.mxu0 %v504
        %989 = vmatpush1.msra.mxu0 %v503
        %990 = vmatprep.mubr.f32.mxu0 %v912
        %991 = vmatmul.mubr.f32.gmra.mrb[0].mxu0 %v904
        %v992 = vpop.f32.mrb[0].mxu0
        %v993 = vadd.f32 0.0, %v992
        %v994 = vpop.f32.mrb[0].mxu0
        %v995 = vadd.f32 0.0, %v994
        %996 = vdwg.mxu0
        %997 = vmatprep.subr.mxu0 %v512
        %998 = vmatpush1.msra.mxu0 %v511
        %999 = vmatprep.subr.mxu0 %v520
        %1000 = vmatpush1.msra.mxu0 %v519
        %1001 = vmatprep.subr.mxu0 %v528
        %1002 = vmatpush1.msra.mxu0 %v527
        %1003 = vmatprep.subr.mxu0 %v536
        %1004 = vmatpush1.msra.mxu0 %v535
        %1005 = vmatprep.subr.mxu0 %v544
        %1006 = vmatpush1.msra.mxu0 %v543
        %1007 = vmatprep.subr.mxu0 %v552
        %1008 = vmatpush1.msra.mxu0 %v551
        %1009 = vmatprep.subr.mxu0 %v560
        %1010 = vmatpush1.msra.mxu0 %v559
        %1011 = vmatprep.subr.mxu0 %v568
        %1012 = vmatpush1.msra.mxu0 %v567
        %1013 = vmatprep.subr.mxu0 %v576
        %1014 = vmatpush1.msra.mxu0 %v575
        %1015 = vmatprep.subr.mxu0 %v584
        %1016 = vmatpush1.msra.mxu0 %v583
        %1017 = vmatprep.subr.mxu0 %v592
        %1018 = vmatpush1.msra.mxu0 %v591
        %1019 = vmatprep.subr.mxu0 %v600
        %1020 = vmatpush1.msra.mxu0 %v599
        %1021 = vmatprep.subr.mxu0 %v608
        %1022 = vmatpush1.msra.mxu0 %v607
        %1023 = vmatprep.subr.mxu0 %v616
        %1024 = vmatpush1.msra.mxu0 %v615
        %1025 = vmatprep.subr.mxu0 %v624
        %1026 = vmatpush1.msra.mxu0 %v623
        %1027 = vmatprep.subr.mxu0 %v632
        %1028 = vmatpush1.msra.mxu0 %v631
        %1029 = vmatprep.subr.mxu0 %v640
        %1030 = vmatpush1.msra.mxu0 %v639
        %1031 = vmatprep.subr.mxu0 %v648
        %1032 = vmatpush1.msra.mxu0 %v647
        %1033 = vmatprep.subr.mxu0 %v656
        %1034 = vmatpush1.msra.mxu0 %v655
        %1035 = vmatprep.subr.mxu0 %v664
        %1036 = vmatpush1.msra.mxu0 %v663
        %1037 = vmatprep.subr.mxu0 %v672
        %1038 = vmatpush1.msra.mxu0 %v671
        %1039 = vmatprep.subr.mxu0 %v680
        %1040 = vmatpush1.msra.mxu0 %v679
        %1041 = vmatprep.subr.mxu0 %v688
        %1042 = vmatpush1.msra.mxu0 %v687
        %1043 = vmatprep.subr.mxu0 %v696
        %1044 = vmatpush1.msra.mxu0 %v695
        %1045 = vmatprep.subr.mxu0 %v704
        %1046 = vmatpush1.msra.mxu0 %v703
        %1047 = vmatprep.subr.mxu0 %v712
        %1048 = vmatpush1.msra.mxu0 %v711
        %1049 = vmatprep.subr.mxu0 %v720
        %1050 = vmatpush1.msra.mxu0 %v719
        %1051 = vmatprep.subr.mxu0 %v728
        %1052 = vmatpush1.msra.mxu0 %v727
        %1053 = vmatprep.subr.mxu0 %v736
        %1054 = vmatpush1.msra.mxu0 %v735
        %1055 = vmatprep.subr.mxu0 %v744
        %1056 = vmatpush1.msra.mxu0 %v743
        %1057 = vmatprep.subr.mxu0 %v752
        %1058 = vmatpush1.msra.mxu0 %v751
        %1059 = vmatprep.subr.mxu0 %v760
        %1060 = vmatpush1.msra.mxu0 %v759
        %1061 = vmatprep.mubr.f32.mxu0 %v913
        %1062 = vmatmul.mubr.f32.gmra.mrb[0].mxu0 %v911
        %v1063 = vpop.f32.mrb[0].mxu0
        %v1064 = vadd.f32 %v993, %v1063
        %v1065 = vpop.f32.mrb[0].mxu0
        %v1066 = vadd.f32 %v995, %v1065
        %1067 = vdwg.mxu0
        %1068 = vmatprep.subr.mxu0 %v768
        %1069 = vmatpush1.msra.mxu0 %v767
        %1070 = vmatprep.subr.mxu0 %v776
        %1071 = vmatpush1.msra.mxu0 %v775
        %1072 = vmatprep.subr.mxu0 %v784
        %1073 = vmatpush1.msra.mxu0 %v783
        %1074 = vmatprep.subr.mxu0 %v792
        %1075 = vmatpush1.msra.mxu0 %v791
        %1076 = vmatprep.subr.mxu0 %v800
        %1077 = vmatpush1.msra.mxu0 %v799
        %1078 = vmatprep.subr.mxu0 %v808
        %1079 = vmatpush1.msra.mxu0 %v807
        %1080 = vmatprep.subr.mxu0 %v816
        %1081 = vmatpush1.msra.mxu0 %v815
        %1082 = vmatprep.subr.mxu0 %v824
        %1083 = vmatpush1.msra.mxu0 %v823
        %1084 = vmatprep.subr.mxu0 %v832
        %1085 = vmatpush1.msra.mxu0 %v831
        %1086 = vmatprep.subr.mxu0 %v840
        %1087 = vmatpush1.msra.mxu0 %v839
        %1088 = vmatprep.subr.mxu0 %v848
        %1089 = vmatpush1.msra.mxu0 %v847
        %1090 = vmatprep.subr.mxu0 %v856
        %1091 = vmatpush1.msra.mxu0 %v855
        %1092 = vmatprep.subr.mxu0 %v864
        %1093 = vmatpush1.msra.mxu0 %v863
        %1094 = vmatprep.subr.mxu0 %v872
        %1095 = vmatpush1.msra.mxu0 %v871
        %1096 = vmatprep.subr.mxu0 %v880
        %1097 = vmatpush1.msra.mxu0 %v879
        %1098 = vmatprep.subr.mxu0 %v888
        %1099 = vmatpush1.msra.mxu0 %v887
        %1100 = vmatprep.subr.mxu0 0.0
        %1101 = vmatpush1.msra.mxu0 0.0
        %1102 = vmatprep.subr.mxu0 0.0
        %1103 = vmatpush1.msra.mxu0 0.0
        %1104 = vmatprep.subr.mxu0 0.0
        %1105 = vmatpush1.msra.mxu0 0.0
        %1106 = vmatprep.subr.mxu0 0.0
        %1107 = vmatpush1.msra.mxu0 0.0
        %1108 = vmatprep.subr.mxu0 0.0
        %1109 = vmatpush1.msra.mxu0 0.0
        %1110 = vmatprep.subr.mxu0 0.0
        %1111 = vmatpush1.msra.mxu0 0.0
        %1112 = vmatprep.subr.mxu0 0.0
        %1113 = vmatpush1.msra.mxu0 0.0
        %1114 = vmatprep.subr.mxu0 0.0
        %1115 = vmatpush1.msra.mxu0 0.0
        %1116 = vmatprep.subr.mxu0 0.0
        %1117 = vmatpush1.msra.mxu0 0.0
        %1118 = vmatprep.subr.mxu0 0.0
        %1119 = vmatpush1.msra.mxu0 0.0
        %1120 = vmatprep.subr.mxu0 0.0
        %1121 = vmatpush1.msra.mxu0 0.0
        %1122 = vmatprep.subr.mxu0 0.0
        %1123 = vmatpush1.msra.mxu0 0.0
        %1124 = vmatprep.subr.mxu0 0.0
        %1125 = vmatpush1.msra.mxu0 0.0
        %1126 = vmatprep.subr.mxu0 0.0
        %1127 = vmatpush1.msra.mxu0 0.0
        %1128 = vmatprep.subr.mxu0 0.0
        %1129 = vmatpush1.msra.mxu0 0.0
        %1130 = vmatprep.subr.mxu0 0.0
        %1131 = vmatpush1.msra.mxu0 0.0
        %1132 = vmatprep.mubr.f32.mxu0 0.0
        %1133 = vmatmul.mubr.f32.gmra.mrb[0].mxu0 %v920
        %v1134 = vpop.f32.mrb[0].mxu0
        %v1135 = vadd.f32 %v1064, %v1134
        %v1136 = vpop.f32.mrb[0].mxu0
        %v1137 = vadd.f32 %v1066, %v1136
        %1138 = vdwg.mxu0
        %1139 = vmatprep.subr.mxu0 %v258
        %1140 = vmatpush1.msra.mxu0 %v257
        %1141 = vmatprep.subr.mxu0 %v266
        %1142 = vmatpush1.msra.mxu0 %v265
        %1143 = vmatprep.subr.mxu0 %v274
        %1144 = vmatpush1.msra.mxu0 %v273
        %1145 = vmatprep.subr.mxu0 %v282
        %1146 = vmatpush1.msra.mxu0 %v281
        %1147 = vmatprep.subr.mxu0 %v290
        %1148 = vmatpush1.msra.mxu0 %v289
        %1149 = vmatprep.subr.mxu0 %v298
        %1150 = vmatpush1.msra.mxu0 %v297
        %1151 = vmatprep.subr.mxu0 %v306
        %1152 = vmatpush1.msra.mxu0 %v305
        %1153 = vmatprep.subr.mxu0 %v314
        %1154 = vmatpush1.msra.mxu0 %v313
        %1155 = vmatprep.subr.mxu0 %v322
        %1156 = vmatpush1.msra.mxu0 %v321
        %1157 = vmatprep.subr.mxu0 %v330
        %1158 = vmatpush1.msra.mxu0 %v329
        %1159 = vmatprep.subr.mxu0 %v338
        %1160 = vmatpush1.msra.mxu0 %v337
        %1161 = vmatprep.subr.mxu0 %v346
        %1162 = vmatpush1.msra.mxu0 %v345
        %1163 = vmatprep.subr.mxu0 %v354
        %1164 = vmatpush1.msra.mxu0 %v353
        %1165 = vmatprep.subr.mxu0 %v362
        %1166 = vmatpush1.msra.mxu0 %v361
        %1167 = vmatprep.subr.mxu0 %v370
        %1168 = vmatpush1.msra.mxu0 %v369
        %1169 = vmatprep.subr.mxu0 %v378
        %1170 = vmatpush1.msra.mxu0 %v377
        %1171 = vmatprep.subr.mxu0 %v386
        %1172 = vmatpush1.msra.mxu0 %v385
        %1173 = vmatprep.subr.mxu0 %v394
        %1174 = vmatpush1.msra.mxu0 %v393
        %1175 = vmatprep.subr.mxu0 %v402
        %1176 = vmatpush1.msra.mxu0 %v401
        %1177 = vmatprep.subr.mxu0 %v410
        %1178 = vmatpush1.msra.mxu0 %v409
        %1179 = vmatprep.subr.mxu0 %v418
        %1180 = vmatpush1.msra.mxu0 %v417
        %1181 = vmatprep.subr.mxu0 %v426
        %1182 = vmatpush1.msra.mxu0 %v425
        %1183 = vmatprep.subr.mxu0 %v434
        %1184 = vmatpush1.msra.mxu0 %v433
        %1185 = vmatprep.subr.mxu0 %v442
        %1186 = vmatpush1.msra.mxu0 %v441
        %1187 = vmatprep.subr.mxu0 %v450
        %1188 = vmatpush1.msra.mxu0 %v449
        %1189 = vmatprep.subr.mxu0 %v458
        %1190 = vmatpush1.msra.mxu0 %v457
        %1191 = vmatprep.subr.mxu0 %v466
        %1192 = vmatpush1.msra.mxu0 %v465
        %1193 = vmatprep.subr.mxu0 %v474
        %1194 = vmatpush1.msra.mxu0 %v473
        %1195 = vmatprep.subr.mxu0 %v482
        %1196 = vmatpush1.msra.mxu0 %v481
        %1197 = vmatprep.subr.mxu0 %v490
        %1198 = vmatpush1.msra.mxu0 %v489
        %1199 = vmatprep.subr.mxu0 %v498
        %1200 = vmatpush1.msra.mxu0 %v497
        %1201 = vmatprep.subr.mxu0 %v506
        %1202 = vmatpush1.msra.mxu0 %v505
        %1203 = vmatprep.mubr.f32.mxu0 %v912
        %1204 = vmatmul.mubr.f32.gmra.mrb[0].mxu0 %v904
        %v1205 = vpop.f32.mrb[0].mxu0
        %v1206 = vadd.f32 0.0, %v1205
        %v1207 = vpop.f32.mrb[0].mxu0
        %v1208 = vadd.f32 0.0, %v1207
        %1209 = vdwg.mxu0
        %1210 = vmatprep.subr.mxu0 %v514
        %1211 = vmatpush1.msra.mxu0 %v513
        %1212 = vmatprep.subr.mxu0 %v522
        %1213 = vmatpush1.msra.mxu0 %v521
        %1214 = vmatprep.subr.mxu0 %v530
        %1215 = vmatpush1.msra.mxu0 %v529
        %1216 = vmatprep.subr.mxu0 %v538
        %1217 = vmatpush1.msra.mxu0 %v537
        %1218 = vmatprep.subr.mxu0 %v546
        %1219 = vmatpush1.msra.mxu0 %v545
        %1220 = vmatprep.subr.mxu0 %v554
        %1221 = vmatpush1.msra.mxu0 %v553
        %1222 = vmatprep.subr.mxu0 %v562
        %1223 = vmatpush1.msra.mxu0 %v561
        %1224 = vmatprep.subr.mxu0 %v570
        %1225 = vmatpush1.msra.mxu0 %v569
        %1226 = vmatprep.subr.mxu0 %v578
        %1227 = vmatpush1.msra.mxu0 %v577
        %1228 = vmatprep.subr.mxu0 %v586
        %1229 = vmatpush1.msra.mxu0 %v585
        %1230 = vmatprep.subr.mxu0 %v594
        %1231 = vmatpush1.msra.mxu0 %v593
        %1232 = vmatprep.subr.mxu0 %v602
        %1233 = vmatpush1.msra.mxu0 %v601
        %1234 = vmatprep.subr.mxu0 %v610
        %1235 = vmatpush1.msra.mxu0 %v609
        %1236 = vmatprep.subr.mxu0 %v618
        %1237 = vmatpush1.msra.mxu0 %v617
        %1238 = vmatprep.subr.mxu0 %v626
        %1239 = vmatpush1.msra.mxu0 %v625
        %1240 = vmatprep.subr.mxu0 %v634
        %1241 = vmatpush1.msra.mxu0 %v633
        %1242 = vmatprep.subr.mxu0 %v642
        %1243 = vmatpush1.msra.mxu0 %v641
        %1244 = vmatprep.subr.mxu0 %v650
        %1245 = vmatpush1.msra.mxu0 %v649
        %1246 = vmatprep.subr.mxu0 %v658
        %1247 = vmatpush1.msra.mxu0 %v657
        %1248 = vmatprep.subr.mxu0 %v666
        %1249 = vmatpush1.msra.mxu0 %v665
        %1250 = vmatprep.subr.mxu0 %v674
        %1251 = vmatpush1.msra.mxu0 %v673
        %1252 = vmatprep.subr.mxu0 %v682
        %1253 = vmatpush1.msra.mxu0 %v681
        %1254 = vmatprep.subr.mxu0 %v690
        %1255 = vmatpush1.msra.mxu0 %v689
        %1256 = vmatprep.subr.mxu0 %v698
        %1257 = vmatpush1.msra.mxu0 %v697
        %1258 = vmatprep.subr.mxu0 %v706
        %1259 = vmatpush1.msra.mxu0 %v705
        %1260 = vmatprep.subr.mxu0 %v714
        %1261 = vmatpush1.msra.mxu0 %v713
        %1262 = vmatprep.subr.mxu0 %v722
        %1263 = vmatpush1.msra.mxu0 %v721
        %1264 = vmatprep.subr.mxu0 %v730
        %1265 = vmatpush1.msra.mxu0 %v729
        %1266 = vmatprep.subr.mxu0 %v738
        %1267 = vmatpush1.msra.mxu0 %v737
        %1268 = vmatprep.subr.mxu0 %v746
        %1269 = vmatpush1.msra.mxu0 %v745
        %1270 = vmatprep.subr.mxu0 %v754
        %1271 = vmatpush1.msra.mxu0 %v753
        %1272 = vmatprep.subr.mxu0 %v762
        %1273 = vmatpush1.msra.mxu0 %v761
        %1274 = vmatprep.mubr.f32.mxu0 %v913
        %1275 = vmatmul.mubr.f32.gmra.mrb[0].mxu0 %v911
        %v1276 = vpop.f32.mrb[0].mxu0
        %v1277 = vadd.f32 %v1206, %v1276
        %v1278 = vpop.f32.mrb[0].mxu0
        %v1279 = vadd.f32 %v1208, %v1278
        %1280 = vdwg.mxu0
        %1281 = vmatprep.subr.mxu0 %v770
        %1282 = vmatpush1.msra.mxu0 %v769
        %1283 = vmatprep.subr.mxu0 %v778
        %1284 = vmatpush1.msra.mxu0 %v777
        %1285 = vmatprep.subr.mxu0 %v786
        %1286 = vmatpush1.msra.mxu0 %v785
        %1287 = vmatprep.subr.mxu0 %v794
        %1288 = vmatpush1.msra.mxu0 %v793
        %1289 = vmatprep.subr.mxu0 %v802
        %1290 = vmatpush1.msra.mxu0 %v801
        %1291 = vmatprep.subr.mxu0 %v810
        %1292 = vmatpush1.msra.mxu0 %v809
        %1293 = vmatprep.subr.mxu0 %v818
        %1294 = vmatpush1.msra.mxu0 %v817
        %1295 = vmatprep.subr.mxu0 %v826
        %1296 = vmatpush1.msra.mxu0 %v825
        %1297 = vmatprep.subr.mxu0 %v834
        %1298 = vmatpush1.msra.mxu0 %v833
        %1299 = vmatprep.subr.mxu0 %v842
        %1300 = vmatpush1.msra.mxu0 %v841
        %1301 = vmatprep.subr.mxu0 %v850
        %1302 = vmatpush1.msra.mxu0 %v849
        %1303 = vmatprep.subr.mxu0 %v858
        %1304 = vmatpush1.msra.mxu0 %v857
        %1305 = vmatprep.subr.mxu0 %v866
        %1306 = vmatpush1.msra.mxu0 %v865
        %1307 = vmatprep.subr.mxu0 %v874
        %1308 = vmatpush1.msra.mxu0 %v873
        %1309 = vmatprep.subr.mxu0 %v882
        %1310 = vmatpush1.msra.mxu0 %v881
        %1311 = vmatprep.subr.mxu0 %v890
        %1312 = vmatpush1.msra.mxu0 %v889
        %1313 = vmatprep.subr.mxu0 0.0
        %1314 = vmatpush1.msra.mxu0 0.0
        %1315 = vmatprep.subr.mxu0 0.0
        %1316 = vmatpush1.msra.mxu0 0.0
        %1317 = vmatprep.subr.mxu0 0.0
        %1318 = vmatpush1.msra.mxu0 0.0
        %1319 = vmatprep.subr.mxu0 0.0
        %1320 = vmatpush1.msra.mxu0 0.0
        %1321 = vmatprep.subr.mxu0 0.0
        %1322 = vmatpush1.msra.mxu0 0.0
        %1323 = vmatprep.subr.mxu0 0.0
        %1324 = vmatpush1.msra.mxu0 0.0
        %1325 = vmatprep.subr.mxu0 0.0
        %1326 = vmatpush1.msra.mxu0 0.0
        %1327 = vmatprep.subr.mxu0 0.0
        %1328 = vmatpush1.msra.mxu0 0.0
        %1329 = vmatprep.subr.mxu0 0.0
        %1330 = vmatpush1.msra.mxu0 0.0
        %1331 = vmatprep.subr.mxu0 0.0
        %1332 = vmatpush1.msra.mxu0 0.0
        %1333 = vmatprep.subr.mxu0 0.0
        %1334 = vmatpush1.msra.mxu0 0.0
        %1335 = vmatprep.subr.mxu0 0.0
        %1336 = vmatpush1.msra.mxu0 0.0
        %1337 = vmatprep.subr.mxu0 0.0
        %1338 = vmatpush1.msra.mxu0 0.0
        %1339 = vmatprep.subr.mxu0 0.0
        %1340 = vmatpush1.msra.mxu0 0.0
        %1341 = vmatprep.subr.mxu0 0.0
        %1342 = vmatpush1.msra.mxu0 0.0
        %1343 = vmatprep.subr.mxu0 0.0
        %1344 = vmatpush1.msra.mxu0 0.0
        %1345 = vmatprep.mubr.f32.mxu0 0.0
        %1346 = vmatmul.mubr.f32.gmra.mrb[0].mxu0 %v920
        %v1347 = vpop.f32.mrb[0].mxu0
        %v1348 = vadd.f32 %v1277, %v1347
        %v1349 = vpop.f32.mrb[0].mxu0
        %v1350 = vadd.f32 %v1279, %v1349
        %1351 = vdwg.mxu0
        %1352 = vmatprep.subr.mxu0 %v260
        %1353 = vmatpush1.msra.mxu0 %v259
        %1354 = vmatprep.subr.mxu0 %v268
        %1355 = vmatpush1.msra.mxu0 %v267
        %1356 = vmatprep.subr.mxu0 %v276
        %1357 = vmatpush1.msra.mxu0 %v275
        %1358 = vmatprep.subr.mxu0 %v284
        %1359 = vmatpush1.msra.mxu0 %v283
        %1360 = vmatprep.subr.mxu0 %v292
        %1361 = vmatpush1.msra.mxu0 %v291
        %1362 = vmatprep.subr.mxu0 %v300
        %1363 = vmatpush1.msra.mxu0 %v299
        %1364 = vmatprep.subr.mxu0 %v308
        %1365 = vmatpush1.msra.mxu0 %v307
        %1366 = vmatprep.subr.mxu0 %v316
        %1367 = vmatpush1.msra.mxu0 %v315
        %1368 = vmatprep.subr.mxu0 %v324
        %1369 = vmatpush1.msra.mxu0 %v323
        %1370 = vmatprep.subr.mxu0 %v332
        %1371 = vmatpush1.msra.mxu0 %v331
        %1372 = vmatprep.subr.mxu0 %v340
        %1373 = vmatpush1.msra.mxu0 %v339
        %1374 = vmatprep.subr.mxu0 %v348
        %1375 = vmatpush1.msra.mxu0 %v347
        %1376 = vmatprep.subr.mxu0 %v356
        %1377 = vmatpush1.msra.mxu0 %v355
        %1378 = vmatprep.subr.mxu0 %v364
        %1379 = vmatpush1.msra.mxu0 %v363
        %1380 = vmatprep.subr.mxu0 %v372
        %1381 = vmatpush1.msra.mxu0 %v371
        %1382 = vmatprep.subr.mxu0 %v380
        %1383 = vmatpush1.msra.mxu0 %v379
        %1384 = vmatprep.subr.mxu0 %v388
        %1385 = vmatpush1.msra.mxu0 %v387
        %1386 = vmatprep.subr.mxu0 %v396
        %1387 = vmatpush1.msra.mxu0 %v395
        %1388 = vmatprep.subr.mxu0 %v404
        %1389 = vmatpush1.msra.mxu0 %v403
        %1390 = vmatprep.subr.mxu0 %v412
        %1391 = vmatpush1.msra.mxu0 %v411
        %1392 = vmatprep.subr.mxu0 %v420
        %1393 = vmatpush1.msra.mxu0 %v419
        %1394 = vmatprep.subr.mxu0 %v428
        %1395 = vmatpush1.msra.mxu0 %v427
        %1396 = vmatprep.subr.mxu0 %v436
        %1397 = vmatpush1.msra.mxu0 %v435
        %1398 = vmatprep.subr.mxu0 %v444
        %1399 = vmatpush1.msra.mxu0 %v443
        %1400 = vmatprep.subr.mxu0 %v452
        %1401 = vmatpush1.msra.mxu0 %v451
        %1402 = vmatprep.subr.mxu0 %v460
        %1403 = vmatpush1.msra.mxu0 %v459
        %1404 = vmatprep.subr.mxu0 %v468
        %1405 = vmatpush1.msra.mxu0 %v467
        %1406 = vmatprep.subr.mxu0 %v476
        %1407 = vmatpush1.msra.mxu0 %v475
        %1408 = vmatprep.subr.mxu0 %v484
        %1409 = vmatpush1.msra.mxu0 %v483
        %1410 = vmatprep.subr.mxu0 %v492
        %1411 = vmatpush1.msra.mxu0 %v491
        %1412 = vmatprep.subr.mxu0 %v500
        %1413 = vmatpush1.msra.mxu0 %v499
        %1414 = vmatprep.subr.mxu0 %v508
        %1415 = vmatpush1.msra.mxu0 %v507
        %1416 = vmatprep.mubr.f32.mxu0 %v912
        %1417 = vmatmul.mubr.f32.gmra.mrb[0].mxu0 %v904
        %v1418 = vpop.f32.mrb[0].mxu0
        %v1419 = vadd.f32 0.0, %v1418
        %v1420 = vpop.f32.mrb[0].mxu0
        %v1421 = vadd.f32 0.0, %v1420
        %1422 = vdwg.mxu0
        %1423 = vmatprep.subr.mxu0 %v516
        %1424 = vmatpush1.msra.mxu0 %v515
        %1425 = vmatprep.subr.mxu0 %v524
        %1426 = vmatpush1.msra.mxu0 %v523
        %1427 = vmatprep.subr.mxu0 %v532
        %1428 = vmatpush1.msra.mxu0 %v531
        %1429 = vmatprep.subr.mxu0 %v540
        %1430 = vmatpush1.msra.mxu0 %v539
        %1431 = vmatprep.subr.mxu0 %v548
        %1432 = vmatpush1.msra.mxu0 %v547
        %1433 = vmatprep.subr.mxu0 %v556
        %1434 = vmatpush1.msra.mxu0 %v555
        %1435 = vmatprep.subr.mxu0 %v564
        %1436 = vmatpush1.msra.mxu0 %v563
        %1437 = vmatprep.subr.mxu0 %v572
        %1438 = vmatpush1.msra.mxu0 %v571
        %1439 = vmatprep.subr.mxu0 %v580
        %1440 = vmatpush1.msra.mxu0 %v579
        %1441 = vmatprep.subr.mxu0 %v588
        %1442 = vmatpush1.msra.mxu0 %v587
        %1443 = vmatprep.subr.mxu0 %v596
        %1444 = vmatpush1.msra.mxu0 %v595
        %1445 = vmatprep.subr.mxu0 %v604
        %1446 = vmatpush1.msra.mxu0 %v603
        %1447 = vmatprep.subr.mxu0 %v612
        %1448 = vmatpush1.msra.mxu0 %v611
        %1449 = vmatprep.subr.mxu0 %v620
        %1450 = vmatpush1.msra.mxu0 %v619
        %1451 = vmatprep.subr.mxu0 %v628
        %1452 = vmatpush1.msra.mxu0 %v627
        %1453 = vmatprep.subr.mxu0 %v636
        %1454 = vmatpush1.msra.mxu0 %v635
        %1455 = vmatprep.subr.mxu0 %v644
        %1456 = vmatpush1.msra.mxu0 %v643
        %1457 = vmatprep.subr.mxu0 %v652
        %1458 = vmatpush1.msra.mxu0 %v651
        %1459 = vmatprep.subr.mxu0 %v660
        %1460 = vmatpush1.msra.mxu0 %v659
        %1461 = vmatprep.subr.mxu0 %v668
        %1462 = vmatpush1.msra.mxu0 %v667
        %1463 = vmatprep.subr.mxu0 %v676
        %1464 = vmatpush1.msra.mxu0 %v675
        %1465 = vmatprep.subr.mxu0 %v684
        %1466 = vmatpush1.msra.mxu0 %v683
        %1467 = vmatprep.subr.mxu0 %v692
        %1468 = vmatpush1.msra.mxu0 %v691
        %1469 = vmatprep.subr.mxu0 %v700
        %1470 = vmatpush1.msra.mxu0 %v699
        %1471 = vmatprep.subr.mxu0 %v708
        %1472 = vmatpush1.msra.mxu0 %v707
        %1473 = vmatprep.subr.mxu0 %v716
        %1474 = vmatpush1.msra.mxu0 %v715
        %1475 = vmatprep.subr.mxu0 %v724
        %1476 = vmatpush1.msra.mxu0 %v723
        %1477 = vmatprep.subr.mxu0 %v732
        %1478 = vmatpush1.msra.mxu0 %v731
        %1479 = vmatprep.subr.mxu0 %v740
        %1480 = vmatpush1.msra.mxu0 %v739
        %1481 = vmatprep.subr.mxu0 %v748
        %1482 = vmatpush1.msra.mxu0 %v747
        %1483 = vmatprep.subr.mxu0 %v756
        %1484 = vmatpush1.msra.mxu0 %v755
        %1485 = vmatprep.subr.mxu0 %v764
        %1486 = vmatpush1.msra.mxu0 %v763
        %1487 = vmatprep.mubr.f32.mxu0 %v913
        %1488 = vmatmul.mubr.f32.gmra.mrb[0].mxu0 %v911
        %v1489 = vpop.f32.mrb[0].mxu0
        %v1490 = vadd.f32 %v1419, %v1489
        %v1491 = vpop.f32.mrb[0].mxu0
        %v1492 = vadd.f32 %v1421, %v1491
        %1493 = vdwg.mxu0
        %1494 = vmatprep.subr.mxu0 %v772
        %1495 = vmatpush1.msra.mxu0 %v771
        %1496 = vmatprep.subr.mxu0 %v780
        %1497 = vmatpush1.msra.mxu0 %v779
        %1498 = vmatprep.subr.mxu0 %v788
        %1499 = vmatpush1.msra.mxu0 %v787
        %1500 = vmatprep.subr.mxu0 %v796
        %1501 = vmatpush1.msra.mxu0 %v795
        %1502 = vmatprep.subr.mxu0 %v804
        %1503 = vmatpush1.msra.mxu0 %v803
        %1504 = vmatprep.subr.mxu0 %v812
        %1505 = vmatpush1.msra.mxu0 %v811
        %1506 = vmatprep.subr.mxu0 %v820
        %1507 = vmatpush1.msra.mxu0 %v819
        %1508 = vmatprep.subr.mxu0 %v828
        %1509 = vmatpush1.msra.mxu0 %v827
        %1510 = vmatprep.subr.mxu0 %v836
        %1511 = vmatpush1.msra.mxu0 %v835
        %1512 = vmatprep.subr.mxu0 %v844
        %1513 = vmatpush1.msra.mxu0 %v843
        %1514 = vmatprep.subr.mxu0 %v852
        %1515 = vmatpush1.msra.mxu0 %v851
        %1516 = vmatprep.subr.mxu0 %v860
        %1517 = vmatpush1.msra.mxu0 %v859
        %1518 = vmatprep.subr.mxu0 %v868
        %1519 = vmatpush1.msra.mxu0 %v867
        %1520 = vmatprep.subr.mxu0 %v876
        %1521 = vmatpush1.msra.mxu0 %v875
        %1522 = vmatprep.subr.mxu0 %v884
        %1523 = vmatpush1.msra.mxu0 %v883
        %1524 = vmatprep.subr.mxu0 %v892
        %1525 = vmatpush1.msra.mxu0 %v891
        %1526 = vmatprep.subr.mxu0 0.0
        %1527 = vmatpush1.msra.mxu0 0.0
        %1528 = vmatprep.subr.mxu0 0.0
        %1529 = vmatpush1.msra.mxu0 0.0
        %1530 = vmatprep.subr.mxu0 0.0
        %1531 = vmatpush1.msra.mxu0 0.0
        %1532 = vmatprep.subr.mxu0 0.0
        %1533 = vmatpush1.msra.mxu0 0.0
        %1534 = vmatprep.subr.mxu0 0.0
        %1535 = vmatpush1.msra.mxu0 0.0
        %1536 = vmatprep.subr.mxu0 0.0
        %1537 = vmatpush1.msra.mxu0 0.0
        %1538 = vmatprep.subr.mxu0 0.0
        %1539 = vmatpush1.msra.mxu0 0.0
        %1540 = vmatprep.subr.mxu0 0.0
        %1541 = vmatpush1.msra.mxu0 0.0
        %1542 = vmatprep.subr.mxu0 0.0
        %1543 = vmatpush1.msra.mxu0 0.0
        %1544 = vmatprep.subr.mxu0 0.0
        %1545 = vmatpush1.msra.mxu0 0.0
        %1546 = vmatprep.subr.mxu0 0.0
        %1547 = vmatpush1.msra.mxu0 0.0
        %1548 = vmatprep.subr.mxu0 0.0
        %1549 = vmatpush1.msra.mxu0 0.0
        %1550 = vmatprep.subr.mxu0 0.0
        %1551 = vmatpush1.msra.mxu0 0.0
        %1552 = vmatprep.subr.mxu0 0.0
        %1553 = vmatpush1.msra.mxu0 0.0
        %1554 = vmatprep.subr.mxu0 0.0
        %1555 = vmatpush1.msra.mxu0 0.0
        %1556 = vmatprep.subr.mxu0 0.0
        %1557 = vmatpush1.msra.mxu0 0.0
        %1558 = vmatprep.mubr.f32.mxu0 0.0
        %1559 = vmatmul.mubr.f32.gmra.mrb[0].mxu0 %v920
        %v1560 = vpop.f32.mrb[0].mxu0
        %v1561 = vadd.f32 %v1490, %v1560
        %v1562 = vpop.f32.mrb[0].mxu0
        %v1563 = vadd.f32 %v1492, %v1562
        %1564 = vdwg.mxu0
        %1565 = vmatprep.subr.mxu0 %v262
        %1566 = vmatpush1.msra.mxu0 %v261
        %1567 = vmatprep.subr.mxu0 %v270
        %1568 = vmatpush1.msra.mxu0 %v269
        %1569 = vmatprep.subr.mxu0 %v278
        %1570 = vmatpush1.msra.mxu0 %v277
        %1571 = vmatprep.subr.mxu0 %v286
        %1572 = vmatpush1.msra.mxu0 %v285
        %1573 = vmatprep.subr.mxu0 %v294
        %1574 = vmatpush1.msra.mxu0 %v293
        %1575 = vmatprep.subr.mxu0 %v302
        %1576 = vmatpush1.msra.mxu0 %v301
        %1577 = vmatprep.subr.mxu0 %v310
        %1578 = vmatpush1.msra.mxu0 %v309
        %1579 = vmatprep.subr.mxu0 %v318
        %1580 = vmatpush1.msra.mxu0 %v317
        %1581 = vmatprep.subr.mxu0 %v326
        %1582 = vmatpush1.msra.mxu0 %v325
        %1583 = vmatprep.subr.mxu0 %v334
        %1584 = vmatpush1.msra.mxu0 %v333
        %1585 = vmatprep.subr.mxu0 %v342
        %1586 = vmatpush1.msra.mxu0 %v341
        %1587 = vmatprep.subr.mxu0 %v350
        %1588 = vmatpush1.msra.mxu0 %v349
        %1589 = vmatprep.subr.mxu0 %v358
        %1590 = vmatpush1.msra.mxu0 %v357
        %1591 = vmatprep.subr.mxu0 %v366
        %1592 = vmatpush1.msra.mxu0 %v365
        %1593 = vmatprep.subr.mxu0 %v374
        %1594 = vmatpush1.msra.mxu0 %v373
        %1595 = vmatprep.subr.mxu0 %v382
        %1596 = vmatpush1.msra.mxu0 %v381
        %1597 = vmatprep.subr.mxu0 %v390
        %1598 = vmatpush1.msra.mxu0 %v389
        %1599 = vmatprep.subr.mxu0 %v398
        %1600 = vmatpush1.msra.mxu0 %v397
        %1601 = vmatprep.subr.mxu0 %v406
        %1602 = vmatpush1.msra.mxu0 %v405
        %1603 = vmatprep.subr.mxu0 %v414
        %1604 = vmatpush1.msra.mxu0 %v413
        %1605 = vmatprep.subr.mxu0 %v422
        %1606 = vmatpush1.msra.mxu0 %v421
        %1607 = vmatprep.subr.mxu0 %v430
        %1608 = vmatpush1.msra.mxu0 %v429
        %1609 = vmatprep.subr.mxu0 %v438
        %1610 = vmatpush1.msra.mxu0 %v437
        %1611 = vmatprep.subr.mxu0 %v446
        %1612 = vmatpush1.msra.mxu0 %v445
        %1613 = vmatprep.subr.mxu0 %v454
        %1614 = vmatpush1.msra.mxu0 %v453
        %1615 = vmatprep.subr.mxu0 %v462
        %1616 = vmatpush1.msra.mxu0 %v461
        %1617 = vmatprep.subr.mxu0 %v470
        %1618 = vmatpush1.msra.mxu0 %v469
        %1619 = vmatprep.subr.mxu0 %v478
        %1620 = vmatpush1.msra.mxu0 %v477
        %1621 = vmatprep.subr.mxu0 %v486
        %1622 = vmatpush1.msra.mxu0 %v485
        %1623 = vmatprep.subr.mxu0 %v494
        %1624 = vmatpush1.msra.mxu0 %v493
        %1625 = vmatprep.subr.mxu0 %v502
        %1626 = vmatpush1.msra.mxu0 %v501
        %1627 = vmatprep.subr.mxu0 %v510
        %1628 = vmatpush1.msra.mxu0 %v509
        %1629 = vmatprep.mubr.f32.mxu0 %v912
        %1630 = vmatmul.mubr.f32.gmra.mrb[0].mxu0 %v904
        %v1631 = vpop.f32.mrb[0].mxu0
        %v1632 = vadd.f32 0.0, %v1631
        %v1633 = vpop.f32.mrb[0].mxu0
        %v1634 = vadd.f32 0.0, %v1633
        %1635 = vdwg.mxu0
        %1636 = vmatprep.subr.mxu0 %v518
        %1637 = vmatpush1.msra.mxu0 %v517
        %1638 = vmatprep.subr.mxu0 %v526
        %1639 = vmatpush1.msra.mxu0 %v525
        %1640 = vmatprep.subr.mxu0 %v534
        %1641 = vmatpush1.msra.mxu0 %v533
        %1642 = vmatprep.subr.mxu0 %v542
        %1643 = vmatpush1.msra.mxu0 %v541
        %1644 = vmatprep.subr.mxu0 %v550
        %1645 = vmatpush1.msra.mxu0 %v549
        %1646 = vmatprep.subr.mxu0 %v558
        %1647 = vmatpush1.msra.mxu0 %v557
        %1648 = vmatprep.subr.mxu0 %v566
        %1649 = vmatpush1.msra.mxu0 %v565
        %1650 = vmatprep.subr.mxu0 %v574
        %1651 = vmatpush1.msra.mxu0 %v573
        %1652 = vmatprep.subr.mxu0 %v582
        %1653 = vmatpush1.msra.mxu0 %v581
        %1654 = vmatprep.subr.mxu0 %v590
        %1655 = vmatpush1.msra.mxu0 %v589
        %1656 = vmatprep.subr.mxu0 %v598
        %1657 = vmatpush1.msra.mxu0 %v597
        %1658 = vmatprep.subr.mxu0 %v606
        %1659 = vmatpush1.msra.mxu0 %v605
        %1660 = vmatprep.subr.mxu0 %v614
        %1661 = vmatpush1.msra.mxu0 %v613
        %1662 = vmatprep.subr.mxu0 %v622
        %1663 = vmatpush1.msra.mxu0 %v621
        %1664 = vmatprep.subr.mxu0 %v630
        %1665 = vmatpush1.msra.mxu0 %v629
        %1666 = vmatprep.subr.mxu0 %v638
        %1667 = vmatpush1.msra.mxu0 %v637
        %1668 = vmatprep.subr.mxu0 %v646
        %1669 = vmatpush1.msra.mxu0 %v645
        %1670 = vmatprep.subr.mxu0 %v654
        %1671 = vmatpush1.msra.mxu0 %v653
        %1672 = vmatprep.subr.mxu0 %v662
        %1673 = vmatpush1.msra.mxu0 %v661
        %1674 = vmatprep.subr.mxu0 %v670
        %1675 = vmatpush1.msra.mxu0 %v669
        %1676 = vmatprep.subr.mxu0 %v678
        %1677 = vmatpush1.msra.mxu0 %v677
        %1678 = vmatprep.subr.mxu0 %v686
        %1679 = vmatpush1.msra.mxu0 %v685
        %1680 = vmatprep.subr.mxu0 %v694
        %1681 = vmatpush1.msra.mxu0 %v693
        %1682 = vmatprep.subr.mxu0 %v702
        %1683 = vmatpush1.msra.mxu0 %v701
        %1684 = vmatprep.subr.mxu0 %v710
        %1685 = vmatpush1.msra.mxu0 %v709
        %1686 = vmatprep.subr.mxu0 %v718
        %1687 = vmatpush1.msra.mxu0 %v717
        %1688 = vmatprep.subr.mxu0 %v726
        %1689 = vmatpush1.msra.mxu0 %v725
        %1690 = vmatprep.subr.mxu0 %v734
        %1691 = vmatpush1.msra.mxu0 %v733
        %1692 = vmatprep.subr.mxu0 %v742
        %1693 = vmatpush1.msra.mxu0 %v741
        %1694 = vmatprep.subr.mxu0 %v750
        %1695 = vmatpush1.msra.mxu0 %v749
        %1696 = vmatprep.subr.mxu0 %v758
        %1697 = vmatpush1.msra.mxu0 %v757
        %1698 = vmatprep.subr.mxu0 %v766
        %1699 = vmatpush1.msra.mxu0 %v765
        %1700 = vmatprep.mubr.f32.mxu0 %v913
        %1701 = vmatmul.mubr.f32.gmra.mrb[0].mxu0 %v911
        %v1702 = vpop.f32.mrb[0].mxu0
        %v1703 = vadd.f32 %v1632, %v1702
        %v1704 = vpop.f32.mrb[0].mxu0
        %v1705 = vadd.f32 %v1634, %v1704
        %1706 = vdwg.mxu0
        %1707 = vmatprep.subr.mxu0 %v774
        %1708 = vmatpush1.msra.mxu0 %v773
        %1709 = vmatprep.subr.mxu0 %v782
        %1710 = vmatpush1.msra.mxu0 %v781
        %1711 = vmatprep.subr.mxu0 %v790
        %1712 = vmatpush1.msra.mxu0 %v789
        %1713 = vmatprep.subr.mxu0 %v798
        %1714 = vmatpush1.msra.mxu0 %v797
        %1715 = vmatprep.subr.mxu0 %v806
        %1716 = vmatpush1.msra.mxu0 %v805
        %1717 = vmatprep.subr.mxu0 %v814
        %1718 = vmatpush1.msra.mxu0 %v813
        %1719 = vmatprep.subr.mxu0 %v822
        %1720 = vmatpush1.msra.mxu0 %v821
        %1721 = vmatprep.subr.mxu0 %v830
        %1722 = vmatpush1.msra.mxu0 %v829
        %1723 = vmatprep.subr.mxu0 %v838
        %1724 = vmatpush1.msra.mxu0 %v837
        %1725 = vmatprep.subr.mxu0 %v846
        %1726 = vmatpush1.msra.mxu0 %v845
        %1727 = vmatprep.subr.mxu0 %v854
        %1728 = vmatpush1.msra.mxu0 %v853
        %1729 = vmatprep.subr.mxu0 %v862
        %1730 = vmatpush1.msra.mxu0 %v861
        %1731 = vmatprep.subr.mxu0 %v870
        %1732 = vmatpush1.msra.mxu0 %v869
        %1733 = vmatprep.subr.mxu0 %v878
        %1734 = vmatpush1.msra.mxu0 %v877
        %1735 = vmatprep.subr.mxu0 %v886
        %1736 = vmatpush1.msra.mxu0 %v885
        %1737 = vmatprep.subr.mxu0 %v894
        %1738 = vmatpush1.msra.mxu0 %v893
        %1739 = vmatprep.subr.mxu0 0.0
        %1740 = vmatpush1.msra.mxu0 0.0
        %1741 = vmatprep.subr.mxu0 0.0
        %1742 = vmatpush1.msra.mxu0 0.0
        %1743 = vmatprep.subr.mxu0 0.0
        %1744 = vmatpush1.msra.mxu0 0.0
        %1745 = vmatprep.subr.mxu0 0.0
        %1746 = vmatpush1.msra.mxu0 0.0
        %1747 = vmatprep.subr.mxu0 0.0
        %1748 = vmatpush1.msra.mxu0 0.0
        %1749 = vmatprep.subr.mxu0 0.0
        %1750 = vmatpush1.msra.mxu0 0.0
        %1751 = vmatprep.subr.mxu0 0.0
        %1752 = vmatpush1.msra.mxu0 0.0
        %1753 = vmatprep.subr.mxu0 0.0
        %1754 = vmatpush1.msra.mxu0 0.0
        %1755 = vmatprep.subr.mxu0 0.0
        %1756 = vmatpush1.msra.mxu0 0.0
        %1757 = vmatprep.subr.mxu0 0.0
        %1758 = vmatpush1.msra.mxu0 0.0
        %1759 = vmatprep.subr.mxu0 0.0
        %1760 = vmatpush1.msra.mxu0 0.0
        %1761 = vmatprep.subr.mxu0 0.0
        %1762 = vmatpush1.msra.mxu0 0.0
        %1763 = vmatprep.subr.mxu0 0.0
        %1764 = vmatpush1.msra.mxu0 0.0
        %1765 = vmatprep.subr.mxu0 0.0
        %1766 = vmatpush1.msra.mxu0 0.0
        %1767 = vmatprep.subr.mxu0 0.0
        %1768 = vmatpush1.msra.mxu0 0.0
        %1769 = vmatprep.subr.mxu0 0.0
        %1770 = vmatpush1.msra.mxu0 0.0
        %1771 = vmatprep.mubr.f32.mxu0 0.0
        %1772 = vmatmul.mubr.f32.gmra.mrb[0].mxu0 %v920
        %v1773 = vpop.f32.mrb[0].mxu0
        %v1774 = vadd.f32 %v1703, %v1773
        %v1775 = vpop.f32.mrb[0].mxu0
        %v1776 = vadd.f32 %v1705, %v1775
        %1777 = vdwg.mxu0
        %v1786 = vcombine.low %v1135, %v1137
        %v1787 = vcombine.low %v1348, %v1350
        %v1789 = vunpack.c.l.s4 1983009808
        %v1790 = vunpack.c.0.s8 %v1789
        %v1791 = vlaneseq
        %v1792 = vshrl.u32 %v1791, 7
        %v1793 = vsub.s32 %v1790, %v1792
        %v1794 = vrot.slane %v1786, %v1793
        %v1796 = vunpack.c.l.s4 1983009808
        %v1797 = vunpack.c.0.s8 %v1796
        %v1798 = vlaneseq
        %v1799 = vshrl.u32 %v1798, 7
        %v1800 = vsub.s32 %v1797, %v1799
        %v1801 = vrot.slane %v1787, %v1800
        %v1802 = vcombine.low %v1794, %v1801
        %v1803 = vcombine.low %v1561, %v1563
        %v1804 = vcombine.low %v1774, %v1776
        %v1806 = vunpack.c.l.s4 1983009808
        %v1807 = vunpack.c.0.s8 %v1806
        %v1808 = vlaneseq
        %v1809 = vshrl.u32 %v1808, 7
        %v1810 = vsub.s32 %v1807, %v1809
        %v1811 = vrot.slane %v1803, %v1810
        %v1813 = vunpack.c.l.s4 1983009808
        %v1814 = vunpack.c.0.s8 %v1813
        %v1815 = vlaneseq
        %v1816 = vshrl.u32 %v1815, 7
        %v1817 = vsub.s32 %v1814, %v1816
        %v1818 = vrot.slane %v1804, %v1817
        %v1819 = vcombine.low %v1811, %v1818
        %v1822 = vadd.f32 %v251, %v1802
        %v1823 = vadd.f32 %v252, %v1819
        %1824 = vst [vmem:[#allocation2] sm:$0xff] %v1822
        %vm1825 = vcmask 1041408
        %vm1826 = vcmask 1043458
        %vm1827 = vmor %vm1826, %vm1825
        %vm1828 = vcmask 1045508
        %vm1829 = vmor %vm1828, %vm1827
        %vm1830 = vcmask 850950
        %vm1831 = vmor %vm1830, %vm1829
        %1832 = vst.msk [vmem:[#allocation2 + $0x8] sm:$0xff] %vm1831, %v1823
        %p1833 = scmp.eq.s32.totalorder %s17, 4
        // Predicated region
        $region45: #{convnet_s_forward.5} parent=39 // pred_check
          %p1834 = pneg %p1833
        $region46: #{convnet_s_forward.5} parent=39 // pred_check_branch
          %1836 = sbr.rel (%p1834) target = $region48
        $region47: #{convnet_s_forward.5} parent=39 // pred_region
          %v1837 = vld [vmem:[#allocation2] sm:$0xff]
          %v1838 = vld [vmem:[#allocation2 + $0x8] sm:$0xff]
          %v1839 = vld [vmem:[%s2] sm:$0xff]
          %v1841 = vlaneseq
          %v1842 = vshrl.u32 %v1841, 7
          %v1843 = vsub.s32 0, %v1842
          %v1844 = vrot.slane %v1839, %v1843
          %v1845 = vlaneseq
          %v1846 = vshrl.u32 %v1845, 7
          %v1847 = vsub.s32 1, %v1846
          %v1848 = vrot.slane %v1839, %v1847
          %v1849 = vlaneseq
          %v1850 = vshrl.u32 %v1849, 7
          %v1851 = vsub.s32 2, %v1850
          %v1852 = vrot.slane %v1839, %v1851
          %v1853 = vlaneseq
          %v1854 = vshrl.u32 %v1853, 7
          %v1855 = vsub.s32 3, %v1854
          %v1856 = vrot.slane %v1839, %v1855
          %v1857 = vlaneseq
          %v1858 = vshrl.u32 %v1857, 7
          %v1859 = vsub.s32 4, %v1858
          %v1860 = vrot.slane %v1839, %v1859
          %v1861 = vlaneseq
          %v1862 = vshrl.u32 %v1861, 7
          %v1863 = vsub.s32 5, %v1862
          %v1864 = vrot.slane %v1839, %v1863
          %v1865 = vlaneseq
          %v1866 = vshrl.u32 %v1865, 7
          %v1867 = vsub.s32 6, %v1866
          %v1868 = vrot.slane %v1839, %v1867
          %v1869 = vlaneseq
          %v1870 = vshrl.u32 %v1869, 7
          %v1871 = vsub.s32 7, %v1870
          %v1872 = vrot.slane %v1839, %v1871
          %v1873 = vcombine.low %v1844, %v1848
          %v1874 = vcombine.low %v1852, %v1856
          %v1876 = vunpack.c.l.s4 1983009808
          %v1877 = vunpack.c.0.s8 %v1876
          %v1878 = vlaneseq
          %v1879 = vshrl.u32 %v1878, 7
          %v1880 = vsub.s32 %v1877, %v1879
          %v1881 = vrot.slane %v1873, %v1880
          %v1883 = vunpack.c.l.s4 1983009808
          %v1884 = vunpack.c.0.s8 %v1883
          %v1885 = vlaneseq
          %v1886 = vshrl.u32 %v1885, 7
          %v1887 = vsub.s32 %v1884, %v1886
          %v1888 = vrot.slane %v1874, %v1887
          %v1889 = vcombine.low %v1881, %v1888
          %v1890 = vcombine.low %v1860, %v1864
          %v1891 = vcombine.low %v1868, %v1872
          %v1893 = vunpack.c.l.s4 1983009808
          %v1894 = vunpack.c.0.s8 %v1893
          %v1895 = vlaneseq
          %v1896 = vshrl.u32 %v1895, 7
          %v1897 = vsub.s32 %v1894, %v1896
          %v1898 = vrot.slane %v1890, %v1897
          %v1900 = vunpack.c.l.s4 1983009808
          %v1901 = vunpack.c.0.s8 %v1900
          %v1902 = vlaneseq
          %v1903 = vshrl.u32 %v1902, 7
          %v1904 = vsub.s32 %v1901, %v1903
          %v1905 = vrot.slane %v1891, %v1904
          %v1906 = vcombine.low %v1898, %v1905
          %v1909 = vadd.f32 %v1837, %v1889
          %v1910 = vadd.f32 %v1838, %v1906
          %v1911 = vmul.f32 %v1909, %v1909
          %v1912 = vmul.f32 %v1910, %v1910
          %v1913 = vmul.f32 %v1911, %v1909
          %v1914 = vmul.f32 %v1912, %v1910
          %v1915 = vmul.f32 %v1913, %v1909
          %v1916 = vmul.f32 %v1914, %v1910
          %v1919 = vcombine.high %v1915, %v1915
          %v1921 = vunpack.c.l.s4 1983009808
          %v1922 = vunpack.c.0.s8 %v1921
          %v1923 = vlaneseq
          %v1924 = vshrl.u32 %v1923, 7
          %v1925 = vsub.s32 %v1922, %v1924
          %v1926 = vrot.slane %v1915, %v1925
          %v1928 = vunpack.c.l.s4 1983009808
          %v1929 = vunpack.c.0.s8 %v1928
          %v1930 = vlaneseq
          %v1931 = vshrl.u32 %v1930, 7
          %v1932 = vsub.s32 %v1929, %v1931
          %v1933 = vrot.slane %v1919, %v1932
          %v1934 = vcombine.high %v1926, %v1926
          %v1935 = vcombine.high %v1933, %v1933
          %v1936 = vcombine.high %v1916, %v1916
          %v1938 = vunpack.c.l.s4 1983009808
          %v1939 = vunpack.c.0.s8 %v1938
          %v1940 = vlaneseq
          %v1941 = vshrl.u32 %v1940, 7
          %v1942 = vsub.s32 %v1939, %v1941
          %v1943 = vrot.slane %v1916, %v1942
          %v1945 = vunpack.c.l.s4 1983009808
          %v1946 = vunpack.c.0.s8 %v1945
          %v1947 = vlaneseq
          %v1948 = vshrl.u32 %v1947, 7
          %v1949 = vsub.s32 %v1946, %v1948
          %v1950 = vrot.slane %v1936, %v1949
          %v1951 = vcombine.high %v1943, %v1943
          %v1952 = vcombine.high %v1950, %v1950
          %v1961 = vsel %vm1825, %v1926, 0.0
          %v1962 = vsel %vm1825, %v1934, 0.0
          %v1963 = vadd.f32 %v1961, %v1962
          %v1964 = vsel %vm1825, %v1933, 0.0
          %v1965 = vadd.f32 %v1963, %v1964
          %v1966 = vsel %vm1825, %v1935, 0.0
          %v1967 = vadd.f32 %v1965, %v1966
          %v1968 = vsel %vm1825, %v1943, 0.0
          %v1969 = vadd.f32 %v1967, %v1968
          %v1970 = vsel %vm1825, %v1951, 0.0
          %v1971 = vadd.f32 %v1969, %v1970
          %v1972 = vsel %vm1825, %v1950, 0.0
          %v1973 = vadd.f32 %v1971, %v1972
          %vm1974 = vcmask 844800
          %v1975 = vsel %vm1974, %v1952, 0.0
          %v1976 = vadd.f32 %v1973, %v1975
          %1977 = vadd.xlane.f32.xlu0 %v1976
          %v1978 = vpop.xlane.xlu0 %1977
          %v1979 = vrot.slane %v1978, 4
          %v1980 = vadd.f32 %v1978, %v1979
          %v1981 = vrot.slane %v1980, 2
          %v1982 = vadd.f32 %v1980, %v1981
          %v1983 = vrot.slane %v1982, 1
          %v1984 = vadd.f32 %v1982, %v1983
          %s1985 = vtos %v1984
          %v1986 = vstv %s1985
          %v1987 = vrsqrt.pop %v1986
          %v1988 = vmul.f32 %v1986, %v1987
          %vm1989 = vcmp.eq.f32.partialorder %v1986, inf
          %v1990 = vsel %vm1989, %v1986, %v1988
          %vm1991 = vcmp.eq.f32.partialorder %v1986, 0.0
          %v1992 = vand.u32 %v1986, 2147483648
          %v1993 = vsel %vm1991, %v1992, %v1990
          %s1994 = vtos %v1993
          %v1995 = vstv %s1994
          %v1996 = vrsqrt.pop %v1995
          %v1997 = vmul.f32 %v1995, %v1996
          %vm1998 = vcmp.eq.f32.partialorder %v1995, inf
          %v1999 = vsel %vm1998, %v1995, %v1997
          %vm2000 = vcmp.eq.f32.partialorder %v1995, 0.0
          %v2001 = vand.u32 %v1995, 2147483648
          %v2002 = vsel %vm2000, %v2001, %v1999
          %s2003 = vtos %v2002
          %s2004 = smin.f32 %s2003, 2.0
          %v2005 = vstv %s2003
          %v2006 = vrcp.pop %v2005
          %s2007 = vtos %v2006
          %s2008 = smul.f32 %s2004, %s2007
          %v2009 = vstv %s2008
          %v2010 = vmul.f32 %v1909, %v2009
          %v2011 = vmul.f32 %v1910, %v2009
          %v2012 = vld [vmem:[%s3] sm:$0xff]
          %v2013 = vld [vmem:[%s3 + $0x8] sm:$0xff]
          %v2014 = vld [vmem:[%s3 + $0x10] sm:$0xff]
          %v2015 = vld [vmem:[%s3 + $0x18] sm:$0xff]
          %v2016 = vld [vmem:[%s3 + $0x20] sm:$0xff]
          %v2017 = vld [vmem:[%s3 + $0x28] sm:$0xff]
          %v2018 = vld [vmem:[%s3 + $0x30] sm:$0xff]
          %v2019 = vld [vmem:[%s3 + $0x38] sm:$0xff]
          %v2020 = vld [vmem:[%s3 + $0x40] sm:$0xff]
          %v2021 = vld [vmem:[%s3 + $0x48] sm:$0xff]
          %v2022 = vld [vmem:[%s3 + $0x50] sm:$0xff]
          %v2023 = vld [vmem:[%s3 + $0x58] sm:$0xff]
          %v2024 = vld [vmem:[%s3 + $0x60] sm:$0xff]
          %v2025 = vld [vmem:[%s3 + $0x68] sm:$0xff]
          %v2026 = vld [vmem:[%s3 + $0x70] sm:$0xff]
          %v2027 = vld [vmem:[%s3 + $0x78] sm:$0xff]
          %v2028 = vld [vmem:[%s3 + $0x80] sm:$0xff]
          %v2029 = vld [vmem:[%s3 + $0x88] sm:$0xff]
          %v2030 = vld [vmem:[%s3 + $0x90] sm:$0xff]
          %v2031 = vld [vmem:[%s3 + $0x98] sm:$0xff]
          %v2032 = vld [vmem:[%s3 + $0xa0] sm:$0xff]
          %v2033 = vld [vmem:[%s3 + $0xa8] sm:$0xff]
          %v2034 = vld [vmem:[%s3 + $0xb0] sm:$0xff]
          %v2035 = vld [vmem:[%s3 + $0xb8] sm:$0xff]
          %v2036 = vld [vmem:[%s3 + $0xc0] sm:$0xff]
          %v2037 = vld [vmem:[%s3 + $0xc8] sm:$0xff]
          %v2038 = vld [vmem:[%s3 + $0xd0] sm:$0xff]
          %v2039 = vld [vmem:[%s3 + $0xd8] sm:$0xff]
          %v2040 = vld [vmem:[%s3 + $0xe0] sm:$0xff]
          %v2041 = vld [vmem:[%s3 + $0xe8] sm:$0xff]
          %v2042 = vld [vmem:[%s3 + $0xf0] sm:$0xff]
          %v2043 = vld [vmem:[%s3 + $0xf8] sm:$0xff]
          %v2044 = vld [vmem:[%s3 + $0x100] sm:$0xff]
          %v2045 = vld [vmem:[%s3 + $0x108] sm:$0xff]
          %v2046 = vld [vmem:[%s3 + $0x110] sm:$0xff]
          %v2047 = vld [vmem:[%s3 + $0x118] sm:$0xff]
          %v2048 = vld [vmem:[%s3 + $0x120] sm:$0xff]
          %v2049 = vld [vmem:[%s3 + $0x128] sm:$0xff]
          %v2050 = vld [vmem:[%s3 + $0x130] sm:$0xff]
          %v2051 = vld [vmem:[%s3 + $0x138] sm:$0xff]
          %v2052 = vld [vmem:[%s3 + $0x140] sm:$0xff]
          %v2053 = vld [vmem:[%s3 + $0x148] sm:$0xff]
          %v2054 = vld [vmem:[%s3 + $0x150] sm:$0xff]
          %v2055 = vld [vmem:[%s3 + $0x158] sm:$0xff]
          %v2056 = vld [vmem:[%s3 + $0x160] sm:$0xff]
          %v2057 = vld [vmem:[%s3 + $0x168] sm:$0xff]
          %v2058 = vld [vmem:[%s3 + $0x170] sm:$0xff]
          %v2059 = vld [vmem:[%s3 + $0x178] sm:$0xff]
          %v2060 = vld [vmem:[%s3 + $0x180] sm:$0xff]
          %v2061 = vld [vmem:[%s3 + $0x188] sm:$0xff]
          %v2062 = vld [vmem:[%s3 + $0x190] sm:$0xff]
          %v2063 = vld [vmem:[%s3 + $0x198] sm:$0xff]
          %v2064 = vld [vmem:[%s3 + $0x1a0] sm:$0xff]
          %v2065 = vld [vmem:[%s3 + $0x1a8] sm:$0xff]
          %v2066 = vld [vmem:[%s3 + $0x1b0] sm:$0xff]
          %v2067 = vld [vmem:[%s3 + $0x1b8] sm:$0xff]
          %v2068 = vld [vmem:[%s3 + $0x1c0] sm:$0xff]
          %v2069 = vld [vmem:[%s3 + $0x1c8] sm:$0xff]
          %v2070 = vld [vmem:[%s3 + $0x1d0] sm:$0xff]
          %v2071 = vld [vmem:[%s3 + $0x1d8] sm:$0xff]
          %v2072 = vld [vmem:[%s3 + $0x1e0] sm:$0xff]
          %v2073 = vld [vmem:[%s3 + $0x1e8] sm:$0xff]
          %v2074 = vld [vmem:[%s3 + $0x1f0] sm:$0xff]
          %v2075 = vld [vmem:[%s3 + $0x1f8] sm:$0xff]
          %v2076 = vld [vmem:[%s3 + $0x200] sm:$0xff]
          %v2077 = vld [vmem:[%s3 + $0x208] sm:$0xff]
          %v2078 = vld [vmem:[%s3 + $0x210] sm:$0xff]
          %v2079 = vld [vmem:[%s3 + $0x218] sm:$0xff]
          %v2080 = vld [vmem:[%s3 + $0x220] sm:$0xff]
          %v2081 = vld [vmem:[%s3 + $0x228] sm:$0xff]
          %v2082 = vld [vmem:[%s3 + $0x230] sm:$0xff]
          %v2083 = vld [vmem:[%s3 + $0x238] sm:$0xff]
          %v2084 = vld [vmem:[%s3 + $0x240] sm:$0xff]
          %v2085 = vld [vmem:[%s3 + $0x248] sm:$0xff]
          %v2086 = vld [vmem:[%s3 + $0x250] sm:$0xff]
          %v2087 = vld [vmem:[%s3 + $0x258] sm:$0xff]
          %v2088 = vld [vmem:[%s3 + $0x260] sm:$0xff]
          %v2089 = vld [vmem:[%s3 + $0x268] sm:$0xff]
          %v2090 = vld [vmem:[%s3 + $0x270] sm:$0xff]
          %v2091 = vld [vmem:[%s3 + $0x278] sm:$0xff]
          %v2092 = vld [vmem:[%s3 + $0x280] sm:$0xff]
          %v2093 = vld [vmem:[%s3 + $0x288] sm:$0xff]
          %v2094 = vld [vmem:[%s3 + $0x290] sm:$0xff]
          %v2095 = vld [vmem:[%s3 + $0x298] sm:$0xff]
          %v2096 = vld [vmem:[%s3 + $0x2a0] sm:$0xff]
          %v2097 = vld [vmem:[%s3 + $0x2a8] sm:$0xff]
          %v2098 = vld [vmem:[%s3 + $0x2b0] sm:$0xff]
          %v2099 = vld [vmem:[%s3 + $0x2b8] sm:$0xff]
          %v2100 = vld [vmem:[%s3 + $0x2c0] sm:$0xff]
          %v2101 = vld [vmem:[%s3 + $0x2c8] sm:$0xff]
          %v2102 = vld [vmem:[%s3 + $0x2d0] sm:$0xff]
          %v2103 = vld [vmem:[%s3 + $0x2d8] sm:$0xff]
          %v2104 = vld [vmem:[%s3 + $0x2e0] sm:$0xff]
          %v2105 = vld [vmem:[%s3 + $0x2e8] sm:$0xff]
          %v2106 = vld [vmem:[%s3 + $0x2f0] sm:$0xff]
          %v2107 = vld [vmem:[%s3 + $0x2f8] sm:$0xff]
          %v2108 = vld [vmem:[%s3 + $0x300] sm:$0xff]
          %v2109 = vld [vmem:[%s3 + $0x308] sm:$0xff]
          %v2110 = vld [vmem:[%s3 + $0x310] sm:$0xff]
          %v2111 = vld [vmem:[%s3 + $0x318] sm:$0xff]
          %v2112 = vld [vmem:[%s3 + $0x320] sm:$0xff]
          %v2113 = vld [vmem:[%s3 + $0x328] sm:$0xff]
          %v2114 = vld [vmem:[%s3 + $0x330] sm:$0xff]
          %v2115 = vld [vmem:[%s3 + $0x338] sm:$0xff]
          %v2116 = vld [vmem:[%s3 + $0x340] sm:$0xff]
          %v2117 = vld [vmem:[%s3 + $0x348] sm:$0xff]
          %v2118 = vld [vmem:[%s3 + $0x350] sm:$0xff]
          %v2119 = vld [vmem:[%s3 + $0x358] sm:$0xff]
          %v2120 = vld [vmem:[%s3 + $0x360] sm:$0xff]
          %v2121 = vld [vmem:[%s3 + $0x368] sm:$0xff]
          %v2122 = vld [vmem:[%s3 + $0x370] sm:$0xff]
          %v2123 = vld [vmem:[%s3 + $0x378] sm:$0xff]
          %v2124 = vld [vmem:[%s3 + $0x380] sm:$0xff]
          %v2125 = vld [vmem:[%s3 + $0x388] sm:$0xff]
          %v2126 = vld [vmem:[%s3 + $0x390] sm:$0xff]
          %v2127 = vld [vmem:[%s3 + $0x398] sm:$0xff]
          %v2128 = vld [vmem:[%s3 + $0x3a0] sm:$0xff]
          %v2129 = vld [vmem:[%s3 + $0x3a8] sm:$0xff]
          %v2130 = vld [vmem:[%s3 + $0x3b0] sm:$0xff]
          %v2131 = vld [vmem:[%s3 + $0x3b8] sm:$0xff]
          %v2132 = vld [vmem:[%s3 + $0x3c0] sm:$0xff]
          %v2133 = vld [vmem:[%s3 + $0x3c8] sm:$0xff]
          %v2134 = vld [vmem:[%s3 + $0x3d0] sm:$0xff]
          %v2135 = vld [vmem:[%s3 + $0x3d8] sm:$0xff]
          %v2136 = vld [vmem:[%s3 + $0x3e0] sm:$0xff]
          %v2137 = vld [vmem:[%s4] sm:$0x1]
          %v2139 = vlaneseq
          %v2140 = vshrl.u32 %v2139, 7
          %v2141 = vsub.s32 0, %v2140
          %v2142 = vrot.slane %v2137, %v2141
          %v2146 = vcombine.high %v2010, %v2010
          %v2148 = vunpack.c.l.s4 1983009808
          %v2149 = vunpack.c.0.s8 %v2148
          %v2150 = vlaneseq
          %v2151 = vshrl.u32 %v2150, 7
          %v2152 = vsub.s32 %v2149, %v2151
          %v2153 = vrot.slane %v2010, %v2152
          %v2155 = vunpack.c.l.s4 1983009808
          %v2156 = vunpack.c.0.s8 %v2155
          %v2157 = vlaneseq
          %v2158 = vshrl.u32 %v2157, 7
          %v2159 = vsub.s32 %v2156, %v2158
          %v2160 = vrot.slane %v2146, %v2159
          %v2161 = vcombine.high %v2153, %v2153
          %v2162 = vcombine.high %v2160, %v2160
          %v2163 = vcombine.high %v2011, %v2011
          %v2165 = vunpack.c.l.s4 1983009808
          %v2166 = vunpack.c.0.s8 %v2165
          %v2167 = vlaneseq
          %v2168 = vshrl.u32 %v2167, 7
          %v2169 = vsub.s32 %v2166, %v2168
          %v2170 = vrot.slane %v2011, %v2169
          %v2172 = vunpack.c.l.s4 1983009808
          %v2173 = vunpack.c.0.s8 %v2172
          %v2174 = vlaneseq
          %v2175 = vshrl.u32 %v2174, 7
          %v2176 = vsub.s32 %v2173, %v2175
          %v2177 = vrot.slane %v2163, %v2176
          %v2178 = vcombine.high %v2170, %v2170
          %v2179 = vcombine.high %v2177, %v2177
          %vm2187 = vcmask 850944
          %v2188 = vsel %vm2187, %v2179, 0
          %2190 = vmatprep.subr.mxu0 0.0
          %2191 = vmatpush1.msra.mxu0 %v2012
          %2192 = vmatprep.subr.mxu0 0.0
          %2193 = vmatpush1.msra.mxu0 %v2013
          %2194 = vmatprep.subr.mxu0 0.0
          %2195 = vmatpush1.msra.mxu0 %v2014
          %2196 = vmatprep.subr.mxu0 0.0
          %2197 = vmatpush1.msra.mxu0 %v2015
          %2198 = vmatprep.subr.mxu0 0.0
          %2199 = vmatpush1.msra.mxu0 %v2016
          %2200 = vmatprep.subr.mxu0 0.0
          %2201 = vmatpush1.msra.mxu0 %v2017
          %2202 = vmatprep.subr.mxu0 0.0
          %2203 = vmatpush1.msra.mxu0 %v2018
          %2204 = vmatprep.subr.mxu0 0.0
          %2205 = vmatpush1.msra.mxu0 %v2019
          %2206 = vmatprep.subr.mxu0 0.0
          %2207 = vmatpush1.msra.mxu0 %v2020
          %2208 = vmatprep.subr.mxu0 0.0
          %2209 = vmatpush1.msra.mxu0 %v2021
          %2210 = vmatprep.subr.mxu0 0.0
          %2211 = vmatpush1.msra.mxu0 %v2022
          %2212 = vmatprep.subr.mxu0 0.0
          %2213 = vmatpush1.msra.mxu0 %v2023
          %2214 = vmatprep.subr.mxu0 0.0
          %2215 = vmatpush1.msra.mxu0 %v2024
          %2216 = vmatprep.subr.mxu0 0.0
          %2217 = vmatpush1.msra.mxu0 %v2025
          %2218 = vmatprep.subr.mxu0 0.0
          %2219 = vmatpush1.msra.mxu0 %v2026
          %2220 = vmatprep.subr.mxu0 0.0
          %2221 = vmatpush1.msra.mxu0 %v2027
          %2222 = vmatprep.subr.mxu0 0.0
          %2223 = vmatpush1.msra.mxu0 %v2028
          %2224 = vmatprep.subr.mxu0 0.0
          %2225 = vmatpush1.msra.mxu0 %v2029
          %2226 = vmatprep.subr.mxu0 0.0
          %2227 = vmatpush1.msra.mxu0 %v2030
          %2228 = vmatprep.subr.mxu0 0.0
          %2229 = vmatpush1.msra.mxu0 %v2031
          %2230 = vmatprep.subr.mxu0 0.0
          %2231 = vmatpush1.msra.mxu0 %v2032
          %2232 = vmatprep.subr.mxu0 0.0
          %2233 = vmatpush1.msra.mxu0 %v2033
          %2234 = vmatprep.subr.mxu0 0.0
          %2235 = vmatpush1.msra.mxu0 %v2034
          %2236 = vmatprep.subr.mxu0 0.0
          %2237 = vmatpush1.msra.mxu0 %v2035
          %2238 = vmatprep.subr.mxu0 0.0
          %2239 = vmatpush1.msra.mxu0 %v2036
          %2240 = vmatprep.subr.mxu0 0.0
          %2241 = vmatpush1.msra.mxu0 %v2037
          %2242 = vmatprep.subr.mxu0 0.0
          %2243 = vmatpush1.msra.mxu0 %v2038
          %2244 = vmatprep.subr.mxu0 0.0
          %2245 = vmatpush1.msra.mxu0 %v2039
          %2246 = vmatprep.subr.mxu0 0.0
          %2247 = vmatpush1.msra.mxu0 %v2040
          %2248 = vmatprep.subr.mxu0 0.0
          %2249 = vmatpush1.msra.mxu0 %v2041
          %2250 = vmatprep.subr.mxu0 0.0
          %2251 = vmatpush1.msra.mxu0 %v2042
          %2252 = vmatprep.subr.mxu0 0.0
          %2253 = vmatpush1.msra.mxu0 %v2043
          %2254 = vmatprep.mubr.f32.mxu0 %v2161
          %2255 = vmatmul.mubr.f32.gmra.mrb[0].mxu0 %v2153
          %v2256 = vpop.f32.mrb[0].mxu0
          %v2257 = vadd.f32 %v2142, %v2256
          %v2258 = vpop.f32.mrb[0].mxu0
          %2259 = vdwg.mxu0
          %2260 = vmatprep.subr.mxu0 0.0
          %2261 = vmatpush1.msra.mxu0 %v2044
          %2262 = vmatprep.subr.mxu0 0.0
          %2263 = vmatpush1.msra.mxu0 %v2045
          %2264 = vmatprep.subr.mxu0 0.0
          %2265 = vmatpush1.msra.mxu0 %v2046
          %2266 = vmatprep.subr.mxu0 0.0
          %2267 = vmatpush1.msra.mxu0 %v2047
          %2268 = vmatprep.subr.mxu0 0.0
          %2269 = vmatpush1.msra.mxu0 %v2048
          %2270 = vmatprep.subr.mxu0 0.0
          %2271 = vmatpush1.msra.mxu0 %v2049
          %2272 = vmatprep.subr.mxu0 0.0
          %2273 = vmatpush1.msra.mxu0 %v2050
          %2274 = vmatprep.subr.mxu0 0.0
          %2275 = vmatpush1.msra.mxu0 %v2051
          %2276 = vmatprep.subr.mxu0 0.0
          %2277 = vmatpush1.msra.mxu0 %v2052
          %2278 = vmatprep.subr.mxu0 0.0
          %2279 = vmatpush1.msra.mxu0 %v2053
          %2280 = vmatprep.subr.mxu0 0.0
          %2281 = vmatpush1.msra.mxu0 %v2054
          %2282 = vmatprep.subr.mxu0 0.0
          %2283 = vmatpush1.msra.mxu0 %v2055
          %2284 = vmatprep.subr.mxu0 0.0
          %2285 = vmatpush1.msra.mxu0 %v2056
          %2286 = vmatprep.subr.mxu0 0.0
          %2287 = vmatpush1.msra.mxu0 %v2057
          %2288 = vmatprep.subr.mxu0 0.0
          %2289 = vmatpush1.msra.mxu0 %v2058
          %2290 = vmatprep.subr.mxu0 0.0
          %2291 = vmatpush1.msra.mxu0 %v2059
          %2292 = vmatprep.subr.mxu0 0.0
          %2293 = vmatpush1.msra.mxu0 %v2060
          %2294 = vmatprep.subr.mxu0 0.0
          %2295 = vmatpush1.msra.mxu0 %v2061
          %2296 = vmatprep.subr.mxu0 0.0
          %2297 = vmatpush1.msra.mxu0 %v2062
          %2298 = vmatprep.subr.mxu0 0.0
          %2299 = vmatpush1.msra.mxu0 %v2063
          %2300 = vmatprep.subr.mxu0 0.0
          %2301 = vmatpush1.msra.mxu0 %v2064
          %2302 = vmatprep.subr.mxu0 0.0
          %2303 = vmatpush1.msra.mxu0 %v2065
          %2304 = vmatprep.subr.mxu0 0.0
          %2305 = vmatpush1.msra.mxu0 %v2066
          %2306 = vmatprep.subr.mxu0 0.0
          %2307 = vmatpush1.msra.mxu0 %v2067
          %2308 = vmatprep.subr.mxu0 0.0
          %2309 = vmatpush1.msra.mxu0 %v2068
          %2310 = vmatprep.subr.mxu0 0.0
          %2311 = vmatpush1.msra.mxu0 %v2069
          %2312 = vmatprep.subr.mxu0 0.0
          %2313 = vmatpush1.msra.mxu0 %v2070
          %2314 = vmatprep.subr.mxu0 0.0
          %2315 = vmatpush1.msra.mxu0 %v2071
          %2316 = vmatprep.subr.mxu0 0.0
          %2317 = vmatpush1.msra.mxu0 %v2072
          %2318 = vmatprep.subr.mxu0 0.0
          %2319 = vmatpush1.msra.mxu0 %v2073
          %2320 = vmatprep.subr.mxu0 0.0
          %2321 = vmatpush1.msra.mxu0 %v2074
          %2322 = vmatprep.subr.mxu0 0.0
          %2323 = vmatpush1.msra.mxu0 %v2075
          %2324 = vmatprep.mubr.f32.mxu0 %v2162
          %2325 = vmatmul.mubr.f32.gmra.mrb[0].mxu0 %v2160
          %v2326 = vpop.f32.mrb[0].mxu0
          %v2327 = vadd.f32 %v2257, %v2326
          %v2328 = vpop.f32.mrb[0].mxu0
          %2329 = vdwg.mxu0
          %2330 = vmatprep.subr.mxu0 0.0
          %2331 = vmatpush1.msra.mxu0 %v2076
          %2332 = vmatprep.subr.mxu0 0.0
          %2333 = vmatpush1.msra.mxu0 %v2077
          %2334 = vmatprep.subr.mxu0 0.0
          %2335 = vmatpush1.msra.mxu0 %v2078
          %2336 = vmatprep.subr.mxu0 0.0
          %2337 = vmatpush1.msra.mxu0 %v2079
          %2338 = vmatprep.subr.mxu0 0.0
          %2339 = vmatpush1.msra.mxu0 %v2080
          %2340 = vmatprep.subr.mxu0 0.0
          %2341 = vmatpush1.msra.mxu0 %v2081
          %2342 = vmatprep.subr.mxu0 0.0
          %2343 = vmatpush1.msra.mxu0 %v2082
          %2344 = vmatprep.subr.mxu0 0.0
          %2345 = vmatpush1.msra.mxu0 %v2083
          %2346 = vmatprep.subr.mxu0 0.0
          %2347 = vmatpush1.msra.mxu0 %v2084
          %2348 = vmatprep.subr.mxu0 0.0
          %2349 = vmatpush1.msra.mxu0 %v2085
          %2350 = vmatprep.subr.mxu0 0.0
          %2351 = vmatpush1.msra.mxu0 %v2086
          %2352 = vmatprep.subr.mxu0 0.0
          %2353 = vmatpush1.msra.mxu0 %v2087
          %2354 = vmatprep.subr.mxu0 0.0
          %2355 = vmatpush1.msra.mxu0 %v2088
          %2356 = vmatprep.subr.mxu0 0.0
          %2357 = vmatpush1.msra.mxu0 %v2089
          %2358 = vmatprep.subr.mxu0 0.0
          %2359 = vmatpush1.msra.mxu0 %v2090
          %2360 = vmatprep.subr.mxu0 0.0
          %2361 = vmatpush1.msra.mxu0 %v2091
          %2362 = vmatprep.subr.mxu0 0.0
          %2363 = vmatpush1.msra.mxu0 %v2092
          %2364 = vmatprep.subr.mxu0 0.0
          %2365 = vmatpush1.msra.mxu0 %v2093
          %2366 = vmatprep.subr.mxu0 0.0
          %2367 = vmatpush1.msra.mxu0 %v2094
          %2368 = vmatprep.subr.mxu0 0.0
          %2369 = vmatpush1.msra.mxu0 %v2095
          %2370 = vmatprep.subr.mxu0 0.0
          %2371 = vmatpush1.msra.mxu0 %v2096
          %2372 = vmatprep.subr.mxu0 0.0
          %2373 = vmatpush1.msra.mxu0 %v2097
          %2374 = vmatprep.subr.mxu0 0.0
          %2375 = vmatpush1.msra.mxu0 %v2098
          %2376 = vmatprep.subr.mxu0 0.0
          %2377 = vmatpush1.msra.mxu0 %v2099
          %2378 = vmatprep.subr.mxu0 0.0
          %2379 = vmatpush1.msra.mxu0 %v2100
          %2380 = vmatprep.subr.mxu0 0.0
          %2381 = vmatpush1.msra.mxu0 %v2101
          %2382 = vmatprep.subr.mxu0 0.0
          %2383 = vmatpush1.msra.mxu0 %v2102
          %2384 = vmatprep.subr.mxu0 0.0
          %2385 = vmatpush1.msra.mxu0 %v2103
          %2386 = vmatprep.subr.mxu0 0.0
          %2387 = vmatpush1.msra.mxu0 %v2104
          %2388 = vmatprep.subr.mxu0 0.0
          %2389 = vmatpush1.msra.mxu0 %v2105
          %2390 = vmatprep.subr.mxu0 0.0
          %2391 = vmatpush1.msra.mxu0 %v2106
          %2392 = vmatprep.subr.mxu0 0.0
          %2393 = vmatpush1.msra.mxu0 %v2107
          %2394 = vmatprep.mubr.f32.mxu0 %v2178
          %2395 = vmatmul.mubr.f32.gmra.mrb[0].mxu0 %v2170
          %v2396 = vpop.f32.mrb[0].mxu0
          %v2397 = vadd.f32 %v2327, %v2396
          %v2398 = vpop.f32.mrb[0].mxu0
          %2399 = vdwg.mxu0
          %2400 = vmatprep.subr.mxu0 0.0
          %2401 = vmatpush1.msra.mxu0 %v2108
          %2402 = vmatprep.subr.mxu0 0.0
          %2403 = vmatpush1.msra.mxu0 %v2109
          %2404 = vmatprep.subr.mxu0 0.0
          %2405 = vmatpush1.msra.mxu0 %v2110
          %2406 = vmatprep.subr.mxu0 0.0
          %2407 = vmatpush1.msra.mxu0 %v2111
          %2408 = vmatprep.subr.mxu0 0.0
          %2409 = vmatpush1.msra.mxu0 %v2112
          %2410 = vmatprep.subr.mxu0 0.0
          %2411 = vmatpush1.msra.mxu0 %v2113
          %2412 = vmatprep.subr.mxu0 0.0
          %2413 = vmatpush1.msra.mxu0 %v2114
          %2414 = vmatprep.subr.mxu0 0.0
          %2415 = vmatpush1.msra.mxu0 %v2115
          %2416 = vmatprep.subr.mxu0 0.0
          %2417 = vmatpush1.msra.mxu0 %v2116
          %2418 = vmatprep.subr.mxu0 0.0
          %2419 = vmatpush1.msra.mxu0 %v2117
          %2420 = vmatprep.subr.mxu0 0.0
          %2421 = vmatpush1.msra.mxu0 %v2118
          %2422 = vmatprep.subr.mxu0 0.0
          %2423 = vmatpush1.msra.mxu0 %v2119
          %2424 = vmatprep.subr.mxu0 0.0
          %2425 = vmatpush1.msra.mxu0 %v2120
          %2426 = vmatprep.subr.mxu0 0.0
          %2427 = vmatpush1.msra.mxu0 %v2121
          %2428 = vmatprep.subr.mxu0 0.0
          %2429 = vmatpush1.msra.mxu0 %v2122
          %2430 = vmatprep.subr.mxu0 0.0
          %2431 = vmatpush1.msra.mxu0 %v2123
          %2432 = vmatprep.subr.mxu0 0.0
          %2433 = vmatpush1.msra.mxu0 %v2124
          %2434 = vmatprep.subr.mxu0 0.0
          %2435 = vmatpush1.msra.mxu0 %v2125
          %2436 = vmatprep.subr.mxu0 0.0
          %2437 = vmatpush1.msra.mxu0 %v2126
          %2438 = vmatprep.subr.mxu0 0.0
          %2439 = vmatpush1.msra.mxu0 %v2127
          %2440 = vmatprep.subr.mxu0 0.0
          %2441 = vmatpush1.msra.mxu0 %v2128
          %2442 = vmatprep.subr.mxu0 0.0
          %2443 = vmatpush1.msra.mxu0 %v2129
          %2444 = vmatprep.subr.mxu0 0.0
          %2445 = vmatpush1.msra.mxu0 %v2130
          %2446 = vmatprep.subr.mxu0 0.0
          %2447 = vmatpush1.msra.mxu0 %v2131
          %2448 = vmatprep.subr.mxu0 0.0
          %2449 = vmatpush1.msra.mxu0 %v2132
          %2450 = vmatprep.subr.mxu0 0.0
          %2451 = vmatpush1.msra.mxu0 %v2133
          %2452 = vmatprep.subr.mxu0 0.0
          %2453 = vmatpush1.msra.mxu0 %v2134
          %2454 = vmatprep.subr.mxu0 0.0
          %2455 = vmatpush1.msra.mxu0 %v2135
          %2456 = vmatprep.subr.mxu0 0.0
          %2457 = vmatpush1.msra.mxu0 %v2136
          %2458 = vmatprep.subr.mxu0 0.0
          %2459 = vmatpush1.msra.mxu0 0.0
          %2460 = vmatprep.subr.mxu0 0.0
          %2461 = vmatpush1.msra.mxu0 0.0
          %2462 = vmatprep.subr.mxu0 0.0
          %2463 = vmatpush1.msra.mxu0 0.0
          %2464 = vmatprep.mubr.f32.mxu0 %v2188
          %2465 = vmatmul.mubr.f32.gmra.mrb[0].mxu0 %v2177
          %v2466 = vpop.f32.mrb[0].mxu0
          %v2467 = vadd.f32 %v2397, %v2466
          %v2468 = vpop.f32.mrb[0].mxu0
          %2469 = vdwg.mxu0
          %vm2470 = vcmask 9216
          %2471 = vst.msk [vmem:[#allocation3] sm:$0x3] %vm2470, %v2467
        $region48: #{convnet_s_forward.5} parent=39 // pred_fallthru
          _
        // Predicated region
        $region49: #{convnet_s_forward.5} parent=39 // pred_check
          %p2472 = pneg %p145
        $region50: #{convnet_s_forward.5} parent=39 // pred_check_branch
          %2474 = sbr.rel (%p2472) target = $region52
        $region51: #{convnet_s_forward.5} parent=39 // pred_region
          %s2476 = ssub.s32 32, 32
          %2477 = vsyncadd [#allocation4], %s2476
          %s2479 = sshll.u32 [#allocation3], 4
          %s2480 = int_to_ptr.vmem [resolvable:$true] %s2479
          %2482 = dma.vmem_to_hbm [thread:$0]  %s2480, 32, %s5, [#allocation4]
        $region52: #{convnet_s_forward.5} parent=39 // pred_fallthru
          _
        // Predicated region
        $region53: #{convnet_s_forward.5} parent=39 // pred_check
          %p2483 = pneg %p145
        $region54: #{convnet_s_forward.5} parent=39 // pred_check_branch
          %2485 = sbr.rel (%p2483) target = $region56
        $region55: #{convnet_s_forward.5} parent=39 // pred_region
          %2486 = dma.done [#allocation4], 32
        $region56: #{convnet_s_forward.5} parent=39 // pred_fallthru
          _
      $region40: #{convnet_s_forward.5} parent=5 // pred_fallthru
        _
      %p2487 = scmp.le.s32.totalorder 2, %s12
      // Predicated region
      $region57: #{convnet_s_forward.5} parent=5 // pred_check
        %p2488 = pneg %p2487
      $region58: #{convnet_s_forward.5} parent=5 // pred_check_branch
        %2490 = sbr.rel (%p2488) target = $region60
      $region59: #{convnet_s_forward.5} parent=5 // pred_region
        %s2491 = ssub.s32 %s12, 2
      $region60: #{convnet_s_forward.5} parent=5 // pred_fallthru
        _
    $region6: #{convnet_s_forward.5} parent=1 // loop_footer
      %s16 = sadd.s32 1, %s12
    $region7: #{convnet_s_forward.5} parent=1 // loop_footer_branch
      %11 = sbr.rel target = $region3
    $region8: #{convnet_s_forward.5} parent=1 // loop_exit
      _
    %2492 = vsyncpa [#allocation4], 1
    %s2493 = scalar_lea.sflag [#allocation4], 1
    %2494 = vsyncpa %s2493, 1

</llo_original>
